<compile_context>
chip_gen: v7x
topology: tpu7x:2x2x1
jax: 0.10.0
libtpu: 0.0.40
codegen_flags: <defaults>
</compile_context>

<pallas_src>
import functools
import math

import jax
import jax.numpy as jnp
from jax.experimental import pallas as pl
from jax.experimental.pallas import tpu as pltpu


# ----------------------------- Pallas kernels --------------------------------
def _conv_pool_kernel(x_ref, w_ref, b_ref, o_ref, *, n_taps, c_out, row_chunk):
    """Fused conv + ReLU + maxpool for one row block.

    x_ref: (rows, K)            bf16, one space-to-depth row per pooled output
    w_ref: (K, n_taps * c_out)  bf16, per-tap scattered conv weights, concatenated
    b_ref: (1, c_out)           f32
    o_ref: (rows, c_out)        relu(max_t(conv_t) + b)  == maxpool(relu(conv))
    """
    n_rows = x_ref.shape[0]
    bias = b_ref[...]
    start = 0
    while start < n_rows:                       # static -> unrolled row chunking
        rows = min(row_chunk, n_rows - start)
        xr = x_ref[start:start + rows, :]
        # One MXU matmul produces all taps' conv outputs for this chunk.
        y = jnp.dot(xr, w_ref[...], preferred_element_type=jnp.float32)
        m = y[:, 0:c_out]
        for t in range(1, n_taps):              # 16/32-lane aligned static slices
            m = jnp.maximum(m, y[:, t * c_out:(t + 1) * c_out])
        # bias + ReLU hoisted out of the tap loop (both are monotone / uniform).
        o_ref[start:start + rows, :] = jnp.maximum(m + bias, 0.0).astype(o_ref.dtype)
        start += rows


def _linear_kernel(x_ref, w_ref, b_ref, o_ref):
    o_ref[...] = (
        jnp.dot(x_ref[...], w_ref[...], preferred_element_type=jnp.float32)
        + b_ref[...]
    )


# ----------------------------- Pallas wrappers --------------------------------
def conv_relu_pool(xs, w_all, bias, *, n_taps, c_out, tile_rows=None,
                   row_chunk=64, out_dtype=jnp.bfloat16, parallel=True):
    """xs: (P, K) bf16; w_all: (K, n_taps*c_out) bf16; bias: (c_out,) -> (P, c_out)."""
    P, K = xs.shape
    cols = w_all.shape[1]
    assert cols == n_taps * c_out
    if tile_rows is None or tile_rows >= P:
        tile_rows = P
    n_blocks = -(-P // tile_rows)
    p_pad = n_blocks * tile_rows
    if p_pad != P:   # <= tile_rows-1 rows of a ~0.5 MB bf16 array; fused by XLA
        xs = jnp.pad(xs, ((0, p_pad - P), (0, 0)))

    out = pl.pallas_call(
        functools.partial(_conv_pool_kernel, n_taps=n_taps, c_out=c_out,
                          row_chunk=row_chunk),
        out_shape=jax.ShapeDtypeStruct((p_pad, c_out), out_dtype),
        grid=(n_blocks,),
        in_specs=[
            pl.BlockSpec((tile_rows, K), lambda i: (i, 0)),
            pl.BlockSpec((K, cols), lambda i: (0, 0)),
            pl.BlockSpec((1, c_out), lambda i: (0, 0)),
        ],
        out_specs=pl.BlockSpec((tile_rows, c_out), lambda i: (i, 0)),
        compiler_params=pltpu.CompilerParams(
            dimension_semantics=(("parallel",) if parallel else ("arbitrary",))),
    )(xs, w_all, bias.reshape(1, c_out).astype(jnp.float32))
    return out[:P] if p_pad != P else out


def linear(x, w_mat, bias):
    """x: (M, K) bf16;  w_mat: (K, O) bf16;  bias: (O,)  ->  (M, O) f32."""
    M, K = x.shape
    O = w_mat.shape[1]
    return pl.pallas_call(
        _linear_kernel,
        out_shape=jax.ShapeDtypeStruct((M, O), jnp.float32),
        grid=(1,),
        in_specs=[
            pl.BlockSpec((M, K), lambda i: (0, 0)),
            pl.BlockSpec((K, O), lambda i: (0, 0)),
            pl.BlockSpec((1, O), lambda i: (0, 0)),
        ],
        out_specs=pl.BlockSpec((M, O), lambda i: (0, 0)),
    )(x, w_mat, bias.reshape(1, O).astype(jnp.float32))


# ----------------------------- plain-JAX glue ---------------------------------
# TODO(synk): the strided window gather (space-to-depth) stays in XLA as
# slice+concat; an in-kernel version would need manual strided DMA gathers.
def _space_to_depth(x, *, win, stride, out_h, out_w):
    """x: (N,H,W,C) -> (N*out_h*out_w, win*win*C); row (n,i,j) is the win x win x C
    input window starting at (stride*i, stride*j), columns ordered (r, s, c)."""
    N, _, _, C = x.shape
    cols = []
    for r in range(win):
        for s in range(win):
            cols.append(x[:, r:r + stride * (out_h - 1) + 1:stride,
                             s:s + stride * (out_w - 1) + 1:stride, :])
    xs = jnp.concatenate(cols, axis=-1)              # (N, out_h, out_w, win*win*C)
    return xs.reshape(N * out_h * out_w, win * win * C)


def _scatter_tap_weights(w_oihw, pool):
    """torch conv weight (O,I,kh,kw) -> (win*win*I, pool*pool*O) bf16.

    Column group t = pi*pool+pj holds the conv kernel zero-scattered to offset
    (pi, pj) inside the (kh+pool-1) x (kw+pool-1) pooled receptive field, so that
    space_to_depth_row @ W_all[:, t*O:(t+1)*O] == conv output of pool tap t."""
    O, I, kh, kw = w_oihw.shape
    win_h, win_w = kh + pool - 1, kw + pool - 1
    w_hwio = jnp.transpose(w_oihw, (2, 3, 1, 0))     # (kh, kw, I, O)
    taps = []
    for pi in range(pool):
        for pj in range(pool):
            wt = jnp.pad(w_hwio, ((pi, win_h - kh - pi), (pj, win_w - kw - pj),
                                  (0, 0), (0, 0)))
            taps.append(wt.reshape(win_h * win_w * I, O))
    return jnp.concatenate(taps, axis=1).astype(jnp.bfloat16)


def cnn_embedding_forward(tokens, params):
    b, l, W, H = tokens.shape
    x = tokens.reshape(-1, W, H, 3).astype(jnp.bfloat16)   # == torch .view(-1,w,h,3); NHWC
    N = x.shape[0]

    # stage 1: Conv2d(3,16,5) + ReLU + MaxPool2d(5)   (pooled window 9x9, stride 5)
    oh1, ow1 = (W - 4) // 5, (H - 4) // 5
    xs1 = _space_to_depth(x, win=9, stride=5, out_h=oh1, out_w=ow1)   # (N*oh1*ow1, 243)
    w1_all = _scatter_tap_weights(params["w1"], pool=5)               # (243, 25*16)
    y1 = conv_relu_pool(xs1, w1_all, params["b1"], n_taps=25, c_out=16,
                        tile_rows=512, row_chunk=64)                  # (N*oh1*ow1, 16) bf16
    y1 = y1.reshape(N, oh1, ow1, 16)

    # stage 2: Conv2d(16,32,3) + ReLU + MaxPool2d(3)  (pooled window 5x5, stride 3)
    oh2, ow2 = (oh1 - 2) // 3, (ow1 - 2) // 3
    xs2 = _space_to_depth(y1, win=5, stride=3, out_h=oh2, out_w=ow2)  # (N*45, 400)
    w2_all = _scatter_tap_weights(params["w2"], pool=3)               # (400, 9*32)
    y2 = conv_relu_pool(xs2, w2_all, params["b2"], n_taps=9, c_out=32,
                        tile_rows=None, row_chunk=128, parallel=False)  # (N*45, 32) bf16

    # fc: fold torch's NCHW flatten order into the weight (one-time permute);
    # the activation side is then a free row-major reshape (no transpose).
    assert 32 * oh2 * ow2 == params["wfc"].shape[1]
    flat = y2.reshape(N, oh2 * ow2 * 32)                              # (N, 1440) bf16
    wfc_p = (params["wfc"].reshape(-1, 32, oh2, ow2)
             .transpose(2, 3, 1, 0).reshape(oh2 * ow2 * 32, -1)
             .astype(jnp.bfloat16))                                   # (1440, outputSize)
    out = linear(flat, wfc_p, params["bfc"])                          # (N, outputSize) f32
    return out.reshape(b, l, -1)


# ----------------------------- pure-JAX reference ------------------------------
def ref_forward(tokens, params):
    b, l, W, H = tokens.shape
    x = tokens.reshape(-1, W, H, 3)
    w1 = jnp.transpose(params["w1"], (2, 3, 1, 0))                    # HWIO
    y = jax.lax.conv_general_dilated(x, w1, (1, 1), "VALID",
                                     dimension_numbers=("NHWC", "HWIO", "NHWC"))
    y = jnp.maximum(y + params["b1"], 0.0)
    y = jax.lax.reduce_window(y, -jnp.inf, jax.lax.max,
                              (1, 5, 5, 1), (1, 5, 5, 1), "VALID")
    w2 = jnp.transpose(params["w2"], (2, 3, 1, 0))
    y = jax.lax.conv_general_dilated(y, w2, (1, 1), "VALID",
                                     dimension_numbers=("NHWC", "HWIO", "NHWC"))
    y = jnp.maximum(y + params["b2"], 0.0)
    y = jax.lax.reduce_window(y, -jnp.inf, jax.lax.max,
                              (1, 3, 3, 1), (1, 3, 3, 1), "VALID")
    N = y.shape[0]
    flat = jnp.transpose(y, (0, 3, 1, 2)).reshape(N, -1)
    out = flat @ params["wfc"].T + params["bfc"]
    return out.reshape(b, l, -1)


# ----------------------------------- main --------------------------------------
if __name__ == "__main__":
    outputSize = 48
    b, l = 2, 3                    # b*l must be divisible by 3 (view(-1, w, h, 3))
    W_img, H_img = 149, 89         # smallest spatial size consistent with Linear(1440, .)

    key = jax.random.PRNGKey(0)
    ks = jax.random.split(key, 7)
    params = dict(
        w1=jax.random.normal(ks[0], (16, 3, 5, 5), jnp.float32) / math.sqrt(3 * 25),
        b1=0.1 * jax.random.normal(ks[1], (16,), jnp.float32),
        w2=jax.random.normal(ks[2], (32, 16, 3, 3), jnp.float32) / math.sqrt(16 * 9),
        b2=0.1 * jax.random.normal(ks[3], (32,), jnp.float32),
        wfc=jax.random.normal(ks[4], (outputSize, 1440), jnp.float32) / math.sqrt(1440),
        bfc=0.1 * jax.random.normal(ks[5], (outputSize,), jnp.float32),
    )
    tokens = jax.random.normal(ks[6], (b, l, W_img, H_img), jnp.float32)

    fwd = jax.jit(cnn_embedding_forward)
    ref_fn = jax.jit(ref_forward)

    out = jax.block_until_ready(fwd(tokens, params))
    ref = jax.block_until_ready(ref_fn(tokens, params))

    expected_last = (b * l // 3) * outputSize // (b * l)          # == outputSize // 3
    assert out.shape == (b, l, expected_last), out.shape
    err = float(jnp.max(jnp.abs(out - ref)))
    scale = float(jnp.max(jnp.abs(ref)))
    assert err <= 0.05 * max(1.0, scale), f"mismatch: err={err}, ref_max={scale}"
    print("KERNEL_OK")
</pallas_src>

<mosaic_0001>
module attributes {stable_mosaic.version = 11 : i64} {
  func.func @_conv_pool_kernel(%arg0: i32, %arg1: memref<512x243xbf16, #tpu.memory_space<vmem>>, %arg2: memref<243x400xbf16, #tpu.memory_space<vmem>>, %arg3: memref<1x16xf32, #tpu.memory_space<vmem>>, %arg4: memref<512x16xbf16, #tpu.memory_space<vmem>>) attributes {dimension_semantics = [#tpu.dimension_semantics<parallel>], iteration_bounds = array<i64: 2>, scalar_prefetch = 0 : i64, scratch_operands = 0 : i64, tpu.core_type = #tpu.core_type<tc>, window_params = [{transform_indices = @transform_0, window_bounds = array<i64: 512, 243>}, {pipeline_mode = #tpu.pipeline_mode<synchronous>, transform_indices = @transform_1, window_bounds = array<i64: 243, 400>}, {pipeline_mode = #tpu.pipeline_mode<synchronous>, transform_indices = @transform_2, window_bounds = array<i64: 1, 16>}, {transform_indices = @transform_3, window_bounds = array<i64: 512, 16>}]} {
    %c0 = arith.constant 0 : index
    %c0_0 = arith.constant 0 : index
    %0 = vector.load %arg3[%c0, %c0_0] : memref<1x16xf32, #tpu.memory_space<vmem>>, vector<1x16xf32>
    %c0_1 = arith.constant 0 : index
    %c0_2 = arith.constant 0 : index
    %1 = vector.load %arg1[%c0_1, %c0_2] : memref<512x243xbf16, #tpu.memory_space<vmem>>, vector<64x243xbf16>
    %c0_3 = arith.constant 0 : index
    %c0_4 = arith.constant 0 : index
    %2 = vector.load %arg2[%c0_3, %c0_4] : memref<243x400xbf16, #tpu.memory_space<vmem>>, vector<243x400xbf16>
    %cst = arith.constant dense<0.000000e+00> : vector<64x400xf32>
    %3 = tpu.matmul %1, %2, %cst {dimension_numbers = #tpu.dot_dimension_numbers<[1], [0], [0], [1], [0, 0, 1, 1], [], []>} : vector<64x243xbf16>, vector<243x400xbf16>, vector<64x400xf32> -> vector<64x400xf32>
    %4 = vector.extract_strided_slice %3 {offsets = [0, 0], sizes = [64, 16], strides = [1, 1]} : vector<64x400xf32> to vector<64x16xf32>
    %5 = vector.extract_strided_slice %3 {offsets = [0, 16], sizes = [64, 16], strides = [1, 1]} : vector<64x400xf32> to vector<64x16xf32>
    %6 = arith.maximumf %4, %5 : vector<64x16xf32>
    %7 = vector.extract_strided_slice %3 {offsets = [0, 32], sizes = [64, 16], strides = [1, 1]} : vector<64x400xf32> to vector<64x16xf32>
    %8 = arith.maximumf %6, %7 : vector<64x16xf32>
    %9 = vector.extract_strided_slice %3 {offsets = [0, 48], sizes = [64, 16], strides = [1, 1]} : vector<64x400xf32> to vector<64x16xf32>
    %10 = arith.maximumf %8, %9 : vector<64x16xf32>
    %11 = vector.extract_strided_slice %3 {offsets = [0, 64], sizes = [64, 16], strides = [1, 1]} : vector<64x400xf32> to vector<64x16xf32>
    %12 = arith.maximumf %10, %11 : vector<64x16xf32>
    %13 = vector.extract_strided_slice %3 {offsets = [0, 80], sizes = [64, 16], strides = [1, 1]} : vector<64x400xf32> to vector<64x16xf32>
    %14 = arith.maximumf %12, %13 : vector<64x16xf32>
    %15 = vector.extract_strided_slice %3 {offsets = [0, 96], sizes = [64, 16], strides = [1, 1]} : vector<64x400xf32> to vector<64x16xf32>
    %16 = arith.maximumf %14, %15 : vector<64x16xf32>
    %17 = vector.extract_strided_slice %3 {offsets = [0, 112], sizes = [64, 16], strides = [1, 1]} : vector<64x400xf32> to vector<64x16xf32>
    %18 = arith.maximumf %16, %17 : vector<64x16xf32>
    %19 = vector.extract_strided_slice %3 {offsets = [0, 128], sizes = [64, 16], strides = [1, 1]} : vector<64x400xf32> to vector<64x16xf32>
    %20 = arith.maximumf %18, %19 : vector<64x16xf32>
    %21 = vector.extract_strided_slice %3 {offsets = [0, 144], sizes = [64, 16], strides = [1, 1]} : vector<64x400xf32> to vector<64x16xf32>
    %22 = arith.maximumf %20, %21 : vector<64x16xf32>
    %23 = vector.extract_strided_slice %3 {offsets = [0, 160], sizes = [64, 16], strides = [1, 1]} : vector<64x400xf32> to vector<64x16xf32>
    %24 = arith.maximumf %22, %23 : vector<64x16xf32>
    %25 = vector.extract_strided_slice %3 {offsets = [0, 176], sizes = [64, 16], strides = [1, 1]} : vector<64x400xf32> to vector<64x16xf32>
    %26 = arith.maximumf %24, %25 : vector<64x16xf32>
    %27 = vector.extract_strided_slice %3 {offsets = [0, 192], sizes = [64, 16], strides = [1, 1]} : vector<64x400xf32> to vector<64x16xf32>
    %28 = arith.maximumf %26, %27 : vector<64x16xf32>
    %29 = vector.extract_strided_slice %3 {offsets = [0, 208], sizes = [64, 16], strides = [1, 1]} : vector<64x400xf32> to vector<64x16xf32>
    %30 = arith.maximumf %28, %29 : vector<64x16xf32>
    %31 = vector.extract_strided_slice %3 {offsets = [0, 224], sizes = [64, 16], strides = [1, 1]} : vector<64x400xf32> to vector<64x16xf32>
    %32 = arith.maximumf %30, %31 : vector<64x16xf32>
    %33 = vector.extract_strided_slice %3 {offsets = [0, 240], sizes = [64, 16], strides = [1, 1]} : vector<64x400xf32> to vector<64x16xf32>
    %34 = arith.maximumf %32, %33 : vector<64x16xf32>
    %35 = vector.extract_strided_slice %3 {offsets = [0, 256], sizes = [64, 16], strides = [1, 1]} : vector<64x400xf32> to vector<64x16xf32>
    %36 = arith.maximumf %34, %35 : vector<64x16xf32>
    %37 = vector.extract_strided_slice %3 {offsets = [0, 272], sizes = [64, 16], strides = [1, 1]} : vector<64x400xf32> to vector<64x16xf32>
    %38 = arith.maximumf %36, %37 : vector<64x16xf32>
    %39 = vector.extract_strided_slice %3 {offsets = [0, 288], sizes = [64, 16], strides = [1, 1]} : vector<64x400xf32> to vector<64x16xf32>
    %40 = arith.maximumf %38, %39 : vector<64x16xf32>
    %41 = vector.extract_strided_slice %3 {offsets = [0, 304], sizes = [64, 16], strides = [1, 1]} : vector<64x400xf32> to vector<64x16xf32>
    %42 = arith.maximumf %40, %41 : vector<64x16xf32>
    %43 = vector.extract_strided_slice %3 {offsets = [0, 320], sizes = [64, 16], strides = [1, 1]} : vector<64x400xf32> to vector<64x16xf32>
    %44 = arith.maximumf %42, %43 : vector<64x16xf32>
    %45 = vector.extract_strided_slice %3 {offsets = [0, 336], sizes = [64, 16], strides = [1, 1]} : vector<64x400xf32> to vector<64x16xf32>
    %46 = arith.maximumf %44, %45 : vector<64x16xf32>
    %47 = vector.extract_strided_slice %3 {offsets = [0, 352], sizes = [64, 16], strides = [1, 1]} : vector<64x400xf32> to vector<64x16xf32>
    %48 = arith.maximumf %46, %47 : vector<64x16xf32>
    %49 = vector.extract_strided_slice %3 {offsets = [0, 368], sizes = [64, 16], strides = [1, 1]} : vector<64x400xf32> to vector<64x16xf32>
    %50 = arith.maximumf %48, %49 : vector<64x16xf32>
    %51 = vector.extract_strided_slice %3 {offsets = [0, 384], sizes = [64, 16], strides = [1, 1]} : vector<64x400xf32> to vector<64x16xf32>
    %52 = arith.maximumf %50, %51 : vector<64x16xf32>
    %53 = vector.broadcast %0 : vector<1x16xf32> to vector<64x16xf32>
    %54 = arith.addf %52, %53 : vector<64x16xf32>
    %cst_5 = arith.constant 0.000000e+00 : f32
    %55 = vector.broadcast %cst_5 : f32 to vector<64x16xf32>
    %56 = arith.maximumf %54, %55 : vector<64x16xf32>
    %57 = arith.truncf %56 : vector<64x16xf32> to vector<64x16xbf16>
    %c0_6 = arith.constant 0 : index
    %c0_7 = arith.constant 0 : index
    %58 = vector.load %arg4[%c0_6, %c0_7] : memref<512x16xbf16, #tpu.memory_space<vmem>>, vector<64x16xbf16>
    tpu.vector_store %arg4[%c0_6, %c0_7], %57 {strides = array<i32>} : memref<512x16xbf16, #tpu.memory_space<vmem>>, vector<64x16xbf16>,
    %c64 = arith.constant 64 : index
    %c0_8 = arith.constant 0 : index
    %59 = vector.load %arg1[%c64, %c0_8] : memref<512x243xbf16, #tpu.memory_space<vmem>>, vector<64x243xbf16>
    %c0_9 = arith.constant 0 : index
    %c0_10 = arith.constant 0 : index
    %60 = vector.load %arg2[%c0_9, %c0_10] : memref<243x400xbf16, #tpu.memory_space<vmem>>, vector<243x400xbf16>
    %cst_11 = arith.constant dense<0.000000e+00> : vector<64x400xf32>
    %61 = tpu.matmul %59, %60, %cst_11 {dimension_numbers = #tpu.dot_dimension_numbers<[1], [0], [0], [1], [0, 0, 1, 1], [], []>} : vector<64x243xbf16>, vector<243x400xbf16>, vector<64x400xf32> -> vector<64x400xf32>
    %62 = vector.extract_strided_slice %61 {offsets = [0, 0], sizes = [64, 16], strides = [1, 1]} : vector<64x400xf32> to vector<64x16xf32>
    %63 = vector.extract_strided_slice %61 {offsets = [0, 16], sizes = [64, 16], strides = [1, 1]} : vector<64x400xf32> to vector<64x16xf32>
    %64 = arith.maximumf %62, %63 : vector<64x16xf32>
    %65 = vector.extract_strided_slice %61 {offsets = [0, 32], sizes = [64, 16], strides = [1, 1]} : vector<64x400xf32> to vector<64x16xf32>
    %66 = arith.maximumf %64, %65 : vector<64x16xf32>
    %67 = vector.extract_strided_slice %61 {offsets = [0, 48], sizes = [64, 16], strides = [1, 1]} : vector<64x400xf32> to vector<64x16xf32>
    %68 = arith.maximumf %66, %67 : vector<64x16xf32>
    %69 = vector.extract_strided_slice %61 {offsets = [0, 64], sizes = [64, 16], strides = [1, 1]} : vector<64x400xf32> to vector<64x16xf32>
    %70 = arith.maximumf %68, %69 : vector<64x16xf32>
    %71 = vector.extract_strided_slice %61 {offsets = [0, 80], sizes = [64, 16], strides = [1, 1]} : vector<64x400xf32> to vector<64x16xf32>
    %72 = arith.maximumf %70, %71 : vector<64x16xf32>
    %73 = vector.extract_strided_slice %61 {offsets = [0, 96], sizes = [64, 16], strides = [1, 1]} : vector<64x400xf32> to vector<64x16xf32>
    %74 = arith.maximumf %72, %73 : vector<64x16xf32>
    %75 = vector.extract_strided_slice %61 {offsets = [0, 112], sizes = [64, 16], strides = [1, 1]} : vector<64x400xf32> to vector<64x16xf32>
    %76 = arith.maximumf %74, %75 : vector<64x16xf32>
    %77 = vector.extract_strided_slice %61 {offsets = [0, 128], sizes = [64, 16], strides = [1, 1]} : vector<64x400xf32> to vector<64x16xf32>
    %78 = arith.maximumf %76, %77 : vector<64x16xf32>
    %79 = vector.extract_strided_slice %61 {offsets = [0, 144], sizes = [64, 16], strides = [1, 1]} : vector<64x400xf32> to vector<64x16xf32>
    %80 = arith.maximumf %78, %79 : vector<64x16xf32>
    %81 = vector.extract_strided_slice %61 {offsets = [0, 160], sizes = [64, 16], strides = [1, 1]} : vector<64x400xf32> to vector<64x16xf32>
    %82 = arith.maximumf %80, %81 : vector<64x16xf32>
    %83 = vector.extract_strided_slice %61 {offsets = [0, 176], sizes = [64, 16], strides = [1, 1]} : vector<64x400xf32> to vector<64x16xf32>
    %84 = arith.maximumf %82, %83 : vector<64x16xf32>
    %85 = vector.extract_strided_slice %61 {offsets = [0, 192], sizes = [64, 16], strides = [1, 1]} : vector<64x400xf32> to vector<64x16xf32>
    %86 = arith.maximumf %84, %85 : vector<64x16xf32>
    %87 = vector.extract_strided_slice %61 {offsets = [0, 208], sizes = [64, 16], strides = [1, 1]} : vector<64x400xf32> to vector<64x16xf32>
    %88 = arith.maximumf %86, %87 : vector<64x16xf32>
    %89 = vector.extract_strided_slice %61 {offsets = [0, 224], sizes = [64, 16], strides = [1, 1]} : vector<64x400xf32> to vector<64x16xf32>
    %90 = arith.maximumf %88, %89 : vector<64x16xf32>
    %91 = vector.extract_strided_slice %61 {offsets = [0, 240], sizes = [64, 16], strides = [1, 1]} : vector<64x400xf32> to vector<64x16xf32>
    %92 = arith.maximumf %90, %91 : vector<64x16xf32>
    %93 = vector.extract_strided_slice %61 {offsets = [0, 256], sizes = [64, 16], strides = [1, 1]} : vector<64x400xf32> to vector<64x16xf32>
    %94 = arith.maximumf %92, %93 : vector<64x16xf32>
    %95 = vector.extract_strided_slice %61 {offsets = [0, 272], sizes = [64, 16], strides = [1, 1]} : vector<64x400xf32> to vector<64x16xf32>
    %96 = arith.maximumf %94, %95 : vector<64x16xf32>
    %97 = vector.extract_strided_slice %61 {offsets = [0, 288], sizes = [64, 16], strides = [1, 1]} : vector<64x400xf32> to vector<64x16xf32>
    %98 = arith.maximumf %96, %97 : vector<64x16xf32>
    %99 = vector.extract_strided_slice %61 {offsets = [0, 304], sizes = [64, 16], strides = [1, 1]} : vector<64x400xf32> to vector<64x16xf32>
    %100 = arith.maximumf %98, %99 : vector<64x16xf32>
    %101 = vector.extract_strided_slice %61 {offsets = [0, 320], sizes = [64, 16], strides = [1, 1]} : vector<64x400xf32> to vector<64x16xf32>
    %102 = arith.maximumf %100, %101 : vector<64x16xf32>
    %103 = vector.extract_strided_slice %61 {offsets = [0, 336], sizes = [64, 16], strides = [1, 1]} : vector<64x400xf32> to vector<64x16xf32>
    %104 = arith.maximumf %102, %103 : vector<64x16xf32>
    %105 = vector.extract_strided_slice %61 {offsets = [0, 352], sizes = [64, 16], strides = [1, 1]} : vector<64x400xf32> to vector<64x16xf32>
    %106 = arith.maximumf %104, %105 : vector<64x16xf32>
    %107 = vector.extract_strided_slice %61 {offsets = [0, 368], sizes = [64, 16], strides = [1, 1]} : vector<64x400xf32> to vector<64x16xf32>
    %108 = arith.maximumf %106, %107 : vector<64x16xf32>
    %109 = vector.extract_strided_slice %61 {offsets = [0, 384], sizes = [64, 16], strides = [1, 1]} : vector<64x400xf32> to vector<64x16xf32>
    %110 = arith.maximumf %108, %109 : vector<64x16xf32>
    %111 = vector.broadcast %0 : vector<1x16xf32> to vector<64x16xf32>
    %112 = arith.addf %110, %111 : vector<64x16xf32>
    %cst_12 = arith.constant 0.000000e+00 : f32
    %113 = vector.broadcast %cst_12 : f32 to vector<64x16xf32>
    %114 = arith.maximumf %112, %113 : vector<64x16xf32>
    %115 = arith.truncf %114 : vector<64x16xf32> to vector<64x16xbf16>
    %c64_13 = arith.constant 64 : index
    %c0_14 = arith.constant 0 : index
    %116 = vector.load %arg4[%c64_13, %c0_14] : memref<512x16xbf16, #tpu.memory_space<vmem>>, vector<64x16xbf16>
    tpu.vector_store %arg4[%c64_13, %c0_14], %115 {strides = array<i32>} : memref<512x16xbf16, #tpu.memory_space<vmem>>, vector<64x16xbf16>,
    %c128 = arith.constant 128 : index
    %c0_15 = arith.constant 0 : index
    %117 = vector.load %arg1[%c128, %c0_15] : memref<512x243xbf16, #tpu.memory_space<vmem>>, vector<64x243xbf16>
    %c0_16 = arith.constant 0 : index
    %c0_17 = arith.constant 0 : index
    %118 = vector.load %arg2[%c0_16, %c0_17] : memref<243x400xbf16, #tpu.memory_space<vmem>>, vector<243x400xbf16>
    %cst_18 = arith.constant dense<0.000000e+00> : vector<64x400xf32>
    %119 = tpu.matmul %117, %118, %cst_18 {dimension_numbers = #tpu.dot_dimension_numbers<[1], [0], [0], [1], [0, 0, 1, 1], [], []>} : vector<64x243xbf16>, vector<243x400xbf16>, vector<64x400xf32> -> vector<64x400xf32>
    %120 = vector.extract_strided_slice %119 {offsets = [0, 0], sizes = [64, 16], strides = [1, 1]} : vector<64x400xf32> to vector<64x16xf32>
    %121 = vector.extract_strided_slice %119 {offsets = [0, 16], sizes = [64, 16], strides = [1, 1]} : vector<64x400xf32> to vector<64x16xf32>
    %122 = arith.maximumf %120, %121 : vector<64x16xf32>
    %123 = vector.extract_strided_slice %119 {offsets = [0, 32], sizes = [64, 16], strides = [1, 1]} : vector<64x400xf32> to vector<64x16xf32>
    %124 = arith.maximumf %122, %123 : vector<64x16xf32>
    %125 = vector.extract_strided_slice %119 {offsets = [0, 48], sizes = [64, 16], strides = [1, 1]} : vector<64x400xf32> to vector<64x16xf32>
    %126 = arith.maximumf %124, %125 : vector<64x16xf32>
    %127 = vector.extract_strided_slice %119 {offsets = [0, 64], sizes = [64, 16], strides = [1, 1]} : vector<64x400xf32> to vector<64x16xf32>
    %128 = arith.maximumf %126, %127 : vector<64x16xf32>
    %129 = vector.extract_strided_slice %119 {offsets = [0, 80], sizes = [64, 16], strides = [1, 1]} : vector<64x400xf32> to vector<64x16xf32>
    %130 = arith.maximumf %128, %129 : vector<64x16xf32>
    %131 = vector.extract_strided_slice %119 {offsets = [0, 96], sizes = [64, 16], strides = [1, 1]} : vector<64x400xf32> to vector<64x16xf32>
    %132 = arith.maximumf %130, %131 : vector<64x16xf32>
    %133 = vector.extract_strided_slice %119 {offsets = [0, 112], sizes = [64, 16], strides = [1, 1]} : vector<64x400xf32> to vector<64x16xf32>
    %134 = arith.maximumf %132, %133 : vector<64x16xf32>
    %135 = vector.extract_strided_slice %119 {offsets = [0, 128], sizes = [64, 16], strides = [1, 1]} : vector<64x400xf32> to vector<64x16xf32>
    %136 = arith.maximumf %134, %135 : vector<64x16xf32>
    %137 = vector.extract_strided_slice %119 {offsets = [0, 144], sizes = [64, 16], strides = [1, 1]} : vector<64x400xf32> to vector<64x16xf32>
    %138 = arith.maximumf %136, %137 : vector<64x16xf32>
    %139 = vector.extract_strided_slice %119 {offsets = [0, 160], sizes = [64, 16], strides = [1, 1]} : vector<64x400xf32> to vector<64x16xf32>
    %140 = arith.maximumf %138, %139 : vector<64x16xf32>
    %141 = vector.extract_strided_slice %119 {offsets = [0, 176], sizes = [64, 16], strides = [1, 1]} : vector<64x400xf32> to vector<64x16xf32>
    %142 = arith.maximumf %140, %141 : vector<64x16xf32>
    %143 = vector.extract_strided_slice %119 {offsets = [0, 192], sizes = [64, 16], strides = [1, 1]} : vector<64x400xf32> to vector<64x16xf32>
    %144 = arith.maximumf %142, %143 : vector<64x16xf32>
    %145 = vector.extract_strided_slice %119 {offsets = [0, 208], sizes = [64, 16], strides = [1, 1]} : vector<64x400xf32> to vector<64x16xf32>
    %146 = arith.maximumf %144, %145 : vector<64x16xf32>
    %147 = vector.extract_strided_slice %119 {offsets = [0, 224], sizes = [64, 16], strides = [1, 1]} : vector<64x400xf32> to vector<64x16xf32>
    %148 = arith.maximumf %146, %147 : vector<64x16xf32>
    %149 = vector.extract_strided_slice %119 {offsets = [0, 240], sizes = [64, 16], strides = [1, 1]} : vector<64x400xf32> to vector<64x16xf32>
    %150 = arith.maximumf %148, %149 : vector<64x16xf32>
    %151 = vector.extract_strided_slice %119 {offsets = [0, 256], sizes = [64, 16], strides = [1, 1]} : vector<64x400xf32> to vector<64x16xf32>
    %152 = arith.maximumf %150, %151 : vector<64x16xf32>
    %153 = vector.extract_strided_slice %119 {offsets = [0, 272], sizes = [64, 16], strides = [1, 1]} : vector<64x400xf32> to vector<64x16xf32>
    %154 = arith.maximumf %152, %153 : vector<64x16xf32>
    %155 = vector.extract_strided_slice %119 {offsets = [0, 288], sizes = [64, 16], strides = [1, 1]} : vector<64x400xf32> to vector<64x16xf32>
    %156 = arith.maximumf %154, %155 : vector<64x16xf32>
    %157 = vector.extract_strided_slice %119 {offsets = [0, 304], sizes = [64, 16], strides = [1, 1]} : vector<64x400xf32> to vector<64x16xf32>
    %158 = arith.maximumf %156, %157 : vector<64x16xf32>
    %159 = vector.extract_strided_slice %119 {offsets = [0, 320], sizes = [64, 16], strides = [1, 1]} : vector<64x400xf32> to vector<64x16xf32>
    %160 = arith.maximumf %158, %159 : vector<64x16xf32>
    %161 = vector.extract_strided_slice %119 {offsets = [0, 336], sizes = [64, 16], strides = [1, 1]} : vector<64x400xf32> to vector<64x16xf32>
    %162 = arith.maximumf %160, %161 : vector<64x16xf32>
    %163 = vector.extract_strided_slice %119 {offsets = [0, 352], sizes = [64, 16], strides = [1, 1]} : vector<64x400xf32> to vector<64x16xf32>
    %164 = arith.maximumf %162, %163 : vector<64x16xf32>
    %165 = vector.extract_strided_slice %119 {offsets = [0, 368], sizes = [64, 16], strides = [1, 1]} : vector<64x400xf32> to vector<64x16xf32>
    %166 = arith.maximumf %164, %165 : vector<64x16xf32>
    %167 = vector.extract_strided_slice %119 {offsets = [0, 384], sizes = [64, 16], strides = [1, 1]} : vector<64x400xf32> to vector<64x16xf32>
    %168 = arith.maximumf %166, %167 : vector<64x16xf32>
    %169 = vector.broadcast %0 : vector<1x16xf32> to vector<64x16xf32>
    %170 = arith.addf %168, %169 : vector<64x16xf32>
    %cst_19 = arith.constant 0.000000e+00 : f32
    %171 = vector.broadcast %cst_19 : f32 to vector<64x16xf32>
    %172 = arith.maximumf %170, %171 : vector<64x16xf32>
    %173 = arith.truncf %172 : vector<64x16xf32> to vector<64x16xbf16>
    %c128_20 = arith.constant 128 : index
    %c0_21 = arith.constant 0 : index
    %174 = vector.load %arg4[%c128_20, %c0_21] : memref<512x16xbf16, #tpu.memory_space<vmem>>, vector<64x16xbf16>
    tpu.vector_store %arg4[%c128_20, %c0_21], %173 {strides = array<i32>} : memref<512x16xbf16, #tpu.memory_space<vmem>>, vector<64x16xbf16>,
    %c192 = arith.constant 192 : index
    %c0_22 = arith.constant 0 : index
    %175 = vector.load %arg1[%c192, %c0_22] : memref<512x243xbf16, #tpu.memory_space<vmem>>, vector<64x243xbf16>
    %c0_23 = arith.constant 0 : index
    %c0_24 = arith.constant 0 : index
    %176 = vector.load %arg2[%c0_23, %c0_24] : memref<243x400xbf16, #tpu.memory_space<vmem>>, vector<243x400xbf16>
    %cst_25 = arith.constant dense<0.000000e+00> : vector<64x400xf32>
    %177 = tpu.matmul %175, %176, %cst_25 {dimension_numbers = #tpu.dot_dimension_numbers<[1], [0], [0], [1], [0, 0, 1, 1], [], []>} : vector<64x243xbf16>, vector<243x400xbf16>, vector<64x400xf32> -> vector<64x400xf32>
    %178 = vector.extract_strided_slice %177 {offsets = [0, 0], sizes = [64, 16], strides = [1, 1]} : vector<64x400xf32> to vector<64x16xf32>
    %179 = vector.extract_strided_slice %177 {offsets = [0, 16], sizes = [64, 16], strides = [1, 1]} : vector<64x400xf32> to vector<64x16xf32>
    %180 = arith.maximumf %178, %179 : vector<64x16xf32>
    %181 = vector.extract_strided_slice %177 {offsets = [0, 32], sizes = [64, 16], strides = [1, 1]} : vector<64x400xf32> to vector<64x16xf32>
    %182 = arith.maximumf %180, %181 : vector<64x16xf32>
    %183 = vector.extract_strided_slice %177 {offsets = [0, 48], sizes = [64, 16], strides = [1, 1]} : vector<64x400xf32> to vector<64x16xf32>
    %184 = arith.maximumf %182, %183 : vector<64x16xf32>
    %185 = vector.extract_strided_slice %177 {offsets = [0, 64], sizes = [64, 16], strides = [1, 1]} : vector<64x400xf32> to vector<64x16xf32>
    %186 = arith.maximumf %184, %185 : vector<64x16xf32>
    %187 = vector.extract_strided_slice %177 {offsets = [0, 80], sizes = [64, 16], strides = [1, 1]} : vector<64x400xf32> to vector<64x16xf32>
    %188 = arith.maximumf %186, %187 : vector<64x16xf32>
    %189 = vector.extract_strided_slice %177 {offsets = [0, 96], sizes = [64, 16], strides = [1, 1]} : vector<64x400xf32> to vector<64x16xf32>
    %190 = arith.maximumf %188, %189 : vector<64x16xf32>
    %191 = vector.extract_strided_slice %177 {offsets = [0, 112], sizes = [64, 16], strides = [1, 1]} : vector<64x400xf32> to vector<64x16xf32>
    %192 = arith.maximumf %190, %191 : vector<64x16xf32>
    %193 = vector.extract_strided_slice %177 {offsets = [0, 128], sizes = [64, 16], strides = [1, 1]} : vector<64x400xf32> to vector<64x16xf32>
    %194 = arith.maximumf %192, %193 : vector<64x16xf32>
    %195 = vector.extract_strided_slice %177 {offsets = [0, 144], sizes = [64, 16], strides = [1, 1]} : vector<64x400xf32> to vector<64x16xf32>
    %196 = arith.maximumf %194, %195 : vector<64x16xf32>
    %197 = vector.extract_strided_slice %177 {offsets = [0, 160], sizes = [64, 16], strides = [1, 1]} : vector<64x400xf32> to vector<64x16xf32>
    %198 = arith.maximumf %196, %197 : vector<64x16xf32>
    %199 = vector.extract_strided_slice %177 {offsets = [0, 176], sizes = [64, 16], strides = [1, 1]} : vector<64x400xf32> to vector<64x16xf32>
    %200 = arith.maximumf %198, %199 : vector<64x16xf32>
    %201 = vector.extract_strided_slice %177 {offsets = [0, 192], sizes = [64, 16], strides = [1, 1]} : vector<64x400xf32> to vector<64x16xf32>
    %202 = arith.maximumf %200, %201 : vector<64x16xf32>
    %203 = vector.extract_strided_slice %177 {offsets = [0, 208], sizes = [64, 16], strides = [1, 1]} : vector<64x400xf32> to vector<64x16xf32>
    %204 = arith.maximumf %202, %203 : vector<64x16xf32>
    %205 = vector.extract_strided_slice %177 {offsets = [0, 224], sizes = [64, 16], strides = [1, 1]} : vector<64x400xf32> to vector<64x16xf32>
    %206 = arith.maximumf %204, %205 : vector<64x16xf32>
    %207 = vector.extract_strided_slice %177 {offsets = [0, 240], sizes = [64, 16], strides = [1, 1]} : vector<64x400xf32> to vector<64x16xf32>
    %208 = arith.maximumf %206, %207 : vector<64x16xf32>
    %209 = vector.extract_strided_slice %177 {offsets = [0, 256], sizes = [64, 16], strides = [1, 1]} : vector<64x400xf32> to vector<64x16xf32>
    %210 = arith.maximumf %208, %209 : vector<64x16xf32>
    %211 = vector.extract_strided_slice %177 {offsets = [0, 272], sizes = [64, 16], strides = [1, 1]} : vector<64x400xf32> to vector<64x16xf32>
    %212 = arith.maximumf %210, %211 : vector<64x16xf32>
    %213 = vector.extract_strided_slice %177 {offsets = [0, 288], sizes = [64, 16], strides = [1, 1]} : vector<64x400xf32> to vector<64x16xf32>
    %214 = arith.maximumf %212, %213 : vector<64x16xf32>
    %215 = vector.extract_strided_slice %177 {offsets = [0, 304], sizes = [64, 16], strides = [1, 1]} : vector<64x400xf32> to vector<64x16xf32>
    %216 = arith.maximumf %214, %215 : vector<64x16xf32>
    %217 = vector.extract_strided_slice %177 {offsets = [0, 320], sizes = [64, 16], strides = [1, 1]} : vector<64x400xf32> to vector<64x16xf32>
    %218 = arith.maximumf %216, %217 : vector<64x16xf32>
    %219 = vector.extract_strided_slice %177 {offsets = [0, 336], sizes = [64, 16], strides = [1, 1]} : vector<64x400xf32> to vector<64x16xf32>
    %220 = arith.maximumf %218, %219 : vector<64x16xf32>
    %221 = vector.extract_strided_slice %177 {offsets = [0, 352], sizes = [64, 16], strides = [1, 1]} : vector<64x400xf32> to vector<64x16xf32>
    %222 = arith.maximumf %220, %221 : vector<64x16xf32>
    %223 = vector.extract_strided_slice %177 {offsets = [0, 368], sizes = [64, 16], strides = [1, 1]} : vector<64x400xf32> to vector<64x16xf32>
    %224 = arith.maximumf %222, %223 : vector<64x16xf32>
    %225 = vector.extract_strided_slice %177 {offsets = [0, 384], sizes = [64, 16], strides = [1, 1]} : vector<64x400xf32> to vector<64x16xf32>
    %226 = arith.maximumf %224, %225 : vector<64x16xf32>
    %227 = vector.broadcast %0 : vector<1x16xf32> to vector<64x16xf32>
    %228 = arith.addf %226, %227 : vector<64x16xf32>
    %cst_26 = arith.constant 0.000000e+00 : f32
    %229 = vector.broadcast %cst_26 : f32 to vector<64x16xf32>
    %230 = arith.maximumf %228, %229 : vector<64x16xf32>
    %231 = arith.truncf %230 : vector<64x16xf32> to vector<64x16xbf16>
    %c192_27 = arith.constant 192 : index
    %c0_28 = arith.constant 0 : index
    %232 = vector.load %arg4[%c192_27, %c0_28] : memref<512x16xbf16, #tpu.memory_space<vmem>>, vector<64x16xbf16>
    tpu.vector_store %arg4[%c192_27, %c0_28], %231 {strides = array<i32>} : memref<512x16xbf16, #tpu.memory_space<vmem>>, vector<64x16xbf16>,
    %c256 = arith.constant 256 : index
    %c0_29 = arith.constant 0 : index
    %233 = vector.load %arg1[%c256, %c0_29] : memref<512x243xbf16, #tpu.memory_space<vmem>>, vector<64x243xbf16>
    %c0_30 = arith.constant 0 : index
    %c0_31 = arith.constant 0 : index
    %234 = vector.load %arg2[%c0_30, %c0_31] : memref<243x400xbf16, #tpu.memory_space<vmem>>, vector<243x400xbf16>
    %cst_32 = arith.constant dense<0.000000e+00> : vector<64x400xf32>
    %235 = tpu.matmul %233, %234, %cst_32 {dimension_numbers = #tpu.dot_dimension_numbers<[1], [0], [0], [1], [0, 0, 1, 1], [], []>} : vector<64x243xbf16>, vector<243x400xbf16>, vector<64x400xf32> -> vector<64x400xf32>
    %236 = vector.extract_strided_slice %235 {offsets = [0, 0], sizes = [64, 16], strides = [1, 1]} : vector<64x400xf32> to vector<64x16xf32>
    %237 = vector.extract_strided_slice %235 {offsets = [0, 16], sizes = [64, 16], strides = [1, 1]} : vector<64x400xf32> to vector<64x16xf32>
    %238 = arith.maximumf %236, %237 : vector<64x16xf32>
    %239 = vector.extract_strided_slice %235 {offsets = [0, 32], sizes = [64, 16], strides = [1, 1]} : vector<64x400xf32> to vector<64x16xf32>
    %240 = arith.maximumf %238, %239 : vector<64x16xf32>
    %241 = vector.extract_strided_slice %235 {offsets = [0, 48], sizes = [64, 16], strides = [1, 1]} : vector<64x400xf32> to vector<64x16xf32>
    %242 = arith.maximumf %240, %241 : vector<64x16xf32>
    %243 = vector.extract_strided_slice %235 {offsets = [0, 64], sizes = [64, 16], strides = [1, 1]} : vector<64x400xf32> to vector<64x16xf32>
    %244 = arith.maximumf %242, %243 : vector<64x16xf32>
    %245 = vector.extract_strided_slice %235 {offsets = [0, 80], sizes = [64, 16], strides = [1, 1]} : vector<64x400xf32> to vector<64x16xf32>
    %246 = arith.maximumf %244, %245 : vector<64x16xf32>
    %247 = vector.extract_strided_slice %235 {offsets = [0, 96], sizes = [64, 16], strides = [1, 1]} : vector<64x400xf32> to vector<64x16xf32>
    %248 = arith.maximumf %246, %247 : vector<64x16xf32>
    %249 = vector.extract_strided_slice %235 {offsets = [0, 112], sizes = [64, 16], strides = [1, 1]} : vector<64x400xf32> to vector<64x16xf32>
    %250 = arith.maximumf %248, %249 : vector<64x16xf32>
    %251 = vector.extract_strided_slice %235 {offsets = [0, 128], sizes = [64, 16], strides = [1, 1]} : vector<64x400xf32> to vector<64x16xf32>
    %252 = arith.maximumf %250, %251 : vector<64x16xf32>
    %253 = vector.extract_strided_slice %235 {offsets = [0, 144], sizes = [64, 16], strides = [1, 1]} : vector<64x400xf32> to vector<64x16xf32>
    %254 = arith.maximumf %252, %253 : vector<64x16xf32>
    %255 = vector.extract_strided_slice %235 {offsets = [0, 160], sizes = [64, 16], strides = [1, 1]} : vector<64x400xf32> to vector<64x16xf32>
    %256 = arith.maximumf %254, %255 : vector<64x16xf32>
    %257 = vector.extract_strided_slice %235 {offsets = [0, 176], sizes = [64, 16], strides = [1, 1]} : vector<64x400xf32> to vector<64x16xf32>
    %258 = arith.maximumf %256, %257 : vector<64x16xf32>
    %259 = vector.extract_strided_slice %235 {offsets = [0, 192], sizes = [64, 16], strides = [1, 1]} : vector<64x400xf32> to vector<64x16xf32>
    %260 = arith.maximumf %258, %259 : vector<64x16xf32>
    %261 = vector.extract_strided_slice %235 {offsets = [0, 208], sizes = [64, 16], strides = [1, 1]} : vector<64x400xf32> to vector<64x16xf32>
    %262 = arith.maximumf %260, %261 : vector<64x16xf32>
    %263 = vector.extract_strided_slice %235 {offsets = [0, 224], sizes = [64, 16], strides = [1, 1]} : vector<64x400xf32> to vector<64x16xf32>
    %264 = arith.maximumf %262, %263 : vector<64x16xf32>
    %265 = vector.extract_strided_slice %235 {offsets = [0, 240], sizes = [64, 16], strides = [1, 1]} : vector<64x400xf32> to vector<64x16xf32>
    %266 = arith.maximumf %264, %265 : vector<64x16xf32>
    %267 = vector.extract_strided_slice %235 {offsets = [0, 256], sizes = [64, 16], strides = [1, 1]} : vector<64x400xf32> to vector<64x16xf32>
    %268 = arith.maximumf %266, %267 : vector<64x16xf32>
    %269 = vector.extract_strided_slice %235 {offsets = [0, 272], sizes = [64, 16], strides = [1, 1]} : vector<64x400xf32> to vector<64x16xf32>
    %270 = arith.maximumf %268, %269 : vector<64x16xf32>
    %271 = vector.extract_strided_slice %235 {offsets = [0, 288], sizes = [64, 16], strides = [1, 1]} : vector<64x400xf32> to vector<64x16xf32>
    %272 = arith.maximumf %270, %271 : vector<64x16xf32>
    %273 = vector.extract_strided_slice %235 {offsets = [0, 304], sizes = [64, 16], strides = [1, 1]} : vector<64x400xf32> to vector<64x16xf32>
    %274 = arith.maximumf %272, %273 : vector<64x16xf32>
    %275 = vector.extract_strided_slice %235 {offsets = [0, 320], sizes = [64, 16], strides = [1, 1]} : vector<64x400xf32> to vector<64x16xf32>
    %276 = arith.maximumf %274, %275 : vector<64x16xf32>
    %277 = vector.extract_strided_slice %235 {offsets = [0, 336], sizes = [64, 16], strides = [1, 1]} : vector<64x400xf32> to vector<64x16xf32>
    %278 = arith.maximumf %276, %277 : vector<64x16xf32>
    %279 = vector.extract_strided_slice %235 {offsets = [0, 352], sizes = [64, 16], strides = [1, 1]} : vector<64x400xf32> to vector<64x16xf32>
    %280 = arith.maximumf %278, %279 : vector<64x16xf32>
    %281 = vector.extract_strided_slice %235 {offsets = [0, 368], sizes = [64, 16], strides = [1, 1]} : vector<64x400xf32> to vector<64x16xf32>
    %282 = arith.maximumf %280, %281 : vector<64x16xf32>
    %283 = vector.extract_strided_slice %235 {offsets = [0, 384], sizes = [64, 16], strides = [1, 1]} : vector<64x400xf32> to vector<64x16xf32>
    %284 = arith.maximumf %282, %283 : vector<64x16xf32>
    %285 = vector.broadcast %0 : vector<1x16xf32> to vector<64x16xf32>
    %286 = arith.addf %284, %285 : vector<64x16xf32>
    %cst_33 = arith.constant 0.000000e+00 : f32
    %287 = vector.broadcast %cst_33 : f32 to vector<64x16xf32>
    %288 = arith.maximumf %286, %287 : vector<64x16xf32>
    %289 = arith.truncf %288 : vector<64x16xf32> to vector<64x16xbf16>
    %c256_34 = arith.constant 256 : index
    %c0_35 = arith.constant 0 : index
    %290 = vector.load %arg4[%c256_34, %c0_35] : memref<512x16xbf16, #tpu.memory_space<vmem>>, vector<64x16xbf16>
    tpu.vector_store %arg4[%c256_34, %c0_35], %289 {strides = array<i32>} : memref<512x16xbf16, #tpu.memory_space<vmem>>, vector<64x16xbf16>,
    %c320 = arith.constant 320 : index
    %c0_36 = arith.constant 0 : index
    %291 = vector.load %arg1[%c320, %c0_36] : memref<512x243xbf16, #tpu.memory_space<vmem>>, vector<64x243xbf16>
    %c0_37 = arith.constant 0 : index
    %c0_38 = arith.constant 0 : index
    %292 = vector.load %arg2[%c0_37, %c0_38] : memref<243x400xbf16, #tpu.memory_space<vmem>>, vector<243x400xbf16>
    %cst_39 = arith.constant dense<0.000000e+00> : vector<64x400xf32>
    %293 = tpu.matmul %291, %292, %cst_39 {dimension_numbers = #tpu.dot_dimension_numbers<[1], [0], [0], [1], [0, 0, 1, 1], [], []>} : vector<64x243xbf16>, vector<243x400xbf16>, vector<64x400xf32> -> vector<64x400xf32>
    %294 = vector.extract_strided_slice %293 {offsets = [0, 0], sizes = [64, 16], strides = [1, 1]} : vector<64x400xf32> to vector<64x16xf32>
    %295 = vector.extract_strided_slice %293 {offsets = [0, 16], sizes = [64, 16], strides = [1, 1]} : vector<64x400xf32> to vector<64x16xf32>
    %296 = arith.maximumf %294, %295 : vector<64x16xf32>
    %297 = vector.extract_strided_slice %293 {offsets = [0, 32], sizes = [64, 16], strides = [1, 1]} : vector<64x400xf32> to vector<64x16xf32>
    %298 = arith.maximumf %296, %297 : vector<64x16xf32>
    %299 = vector.extract_strided_slice %293 {offsets = [0, 48], sizes = [64, 16], strides = [1, 1]} : vector<64x400xf32> to vector<64x16xf32>
    %300 = arith.maximumf %298, %299 : vector<64x16xf32>
    %301 = vector.extract_strided_slice %293 {offsets = [0, 64], sizes = [64, 16], strides = [1, 1]} : vector<64x400xf32> to vector<64x16xf32>
    %302 = arith.maximumf %300, %301 : vector<64x16xf32>
    %303 = vector.extract_strided_slice %293 {offsets = [0, 80], sizes = [64, 16], strides = [1, 1]} : vector<64x400xf32> to vector<64x16xf32>
    %304 = arith.maximumf %302, %303 : vector<64x16xf32>
    %305 = vector.extract_strided_slice %293 {offsets = [0, 96], sizes = [64, 16], strides = [1, 1]} : vector<64x400xf32> to vector<64x16xf32>
    %306 = arith.maximumf %304, %305 : vector<64x16xf32>
    %307 = vector.extract_strided_slice %293 {offsets = [0, 112], sizes = [64, 16], strides = [1, 1]} : vector<64x400xf32> to vector<64x16xf32>
    %308 = arith.maximumf %306, %307 : vector<64x16xf32>
    %309 = vector.extract_strided_slice %293 {offsets = [0, 128], sizes = [64, 16], strides = [1, 1]} : vector<64x400xf32> to vector<64x16xf32>
    %310 = arith.maximumf %308, %309 : vector<64x16xf32>
    %311 = vector.extract_strided_slice %293 {offsets = [0, 144], sizes = [64, 16], strides = [1, 1]} : vector<64x400xf32> to vector<64x16xf32>
    %312 = arith.maximumf %310, %311 : vector<64x16xf32>
    %313 = vector.extract_strided_slice %293 {offsets = [0, 160], sizes = [64, 16], strides = [1, 1]} : vector<64x400xf32> to vector<64x16xf32>
    %314 = arith.maximumf %312, %313 : vector<64x16xf32>
    %315 = vector.extract_strided_slice %293 {offsets = [0, 176], sizes = [64, 16], strides = [1, 1]} : vector<64x400xf32> to vector<64x16xf32>
    %316 = arith.maximumf %314, %315 : vector<64x16xf32>
    %317 = vector.extract_strided_slice %293 {offsets = [0, 192], sizes = [64, 16], strides = [1, 1]} : vector<64x400xf32> to vector<64x16xf32>
    %318 = arith.maximumf %316, %317 : vector<64x16xf32>
    %319 = vector.extract_strided_slice %293 {offsets = [0, 208], sizes = [64, 16], strides = [1, 1]} : vector<64x400xf32> to vector<64x16xf32>
    %320 = arith.maximumf %318, %319 : vector<64x16xf32>
    %321 = vector.extract_strided_slice %293 {offsets = [0, 224], sizes = [64, 16], strides = [1, 1]} : vector<64x400xf32> to vector<64x16xf32>
    %322 = arith.maximumf %320, %321 : vector<64x16xf32>
    %323 = vector.extract_strided_slice %293 {offsets = [0, 240], sizes = [64, 16], strides = [1, 1]} : vector<64x400xf32> to vector<64x16xf32>
    %324 = arith.maximumf %322, %323 : vector<64x16xf32>
    %325 = vector.extract_strided_slice %293 {offsets = [0, 256], sizes = [64, 16], strides = [1, 1]} : vector<64x400xf32> to vector<64x16xf32>
    %326 = arith.maximumf %324, %325 : vector<64x16xf32>
    %327 = vector.extract_strided_slice %293 {offsets = [0, 272], sizes = [64, 16], strides = [1, 1]} : vector<64x400xf32> to vector<64x16xf32>
    %328 = arith.maximumf %326, %327 : vector<64x16xf32>
    %329 = vector.extract_strided_slice %293 {offsets = [0, 288], sizes = [64, 16], strides = [1, 1]} : vector<64x400xf32> to vector<64x16xf32>
    %330 = arith.maximumf %328, %329 : vector<64x16xf32>
    %331 = vector.extract_strided_slice %293 {offsets = [0, 304], sizes = [64, 16], strides = [1, 1]} : vector<64x400xf32> to vector<64x16xf32>
    %332 = arith.maximumf %330, %331 : vector<64x16xf32>
    %333 = vector.extract_strided_slice %293 {offsets = [0, 320], sizes = [64, 16], strides = [1, 1]} : vector<64x400xf32> to vector<64x16xf32>
    %334 = arith.maximumf %332, %333 : vector<64x16xf32>
    %335 = vector.extract_strided_slice %293 {offsets = [0, 336], sizes = [64, 16], strides = [1, 1]} : vector<64x400xf32> to vector<64x16xf32>
    %336 = arith.maximumf %334, %335 : vector<64x16xf32>
    %337 = vector.extract_strided_slice %293 {offsets = [0, 352], sizes = [64, 16], strides = [1, 1]} : vector<64x400xf32> to vector<64x16xf32>
    %338 = arith.maximumf %336, %337 : vector<64x16xf32>
    %339 = vector.extract_strided_slice %293 {offsets = [0, 368], sizes = [64, 16], strides = [1, 1]} : vector<64x400xf32> to vector<64x16xf32>
    %340 = arith.maximumf %338, %339 : vector<64x16xf32>
    %341 = vector.extract_strided_slice %293 {offsets = [0, 384], sizes = [64, 16], strides = [1, 1]} : vector<64x400xf32> to vector<64x16xf32>
    %342 = arith.maximumf %340, %341 : vector<64x16xf32>
    %343 = vector.broadcast %0 : vector<1x16xf32> to vector<64x16xf32>
    %344 = arith.addf %342, %343 : vector<64x16xf32>
    %cst_40 = arith.constant 0.000000e+00 : f32
    %345 = vector.broadcast %cst_40 : f32 to vector<64x16xf32>
    %346 = arith.maximumf %344, %345 : vector<64x16xf32>
    %347 = arith.truncf %346 : vector<64x16xf32> to vector<64x16xbf16>
    %c320_41 = arith.constant 320 : index
    %c0_42 = arith.constant 0 : index
    %348 = vector.load %arg4[%c320_41, %c0_42] : memref<512x16xbf16, #tpu.memory_space<vmem>>, vector<64x16xbf16>
    tpu.vector_store %arg4[%c320_41, %c0_42], %347 {strides = array<i32>} : memref<512x16xbf16, #tpu.memory_space<vmem>>, vector<64x16xbf16>,
    %c384 = arith.constant 384 : index
    %c0_43 = arith.constant 0 : index
    %349 = vector.load %arg1[%c384, %c0_43] : memref<512x243xbf16, #tpu.memory_space<vmem>>, vector<64x243xbf16>
    %c0_44 = arith.constant 0 : index
    %c0_45 = arith.constant 0 : index
    %350 = vector.load %arg2[%c0_44, %c0_45] : memref<243x400xbf16, #tpu.memory_space<vmem>>, vector<243x400xbf16>
    %cst_46 = arith.constant dense<0.000000e+00> : vector<64x400xf32>
    %351 = tpu.matmul %349, %350, %cst_46 {dimension_numbers = #tpu.dot_dimension_numbers<[1], [0], [0], [1], [0, 0, 1, 1], [], []>} : vector<64x243xbf16>, vector<243x400xbf16>, vector<64x400xf32> -> vector<64x400xf32>
    %352 = vector.extract_strided_slice %351 {offsets = [0, 0], sizes = [64, 16], strides = [1, 1]} : vector<64x400xf32> to vector<64x16xf32>
    %353 = vector.extract_strided_slice %351 {offsets = [0, 16], sizes = [64, 16], strides = [1, 1]} : vector<64x400xf32> to vector<64x16xf32>
    %354 = arith.maximumf %352, %353 : vector<64x16xf32>
    %355 = vector.extract_strided_slice %351 {offsets = [0, 32], sizes = [64, 16], strides = [1, 1]} : vector<64x400xf32> to vector<64x16xf32>
    %356 = arith.maximumf %354, %355 : vector<64x16xf32>
    %357 = vector.extract_strided_slice %351 {offsets = [0, 48], sizes = [64, 16], strides = [1, 1]} : vector<64x400xf32> to vector<64x16xf32>
    %358 = arith.maximumf %356, %357 : vector<64x16xf32>
    %359 = vector.extract_strided_slice %351 {offsets = [0, 64], sizes = [64, 16], strides = [1, 1]} : vector<64x400xf32> to vector<64x16xf32>
    %360 = arith.maximumf %358, %359 : vector<64x16xf32>
    %361 = vector.extract_strided_slice %351 {offsets = [0, 80], sizes = [64, 16], strides = [1, 1]} : vector<64x400xf32> to vector<64x16xf32>
    %362 = arith.maximumf %360, %361 : vector<64x16xf32>
    %363 = vector.extract_strided_slice %351 {offsets = [0, 96], sizes = [64, 16], strides = [1, 1]} : vector<64x400xf32> to vector<64x16xf32>
    %364 = arith.maximumf %362, %363 : vector<64x16xf32>
    %365 = vector.extract_strided_slice %351 {offsets = [0, 112], sizes = [64, 16], strides = [1, 1]} : vector<64x400xf32> to vector<64x16xf32>
    %366 = arith.maximumf %364, %365 : vector<64x16xf32>
    %367 = vector.extract_strided_slice %351 {offsets = [0, 128], sizes = [64, 16], strides = [1, 1]} : vector<64x400xf32> to vector<64x16xf32>
    %368 = arith.maximumf %366, %367 : vector<64x16xf32>
    %369 = vector.extract_strided_slice %351 {offsets = [0, 144], sizes = [64, 16], strides = [1, 1]} : vector<64x400xf32> to vector<64x16xf32>
    %370 = arith.maximumf %368, %369 : vector<64x16xf32>
    %371 = vector.extract_strided_slice %351 {offsets = [0, 160], sizes = [64, 16], strides = [1, 1]} : vector<64x400xf32> to vector<64x16xf32>
    %372 = arith.maximumf %370, %371 : vector<64x16xf32>
    %373 = vector.extract_strided_slice %351 {offsets = [0, 176], sizes = [64, 16], strides = [1, 1]} : vector<64x400xf32> to vector<64x16xf32>
    %374 = arith.maximumf %372, %373 : vector<64x16xf32>
    %375 = vector.extract_strided_slice %351 {offsets = [0, 192], sizes = [64, 16], strides = [1, 1]} : vector<64x400xf32> to vector<64x16xf32>
    %376 = arith.maximumf %374, %375 : vector<64x16xf32>
    %377 = vector.extract_strided_slice %351 {offsets = [0, 208], sizes = [64, 16], strides = [1, 1]} : vector<64x400xf32> to vector<64x16xf32>
    %378 = arith.maximumf %376, %377 : vector<64x16xf32>
    %379 = vector.extract_strided_slice %351 {offsets = [0, 224], sizes = [64, 16], strides = [1, 1]} : vector<64x400xf32> to vector<64x16xf32>
    %380 = arith.maximumf %378, %379 : vector<64x16xf32>
    %381 = vector.extract_strided_slice %351 {offsets = [0, 240], sizes = [64, 16], strides = [1, 1]} : vector<64x400xf32> to vector<64x16xf32>
    %382 = arith.maximumf %380, %381 : vector<64x16xf32>
    %383 = vector.extract_strided_slice %351 {offsets = [0, 256], sizes = [64, 16], strides = [1, 1]} : vector<64x400xf32> to vector<64x16xf32>
    %384 = arith.maximumf %382, %383 : vector<64x16xf32>
    %385 = vector.extract_strided_slice %351 {offsets = [0, 272], sizes = [64, 16], strides = [1, 1]} : vector<64x400xf32> to vector<64x16xf32>
    %386 = arith.maximumf %384, %385 : vector<64x16xf32>
    %387 = vector.extract_strided_slice %351 {offsets = [0, 288], sizes = [64, 16], strides = [1, 1]} : vector<64x400xf32> to vector<64x16xf32>
    %388 = arith.maximumf %386, %387 : vector<64x16xf32>
    %389 = vector.extract_strided_slice %351 {offsets = [0, 304], sizes = [64, 16], strides = [1, 1]} : vector<64x400xf32> to vector<64x16xf32>
    %390 = arith.maximumf %388, %389 : vector<64x16xf32>
    %391 = vector.extract_strided_slice %351 {offsets = [0, 320], sizes = [64, 16], strides = [1, 1]} : vector<64x400xf32> to vector<64x16xf32>
    %392 = arith.maximumf %390, %391 : vector<64x16xf32>
    %393 = vector.extract_strided_slice %351 {offsets = [0, 336], sizes = [64, 16], strides = [1, 1]} : vector<64x400xf32> to vector<64x16xf32>
    %394 = arith.maximumf %392, %393 : vector<64x16xf32>
    %395 = vector.extract_strided_slice %351 {offsets = [0, 352], sizes = [64, 16], strides = [1, 1]} : vector<64x400xf32> to vector<64x16xf32>
    %396 = arith.maximumf %394, %395 : vector<64x16xf32>
    %397 = vector.extract_strided_slice %351 {offsets = [0, 368], sizes = [64, 16], strides = [1, 1]} : vector<64x400xf32> to vector<64x16xf32>
    %398 = arith.maximumf %396, %397 : vector<64x16xf32>
    %399 = vector.extract_strided_slice %351 {offsets = [0, 384], sizes = [64, 16], strides = [1, 1]} : vector<64x400xf32> to vector<64x16xf32>
    %400 = arith.maximumf %398, %399 : vector<64x16xf32>
    %401 = vector.broadcast %0 : vector<1x16xf32> to vector<64x16xf32>
    %402 = arith.addf %400, %401 : vector<64x16xf32>
    %cst_47 = arith.constant 0.000000e+00 : f32
    %403 = vector.broadcast %cst_47 : f32 to vector<64x16xf32>
    %404 = arith.maximumf %402, %403 : vector<64x16xf32>
    %405 = arith.truncf %404 : vector<64x16xf32> to vector<64x16xbf16>
    %c384_48 = arith.constant 384 : index
    %c0_49 = arith.constant 0 : index
    %406 = vector.load %arg4[%c384_48, %c0_49] : memref<512x16xbf16, #tpu.memory_space<vmem>>, vector<64x16xbf16>
    tpu.vector_store %arg4[%c384_48, %c0_49], %405 {strides = array<i32>} : memref<512x16xbf16, #tpu.memory_space<vmem>>, vector<64x16xbf16>,
    %c448 = arith.constant 448 : index
    %c0_50 = arith.constant 0 : index
    %407 = vector.load %arg1[%c448, %c0_50] : memref<512x243xbf16, #tpu.memory_space<vmem>>, vector<64x243xbf16>
    %c0_51 = arith.constant 0 : index
    %c0_52 = arith.constant 0 : index
    %408 = vector.load %arg2[%c0_51, %c0_52] : memref<243x400xbf16, #tpu.memory_space<vmem>>, vector<243x400xbf16>
    %cst_53 = arith.constant dense<0.000000e+00> : vector<64x400xf32>
    %409 = tpu.matmul %407, %408, %cst_53 {dimension_numbers = #tpu.dot_dimension_numbers<[1], [0], [0], [1], [0, 0, 1, 1], [], []>} : vector<64x243xbf16>, vector<243x400xbf16>, vector<64x400xf32> -> vector<64x400xf32>
    %410 = vector.extract_strided_slice %409 {offsets = [0, 0], sizes = [64, 16], strides = [1, 1]} : vector<64x400xf32> to vector<64x16xf32>
    %411 = vector.extract_strided_slice %409 {offsets = [0, 16], sizes = [64, 16], strides = [1, 1]} : vector<64x400xf32> to vector<64x16xf32>
    %412 = arith.maximumf %410, %411 : vector<64x16xf32>
    %413 = vector.extract_strided_slice %409 {offsets = [0, 32], sizes = [64, 16], strides = [1, 1]} : vector<64x400xf32> to vector<64x16xf32>
    %414 = arith.maximumf %412, %413 : vector<64x16xf32>
    %415 = vector.extract_strided_slice %409 {offsets = [0, 48], sizes = [64, 16], strides = [1, 1]} : vector<64x400xf32> to vector<64x16xf32>
    %416 = arith.maximumf %414, %415 : vector<64x16xf32>
    %417 = vector.extract_strided_slice %409 {offsets = [0, 64], sizes = [64, 16], strides = [1, 1]} : vector<64x400xf32> to vector<64x16xf32>
    %418 = arith.maximumf %416, %417 : vector<64x16xf32>
    %419 = vector.extract_strided_slice %409 {offsets = [0, 80], sizes = [64, 16], strides = [1, 1]} : vector<64x400xf32> to vector<64x16xf32>
    %420 = arith.maximumf %418, %419 : vector<64x16xf32>
    %421 = vector.extract_strided_slice %409 {offsets = [0, 96], sizes = [64, 16], strides = [1, 1]} : vector<64x400xf32> to vector<64x16xf32>
    %422 = arith.maximumf %420, %421 : vector<64x16xf32>
    %423 = vector.extract_strided_slice %409 {offsets = [0, 112], sizes = [64, 16], strides = [1, 1]} : vector<64x400xf32> to vector<64x16xf32>
    %424 = arith.maximumf %422, %423 : vector<64x16xf32>
    %425 = vector.extract_strided_slice %409 {offsets = [0, 128], sizes = [64, 16], strides = [1, 1]} : vector<64x400xf32> to vector<64x16xf32>
    %426 = arith.maximumf %424, %425 : vector<64x16xf32>
    %427 = vector.extract_strided_slice %409 {offsets = [0, 144], sizes = [64, 16], strides = [1, 1]} : vector<64x400xf32> to vector<64x16xf32>
    %428 = arith.maximumf %426, %427 : vector<64x16xf32>
    %429 = vector.extract_strided_slice %409 {offsets = [0, 160], sizes = [64, 16], strides = [1, 1]} : vector<64x400xf32> to vector<64x16xf32>
    %430 = arith.maximumf %428, %429 : vector<64x16xf32>
    %431 = vector.extract_strided_slice %409 {offsets = [0, 176], sizes = [64, 16], strides = [1, 1]} : vector<64x400xf32> to vector<64x16xf32>
    %432 = arith.maximumf %430, %431 : vector<64x16xf32>
    %433 = vector.extract_strided_slice %409 {offsets = [0, 192], sizes = [64, 16], strides = [1, 1]} : vector<64x400xf32> to vector<64x16xf32>
    %434 = arith.maximumf %432, %433 : vector<64x16xf32>
    %435 = vector.extract_strided_slice %409 {offsets = [0, 208], sizes = [64, 16], strides = [1, 1]} : vector<64x400xf32> to vector<64x16xf32>
    %436 = arith.maximumf %434, %435 : vector<64x16xf32>
    %437 = vector.extract_strided_slice %409 {offsets = [0, 224], sizes = [64, 16], strides = [1, 1]} : vector<64x400xf32> to vector<64x16xf32>
    %438 = arith.maximumf %436, %437 : vector<64x16xf32>
    %439 = vector.extract_strided_slice %409 {offsets = [0, 240], sizes = [64, 16], strides = [1, 1]} : vector<64x400xf32> to vector<64x16xf32>
    %440 = arith.maximumf %438, %439 : vector<64x16xf32>
    %441 = vector.extract_strided_slice %409 {offsets = [0, 256], sizes = [64, 16], strides = [1, 1]} : vector<64x400xf32> to vector<64x16xf32>
    %442 = arith.maximumf %440, %441 : vector<64x16xf32>
    %443 = vector.extract_strided_slice %409 {offsets = [0, 272], sizes = [64, 16], strides = [1, 1]} : vector<64x400xf32> to vector<64x16xf32>
    %444 = arith.maximumf %442, %443 : vector<64x16xf32>
    %445 = vector.extract_strided_slice %409 {offsets = [0, 288], sizes = [64, 16], strides = [1, 1]} : vector<64x400xf32> to vector<64x16xf32>
    %446 = arith.maximumf %444, %445 : vector<64x16xf32>
    %447 = vector.extract_strided_slice %409 {offsets = [0, 304], sizes = [64, 16], strides = [1, 1]} : vector<64x400xf32> to vector<64x16xf32>
    %448 = arith.maximumf %446, %447 : vector<64x16xf32>
    %449 = vector.extract_strided_slice %409 {offsets = [0, 320], sizes = [64, 16], strides = [1, 1]} : vector<64x400xf32> to vector<64x16xf32>
    %450 = arith.maximumf %448, %449 : vector<64x16xf32>
    %451 = vector.extract_strided_slice %409 {offsets = [0, 336], sizes = [64, 16], strides = [1, 1]} : vector<64x400xf32> to vector<64x16xf32>
    %452 = arith.maximumf %450, %451 : vector<64x16xf32>
    %453 = vector.extract_strided_slice %409 {offsets = [0, 352], sizes = [64, 16], strides = [1, 1]} : vector<64x400xf32> to vector<64x16xf32>
    %454 = arith.maximumf %452, %453 : vector<64x16xf32>
    %455 = vector.extract_strided_slice %409 {offsets = [0, 368], sizes = [64, 16], strides = [1, 1]} : vector<64x400xf32> to vector<64x16xf32>
    %456 = arith.maximumf %454, %455 : vector<64x16xf32>
    %457 = vector.extract_strided_slice %409 {offsets = [0, 384], sizes = [64, 16], strides = [1, 1]} : vector<64x400xf32> to vector<64x16xf32>
    %458 = arith.maximumf %456, %457 : vector<64x16xf32>
    %459 = vector.broadcast %0 : vector<1x16xf32> to vector<64x16xf32>
    %460 = arith.addf %458, %459 : vector<64x16xf32>
    %cst_54 = arith.constant 0.000000e+00 : f32
    %461 = vector.broadcast %cst_54 : f32 to vector<64x16xf32>
    %462 = arith.maximumf %460, %461 : vector<64x16xf32>
    %463 = arith.truncf %462 : vector<64x16xf32> to vector<64x16xbf16>
    %c448_55 = arith.constant 448 : index
    %c0_56 = arith.constant 0 : index
    %464 = vector.load %arg4[%c448_55, %c0_56] : memref<512x16xbf16, #tpu.memory_space<vmem>>, vector<64x16xbf16>
    tpu.vector_store %arg4[%c448_55, %c0_56], %463 {strides = array<i32>} : memref<512x16xbf16, #tpu.memory_space<vmem>>, vector<64x16xbf16>,
    return
  }
  func.func @transform_0(%arg0: i32) -> (i32, i32) {
    %c0_i32 = arith.constant 0 : i32
    %c0_i32_0 = arith.constant 0 : i32
    return %arg0, %c0_i32 : i32, i32
  }
  func.func @transform_1(%arg0: i32) -> (i32, i32) {
    %c0_i32 = arith.constant 0 : i32
    %c0_i32_0 = arith.constant 0 : i32
    %c0_i32_1 = arith.constant 0 : i32
    return %c0_i32, %c0_i32_0 : i32, i32
  }
  func.func @transform_2(%arg0: i32) -> (i32, i32) {
    %c0_i32 = arith.constant 0 : i32
    %c0_i32_0 = arith.constant 0 : i32
    %c0_i32_1 = arith.constant 0 : i32
    return %c0_i32, %c0_i32_0 : i32, i32
  }
  func.func @transform_3(%arg0: i32) -> (i32, i32) {
    %c0_i32 = arith.constant 0 : i32
    %c0_i32_0 = arith.constant 0 : i32
    return %arg0, %c0_i32 : i32, i32
  }
}

module attributes {stable_mosaic.version = 11 : i64} {
  func.func @_conv_pool_kernel(%arg0: i32, %arg1: memref<90x400xbf16, #tpu.memory_space<vmem>>, %arg2: memref<400x288xbf16, #tpu.memory_space<vmem>>, %arg3: memref<1x32xf32, #tpu.memory_space<vmem>>, %arg4: memref<90x32xbf16, #tpu.memory_space<vmem>>) attributes {dimension_semantics = [#tpu.dimension_semantics<arbitrary>], iteration_bounds = array<i64: 1>, scalar_prefetch = 0 : i64, scratch_operands = 0 : i64, tpu.core_type = #tpu.core_type<tc>, window_params = [{transform_indices = @transform_0, window_bounds = array<i64: 90, 400>}, {pipeline_mode = #tpu.pipeline_mode<synchronous>, transform_indices = @transform_1, window_bounds = array<i64: 400, 288>}, {pipeline_mode = #tpu.pipeline_mode<synchronous>, transform_indices = @transform_2, window_bounds = array<i64: 1, 32>}, {transform_indices = @transform_3, window_bounds = array<i64: 90, 32>}]} {
    %c0 = arith.constant 0 : index
    %c0_0 = arith.constant 0 : index
    %0 = vector.load %arg3[%c0, %c0_0] : memref<1x32xf32, #tpu.memory_space<vmem>>, vector<1x32xf32>
    %c0_1 = arith.constant 0 : index
    %c0_2 = arith.constant 0 : index
    %1 = vector.load %arg1[%c0_1, %c0_2] : memref<90x400xbf16, #tpu.memory_space<vmem>>, vector<90x400xbf16>
    %c0_3 = arith.constant 0 : index
    %c0_4 = arith.constant 0 : index
    %2 = vector.load %arg2[%c0_3, %c0_4] : memref<400x288xbf16, #tpu.memory_space<vmem>>, vector<400x288xbf16>
    %cst = arith.constant dense<0.000000e+00> : vector<90x288xf32>
    %3 = tpu.matmul %1, %2, %cst {dimension_numbers = #tpu.dot_dimension_numbers<[1], [0], [0], [1], [0, 0, 1, 1], [], []>} : vector<90x400xbf16>, vector<400x288xbf16>, vector<90x288xf32> -> vector<90x288xf32>
    %4 = vector.extract_strided_slice %3 {offsets = [0, 0], sizes = [90, 32], strides = [1, 1]} : vector<90x288xf32> to vector<90x32xf32>
    %5 = vector.extract_strided_slice %3 {offsets = [0, 32], sizes = [90, 32], strides = [1, 1]} : vector<90x288xf32> to vector<90x32xf32>
    %6 = arith.maximumf %4, %5 : vector<90x32xf32>
    %7 = vector.extract_strided_slice %3 {offsets = [0, 64], sizes = [90, 32], strides = [1, 1]} : vector<90x288xf32> to vector<90x32xf32>
    %8 = arith.maximumf %6, %7 : vector<90x32xf32>
    %9 = vector.extract_strided_slice %3 {offsets = [0, 96], sizes = [90, 32], strides = [1, 1]} : vector<90x288xf32> to vector<90x32xf32>
    %10 = arith.maximumf %8, %9 : vector<90x32xf32>
    %11 = vector.extract_strided_slice %3 {offsets = [0, 128], sizes = [90, 32], strides = [1, 1]} : vector<90x288xf32> to vector<90x32xf32>
    %12 = arith.maximumf %10, %11 : vector<90x32xf32>
    %13 = vector.extract_strided_slice %3 {offsets = [0, 160], sizes = [90, 32], strides = [1, 1]} : vector<90x288xf32> to vector<90x32xf32>
    %14 = arith.maximumf %12, %13 : vector<90x32xf32>
    %15 = vector.extract_strided_slice %3 {offsets = [0, 192], sizes = [90, 32], strides = [1, 1]} : vector<90x288xf32> to vector<90x32xf32>
    %16 = arith.maximumf %14, %15 : vector<90x32xf32>
    %17 = vector.extract_strided_slice %3 {offsets = [0, 224], sizes = [90, 32], strides = [1, 1]} : vector<90x288xf32> to vector<90x32xf32>
    %18 = arith.maximumf %16, %17 : vector<90x32xf32>
    %19 = vector.extract_strided_slice %3 {offsets = [0, 256], sizes = [90, 32], strides = [1, 1]} : vector<90x288xf32> to vector<90x32xf32>
    %20 = arith.maximumf %18, %19 : vector<90x32xf32>
    %21 = vector.broadcast %0 : vector<1x32xf32> to vector<90x32xf32>
    %22 = arith.addf %20, %21 : vector<90x32xf32>
    %cst_5 = arith.constant 0.000000e+00 : f32
    %23 = vector.broadcast %cst_5 : f32 to vector<90x32xf32>
    %24 = arith.maximumf %22, %23 : vector<90x32xf32>
    %25 = arith.truncf %24 : vector<90x32xf32> to vector<90x32xbf16>
    %c0_6 = arith.constant 0 : index
    %c0_7 = arith.constant 0 : index
    %26 = vector.load %arg4[%c0_6, %c0_7] : memref<90x32xbf16, #tpu.memory_space<vmem>>, vector<90x32xbf16>
    tpu.vector_store %arg4[%c0_6, %c0_7], %25 {strides = array<i32>} : memref<90x32xbf16, #tpu.memory_space<vmem>>, vector<90x32xbf16>,
    return
  }
  func.func @transform_0(%arg0: i32) -> (i32, i32) {
    %c0_i32 = arith.constant 0 : i32
    %c0_i32_0 = arith.constant 0 : i32
    return %arg0, %c0_i32 : i32, i32
  }
  func.func @transform_1(%arg0: i32) -> (i32, i32) {
    %c0_i32 = arith.constant 0 : i32
    %c0_i32_0 = arith.constant 0 : i32
    %c0_i32_1 = arith.constant 0 : i32
    return %c0_i32, %c0_i32_0 : i32, i32
  }
  func.func @transform_2(%arg0: i32) -> (i32, i32) {
    %c0_i32 = arith.constant 0 : i32
    %c0_i32_0 = arith.constant 0 : i32
    %c0_i32_1 = arith.constant 0 : i32
    return %c0_i32, %c0_i32_0 : i32, i32
  }
  func.func @transform_3(%arg0: i32) -> (i32, i32) {
    %c0_i32 = arith.constant 0 : i32
    %c0_i32_0 = arith.constant 0 : i32
    return %arg0, %c0_i32 : i32, i32
  }
}

module attributes {stable_mosaic.version = 11 : i64} {
  func.func @_linear_kernel(%arg0: i32, %arg1: memref<2x1440xbf16, #tpu.memory_space<vmem>>, %arg2: memref<1440x48xbf16, #tpu.memory_space<vmem>>, %arg3: memref<1x48xf32, #tpu.memory_space<vmem>>, %arg4: memref<2x48xf32, #tpu.memory_space<vmem>>) attributes {dimension_semantics = [#tpu.dimension_semantics<arbitrary>], iteration_bounds = array<i64: 1>, scalar_prefetch = 0 : i64, scratch_operands = 0 : i64, tpu.core_type = #tpu.core_type<tc>, window_params = [{pipeline_mode = #tpu.pipeline_mode<synchronous>, transform_indices = @transform_0, window_bounds = array<i64: 2, 1440>}, {pipeline_mode = #tpu.pipeline_mode<synchronous>, transform_indices = @transform_1, window_bounds = array<i64: 1440, 48>}, {pipeline_mode = #tpu.pipeline_mode<synchronous>, transform_indices = @transform_2, window_bounds = array<i64: 1, 48>}, {pipeline_mode = #tpu.pipeline_mode<synchronous>, transform_indices = @transform_3, window_bounds = array<i64: 2, 48>}]} {
    %c0 = arith.constant 0 : index
    %c0_0 = arith.constant 0 : index
    %0 = vector.load %arg1[%c0, %c0_0] : memref<2x1440xbf16, #tpu.memory_space<vmem>>, vector<2x1440xbf16>
    %c0_1 = arith.constant 0 : index
    %c0_2 = arith.constant 0 : index
    %1 = vector.load %arg2[%c0_1, %c0_2] : memref<1440x48xbf16, #tpu.memory_space<vmem>>, vector<1440x48xbf16>
    %cst = arith.constant dense<0.000000e+00> : vector<2x48xf32>
    %2 = tpu.matmul %0, %1, %cst {dimension_numbers = #tpu.dot_dimension_numbers<[1], [0], [0], [1], [0, 0, 1, 1], [], []>} : vector<2x1440xbf16>, vector<1440x48xbf16>, vector<2x48xf32> -> vector<2x48xf32>
    %c0_3 = arith.constant 0 : index
    %c0_4 = arith.constant 0 : index
    %3 = vector.load %arg3[%c0_3, %c0_4] : memref<1x48xf32, #tpu.memory_space<vmem>>, vector<1x48xf32>
    %4 = vector.broadcast %3 : vector<1x48xf32> to vector<2x48xf32>
    %5 = arith.addf %2, %4 : vector<2x48xf32>
    %c0_5 = arith.constant 0 : index
    %c0_6 = arith.constant 0 : index
    %6 = vector.load %arg4[%c0_5, %c0_6] : memref<2x48xf32, #tpu.memory_space<vmem>>, vector<2x48xf32>
    tpu.vector_store %arg4[%c0_5, %c0_6], %5 {strides = array<i32>} : memref<2x48xf32, #tpu.memory_space<vmem>>, vector<2x48xf32>,
    return
  }
  func.func @transform_0(%arg0: i32) -> (i32, i32) {
    %c0_i32 = arith.constant 0 : i32
    %c0_i32_0 = arith.constant 0 : i32
    %c0_i32_1 = arith.constant 0 : i32
    return %c0_i32, %c0_i32_0 : i32, i32
  }
  func.func @transform_1(%arg0: i32) -> (i32, i32) {
    %c0_i32 = arith.constant 0 : i32
    %c0_i32_0 = arith.constant 0 : i32
    %c0_i32_1 = arith.constant 0 : i32
    return %c0_i32, %c0_i32_0 : i32, i32
  }
  func.func @transform_2(%arg0: i32) -> (i32, i32) {
    %c0_i32 = arith.constant 0 : i32
    %c0_i32_0 = arith.constant 0 : i32
    %c0_i32_1 = arith.constant 0 : i32
    return %c0_i32, %c0_i32_0 : i32, i32
  }
  func.func @transform_3(%arg0: i32) -> (i32, i32) {
    %c0_i32 = arith.constant 0 : i32
    %c0_i32_0 = arith.constant 0 : i32
    %c0_i32_1 = arith.constant 0 : i32
    return %c0_i32, %c0_i32_0 : i32, i32
  }
}

</mosaic_0001>

<llo_original>
// kernel: cnn_embedding_forward.3
$region0: #{cnn_embedding_forward.3}
  #allocation0 [shape = 'u32[]', space=smem, size = 0x4, offset = 0x4, fixed_abs, tag = 'smem constant byte address 0x4 - core index']
  #allocation1 [shape = 'u32[144,128]{1,0:T(1,128)}', space=vmem, size = 0x12000, scoped, tag = 'internal scratch']
  %s0 = inlined_call_operand.vmem [shape: bf16[1024,243], index: 0, kind: input, shape index: {}]
  %s1 = inlined_call_operand.vmem [shape: bf16[243,400], index: 1, kind: input, shape index: {}]
  %s2 = inlined_call_operand.vmem [shape: f32[1,16], index: 2, kind: input, shape index: {}]
  %s3 = inlined_call_operand.vmem [shape: bf16[1024,16], index: 3, kind: output, shape index: {}]
  %s4 = sld [smem:[#allocation0]]
  $region45: #{cnn_embedding_forward.3} parent=0
    _
  %s6 = ssub.s32 1, %s4
  %s7 = scalar_select 0, %s6, %s4
  loop: start=0, step=1, limit=4
  $region2: #{cnn_embedding_forward.3} parent=0 // loop_pre_header
    _
  $region3: #{cnn_embedding_forward.3} parent=0 // loop_header
    %s9 = sphi 0, %s13
    %p10 = scmp.ge.s32.totalorder %s9, 4
    %s19 = sphi 0, %s21
    %s22 = sphi 0, %s19
    %s23 = sphi 0, %s22
    %s39 = sphi 0, %s23
    %s43 = sphi 0, %s43
    %s45 = sphi 0, %s43
    %s46 = sphi 0, %s45
    %s60 = sphi 0, %s46
    %s64 = sphi 0, %s64
    %s66 = sphi 0, %s64
    %s67 = sphi 0, %s66
    %s81 = sphi 0, %s67
    %s87 = sphi 0, %s89
    %s90 = sphi 0, %s87
    %s91 = sphi 0, %s90
    %s107 = sphi 0, %s91
  $region4: #{cnn_embedding_forward.3} parent=0 // loop_header_branch
    %12 = sbr.rel (%p10) target = $region8
  $region5: #{cnn_embedding_forward.3} parent=0 // loop_body
    %s14 = ssub.s32 %s9, 1
    %s15 = ssub.s32 %s9, 2
    %s16 = sadd.s32 %s9, 1
    %s17 = ssub.s32 %s9, %s16
    %p18 = scmp.eq.s32.totalorder %s17, 0
    %s20 = sadd.s32 %s19, 1
    %s21 = scalar_select %p18, %s19, %s20
    %p24 = pneg %p18
    %p25 = scmp.eq.s32.totalorder %s9, 1
    %p26 = por %p24, %p25
    %p27 = scmp.ne.s32.totalorder %s19, %s22
    %p28 = scmp.eq.s32.totalorder %s9, 0
    %p29 = por %p27, %p28
    %p30 = scmp.ne.s32.totalorder %s19, %s22
    %p31 = scmp.eq.s32.totalorder %s14, 1
    %p32 = por %p30, %p31
    %p33 = scmp.ne.s32.totalorder %s22, %s23
    %p34 = scmp.eq.s32.totalorder %s14, 0
    %p35 = por %p33, %p34
    %p36 = scmp.ne.s32.totalorder %s22, %s23
    %p37 = scmp.eq.s32.totalorder %s15, 1
    %p38 = por %p36, %p37
    %p40 = scmp.ne.s32.totalorder %s23, %s39
    %p41 = scmp.eq.s32.totalorder %s15, 0
    %p42 = por %p40, %p41
    %s44 = sadd.s32 %s43, 1
    %p47 = scmp.eq.s32.totalorder %s9, 1
    %p48 = scmp.ne.s32.totalorder %s43, %s45
    %p49 = scmp.eq.s32.totalorder %s9, 0
    %p50 = por %p48, %p49
    %p51 = scmp.ne.s32.totalorder %s43, %s45
    %p52 = scmp.eq.s32.totalorder %s14, 1
    %p53 = por %p51, %p52
    %p54 = scmp.ne.s32.totalorder %s45, %s46
    %p55 = scmp.eq.s32.totalorder %s14, 0
    %p56 = por %p54, %p55
    %p57 = scmp.ne.s32.totalorder %s45, %s46
    %p58 = scmp.eq.s32.totalorder %s15, 1
    %p59 = por %p57, %p58
    %p61 = scmp.ne.s32.totalorder %s46, %s60
    %p62 = scmp.eq.s32.totalorder %s15, 0
    %p63 = por %p61, %p62
    %s65 = sadd.s32 %s64, 1
    %p68 = scmp.eq.s32.totalorder %s9, 1
    %p69 = scmp.ne.s32.totalorder %s64, %s66
    %p70 = scmp.eq.s32.totalorder %s9, 0
    %p71 = por %p69, %p70
    %p72 = scmp.ne.s32.totalorder %s64, %s66
    %p73 = scmp.eq.s32.totalorder %s14, 1
    %p74 = por %p72, %p73
    %p75 = scmp.ne.s32.totalorder %s66, %s67
    %p76 = scmp.eq.s32.totalorder %s14, 0
    %p77 = por %p75, %p76
    %p78 = scmp.ne.s32.totalorder %s66, %s67
    %p79 = scmp.eq.s32.totalorder %s15, 1
    %p80 = por %p78, %p79
    %p82 = scmp.ne.s32.totalorder %s67, %s81
    %p83 = scmp.eq.s32.totalorder %s15, 0
    %p84 = por %p82, %p83
    %s85 = ssub.s32 %s9, %s16
    %p86 = scmp.eq.s32.totalorder %s85, 0
    %s88 = sadd.s32 %s87, 1
    %s89 = scalar_select %p86, %s87, %s88
    %p92 = pneg %p86
    %p93 = scmp.eq.s32.totalorder %s9, 1
    %p94 = por %p92, %p93
    %p95 = scmp.ne.s32.totalorder %s87, %s90
    %p96 = scmp.eq.s32.totalorder %s9, 0
    %p97 = por %p95, %p96
    %p98 = scmp.ne.s32.totalorder %s87, %s90
    %p99 = scmp.eq.s32.totalorder %s14, 1
    %p100 = por %p98, %p99
    %p101 = scmp.ne.s32.totalorder %s90, %s91
    %p102 = scmp.eq.s32.totalorder %s14, 0
    %p103 = por %p101, %p102
    %p104 = scmp.ne.s32.totalorder %s90, %s91
    %p105 = scmp.eq.s32.totalorder %s15, 1
    %p106 = por %p104, %p105
    %p108 = scmp.ne.s32.totalorder %s91, %s107
    %p109 = scmp.eq.s32.totalorder %s15, 0
    %p110 = por %p108, %p109
    %p111 = scmp.le.s32.totalorder 1, %s9
    %p112 = scmp.lt.s32.totalorder %s9, 3
    %p113 = pnand %p111, %p112
    %p114 = pneg %p113
    // Predicated region
    $region9: #{cnn_embedding_forward.3} parent=5 // pred_check
      _
    $region10: #{cnn_embedding_forward.3} parent=5 // pred_check_branch
      %116 = sbr.rel (%p113) target = $region12
    $region11: #{cnn_embedding_forward.3} parent=5 // pred_region
      %s117 = ssub.s32 %s9, 1
      // Predicated region
      $region13: #{cnn_embedding_forward.3} parent=11 // pred_check
        %p118 = pneg %p56
      $region14: #{cnn_embedding_forward.3} parent=11 // pred_check_branch
        %120 = sbr.rel (%p118) target = $region16
      $region15: #{cnn_embedding_forward.3} parent=11 // pred_region
        _
      $region16: #{cnn_embedding_forward.3} parent=11 // pred_fallthru
        _
      // Predicated region
      $region17: #{cnn_embedding_forward.3} parent=11 // pred_check
        %p121 = pneg %p77
      $region18: #{cnn_embedding_forward.3} parent=11 // pred_check_branch
        %123 = sbr.rel (%p121) target = $region20
      $region19: #{cnn_embedding_forward.3} parent=11 // pred_region
        _
      $region20: #{cnn_embedding_forward.3} parent=11 // pred_fallthru
        _
    $region12: #{cnn_embedding_forward.3} parent=5 // pred_fallthru
      _
    %p124 = scmp.lt.s32.totalorder %s9, 2
    // Predicated region
    $region21: #{cnn_embedding_forward.3} parent=5 // pred_check
      %p125 = pneg %p124
    $region22: #{cnn_embedding_forward.3} parent=5 // pred_check_branch
      %127 = sbr.rel (%p125) target = $region24
    $region23: #{cnn_embedding_forward.3} parent=5 // pred_region
      // Predicated region
      $region25: #{cnn_embedding_forward.3} parent=23 // pred_check
        %p128 = pneg %p29
      $region26: #{cnn_embedding_forward.3} parent=23 // pred_check_branch
        %130 = sbr.rel (%p128) target = $region28
      $region27: #{cnn_embedding_forward.3} parent=23 // pred_region
        %s131 = smul.u32 64, %s9
        %p132 = scmp.lt.s32.totalorder %s131, 127
        %s133 = scalar_select %p132, %s131, 127
        %s134 = smul.addr %s133, 2
        %s135 = smul.addr %s134, 4
        %s136 = scalar_lea.vmem %s0, %s135
        %s137 = smul.u32 64, %s9
      $region28: #{cnn_embedding_forward.3} parent=23 // pred_fallthru
        _
    $region24: #{cnn_embedding_forward.3} parent=5 // pred_fallthru
      _
    %p138 = scmp.le.s32.totalorder 1, %s9
    %p139 = scmp.lt.s32.totalorder %s9, 3
    %p140 = pnand %p138, %p139
    %p141 = pneg %p140
    // Predicated region
    $region29: #{cnn_embedding_forward.3} parent=5 // pred_check
      _
    $region30: #{cnn_embedding_forward.3} parent=5 // pred_check_branch
      %143 = sbr.rel (%p140) target = $region32
    $region31: #{cnn_embedding_forward.3} parent=5 // pred_region
      %s144 = ssub.s32 %s9, 1
      %s145 = smul.u32 64, %s14
      %p146 = scmp.lt.s32.totalorder %s145, 127
      %s147 = scalar_select %p146, %s145, 127
      %s148 = smul.addr %s147, 2
      %s149 = smul.addr %s148, 4
      %s150 = scalar_lea.vmem %s0, %s149
      %p151 = pneg %p35
      %p152 = pneg %p32
      %p153 = pneg %p56
      %p154 = pneg %p53
      %p155 = pneg %p77
      %p156 = pneg %p74
      %p157 = pneg %p103
      %p158 = pneg %p100
      %s159 = smul.u32 64, %s14
      %p160 = scmp.lt.s32.totalorder %s159, 127
      %s161 = scalar_select %p160, %s159, 127
      %s162 = smul.addr %s161, 4
      %s163 = scalar_lea.vmem %s3, %s162
      %s164 = smul.u32 64, %s14
      %p165 = scmp.lt.s32.totalorder %s164, 127
      %s166 = scalar_select %p165, %s164, 127
      %s167 = smul.addr %s166, 2
      %s168 = smul.addr %s167, 4
      %s169 = scalar_lea.vmem %s0, %s168
      %s170 = smul.u32 64, %s14
      %s171 = smul.u32 64, %s14
      %p172 = scmp.lt.s32.totalorder %s171, 127
      %s173 = scalar_select %p172, %s171, 127
      %s174 = smul.addr %s173, 4
      %s175 = scalar_lea.vmem %s3, %s174
      %s176 = smul.u32 64, %s14
      %v177 = vld [vmem:[%s2] sm:$0x1]
      %v178 = vld [vmem:[%s169] sm:$0xff]
      %v179 = vld [vmem:[%s169 + $0x8] sm:$0xff]
      %v180 = vld [vmem:[%s169 + $0x10] sm:$0xff]
      %v181 = vld [vmem:[%s169 + $0x18] sm:$0xff]
      %v182 = vld [vmem:[%s169 + $0x20] sm:$0xff]
      %v183 = vld [vmem:[%s169 + $0x28] sm:$0xff]
      %v184 = vld [vmem:[%s169 + $0x30] sm:$0xff]
      %v185 = vld [vmem:[%s169 + $0x38] sm:$0xff]
      %v186 = vld [vmem:[%s1] sm:$0xff]
      %v187 = vld [vmem:[%s1 + $0x8] sm:$0xff]
      %v188 = vld [vmem:[%s1 + $0x10] sm:$0xff]
      %v189 = vld [vmem:[%s1 + $0x18] sm:$0xff]
      %v190 = vld [vmem:[%s1 + $0x20] sm:$0xff]
      %v191 = vld [vmem:[%s1 + $0x28] sm:$0xff]
      %v192 = vld [vmem:[%s1 + $0x30] sm:$0xff]
      %v193 = vld [vmem:[%s1 + $0x38] sm:$0xff]
      %v194 = vld [vmem:[%s1 + $0x40] sm:$0xff]
      %v195 = vld [vmem:[%s1 + $0x48] sm:$0xff]
      %v196 = vld [vmem:[%s1 + $0x50] sm:$0xff]
      %v197 = vld [vmem:[%s1 + $0x58] sm:$0xff]
      %v198 = vld [vmem:[%s1 + $0x60] sm:$0xff]
      %v199 = vld [vmem:[%s1 + $0x68] sm:$0xff]
      %v200 = vld [vmem:[%s1 + $0x70] sm:$0xff]
      %v201 = vld [vmem:[%s1 + $0x78] sm:$0xff]
      %v202 = vld [vmem:[%s1 + $0x80] sm:$0xff]
      %v203 = vld [vmem:[%s1 + $0x88] sm:$0xff]
      %v204 = vld [vmem:[%s1 + $0x90] sm:$0xff]
      %v205 = vld [vmem:[%s1 + $0x98] sm:$0xff]
      %v206 = vld [vmem:[%s1 + $0xa0] sm:$0xff]
      %v207 = vld [vmem:[%s1 + $0xa8] sm:$0xff]
      %v208 = vld [vmem:[%s1 + $0xb0] sm:$0xff]
      %v209 = vld [vmem:[%s1 + $0xb8] sm:$0xff]
      %v210 = vld [vmem:[%s1 + $0xc0] sm:$0xff]
      %v211 = vld [vmem:[%s1 + $0xc8] sm:$0xff]
      %v212 = vld [vmem:[%s1 + $0xd0] sm:$0xff]
      %v213 = vld [vmem:[%s1 + $0xd8] sm:$0xff]
      %v214 = vld [vmem:[%s1 + $0xe0] sm:$0xff]
      %v215 = vld [vmem:[%s1 + $0xe8] sm:$0xff]
      %v216 = vld [vmem:[%s1 + $0xf0] sm:$0xff]
      %v217 = vld [vmem:[%s1 + $0xf8] sm:$0xff]
      %v218 = vld [vmem:[%s1 + $0x100] sm:$0xff]
      %v219 = vld [vmem:[%s1 + $0x108] sm:$0xff]
      %v220 = vld [vmem:[%s1 + $0x110] sm:$0xff]
      %v221 = vld [vmem:[%s1 + $0x118] sm:$0xff]
      %v222 = vld [vmem:[%s1 + $0x120] sm:$0xff]
      %v223 = vld [vmem:[%s1 + $0x128] sm:$0xff]
      %v224 = vld [vmem:[%s1 + $0x130] sm:$0xff]
      %v225 = vld [vmem:[%s1 + $0x138] sm:$0xff]
      %v226 = vld [vmem:[%s1 + $0x140] sm:$0xff]
      %v227 = vld [vmem:[%s1 + $0x148] sm:$0xff]
      %v228 = vld [vmem:[%s1 + $0x150] sm:$0xff]
      %v229 = vld [vmem:[%s1 + $0x158] sm:$0xff]
      %v230 = vld [vmem:[%s1 + $0x160] sm:$0xff]
      %v231 = vld [vmem:[%s1 + $0x168] sm:$0xff]
      %v232 = vld [vmem:[%s1 + $0x170] sm:$0xff]
      %v233 = vld [vmem:[%s1 + $0x178] sm:$0xff]
      %v234 = vld [vmem:[%s1 + $0x180] sm:$0xff]
      %v235 = vld [vmem:[%s1 + $0x188] sm:$0xff]
      %v236 = vld [vmem:[%s1 + $0x190] sm:$0xff]
      %v237 = vld [vmem:[%s1 + $0x198] sm:$0xff]
      %v238 = vld [vmem:[%s1 + $0x1a0] sm:$0xff]
      %v239 = vld [vmem:[%s1 + $0x1a8] sm:$0xff]
      %v240 = vld [vmem:[%s1 + $0x1b0] sm:$0xff]
      %v241 = vld [vmem:[%s1 + $0x1b8] sm:$0xff]
      %v242 = vld [vmem:[%s1 + $0x1c0] sm:$0xff]
      %v243 = vld [vmem:[%s1 + $0x1c8] sm:$0xff]
      %v244 = vld [vmem:[%s1 + $0x1d0] sm:$0xff]
      %v245 = vld [vmem:[%s1 + $0x1d8] sm:$0xff]
      %v246 = vld [vmem:[%s1 + $0x1e0] sm:$0x33]
      %v247 = vld [vmem:[%s1 + $0x1e8] sm:$0x33]
      %v256 = vunpack.c.l.b16 %v178
      %v257 = vunpack.c.h.b16 %v178
      %v258 = vunpack.c.l.b16 %v179
      %v259 = vunpack.c.h.b16 %v179
      %v260 = vunpack.c.l.b16 %v180
      %v261 = vunpack.c.h.b16 %v180
      %v262 = vunpack.c.l.b16 %v181
      %v263 = vunpack.c.h.b16 %v181
      %v264 = vunpack.c.l.b16 %v182
      %v265 = vunpack.c.h.b16 %v182
      %v266 = vunpack.c.l.b16 %v183
      %v267 = vunpack.c.h.b16 %v183
      %v268 = vunpack.c.l.b16 %v184
      %v269 = vunpack.c.h.b16 %v184
      %v270 = vunpack.c.l.b16 %v185
      %v271 = vunpack.c.h.b16 %v185
      %v272 = vpack.c.b16 %v258, %v256
      %v273 = vpack.c.b16 %v259, %v257
      %v274 = vpack.c.b16 %v262, %v260
      %v275 = vpack.c.b16 %v263, %v261
      %v276 = vpack.c.b16 %v266, %v264
      %v277 = vpack.c.b16 %v267, %v265
      %v278 = vpack.c.b16 %v270, %v268
      %v279 = vpack.c.b16 %v271, %v269
      %v346 = vunpack.c.l.b16 %v186
      %v347 = vunpack.c.h.b16 %v186
      %v348 = vunpack.c.l.b16 %v187
      %v349 = vunpack.c.h.b16 %v187
      %v350 = vunpack.c.l.b16 %v188
      %v351 = vunpack.c.h.b16 %v188
      %v352 = vunpack.c.l.b16 %v189
      %v353 = vunpack.c.h.b16 %v189
      %v354 = vunpack.c.l.b16 %v190
      %v355 = vunpack.c.h.b16 %v190
      %v356 = vunpack.c.l.b16 %v191
      %v357 = vunpack.c.h.b16 %v191
      %v358 = vunpack.c.l.b16 %v192
      %v359 = vunpack.c.h.b16 %v192
      %v360 = vunpack.c.l.b16 %v193
      %v361 = vunpack.c.h.b16 %v193
      %v362 = vunpack.c.l.b16 %v194
      %v363 = vunpack.c.h.b16 %v194
      %v364 = vunpack.c.l.b16 %v195
      %v365 = vunpack.c.h.b16 %v195
      %v366 = vunpack.c.l.b16 %v196
      %v367 = vunpack.c.h.b16 %v196
      %v368 = vunpack.c.l.b16 %v197
      %v369 = vunpack.c.h.b16 %v197
      %v370 = vunpack.c.l.b16 %v198
      %v371 = vunpack.c.h.b16 %v198
      %v372 = vunpack.c.l.b16 %v199
      %v373 = vunpack.c.h.b16 %v199
      %v374 = vunpack.c.l.b16 %v200
      %v375 = vunpack.c.h.b16 %v200
      %v376 = vunpack.c.l.b16 %v201
      %v377 = vunpack.c.h.b16 %v201
      %v378 = vunpack.c.l.b16 %v202
      %v379 = vunpack.c.h.b16 %v202
      %v380 = vunpack.c.l.b16 %v203
      %v381 = vunpack.c.h.b16 %v203
      %v382 = vunpack.c.l.b16 %v204
      %v383 = vunpack.c.h.b16 %v204
      %v384 = vunpack.c.l.b16 %v205
      %v385 = vunpack.c.h.b16 %v205
      %v386 = vunpack.c.l.b16 %v206
      %v387 = vunpack.c.h.b16 %v206
      %v388 = vunpack.c.l.b16 %v207
      %v389 = vunpack.c.h.b16 %v207
      %v390 = vunpack.c.l.b16 %v208
      %v391 = vunpack.c.h.b16 %v208
      %v392 = vunpack.c.l.b16 %v209
      %v393 = vunpack.c.h.b16 %v209
      %v394 = vunpack.c.l.b16 %v210
      %v395 = vunpack.c.h.b16 %v210
      %v396 = vunpack.c.l.b16 %v211
      %v397 = vunpack.c.h.b16 %v211
      %v398 = vunpack.c.l.b16 %v212
      %v399 = vunpack.c.h.b16 %v212
      %v400 = vunpack.c.l.b16 %v213
      %v401 = vunpack.c.h.b16 %v213
      %v402 = vunpack.c.l.b16 %v214
      %v403 = vunpack.c.h.b16 %v214
      %v404 = vunpack.c.l.b16 %v215
      %v405 = vunpack.c.h.b16 %v215
      %v406 = vunpack.c.l.b16 %v216
      %v407 = vunpack.c.h.b16 %v216
      %v408 = vunpack.c.l.b16 %v217
      %v409 = vunpack.c.h.b16 %v217
      %v410 = vunpack.c.l.b16 %v218
      %v411 = vunpack.c.h.b16 %v218
      %v412 = vunpack.c.l.b16 %v219
      %v413 = vunpack.c.h.b16 %v219
      %v414 = vunpack.c.l.b16 %v220
      %v415 = vunpack.c.h.b16 %v220
      %v416 = vunpack.c.l.b16 %v221
      %v417 = vunpack.c.h.b16 %v221
      %v418 = vunpack.c.l.b16 %v222
      %v419 = vunpack.c.h.b16 %v222
      %v420 = vunpack.c.l.b16 %v223
      %v421 = vunpack.c.h.b16 %v223
      %v422 = vunpack.c.l.b16 %v224
      %v423 = vunpack.c.h.b16 %v224
      %v424 = vunpack.c.l.b16 %v225
      %v425 = vunpack.c.h.b16 %v225
      %v426 = vunpack.c.l.b16 %v226
      %v427 = vunpack.c.h.b16 %v226
      %v428 = vunpack.c.l.b16 %v227
      %v429 = vunpack.c.h.b16 %v227
      %v430 = vunpack.c.l.b16 %v228
      %v431 = vunpack.c.h.b16 %v228
      %v432 = vunpack.c.l.b16 %v229
      %v433 = vunpack.c.h.b16 %v229
      %v434 = vunpack.c.l.b16 %v230
      %v435 = vunpack.c.h.b16 %v230
      %v436 = vunpack.c.l.b16 %v231
      %v437 = vunpack.c.h.b16 %v231
      %v438 = vunpack.c.l.b16 %v232
      %v439 = vunpack.c.h.b16 %v232
      %v440 = vunpack.c.l.b16 %v233
      %v441 = vunpack.c.h.b16 %v233
      %v442 = vunpack.c.l.b16 %v234
      %v443 = vunpack.c.h.b16 %v234
      %v444 = vunpack.c.l.b16 %v235
      %v445 = vunpack.c.h.b16 %v235
      %v446 = vunpack.c.l.b16 %v236
      %v447 = vunpack.c.h.b16 %v236
      %v448 = vunpack.c.l.b16 %v237
      %v449 = vunpack.c.h.b16 %v237
      %v450 = vunpack.c.l.b16 %v238
      %v451 = vunpack.c.h.b16 %v238
      %v452 = vunpack.c.l.b16 %v239
      %v453 = vunpack.c.h.b16 %v239
      %v454 = vunpack.c.l.b16 %v240
      %v455 = vunpack.c.h.b16 %v240
      %v456 = vunpack.c.l.b16 %v241
      %v457 = vunpack.c.h.b16 %v241
      %v458 = vunpack.c.l.b16 %v242
      %v459 = vunpack.c.h.b16 %v242
      %v460 = vunpack.c.l.b16 %v243
      %v461 = vunpack.c.h.b16 %v243
      %v462 = vunpack.c.l.b16 %v244
      %v463 = vunpack.c.h.b16 %v244
      %v464 = vunpack.c.l.b16 %v245
      %v465 = vunpack.c.h.b16 %v245
      %v466 = vunpack.c.l.b16 %v246
      %v467 = vunpack.c.h.b16 %v246
      %v468 = vunpack.c.l.b16 %v247
      %v469 = vunpack.c.h.b16 %v247
      %v470 = vpack.c.b16 %v350, %v346
      %v471 = vpack.c.b16 %v351, %v347
      %v472 = vpack.c.b16 %v352, %v348
      %v473 = vpack.c.b16 %v353, %v349
      %v474 = vpack.c.b16 %v358, %v354
      %v475 = vpack.c.b16 %v359, %v355
      %v476 = vpack.c.b16 %v360, %v356
      %v477 = vpack.c.b16 %v361, %v357
      %v478 = vpack.c.b16 %v366, %v362
      %v479 = vpack.c.b16 %v367, %v363
      %v480 = vpack.c.b16 %v368, %v364
      %v481 = vpack.c.b16 %v369, %v365
      %v482 = vpack.c.b16 %v374, %v370
      %v483 = vpack.c.b16 %v375, %v371
      %v484 = vpack.c.b16 %v376, %v372
      %v485 = vpack.c.b16 %v377, %v373
      %v486 = vpack.c.b16 %v382, %v378
      %v487 = vpack.c.b16 %v383, %v379
      %v488 = vpack.c.b16 %v384, %v380
      %v489 = vpack.c.b16 %v385, %v381
      %v490 = vpack.c.b16 %v390, %v386
      %v491 = vpack.c.b16 %v391, %v387
      %v492 = vpack.c.b16 %v392, %v388
      %v493 = vpack.c.b16 %v393, %v389
      %v494 = vpack.c.b16 %v398, %v394
      %v495 = vpack.c.b16 %v399, %v395
      %v496 = vpack.c.b16 %v400, %v396
      %v497 = vpack.c.b16 %v401, %v397
      %v498 = vpack.c.b16 %v406, %v402
      %v499 = vpack.c.b16 %v407, %v403
      %v500 = vpack.c.b16 %v408, %v404
      %v501 = vpack.c.b16 %v409, %v405
      %v502 = vpack.c.b16 %v414, %v410
      %v503 = vpack.c.b16 %v415, %v411
      %v504 = vpack.c.b16 %v416, %v412
      %v505 = vpack.c.b16 %v417, %v413
      %v506 = vpack.c.b16 %v422, %v418
      %v507 = vpack.c.b16 %v423, %v419
      %v508 = vpack.c.b16 %v424, %v420
      %v509 = vpack.c.b16 %v425, %v421
      %v510 = vpack.c.b16 %v430, %v426
      %v511 = vpack.c.b16 %v431, %v427
      %v512 = vpack.c.b16 %v432, %v428
      %v513 = vpack.c.b16 %v433, %v429
      %v514 = vpack.c.b16 %v438, %v434
      %v515 = vpack.c.b16 %v439, %v435
      %v516 = vpack.c.b16 %v440, %v436
      %v517 = vpack.c.b16 %v441, %v437
      %v518 = vpack.c.b16 %v446, %v442
      %v519 = vpack.c.b16 %v447, %v443
      %v520 = vpack.c.b16 %v448, %v444
      %v521 = vpack.c.b16 %v449, %v445
      %v522 = vpack.c.b16 %v454, %v450
      %v523 = vpack.c.b16 %v455, %v451
      %v524 = vpack.c.b16 %v456, %v452
      %v525 = vpack.c.b16 %v457, %v453
      %v526 = vpack.c.b16 %v462, %v458
      %v527 = vpack.c.b16 %v463, %v459
      %v528 = vpack.c.b16 %v464, %v460
      %v529 = vpack.c.b16 %v465, %v461
      %v530 = vpack.c.b16 %v466, %v466
      %v531 = vpack.c.b16 %v467, %v467
      %v532 = vpack.c.b16 %v468, %v468
      %v533 = vpack.c.b16 %v469, %v469
      %vm594 = vcmask 941056
      %v596 = vsel %vm594, %v273, 0
      %v599 = vsel %vm594, %v275, 0
      %v602 = vsel %vm594, %v277, 0
      %v605 = vsel %vm594, %v279, 0
      %vm607 = vcmask 1040384
      %vm608 = vcmask 1041408
      %v609 = vsel %vm607, 4294967295, 65535
      %v610 = vsel %vm608, %v609, 0
      %v612 = vand.u32 %v530, %v610
      %v615 = vand.u32 %v531, %v610
      %v618 = vand.u32 %v532, %v610
      %v621 = vand.u32 %v533, %v610
      %623 = vmatprep.subr.bf16.mxu0 %v471
      %624 = vmatpush1.bf16.msra.mxu0 %v470
      %625 = vmatprep.subr.bf16.mxu0 %v475
      %626 = vmatpush1.bf16.msra.mxu0 %v474
      %627 = vmatprep.subr.bf16.mxu0 %v479
      %628 = vmatpush1.bf16.msra.mxu0 %v478
      %629 = vmatprep.subr.bf16.mxu0 %v483
      %630 = vmatpush1.bf16.msra.mxu0 %v482
      %631 = vmatprep.subr.bf16.mxu0 %v487
      %632 = vmatpush1.bf16.msra.mxu0 %v486
      %633 = vmatprep.subr.bf16.mxu0 %v491
      %634 = vmatpush1.bf16.msra.mxu0 %v490
      %635 = vmatprep.subr.bf16.mxu0 %v495
      %636 = vmatpush1.bf16.msra.mxu0 %v494
      %637 = vmatprep.subr.bf16.mxu0 %v499
      %638 = vmatpush1.bf16.msra.mxu0 %v498
      %639 = vmatprep.subr.bf16.mxu0 %v503
      %640 = vmatpush1.bf16.msra.mxu0 %v502
      %641 = vmatprep.subr.bf16.mxu0 %v507
      %642 = vmatpush1.bf16.msra.mxu0 %v506
      %643 = vmatprep.subr.bf16.mxu0 %v511
      %644 = vmatpush1.bf16.msra.mxu0 %v510
      %645 = vmatprep.subr.bf16.mxu0 %v515
      %646 = vmatpush1.bf16.msra.mxu0 %v514
      %647 = vmatprep.subr.bf16.mxu0 %v519
      %648 = vmatpush1.bf16.msra.mxu0 %v518
      %649 = vmatprep.subr.bf16.mxu0 %v523
      %650 = vmatpush1.bf16.msra.mxu0 %v522
      %651 = vmatprep.subr.bf16.mxu0 %v527
      %652 = vmatpush1.bf16.msra.mxu0 %v526
      %653 = vmatprep.subr.bf16.mxu0 %v615
      %654 = vmatpush1.bf16.msra.mxu0 %v612
      %655 = vmatprep.mubr.bf16.mxu0 %v596
      %656 = vmatmul.mubr.bf16.gmra.mrb[0].mxu0 %v272
      %v657 = vpop.f32.mrb[0].mxu0
      %v658 = vadd.f32 0.0, %v657
      %v659 = vpop.f32.mrb[0].mxu0
      %v660 = vadd.f32 0.0, %v659
      %v661 = vpop.f32.mrb[0].mxu0
      %v662 = vadd.f32 0.0, %v661
      %v663 = vpop.f32.mrb[0].mxu0
      %v664 = vadd.f32 0.0, %v663
      %665 = vmatprep.mubr.bf16.mxu0 %v599
      %666 = vmatmul.mubr.bf16.gmra.mrb[0].mxu0 %v274
      %v667 = vpop.f32.mrb[0].mxu0
      %v668 = vadd.f32 0.0, %v667
      %v669 = vpop.f32.mrb[0].mxu0
      %v670 = vadd.f32 0.0, %v669
      %v671 = vpop.f32.mrb[0].mxu0
      %v672 = vadd.f32 0.0, %v671
      %v673 = vpop.f32.mrb[0].mxu0
      %v674 = vadd.f32 0.0, %v673
      %675 = vmatprep.mubr.bf16.mxu0 %v602
      %676 = vmatmul.mubr.bf16.gmra.mrb[0].mxu0 %v276
      %v677 = vpop.f32.mrb[0].mxu0
      %v678 = vadd.f32 0.0, %v677
      %v679 = vpop.f32.mrb[0].mxu0
      %v680 = vadd.f32 0.0, %v679
      %v681 = vpop.f32.mrb[0].mxu0
      %v682 = vadd.f32 0.0, %v681
      %v683 = vpop.f32.mrb[0].mxu0
      %v684 = vadd.f32 0.0, %v683
      %685 = vmatprep.mubr.bf16.mxu0 %v605
      %686 = vmatmul.mubr.bf16.gmra.mrb[0].mxu0 %v278
      %v687 = vpop.f32.mrb[0].mxu0
      %v688 = vadd.f32 0.0, %v687
      %v689 = vpop.f32.mrb[0].mxu0
      %v690 = vadd.f32 0.0, %v689
      %v691 = vpop.f32.mrb[0].mxu0
      %v692 = vadd.f32 0.0, %v691
      %v693 = vpop.f32.mrb[0].mxu0
      %v694 = vadd.f32 0.0, %v693
      %695 = vdwg.mxu0
      %696 = vmatprep.subr.bf16.mxu0 %v473
      %697 = vmatpush1.bf16.msra.mxu0 %v472
      %698 = vmatprep.subr.bf16.mxu0 %v477
      %699 = vmatpush1.bf16.msra.mxu0 %v476
      %700 = vmatprep.subr.bf16.mxu0 %v481
      %701 = vmatpush1.bf16.msra.mxu0 %v480
      %702 = vmatprep.subr.bf16.mxu0 %v485
      %703 = vmatpush1.bf16.msra.mxu0 %v484
      %704 = vmatprep.subr.bf16.mxu0 %v489
      %705 = vmatpush1.bf16.msra.mxu0 %v488
      %706 = vmatprep.subr.bf16.mxu0 %v493
      %707 = vmatpush1.bf16.msra.mxu0 %v492
      %708 = vmatprep.subr.bf16.mxu0 %v497
      %709 = vmatpush1.bf16.msra.mxu0 %v496
      %710 = vmatprep.subr.bf16.mxu0 %v501
      %711 = vmatpush1.bf16.msra.mxu0 %v500
      %712 = vmatprep.subr.bf16.mxu0 %v505
      %713 = vmatpush1.bf16.msra.mxu0 %v504
      %714 = vmatprep.subr.bf16.mxu0 %v509
      %715 = vmatpush1.bf16.msra.mxu0 %v508
      %716 = vmatprep.subr.bf16.mxu0 %v513
      %717 = vmatpush1.bf16.msra.mxu0 %v512
      %718 = vmatprep.subr.bf16.mxu0 %v517
      %719 = vmatpush1.bf16.msra.mxu0 %v516
      %720 = vmatprep.subr.bf16.mxu0 %v521
      %721 = vmatpush1.bf16.msra.mxu0 %v520
      %722 = vmatprep.subr.bf16.mxu0 %v525
      %723 = vmatpush1.bf16.msra.mxu0 %v524
      %724 = vmatprep.subr.bf16.mxu0 %v529
      %725 = vmatpush1.bf16.msra.mxu0 %v528
      %726 = vmatprep.subr.bf16.mxu0 %v621
      %727 = vmatpush1.bf16.msra.mxu0 %v618
      %728 = vmatprep.mubr.bf16.mxu0 %v596
      %729 = vmatmul.mubr.bf16.gmra.mrb[0].mxu0 %v272
      %v730 = vpop.f32.mrb[0].mxu0
      %v731 = vadd.f32 0.0, %v730
      %v732 = vpop.f32.mrb[0].mxu0
      %v733 = vadd.f32 0.0, %v732
      %v734 = vpop.f32.mrb[0].mxu0
      %v735 = vadd.f32 0.0, %v734
      %v736 = vpop.f32.mrb[0].mxu0
      %v737 = vadd.f32 0.0, %v736
      %738 = vmatprep.mubr.bf16.mxu0 %v599
      %739 = vmatmul.mubr.bf16.gmra.mrb[0].mxu0 %v274
      %v740 = vpop.f32.mrb[0].mxu0
      %v741 = vadd.f32 0.0, %v740
      %v742 = vpop.f32.mrb[0].mxu0
      %v743 = vadd.f32 0.0, %v742
      %v744 = vpop.f32.mrb[0].mxu0
      %v745 = vadd.f32 0.0, %v744
      %v746 = vpop.f32.mrb[0].mxu0
      %v747 = vadd.f32 0.0, %v746
      %748 = vmatprep.mubr.bf16.mxu0 %v602
      %749 = vmatmul.mubr.bf16.gmra.mrb[0].mxu0 %v276
      %v750 = vpop.f32.mrb[0].mxu0
      %v751 = vadd.f32 0.0, %v750
      %v752 = vpop.f32.mrb[0].mxu0
      %v753 = vadd.f32 0.0, %v752
      %v754 = vpop.f32.mrb[0].mxu0
      %v755 = vadd.f32 0.0, %v754
      %v756 = vpop.f32.mrb[0].mxu0
      %v757 = vadd.f32 0.0, %v756
      %758 = vmatprep.mubr.bf16.mxu0 %v605
      %759 = vmatmul.mubr.bf16.gmra.mrb[0].mxu0 %v278
      %v760 = vpop.f32.mrb[0].mxu0
      %v761 = vadd.f32 0.0, %v760
      %v762 = vpop.f32.mrb[0].mxu0
      %v763 = vadd.f32 0.0, %v762
      %v764 = vpop.f32.mrb[0].mxu0
      %v765 = vadd.f32 0.0, %v764
      %v766 = vpop.f32.mrb[0].mxu0
      %v767 = vadd.f32 0.0, %v766
      %768 = vdwg.mxu0
      %777 = vrot.lane.b32.xlu0 %v658, 112
      %v778 = vpop.permute.xlu0 %777
      %779 = vrot.lane.b32.xlu0 %v662, 112
      %v780 = vpop.permute.xlu0 %779
      %781 = vrot.lane.b32.xlu0 %v668, 112
      %v782 = vpop.permute.xlu0 %781
      %783 = vrot.lane.b32.xlu0 %v672, 112
      %v784 = vpop.permute.xlu0 %783
      %785 = vrot.lane.b32.xlu0 %v678, 112
      %v786 = vpop.permute.xlu0 %785
      %787 = vrot.lane.b32.xlu0 %v682, 112
      %v788 = vpop.permute.xlu0 %787
      %789 = vrot.lane.b32.xlu0 %v688, 112
      %v790 = vpop.permute.xlu0 %789
      %791 = vrot.lane.b32.xlu0 %v692, 112
      %v792 = vpop.permute.xlu0 %791
      %v801 = vmax.f32 %v658, %v778
      %v802 = vmax.f32 %v662, %v780
      %v803 = vmax.f32 %v668, %v782
      %v804 = vmax.f32 %v672, %v784
      %v805 = vmax.f32 %v678, %v786
      %v806 = vmax.f32 %v682, %v788
      %v807 = vmax.f32 %v688, %v790
      %v808 = vmax.f32 %v692, %v792
      %809 = vrot.lane.b32.xlu0 %v658, 96
      %v810 = vpop.permute.xlu0 %809
      %811 = vrot.lane.b32.xlu0 %v662, 96
      %v812 = vpop.permute.xlu0 %811
      %813 = vrot.lane.b32.xlu0 %v668, 96
      %v814 = vpop.permute.xlu0 %813
      %815 = vrot.lane.b32.xlu0 %v672, 96
      %v816 = vpop.permute.xlu0 %815
      %817 = vrot.lane.b32.xlu0 %v678, 96
      %v818 = vpop.permute.xlu0 %817
      %819 = vrot.lane.b32.xlu0 %v682, 96
      %v820 = vpop.permute.xlu0 %819
      %821 = vrot.lane.b32.xlu0 %v688, 96
      %v822 = vpop.permute.xlu0 %821
      %823 = vrot.lane.b32.xlu0 %v692, 96
      %v824 = vpop.permute.xlu0 %823
      %v833 = vmax.f32 %v801, %v810
      %v834 = vmax.f32 %v802, %v812
      %v835 = vmax.f32 %v803, %v814
      %v836 = vmax.f32 %v804, %v816
      %v837 = vmax.f32 %v805, %v818
      %v838 = vmax.f32 %v806, %v820
      %v839 = vmax.f32 %v807, %v822
      %v840 = vmax.f32 %v808, %v824
      %841 = vrot.lane.b32.xlu0 %v658, 80
      %v842 = vpop.permute.xlu0 %841
      %843 = vrot.lane.b32.xlu0 %v662, 80
      %v844 = vpop.permute.xlu0 %843
      %845 = vrot.lane.b32.xlu0 %v668, 80
      %v846 = vpop.permute.xlu0 %845
      %847 = vrot.lane.b32.xlu0 %v672, 80
      %v848 = vpop.permute.xlu0 %847
      %849 = vrot.lane.b32.xlu0 %v678, 80
      %v850 = vpop.permute.xlu0 %849
      %851 = vrot.lane.b32.xlu0 %v682, 80
      %v852 = vpop.permute.xlu0 %851
      %853 = vrot.lane.b32.xlu0 %v688, 80
      %v854 = vpop.permute.xlu0 %853
      %855 = vrot.lane.b32.xlu0 %v692, 80
      %v856 = vpop.permute.xlu0 %855
      %v865 = vmax.f32 %v833, %v842
      %v866 = vmax.f32 %v834, %v844
      %v867 = vmax.f32 %v835, %v846
      %v868 = vmax.f32 %v836, %v848
      %v869 = vmax.f32 %v837, %v850
      %v870 = vmax.f32 %v838, %v852
      %v871 = vmax.f32 %v839, %v854
      %v872 = vmax.f32 %v840, %v856
      %873 = vrot.lane.b32.xlu0 %v658, 64
      %v874 = vpop.permute.xlu0 %873
      %875 = vrot.lane.b32.xlu0 %v662, 64
      %v876 = vpop.permute.xlu0 %875
      %877 = vrot.lane.b32.xlu0 %v668, 64
      %v878 = vpop.permute.xlu0 %877
      %879 = vrot.lane.b32.xlu0 %v672, 64
      %v880 = vpop.permute.xlu0 %879
      %881 = vrot.lane.b32.xlu0 %v678, 64
      %v882 = vpop.permute.xlu0 %881
      %883 = vrot.lane.b32.xlu0 %v682, 64
      %v884 = vpop.permute.xlu0 %883
      %885 = vrot.lane.b32.xlu0 %v688, 64
      %v886 = vpop.permute.xlu0 %885
      %887 = vrot.lane.b32.xlu0 %v692, 64
      %v888 = vpop.permute.xlu0 %887
      %v897 = vmax.f32 %v865, %v874
      %v898 = vmax.f32 %v866, %v876
      %v899 = vmax.f32 %v867, %v878
      %v900 = vmax.f32 %v868, %v880
      %v901 = vmax.f32 %v869, %v882
      %v902 = vmax.f32 %v870, %v884
      %v903 = vmax.f32 %v871, %v886
      %v904 = vmax.f32 %v872, %v888
      %905 = vrot.lane.b32.xlu0 %v658, 48
      %v906 = vpop.permute.xlu0 %905
      %907 = vrot.lane.b32.xlu0 %v662, 48
      %v908 = vpop.permute.xlu0 %907
      %909 = vrot.lane.b32.xlu0 %v668, 48
      %v910 = vpop.permute.xlu0 %909
      %911 = vrot.lane.b32.xlu0 %v672, 48
      %v912 = vpop.permute.xlu0 %911
      %913 = vrot.lane.b32.xlu0 %v678, 48
      %v914 = vpop.permute.xlu0 %913
      %915 = vrot.lane.b32.xlu0 %v682, 48
      %v916 = vpop.permute.xlu0 %915
      %917 = vrot.lane.b32.xlu0 %v688, 48
      %v918 = vpop.permute.xlu0 %917
      %919 = vrot.lane.b32.xlu0 %v692, 48
      %v920 = vpop.permute.xlu0 %919
      %v929 = vmax.f32 %v897, %v906
      %v930 = vmax.f32 %v898, %v908
      %v931 = vmax.f32 %v899, %v910
      %v932 = vmax.f32 %v900, %v912
      %v933 = vmax.f32 %v901, %v914
      %v934 = vmax.f32 %v902, %v916
      %v935 = vmax.f32 %v903, %v918
      %v936 = vmax.f32 %v904, %v920
      %937 = vrot.lane.b32.xlu0 %v658, 32
      %v938 = vpop.permute.xlu0 %937
      %939 = vrot.lane.b32.xlu0 %v662, 32
      %v940 = vpop.permute.xlu0 %939
      %941 = vrot.lane.b32.xlu0 %v668, 32
      %v942 = vpop.permute.xlu0 %941
      %943 = vrot.lane.b32.xlu0 %v672, 32
      %v944 = vpop.permute.xlu0 %943
      %945 = vrot.lane.b32.xlu0 %v678, 32
      %v946 = vpop.permute.xlu0 %945
      %947 = vrot.lane.b32.xlu0 %v682, 32
      %v948 = vpop.permute.xlu0 %947
      %949 = vrot.lane.b32.xlu0 %v688, 32
      %v950 = vpop.permute.xlu0 %949
      %951 = vrot.lane.b32.xlu0 %v692, 32
      %v952 = vpop.permute.xlu0 %951
      %v961 = vmax.f32 %v929, %v938
      %v962 = vmax.f32 %v930, %v940
      %v963 = vmax.f32 %v931, %v942
      %v964 = vmax.f32 %v932, %v944
      %v965 = vmax.f32 %v933, %v946
      %v966 = vmax.f32 %v934, %v948
      %v967 = vmax.f32 %v935, %v950
      %v968 = vmax.f32 %v936, %v952
      %969 = vrot.lane.b32.xlu0 %v658, 16
      %v970 = vpop.permute.xlu0 %969
      %971 = vrot.lane.b32.xlu0 %v662, 16
      %v972 = vpop.permute.xlu0 %971
      %973 = vrot.lane.b32.xlu0 %v668, 16
      %v974 = vpop.permute.xlu0 %973
      %975 = vrot.lane.b32.xlu0 %v672, 16
      %v976 = vpop.permute.xlu0 %975
      %977 = vrot.lane.b32.xlu0 %v678, 16
      %v978 = vpop.permute.xlu0 %977
      %979 = vrot.lane.b32.xlu0 %v682, 16
      %v980 = vpop.permute.xlu0 %979
      %981 = vrot.lane.b32.xlu0 %v688, 16
      %v982 = vpop.permute.xlu0 %981
      %983 = vrot.lane.b32.xlu0 %v692, 16
      %v984 = vpop.permute.xlu0 %983
      %v993 = vmax.f32 %v961, %v970
      %v994 = vmax.f32 %v962, %v972
      %v995 = vmax.f32 %v963, %v974
      %v996 = vmax.f32 %v964, %v976
      %v997 = vmax.f32 %v965, %v978
      %v998 = vmax.f32 %v966, %v980
      %v999 = vmax.f32 %v967, %v982
      %v1000 = vmax.f32 %v968, %v984
      %v1001 = vmax.f32 %v993, %v660
      %v1002 = vmax.f32 %v994, %v664
      %v1003 = vmax.f32 %v995, %v670
      %v1004 = vmax.f32 %v996, %v674
      %v1005 = vmax.f32 %v997, %v680
      %v1006 = vmax.f32 %v998, %v684
      %v1007 = vmax.f32 %v999, %v690
      %v1008 = vmax.f32 %v1000, %v694
      %1017 = vrot.lane.b32.xlu0 %v660, 112
      %v1018 = vpop.permute.xlu0 %1017
      %1019 = vrot.lane.b32.xlu0 %v664, 112
      %v1020 = vpop.permute.xlu0 %1019
      %1021 = vrot.lane.b32.xlu0 %v670, 112
      %v1022 = vpop.permute.xlu0 %1021
      %1023 = vrot.lane.b32.xlu0 %v674, 112
      %v1024 = vpop.permute.xlu0 %1023
      %1025 = vrot.lane.b32.xlu0 %v680, 112
      %v1026 = vpop.permute.xlu0 %1025
      %1027 = vrot.lane.b32.xlu0 %v684, 112
      %v1028 = vpop.permute.xlu0 %1027
      %1029 = vrot.lane.b32.xlu0 %v690, 112
      %v1030 = vpop.permute.xlu0 %1029
      %1031 = vrot.lane.b32.xlu0 %v694, 112
      %v1032 = vpop.permute.xlu0 %1031
      %v1041 = vmax.f32 %v1001, %v1018
      %v1042 = vmax.f32 %v1002, %v1020
      %v1043 = vmax.f32 %v1003, %v1022
      %v1044 = vmax.f32 %v1004, %v1024
      %v1045 = vmax.f32 %v1005, %v1026
      %v1046 = vmax.f32 %v1006, %v1028
      %v1047 = vmax.f32 %v1007, %v1030
      %v1048 = vmax.f32 %v1008, %v1032
      %1049 = vrot.lane.b32.xlu0 %v660, 96
      %v1050 = vpop.permute.xlu0 %1049
      %1051 = vrot.lane.b32.xlu0 %v664, 96
      %v1052 = vpop.permute.xlu0 %1051
      %1053 = vrot.lane.b32.xlu0 %v670, 96
      %v1054 = vpop.permute.xlu0 %1053
      %1055 = vrot.lane.b32.xlu0 %v674, 96
      %v1056 = vpop.permute.xlu0 %1055
      %1057 = vrot.lane.b32.xlu0 %v680, 96
      %v1058 = vpop.permute.xlu0 %1057
      %1059 = vrot.lane.b32.xlu0 %v684, 96
      %v1060 = vpop.permute.xlu0 %1059
      %1061 = vrot.lane.b32.xlu0 %v690, 96
      %v1062 = vpop.permute.xlu0 %1061
      %1063 = vrot.lane.b32.xlu0 %v694, 96
      %v1064 = vpop.permute.xlu0 %1063
      %v1073 = vmax.f32 %v1041, %v1050
      %v1074 = vmax.f32 %v1042, %v1052
      %v1075 = vmax.f32 %v1043, %v1054
      %v1076 = vmax.f32 %v1044, %v1056
      %v1077 = vmax.f32 %v1045, %v1058
      %v1078 = vmax.f32 %v1046, %v1060
      %v1079 = vmax.f32 %v1047, %v1062
      %v1080 = vmax.f32 %v1048, %v1064
      %1081 = vrot.lane.b32.xlu0 %v660, 80
      %v1082 = vpop.permute.xlu0 %1081
      %1083 = vrot.lane.b32.xlu0 %v664, 80
      %v1084 = vpop.permute.xlu0 %1083
      %1085 = vrot.lane.b32.xlu0 %v670, 80
      %v1086 = vpop.permute.xlu0 %1085
      %1087 = vrot.lane.b32.xlu0 %v674, 80
      %v1088 = vpop.permute.xlu0 %1087
      %1089 = vrot.lane.b32.xlu0 %v680, 80
      %v1090 = vpop.permute.xlu0 %1089
      %1091 = vrot.lane.b32.xlu0 %v684, 80
      %v1092 = vpop.permute.xlu0 %1091
      %1093 = vrot.lane.b32.xlu0 %v690, 80
      %v1094 = vpop.permute.xlu0 %1093
      %1095 = vrot.lane.b32.xlu0 %v694, 80
      %v1096 = vpop.permute.xlu0 %1095
      %v1105 = vmax.f32 %v1073, %v1082
      %v1106 = vmax.f32 %v1074, %v1084
      %v1107 = vmax.f32 %v1075, %v1086
      %v1108 = vmax.f32 %v1076, %v1088
      %v1109 = vmax.f32 %v1077, %v1090
      %v1110 = vmax.f32 %v1078, %v1092
      %v1111 = vmax.f32 %v1079, %v1094
      %v1112 = vmax.f32 %v1080, %v1096
      %1113 = vrot.lane.b32.xlu0 %v660, 64
      %v1114 = vpop.permute.xlu0 %1113
      %1115 = vrot.lane.b32.xlu0 %v664, 64
      %v1116 = vpop.permute.xlu0 %1115
      %1117 = vrot.lane.b32.xlu0 %v670, 64
      %v1118 = vpop.permute.xlu0 %1117
      %1119 = vrot.lane.b32.xlu0 %v674, 64
      %v1120 = vpop.permute.xlu0 %1119
      %1121 = vrot.lane.b32.xlu0 %v680, 64
      %v1122 = vpop.permute.xlu0 %1121
      %1123 = vrot.lane.b32.xlu0 %v684, 64
      %v1124 = vpop.permute.xlu0 %1123
      %1125 = vrot.lane.b32.xlu0 %v690, 64
      %v1126 = vpop.permute.xlu0 %1125
      %1127 = vrot.lane.b32.xlu0 %v694, 64
      %v1128 = vpop.permute.xlu0 %1127
      %v1137 = vmax.f32 %v1105, %v1114
      %v1138 = vmax.f32 %v1106, %v1116
      %v1139 = vmax.f32 %v1107, %v1118
      %v1140 = vmax.f32 %v1108, %v1120
      %v1141 = vmax.f32 %v1109, %v1122
      %v1142 = vmax.f32 %v1110, %v1124
      %v1143 = vmax.f32 %v1111, %v1126
      %v1144 = vmax.f32 %v1112, %v1128
      %1145 = vrot.lane.b32.xlu0 %v660, 48
      %v1146 = vpop.permute.xlu0 %1145
      %1147 = vrot.lane.b32.xlu0 %v664, 48
      %v1148 = vpop.permute.xlu0 %1147
      %1149 = vrot.lane.b32.xlu0 %v670, 48
      %v1150 = vpop.permute.xlu0 %1149
      %1151 = vrot.lane.b32.xlu0 %v674, 48
      %v1152 = vpop.permute.xlu0 %1151
      %1153 = vrot.lane.b32.xlu0 %v680, 48
      %v1154 = vpop.permute.xlu0 %1153
      %1155 = vrot.lane.b32.xlu0 %v684, 48
      %v1156 = vpop.permute.xlu0 %1155
      %1157 = vrot.lane.b32.xlu0 %v690, 48
      %v1158 = vpop.permute.xlu0 %1157
      %1159 = vrot.lane.b32.xlu0 %v694, 48
      %v1160 = vpop.permute.xlu0 %1159
      %v1169 = vmax.f32 %v1137, %v1146
      %v1170 = vmax.f32 %v1138, %v1148
      %v1171 = vmax.f32 %v1139, %v1150
      %v1172 = vmax.f32 %v1140, %v1152
      %v1173 = vmax.f32 %v1141, %v1154
      %v1174 = vmax.f32 %v1142, %v1156
      %v1175 = vmax.f32 %v1143, %v1158
      %v1176 = vmax.f32 %v1144, %v1160
      %1177 = vrot.lane.b32.xlu0 %v660, 32
      %v1178 = vpop.permute.xlu0 %1177
      %1179 = vrot.lane.b32.xlu0 %v664, 32
      %v1180 = vpop.permute.xlu0 %1179
      %1181 = vrot.lane.b32.xlu0 %v670, 32
      %v1182 = vpop.permute.xlu0 %1181
      %1183 = vrot.lane.b32.xlu0 %v674, 32
      %v1184 = vpop.permute.xlu0 %1183
      %1185 = vrot.lane.b32.xlu0 %v680, 32
      %v1186 = vpop.permute.xlu0 %1185
      %1187 = vrot.lane.b32.xlu0 %v684, 32
      %v1188 = vpop.permute.xlu0 %1187
      %1189 = vrot.lane.b32.xlu0 %v690, 32
      %v1190 = vpop.permute.xlu0 %1189
      %1191 = vrot.lane.b32.xlu0 %v694, 32
      %v1192 = vpop.permute.xlu0 %1191
      %v1201 = vmax.f32 %v1169, %v1178
      %v1202 = vmax.f32 %v1170, %v1180
      %v1203 = vmax.f32 %v1171, %v1182
      %v1204 = vmax.f32 %v1172, %v1184
      %v1205 = vmax.f32 %v1173, %v1186
      %v1206 = vmax.f32 %v1174, %v1188
      %v1207 = vmax.f32 %v1175, %v1190
      %v1208 = vmax.f32 %v1176, %v1192
      %1209 = vrot.lane.b32.xlu0 %v660, 16
      %v1210 = vpop.permute.xlu0 %1209
      %1211 = vrot.lane.b32.xlu0 %v664, 16
      %v1212 = vpop.permute.xlu0 %1211
      %1213 = vrot.lane.b32.xlu0 %v670, 16
      %v1214 = vpop.permute.xlu0 %1213
      %1215 = vrot.lane.b32.xlu0 %v674, 16
      %v1216 = vpop.permute.xlu0 %1215
      %1217 = vrot.lane.b32.xlu0 %v680, 16
      %v1218 = vpop.permute.xlu0 %1217
      %1219 = vrot.lane.b32.xlu0 %v684, 16
      %v1220 = vpop.permute.xlu0 %1219
      %1221 = vrot.lane.b32.xlu0 %v690, 16
      %v1222 = vpop.permute.xlu0 %1221
      %1223 = vrot.lane.b32.xlu0 %v694, 16
      %v1224 = vpop.permute.xlu0 %1223
      %v1233 = vmax.f32 %v1201, %v1210
      %v1234 = vmax.f32 %v1202, %v1212
      %v1235 = vmax.f32 %v1203, %v1214
      %v1236 = vmax.f32 %v1204, %v1216
      %v1237 = vmax.f32 %v1205, %v1218
      %v1238 = vmax.f32 %v1206, %v1220
      %v1239 = vmax.f32 %v1207, %v1222
      %v1240 = vmax.f32 %v1208, %v1224
      %v1241 = vmax.f32 %v1233, %v731
      %v1242 = vmax.f32 %v1234, %v735
      %v1243 = vmax.f32 %v1235, %v741
      %v1244 = vmax.f32 %v1236, %v745
      %v1245 = vmax.f32 %v1237, %v751
      %v1246 = vmax.f32 %v1238, %v755
      %v1247 = vmax.f32 %v1239, %v761
      %v1248 = vmax.f32 %v1240, %v765
      %1257 = vrot.lane.b32.xlu0 %v731, 112
      %v1258 = vpop.permute.xlu0 %1257
      %1259 = vrot.lane.b32.xlu0 %v735, 112
      %v1260 = vpop.permute.xlu0 %1259
      %1261 = vrot.lane.b32.xlu0 %v741, 112
      %v1262 = vpop.permute.xlu0 %1261
      %1263 = vrot.lane.b32.xlu0 %v745, 112
      %v1264 = vpop.permute.xlu0 %1263
      %1265 = vrot.lane.b32.xlu0 %v751, 112
      %v1266 = vpop.permute.xlu0 %1265
      %1267 = vrot.lane.b32.xlu0 %v755, 112
      %v1268 = vpop.permute.xlu0 %1267
      %1269 = vrot.lane.b32.xlu0 %v761, 112
      %v1270 = vpop.permute.xlu0 %1269
      %1271 = vrot.lane.b32.xlu0 %v765, 112
      %v1272 = vpop.permute.xlu0 %1271
      %v1281 = vmax.f32 %v1241, %v1258
      %v1282 = vmax.f32 %v1242, %v1260
      %v1283 = vmax.f32 %v1243, %v1262
      %v1284 = vmax.f32 %v1244, %v1264
      %v1285 = vmax.f32 %v1245, %v1266
      %v1286 = vmax.f32 %v1246, %v1268
      %v1287 = vmax.f32 %v1247, %v1270
      %v1288 = vmax.f32 %v1248, %v1272
      %1289 = vrot.lane.b32.xlu0 %v731, 96
      %v1290 = vpop.permute.xlu0 %1289
      %1291 = vrot.lane.b32.xlu0 %v735, 96
      %v1292 = vpop.permute.xlu0 %1291
      %1293 = vrot.lane.b32.xlu0 %v741, 96
      %v1294 = vpop.permute.xlu0 %1293
      %1295 = vrot.lane.b32.xlu0 %v745, 96
      %v1296 = vpop.permute.xlu0 %1295
      %1297 = vrot.lane.b32.xlu0 %v751, 96
      %v1298 = vpop.permute.xlu0 %1297
      %1299 = vrot.lane.b32.xlu0 %v755, 96
      %v1300 = vpop.permute.xlu0 %1299
      %1301 = vrot.lane.b32.xlu0 %v761, 96
      %v1302 = vpop.permute.xlu0 %1301
      %1303 = vrot.lane.b32.xlu0 %v765, 96
      %v1304 = vpop.permute.xlu0 %1303
      %v1313 = vmax.f32 %v1281, %v1290
      %v1314 = vmax.f32 %v1282, %v1292
      %v1315 = vmax.f32 %v1283, %v1294
      %v1316 = vmax.f32 %v1284, %v1296
      %v1317 = vmax.f32 %v1285, %v1298
      %v1318 = vmax.f32 %v1286, %v1300
      %v1319 = vmax.f32 %v1287, %v1302
      %v1320 = vmax.f32 %v1288, %v1304
      %1321 = vrot.lane.b32.xlu0 %v731, 80
      %v1322 = vpop.permute.xlu0 %1321
      %1323 = vrot.lane.b32.xlu0 %v735, 80
      %v1324 = vpop.permute.xlu0 %1323
      %1325 = vrot.lane.b32.xlu0 %v741, 80
      %v1326 = vpop.permute.xlu0 %1325
      %1327 = vrot.lane.b32.xlu0 %v745, 80
      %v1328 = vpop.permute.xlu0 %1327
      %1329 = vrot.lane.b32.xlu0 %v751, 80
      %v1330 = vpop.permute.xlu0 %1329
      %1331 = vrot.lane.b32.xlu0 %v755, 80
      %v1332 = vpop.permute.xlu0 %1331
      %1333 = vrot.lane.b32.xlu0 %v761, 80
      %v1334 = vpop.permute.xlu0 %1333
      %1335 = vrot.lane.b32.xlu0 %v765, 80
      %v1336 = vpop.permute.xlu0 %1335
      %v1345 = vmax.f32 %v1313, %v1322
      %v1346 = vmax.f32 %v1314, %v1324
      %v1347 = vmax.f32 %v1315, %v1326
      %v1348 = vmax.f32 %v1316, %v1328
      %v1349 = vmax.f32 %v1317, %v1330
      %v1350 = vmax.f32 %v1318, %v1332
      %v1351 = vmax.f32 %v1319, %v1334
      %v1352 = vmax.f32 %v1320, %v1336
      %1353 = vrot.lane.b32.xlu0 %v731, 64
      %v1354 = vpop.permute.xlu0 %1353
      %1355 = vrot.lane.b32.xlu0 %v735, 64
      %v1356 = vpop.permute.xlu0 %1355
      %1357 = vrot.lane.b32.xlu0 %v741, 64
      %v1358 = vpop.permute.xlu0 %1357
      %1359 = vrot.lane.b32.xlu0 %v745, 64
      %v1360 = vpop.permute.xlu0 %1359
      %1361 = vrot.lane.b32.xlu0 %v751, 64
      %v1362 = vpop.permute.xlu0 %1361
      %1363 = vrot.lane.b32.xlu0 %v755, 64
      %v1364 = vpop.permute.xlu0 %1363
      %1365 = vrot.lane.b32.xlu0 %v761, 64
      %v1366 = vpop.permute.xlu0 %1365
      %1367 = vrot.lane.b32.xlu0 %v765, 64
      %v1368 = vpop.permute.xlu0 %1367
      %v1377 = vmax.f32 %v1345, %v1354
      %v1378 = vmax.f32 %v1346, %v1356
      %v1379 = vmax.f32 %v1347, %v1358
      %v1380 = vmax.f32 %v1348, %v1360
      %v1381 = vmax.f32 %v1349, %v1362
      %v1382 = vmax.f32 %v1350, %v1364
      %v1383 = vmax.f32 %v1351, %v1366
      %v1384 = vmax.f32 %v1352, %v1368
      %1385 = vrot.lane.b32.xlu0 %v731, 48
      %v1386 = vpop.permute.xlu0 %1385
      %1387 = vrot.lane.b32.xlu0 %v735, 48
      %v1388 = vpop.permute.xlu0 %1387
      %1389 = vrot.lane.b32.xlu0 %v741, 48
      %v1390 = vpop.permute.xlu0 %1389
      %1391 = vrot.lane.b32.xlu0 %v745, 48
      %v1392 = vpop.permute.xlu0 %1391
      %1393 = vrot.lane.b32.xlu0 %v751, 48
      %v1394 = vpop.permute.xlu0 %1393
      %1395 = vrot.lane.b32.xlu0 %v755, 48
      %v1396 = vpop.permute.xlu0 %1395
      %1397 = vrot.lane.b32.xlu0 %v761, 48
      %v1398 = vpop.permute.xlu0 %1397
      %1399 = vrot.lane.b32.xlu0 %v765, 48
      %v1400 = vpop.permute.xlu0 %1399
      %v1409 = vmax.f32 %v1377, %v1386
      %v1410 = vmax.f32 %v1378, %v1388
      %v1411 = vmax.f32 %v1379, %v1390
      %v1412 = vmax.f32 %v1380, %v1392
      %v1413 = vmax.f32 %v1381, %v1394
      %v1414 = vmax.f32 %v1382, %v1396
      %v1415 = vmax.f32 %v1383, %v1398
      %v1416 = vmax.f32 %v1384, %v1400
      %1417 = vrot.lane.b32.xlu0 %v731, 32
      %v1418 = vpop.permute.xlu0 %1417
      %1419 = vrot.lane.b32.xlu0 %v735, 32
      %v1420 = vpop.permute.xlu0 %1419
      %1421 = vrot.lane.b32.xlu0 %v741, 32
      %v1422 = vpop.permute.xlu0 %1421
      %1423 = vrot.lane.b32.xlu0 %v745, 32
      %v1424 = vpop.permute.xlu0 %1423
      %1425 = vrot.lane.b32.xlu0 %v751, 32
      %v1426 = vpop.permute.xlu0 %1425
      %1427 = vrot.lane.b32.xlu0 %v755, 32
      %v1428 = vpop.permute.xlu0 %1427
      %1429 = vrot.lane.b32.xlu0 %v761, 32
      %v1430 = vpop.permute.xlu0 %1429
      %1431 = vrot.lane.b32.xlu0 %v765, 32
      %v1432 = vpop.permute.xlu0 %1431
      %v1441 = vmax.f32 %v1409, %v1418
      %v1442 = vmax.f32 %v1410, %v1420
      %v1443 = vmax.f32 %v1411, %v1422
      %v1444 = vmax.f32 %v1412, %v1424
      %v1445 = vmax.f32 %v1413, %v1426
      %v1446 = vmax.f32 %v1414, %v1428
      %v1447 = vmax.f32 %v1415, %v1430
      %v1448 = vmax.f32 %v1416, %v1432
      %1449 = vrot.lane.b32.xlu0 %v731, 16
      %v1450 = vpop.permute.xlu0 %1449
      %1451 = vrot.lane.b32.xlu0 %v735, 16
      %v1452 = vpop.permute.xlu0 %1451
      %1453 = vrot.lane.b32.xlu0 %v741, 16
      %v1454 = vpop.permute.xlu0 %1453
      %1455 = vrot.lane.b32.xlu0 %v745, 16
      %v1456 = vpop.permute.xlu0 %1455
      %1457 = vrot.lane.b32.xlu0 %v751, 16
      %v1458 = vpop.permute.xlu0 %1457
      %1459 = vrot.lane.b32.xlu0 %v755, 16
      %v1460 = vpop.permute.xlu0 %1459
      %1461 = vrot.lane.b32.xlu0 %v761, 16
      %v1462 = vpop.permute.xlu0 %1461
      %1463 = vrot.lane.b32.xlu0 %v765, 16
      %v1464 = vpop.permute.xlu0 %1463
      %v1473 = vmax.f32 %v1441, %v1450
      %v1474 = vmax.f32 %v1442, %v1452
      %v1475 = vmax.f32 %v1443, %v1454
      %v1476 = vmax.f32 %v1444, %v1456
      %v1477 = vmax.f32 %v1445, %v1458
      %v1478 = vmax.f32 %v1446, %v1460
      %v1479 = vmax.f32 %v1447, %v1462
      %v1480 = vmax.f32 %v1448, %v1464
      %v1481 = vmax.f32 %v1473, %v733
      %v1482 = vmax.f32 %v1474, %v737
      %v1483 = vmax.f32 %v1475, %v743
      %v1484 = vmax.f32 %v1476, %v747
      %v1485 = vmax.f32 %v1477, %v753
      %v1486 = vmax.f32 %v1478, %v757
      %v1487 = vmax.f32 %v1479, %v763
      %v1488 = vmax.f32 %v1480, %v767
      %v1490 = vlaneseq
      %v1491 = vshrl.u32 %v1490, 7
      %v1492 = vsub.s32 0, %v1491
      %v1493 = vrot.slane %v177, %v1492
      %v1495 = vadd.f32 %v1481, %v1493
      %v1496 = vadd.f32 %v1482, %v1493
      %v1497 = vadd.f32 %v1483, %v1493
      %v1498 = vadd.f32 %v1484, %v1493
      %v1499 = vadd.f32 %v1485, %v1493
      %v1500 = vadd.f32 %v1486, %v1493
      %v1501 = vadd.f32 %v1487, %v1493
      %v1502 = vadd.f32 %v1488, %v1493
      %v1503 = vmax.f32 %v1495, 0.0
      %v1504 = vmax.f32 %v1496, 0.0
      %v1505 = vmax.f32 %v1497, 0.0
      %v1506 = vmax.f32 %v1498, 0.0
      %v1507 = vmax.f32 %v1499, 0.0
      %v1508 = vmax.f32 %v1500, 0.0
      %v1509 = vmax.f32 %v1501, 0.0
      %v1510 = vmax.f32 %v1502, 0.0
      %v1511 = vpack.c.bf16 %v1504, %v1503
      %v1512 = vpack.c.bf16 %v1506, %v1505
      %v1513 = vpack.c.bf16 %v1508, %v1507
      %v1514 = vpack.c.bf16 %v1510, %v1509
      %v1519 = vunpack.c.l.b16 %v1511
      %v1520 = vunpack.c.h.b16 %v1511
      %v1521 = vunpack.c.l.b16 %v1512
      %v1522 = vunpack.c.h.b16 %v1512
      %v1523 = vunpack.c.l.b16 %v1513
      %v1524 = vunpack.c.h.b16 %v1513
      %v1525 = vunpack.c.l.b16 %v1514
      %v1526 = vunpack.c.h.b16 %v1514
      %v1527 = vpack.c.b16 %v1519, %v1519
      %v1528 = vpack.c.b16 %v1520, %v1520
      %v1529 = vpack.c.b16 %v1521, %v1521
      %v1530 = vpack.c.b16 %v1522, %v1522
      %v1531 = vpack.c.b16 %v1523, %v1523
      %v1532 = vpack.c.b16 %v1524, %v1524
      %v1533 = vpack.c.b16 %v1525, %v1525
      %v1534 = vpack.c.b16 %v1526, %v1526
      %vm1543 = vcmask 125952
      %1544 = vst.msk [vmem:[%s175] sm:$0xf] %vm1543, %v1527
      %1545 = vst.msk [vmem:[%s175 + $0x4] sm:$0xf] %vm1543, %v1528
      %1546 = vst.msk [vmem:[%s175 + $0x8] sm:$0xf] %vm1543, %v1529
      %1547 = vst.msk [vmem:[%s175 + $0xc] sm:$0xf] %vm1543, %v1530
      %1548 = vst.msk [vmem:[%s175 + $0x10] sm:$0xf] %vm1543, %v1531
      %1549 = vst.msk [vmem:[%s175 + $0x14] sm:$0xf] %vm1543, %v1532
      %1550 = vst.msk [vmem:[%s175 + $0x18] sm:$0xf] %vm1543, %v1533
      %1551 = vst.msk [vmem:[%s175 + $0x1c] sm:$0xf] %vm1543, %v1534
      %v1552 = vld [vmem:[%s169 + $0x40] sm:$0xff]
      %v1553 = vld [vmem:[%s169 + $0x48] sm:$0xff]
      %v1554 = vld [vmem:[%s169 + $0x50] sm:$0xff]
      %v1555 = vld [vmem:[%s169 + $0x58] sm:$0xff]
      %v1556 = vld [vmem:[%s169 + $0x60] sm:$0xff]
      %v1557 = vld [vmem:[%s169 + $0x68] sm:$0xff]
      %v1558 = vld [vmem:[%s169 + $0x70] sm:$0xff]
      %v1559 = vld [vmem:[%s169 + $0x78] sm:$0xff]
      %v1560 = vld [vmem:[%s1] sm:$0xff]
      %v1561 = vld [vmem:[%s1 + $0x8] sm:$0xff]
      %v1562 = vld [vmem:[%s1 + $0x10] sm:$0xff]
      %v1563 = vld [vmem:[%s1 + $0x18] sm:$0xff]
      %v1564 = vld [vmem:[%s1 + $0x20] sm:$0xff]
      %v1565 = vld [vmem:[%s1 + $0x28] sm:$0xff]
      %v1566 = vld [vmem:[%s1 + $0x30] sm:$0xff]
      %v1567 = vld [vmem:[%s1 + $0x38] sm:$0xff]
      %v1568 = vld [vmem:[%s1 + $0x40] sm:$0xff]
      %v1569 = vld [vmem:[%s1 + $0x48] sm:$0xff]
      %v1570 = vld [vmem:[%s1 + $0x50] sm:$0xff]
      %v1571 = vld [vmem:[%s1 + $0x58] sm:$0xff]
      %v1572 = vld [vmem:[%s1 + $0x60] sm:$0xff]
      %v1573 = vld [vmem:[%s1 + $0x68] sm:$0xff]
      %v1574 = vld [vmem:[%s1 + $0x70] sm:$0xff]
      %v1575 = vld [vmem:[%s1 + $0x78] sm:$0xff]
      %v1576 = vld [vmem:[%s1 + $0x80] sm:$0xff]
      %v1577 = vld [vmem:[%s1 + $0x88] sm:$0xff]
      %v1578 = vld [vmem:[%s1 + $0x90] sm:$0xff]
      %v1579 = vld [vmem:[%s1 + $0x98] sm:$0xff]
      %v1580 = vld [vmem:[%s1 + $0xa0] sm:$0xff]
      %v1581 = vld [vmem:[%s1 + $0xa8] sm:$0xff]
      %v1582 = vld [vmem:[%s1 + $0xb0] sm:$0xff]
      %v1583 = vld [vmem:[%s1 + $0xb8] sm:$0xff]
      %v1584 = vld [vmem:[%s1 + $0xc0] sm:$0xff]
      %v1585 = vld [vmem:[%s1 + $0xc8] sm:$0xff]
      %v1586 = vld [vmem:[%s1 + $0xd0] sm:$0xff]
      %v1587 = vld [vmem:[%s1 + $0xd8] sm:$0xff]
      %v1588 = vld [vmem:[%s1 + $0xe0] sm:$0xff]
      %v1589 = vld [vmem:[%s1 + $0xe8] sm:$0xff]
      %v1590 = vld [vmem:[%s1 + $0xf0] sm:$0xff]
      %v1591 = vld [vmem:[%s1 + $0xf8] sm:$0xff]
      %v1592 = vld [vmem:[%s1 + $0x100] sm:$0xff]
      %v1593 = vld [vmem:[%s1 + $0x108] sm:$0xff]
      %v1594 = vld [vmem:[%s1 + $0x110] sm:$0xff]
      %v1595 = vld [vmem:[%s1 + $0x118] sm:$0xff]
      %v1596 = vld [vmem:[%s1 + $0x120] sm:$0xff]
      %v1597 = vld [vmem:[%s1 + $0x128] sm:$0xff]
      %v1598 = vld [vmem:[%s1 + $0x130] sm:$0xff]
      %v1599 = vld [vmem:[%s1 + $0x138] sm:$0xff]
      %v1600 = vld [vmem:[%s1 + $0x140] sm:$0xff]
      %v1601 = vld [vmem:[%s1 + $0x148] sm:$0xff]
      %v1602 = vld [vmem:[%s1 + $0x150] sm:$0xff]
      %v1603 = vld [vmem:[%s1 + $0x158] sm:$0xff]
      %v1604 = vld [vmem:[%s1 + $0x160] sm:$0xff]
      %v1605 = vld [vmem:[%s1 + $0x168] sm:$0xff]
      %v1606 = vld [vmem:[%s1 + $0x170] sm:$0xff]
      %v1607 = vld [vmem:[%s1 + $0x178] sm:$0xff]
      %v1608 = vld [vmem:[%s1 + $0x180] sm:$0xff]
      %v1609 = vld [vmem:[%s1 + $0x188] sm:$0xff]
      %v1610 = vld [vmem:[%s1 + $0x190] sm:$0xff]
      %v1611 = vld [vmem:[%s1 + $0x198] sm:$0xff]
      %v1612 = vld [vmem:[%s1 + $0x1a0] sm:$0xff]
      %v1613 = vld [vmem:[%s1 + $0x1a8] sm:$0xff]
      %v1614 = vld [vmem:[%s1 + $0x1b0] sm:$0xff]
      %v1615 = vld [vmem:[%s1 + $0x1b8] sm:$0xff]
      %v1616 = vld [vmem:[%s1 + $0x1c0] sm:$0xff]
      %v1617 = vld [vmem:[%s1 + $0x1c8] sm:$0xff]
      %v1618 = vld [vmem:[%s1 + $0x1d0] sm:$0xff]
      %v1619 = vld [vmem:[%s1 + $0x1d8] sm:$0xff]
      %v1620 = vld [vmem:[%s1 + $0x1e0] sm:$0x33]
      %v1621 = vld [vmem:[%s1 + $0x1e8] sm:$0x33]
      %v1630 = vunpack.c.l.b16 %v1552
      %v1631 = vunpack.c.h.b16 %v1552
      %v1632 = vunpack.c.l.b16 %v1553
      %v1633 = vunpack.c.h.b16 %v1553
      %v1634 = vunpack.c.l.b16 %v1554
      %v1635 = vunpack.c.h.b16 %v1554
      %v1636 = vunpack.c.l.b16 %v1555
      %v1637 = vunpack.c.h.b16 %v1555
      %v1638 = vunpack.c.l.b16 %v1556
      %v1639 = vunpack.c.h.b16 %v1556
      %v1640 = vunpack.c.l.b16 %v1557
      %v1641 = vunpack.c.h.b16 %v1557
      %v1642 = vunpack.c.l.b16 %v1558
      %v1643 = vunpack.c.h.b16 %v1558
      %v1644 = vunpack.c.l.b16 %v1559
      %v1645 = vunpack.c.h.b16 %v1559
      %v1646 = vpack.c.b16 %v1632, %v1630
      %v1647 = vpack.c.b16 %v1633, %v1631
      %v1648 = vpack.c.b16 %v1636, %v1634
      %v1649 = vpack.c.b16 %v1637, %v1635
      %v1650 = vpack.c.b16 %v1640, %v1638
      %v1651 = vpack.c.b16 %v1641, %v1639
      %v1652 = vpack.c.b16 %v1644, %v1642
      %v1653 = vpack.c.b16 %v1645, %v1643
      %v1720 = vunpack.c.l.b16 %v1560
      %v1721 = vunpack.c.h.b16 %v1560
      %v1722 = vunpack.c.l.b16 %v1561
      %v1723 = vunpack.c.h.b16 %v1561
      %v1724 = vunpack.c.l.b16 %v1562
      %v1725 = vunpack.c.h.b16 %v1562
      %v1726 = vunpack.c.l.b16 %v1563
      %v1727 = vunpack.c.h.b16 %v1563
      %v1728 = vunpack.c.l.b16 %v1564
      %v1729 = vunpack.c.h.b16 %v1564
      %v1730 = vunpack.c.l.b16 %v1565
      %v1731 = vunpack.c.h.b16 %v1565
      %v1732 = vunpack.c.l.b16 %v1566
      %v1733 = vunpack.c.h.b16 %v1566
      %v1734 = vunpack.c.l.b16 %v1567
      %v1735 = vunpack.c.h.b16 %v1567
      %v1736 = vunpack.c.l.b16 %v1568
      %v1737 = vunpack.c.h.b16 %v1568
      %v1738 = vunpack.c.l.b16 %v1569
      %v1739 = vunpack.c.h.b16 %v1569
      %v1740 = vunpack.c.l.b16 %v1570
      %v1741 = vunpack.c.h.b16 %v1570
      %v1742 = vunpack.c.l.b16 %v1571
      %v1743 = vunpack.c.h.b16 %v1571
      %v1744 = vunpack.c.l.b16 %v1572
      %v1745 = vunpack.c.h.b16 %v1572
      %v1746 = vunpack.c.l.b16 %v1573
      %v1747 = vunpack.c.h.b16 %v1573
      %v1748 = vunpack.c.l.b16 %v1574
      %v1749 = vunpack.c.h.b16 %v1574
      %v1750 = vunpack.c.l.b16 %v1575
      %v1751 = vunpack.c.h.b16 %v1575
      %v1752 = vunpack.c.l.b16 %v1576
      %v1753 = vunpack.c.h.b16 %v1576
      %v1754 = vunpack.c.l.b16 %v1577
      %v1755 = vunpack.c.h.b16 %v1577
      %v1756 = vunpack.c.l.b16 %v1578
      %v1757 = vunpack.c.h.b16 %v1578
      %v1758 = vunpack.c.l.b16 %v1579
      %v1759 = vunpack.c.h.b16 %v1579
      %v1760 = vunpack.c.l.b16 %v1580
      %v1761 = vunpack.c.h.b16 %v1580
      %v1762 = vunpack.c.l.b16 %v1581
      %v1763 = vunpack.c.h.b16 %v1581
      %v1764 = vunpack.c.l.b16 %v1582
      %v1765 = vunpack.c.h.b16 %v1582
      %v1766 = vunpack.c.l.b16 %v1583
      %v1767 = vunpack.c.h.b16 %v1583
      %v1768 = vunpack.c.l.b16 %v1584
      %v1769 = vunpack.c.h.b16 %v1584
      %v1770 = vunpack.c.l.b16 %v1585
      %v1771 = vunpack.c.h.b16 %v1585
      %v1772 = vunpack.c.l.b16 %v1586
      %v1773 = vunpack.c.h.b16 %v1586
      %v1774 = vunpack.c.l.b16 %v1587
      %v1775 = vunpack.c.h.b16 %v1587
      %v1776 = vunpack.c.l.b16 %v1588
      %v1777 = vunpack.c.h.b16 %v1588
      %v1778 = vunpack.c.l.b16 %v1589
      %v1779 = vunpack.c.h.b16 %v1589
      %v1780 = vunpack.c.l.b16 %v1590
      %v1781 = vunpack.c.h.b16 %v1590
      %v1782 = vunpack.c.l.b16 %v1591
      %v1783 = vunpack.c.h.b16 %v1591
      %v1784 = vunpack.c.l.b16 %v1592
      %v1785 = vunpack.c.h.b16 %v1592
      %v1786 = vunpack.c.l.b16 %v1593
      %v1787 = vunpack.c.h.b16 %v1593
      %v1788 = vunpack.c.l.b16 %v1594
      %v1789 = vunpack.c.h.b16 %v1594
      %v1790 = vunpack.c.l.b16 %v1595
      %v1791 = vunpack.c.h.b16 %v1595
      %v1792 = vunpack.c.l.b16 %v1596
      %v1793 = vunpack.c.h.b16 %v1596
      %v1794 = vunpack.c.l.b16 %v1597
      %v1795 = vunpack.c.h.b16 %v1597
      %v1796 = vunpack.c.l.b16 %v1598
      %v1797 = vunpack.c.h.b16 %v1598
      %v1798 = vunpack.c.l.b16 %v1599
      %v1799 = vunpack.c.h.b16 %v1599
      %v1800 = vunpack.c.l.b16 %v1600
      %v1801 = vunpack.c.h.b16 %v1600
      %v1802 = vunpack.c.l.b16 %v1601
      %v1803 = vunpack.c.h.b16 %v1601
      %v1804 = vunpack.c.l.b16 %v1602
      %v1805 = vunpack.c.h.b16 %v1602
      %v1806 = vunpack.c.l.b16 %v1603
      %v1807 = vunpack.c.h.b16 %v1603
      %v1808 = vunpack.c.l.b16 %v1604
      %v1809 = vunpack.c.h.b16 %v1604
      %v1810 = vunpack.c.l.b16 %v1605
      %v1811 = vunpack.c.h.b16 %v1605
      %v1812 = vunpack.c.l.b16 %v1606
      %v1813 = vunpack.c.h.b16 %v1606
      %v1814 = vunpack.c.l.b16 %v1607
      %v1815 = vunpack.c.h.b16 %v1607
      %v1816 = vunpack.c.l.b16 %v1608
      %v1817 = vunpack.c.h.b16 %v1608
      %v1818 = vunpack.c.l.b16 %v1609
      %v1819 = vunpack.c.h.b16 %v1609
      %v1820 = vunpack.c.l.b16 %v1610
      %v1821 = vunpack.c.h.b16 %v1610
      %v1822 = vunpack.c.l.b16 %v1611
      %v1823 = vunpack.c.h.b16 %v1611
      %v1824 = vunpack.c.l.b16 %v1612
      %v1825 = vunpack.c.h.b16 %v1612
      %v1826 = vunpack.c.l.b16 %v1613
      %v1827 = vunpack.c.h.b16 %v1613
      %v1828 = vunpack.c.l.b16 %v1614
      %v1829 = vunpack.c.h.b16 %v1614
      %v1830 = vunpack.c.l.b16 %v1615
      %v1831 = vunpack.c.h.b16 %v1615
      %v1832 = vunpack.c.l.b16 %v1616
      %v1833 = vunpack.c.h.b16 %v1616
      %v1834 = vunpack.c.l.b16 %v1617
      %v1835 = vunpack.c.h.b16 %v1617
      %v1836 = vunpack.c.l.b16 %v1618
      %v1837 = vunpack.c.h.b16 %v1618
      %v1838 = vunpack.c.l.b16 %v1619
      %v1839 = vunpack.c.h.b16 %v1619
      %v1840 = vunpack.c.l.b16 %v1620
      %v1841 = vunpack.c.h.b16 %v1620
      %v1842 = vunpack.c.l.b16 %v1621
      %v1843 = vunpack.c.h.b16 %v1621
      %v1844 = vpack.c.b16 %v1724, %v1720
      %v1845 = vpack.c.b16 %v1725, %v1721
      %v1846 = vpack.c.b16 %v1726, %v1722
      %v1847 = vpack.c.b16 %v1727, %v1723
      %v1848 = vpack.c.b16 %v1732, %v1728
      %v1849 = vpack.c.b16 %v1733, %v1729
      %v1850 = vpack.c.b16 %v1734, %v1730
      %v1851 = vpack.c.b16 %v1735, %v1731
      %v1852 = vpack.c.b16 %v1740, %v1736
      %v1853 = vpack.c.b16 %v1741, %v1737
      %v1854 = vpack.c.b16 %v1742, %v1738
      %v1855 = vpack.c.b16 %v1743, %v1739
      %v1856 = vpack.c.b16 %v1748, %v1744
      %v1857 = vpack.c.b16 %v1749, %v1745
      %v1858 = vpack.c.b16 %v1750, %v1746
      %v1859 = vpack.c.b16 %v1751, %v1747
      %v1860 = vpack.c.b16 %v1756, %v1752
      %v1861 = vpack.c.b16 %v1757, %v1753
      %v1862 = vpack.c.b16 %v1758, %v1754
      %v1863 = vpack.c.b16 %v1759, %v1755
      %v1864 = vpack.c.b16 %v1764, %v1760
      %v1865 = vpack.c.b16 %v1765, %v1761
      %v1866 = vpack.c.b16 %v1766, %v1762
      %v1867 = vpack.c.b16 %v1767, %v1763
      %v1868 = vpack.c.b16 %v1772, %v1768
      %v1869 = vpack.c.b16 %v1773, %v1769
      %v1870 = vpack.c.b16 %v1774, %v1770
      %v1871 = vpack.c.b16 %v1775, %v1771
      %v1872 = vpack.c.b16 %v1780, %v1776
      %v1873 = vpack.c.b16 %v1781, %v1777
      %v1874 = vpack.c.b16 %v1782, %v1778
      %v1875 = vpack.c.b16 %v1783, %v1779
      %v1876 = vpack.c.b16 %v1788, %v1784
      %v1877 = vpack.c.b16 %v1789, %v1785
      %v1878 = vpack.c.b16 %v1790, %v1786
      %v1879 = vpack.c.b16 %v1791, %v1787
      %v1880 = vpack.c.b16 %v1796, %v1792
      %v1881 = vpack.c.b16 %v1797, %v1793
      %v1882 = vpack.c.b16 %v1798, %v1794
      %v1883 = vpack.c.b16 %v1799, %v1795
      %v1884 = vpack.c.b16 %v1804, %v1800
      %v1885 = vpack.c.b16 %v1805, %v1801
      %v1886 = vpack.c.b16 %v1806, %v1802
      %v1887 = vpack.c.b16 %v1807, %v1803
      %v1888 = vpack.c.b16 %v1812, %v1808
      %v1889 = vpack.c.b16 %v1813, %v1809
      %v1890 = vpack.c.b16 %v1814, %v1810
      %v1891 = vpack.c.b16 %v1815, %v1811
      %v1892 = vpack.c.b16 %v1820, %v1816
      %v1893 = vpack.c.b16 %v1821, %v1817
      %v1894 = vpack.c.b16 %v1822, %v1818
      %v1895 = vpack.c.b16 %v1823, %v1819
      %v1896 = vpack.c.b16 %v1828, %v1824
      %v1897 = vpack.c.b16 %v1829, %v1825
      %v1898 = vpack.c.b16 %v1830, %v1826
      %v1899 = vpack.c.b16 %v1831, %v1827
      %v1900 = vpack.c.b16 %v1836, %v1832
      %v1901 = vpack.c.b16 %v1837, %v1833
      %v1902 = vpack.c.b16 %v1838, %v1834
      %v1903 = vpack.c.b16 %v1839, %v1835
      %v1904 = vpack.c.b16 %v1840, %v1840
      %v1905 = vpack.c.b16 %v1841, %v1841
      %v1906 = vpack.c.b16 %v1842, %v1842
      %v1907 = vpack.c.b16 %v1843, %v1843
      %v1969 = vsel %vm594, %v1647, 0
      %v1972 = vsel %vm594, %v1649, 0
      %v1975 = vsel %vm594, %v1651, 0
      %v1978 = vsel %vm594, %v1653, 0
      %v1981 = vand.u32 %v1904, %v610
      %v1984 = vand.u32 %v1905, %v610
      %v1987 = vand.u32 %v1906, %v610
      %v1990 = vand.u32 %v1907, %v610
      %1992 = vmatprep.subr.bf16.mxu0 %v1845
      %1993 = vmatpush1.bf16.msra.mxu0 %v1844
      %1994 = vmatprep.subr.bf16.mxu0 %v1849
      %1995 = vmatpush1.bf16.msra.mxu0 %v1848
      %1996 = vmatprep.subr.bf16.mxu0 %v1853
      %1997 = vmatpush1.bf16.msra.mxu0 %v1852
      %1998 = vmatprep.subr.bf16.mxu0 %v1857
      %1999 = vmatpush1.bf16.msra.mxu0 %v1856
      %2000 = vmatprep.subr.bf16.mxu0 %v1861
      %2001 = vmatpush1.bf16.msra.mxu0 %v1860
      %2002 = vmatprep.subr.bf16.mxu0 %v1865
      %2003 = vmatpush1.bf16.msra.mxu0 %v1864
      %2004 = vmatprep.subr.bf16.mxu0 %v1869
      %2005 = vmatpush1.bf16.msra.mxu0 %v1868
      %2006 = vmatprep.subr.bf16.mxu0 %v1873
      %2007 = vmatpush1.bf16.msra.mxu0 %v1872
      %2008 = vmatprep.subr.bf16.mxu0 %v1877
      %2009 = vmatpush1.bf16.msra.mxu0 %v1876
      %2010 = vmatprep.subr.bf16.mxu0 %v1881
      %2011 = vmatpush1.bf16.msra.mxu0 %v1880
      %2012 = vmatprep.subr.bf16.mxu0 %v1885
      %2013 = vmatpush1.bf16.msra.mxu0 %v1884
      %2014 = vmatprep.subr.bf16.mxu0 %v1889
      %2015 = vmatpush1.bf16.msra.mxu0 %v1888
      %2016 = vmatprep.subr.bf16.mxu0 %v1893
      %2017 = vmatpush1.bf16.msra.mxu0 %v1892
      %2018 = vmatprep.subr.bf16.mxu0 %v1897
      %2019 = vmatpush1.bf16.msra.mxu0 %v1896
      %2020 = vmatprep.subr.bf16.mxu0 %v1901
      %2021 = vmatpush1.bf16.msra.mxu0 %v1900
      %2022 = vmatprep.subr.bf16.mxu0 %v1984
      %2023 = vmatpush1.bf16.msra.mxu0 %v1981
      %2024 = vmatprep.mubr.bf16.mxu0 %v1969
      %2025 = vmatmul.mubr.bf16.gmra.mrb[0].mxu0 %v1646
      %v2026 = vpop.f32.mrb[0].mxu0
      %v2027 = vadd.f32 0.0, %v2026
      %v2028 = vpop.f32.mrb[0].mxu0
      %v2029 = vadd.f32 0.0, %v2028
      %v2030 = vpop.f32.mrb[0].mxu0
      %v2031 = vadd.f32 0.0, %v2030
      %v2032 = vpop.f32.mrb[0].mxu0
      %v2033 = vadd.f32 0.0, %v2032
      %2034 = vmatprep.mubr.bf16.mxu0 %v1972
      %2035 = vmatmul.mubr.bf16.gmra.mrb[0].mxu0 %v1648
      %v2036 = vpop.f32.mrb[0].mxu0
      %v2037 = vadd.f32 0.0, %v2036
      %v2038 = vpop.f32.mrb[0].mxu0
      %v2039 = vadd.f32 0.0, %v2038
      %v2040 = vpop.f32.mrb[0].mxu0
      %v2041 = vadd.f32 0.0, %v2040
      %v2042 = vpop.f32.mrb[0].mxu0
      %v2043 = vadd.f32 0.0, %v2042
      %2044 = vmatprep.mubr.bf16.mxu0 %v1975
      %2045 = vmatmul.mubr.bf16.gmra.mrb[0].mxu0 %v1650
      %v2046 = vpop.f32.mrb[0].mxu0
      %v2047 = vadd.f32 0.0, %v2046
      %v2048 = vpop.f32.mrb[0].mxu0
      %v2049 = vadd.f32 0.0, %v2048
      %v2050 = vpop.f32.mrb[0].mxu0
      %v2051 = vadd.f32 0.0, %v2050
      %v2052 = vpop.f32.mrb[0].mxu0
      %v2053 = vadd.f32 0.0, %v2052
      %2054 = vmatprep.mubr.bf16.mxu0 %v1978
      %2055 = vmatmul.mubr.bf16.gmra.mrb[0].mxu0 %v1652
      %v2056 = vpop.f32.mrb[0].mxu0
      %v2057 = vadd.f32 0.0, %v2056
      %v2058 = vpop.f32.mrb[0].mxu0
      %v2059 = vadd.f32 0.0, %v2058
      %v2060 = vpop.f32.mrb[0].mxu0
      %v2061 = vadd.f32 0.0, %v2060
      %v2062 = vpop.f32.mrb[0].mxu0
      %v2063 = vadd.f32 0.0, %v2062
      %2064 = vdwg.mxu0
      %2065 = vmatprep.subr.bf16.mxu0 %v1847
      %2066 = vmatpush1.bf16.msra.mxu0 %v1846
      %2067 = vmatprep.subr.bf16.mxu0 %v1851
      %2068 = vmatpush1.bf16.msra.mxu0 %v1850
      %2069 = vmatprep.subr.bf16.mxu0 %v1855
      %2070 = vmatpush1.bf16.msra.mxu0 %v1854
      %2071 = vmatprep.subr.bf16.mxu0 %v1859
      %2072 = vmatpush1.bf16.msra.mxu0 %v1858
      %2073 = vmatprep.subr.bf16.mxu0 %v1863
      %2074 = vmatpush1.bf16.msra.mxu0 %v1862
      %2075 = vmatprep.subr.bf16.mxu0 %v1867
      %2076 = vmatpush1.bf16.msra.mxu0 %v1866
      %2077 = vmatprep.subr.bf16.mxu0 %v1871
      %2078 = vmatpush1.bf16.msra.mxu0 %v1870
      %2079 = vmatprep.subr.bf16.mxu0 %v1875
      %2080 = vmatpush1.bf16.msra.mxu0 %v1874
      %2081 = vmatprep.subr.bf16.mxu0 %v1879
      %2082 = vmatpush1.bf16.msra.mxu0 %v1878
      %2083 = vmatprep.subr.bf16.mxu0 %v1883
      %2084 = vmatpush1.bf16.msra.mxu0 %v1882
      %2085 = vmatprep.subr.bf16.mxu0 %v1887
      %2086 = vmatpush1.bf16.msra.mxu0 %v1886
      %2087 = vmatprep.subr.bf16.mxu0 %v1891
      %2088 = vmatpush1.bf16.msra.mxu0 %v1890
      %2089 = vmatprep.subr.bf16.mxu0 %v1895
      %2090 = vmatpush1.bf16.msra.mxu0 %v1894
      %2091 = vmatprep.subr.bf16.mxu0 %v1899
      %2092 = vmatpush1.bf16.msra.mxu0 %v1898
      %2093 = vmatprep.subr.bf16.mxu0 %v1903
      %2094 = vmatpush1.bf16.msra.mxu0 %v1902
      %2095 = vmatprep.subr.bf16.mxu0 %v1990
      %2096 = vmatpush1.bf16.msra.mxu0 %v1987
      %2097 = vmatprep.mubr.bf16.mxu0 %v1969
      %2098 = vmatmul.mubr.bf16.gmra.mrb[0].mxu0 %v1646
      %v2099 = vpop.f32.mrb[0].mxu0
      %v2100 = vadd.f32 0.0, %v2099
      %v2101 = vpop.f32.mrb[0].mxu0
      %v2102 = vadd.f32 0.0, %v2101
      %v2103 = vpop.f32.mrb[0].mxu0
      %v2104 = vadd.f32 0.0, %v2103
      %v2105 = vpop.f32.mrb[0].mxu0
      %v2106 = vadd.f32 0.0, %v2105
      %2107 = vmatprep.mubr.bf16.mxu0 %v1972
      %2108 = vmatmul.mubr.bf16.gmra.mrb[0].mxu0 %v1648
      %v2109 = vpop.f32.mrb[0].mxu0
      %v2110 = vadd.f32 0.0, %v2109
      %v2111 = vpop.f32.mrb[0].mxu0
      %v2112 = vadd.f32 0.0, %v2111
      %v2113 = vpop.f32.mrb[0].mxu0
      %v2114 = vadd.f32 0.0, %v2113
      %v2115 = vpop.f32.mrb[0].mxu0
      %v2116 = vadd.f32 0.0, %v2115
      %2117 = vmatprep.mubr.bf16.mxu0 %v1975
      %2118 = vmatmul.mubr.bf16.gmra.mrb[0].mxu0 %v1650
      %v2119 = vpop.f32.mrb[0].mxu0
      %v2120 = vadd.f32 0.0, %v2119
      %v2121 = vpop.f32.mrb[0].mxu0
      %v2122 = vadd.f32 0.0, %v2121
      %v2123 = vpop.f32.mrb[0].mxu0
      %v2124 = vadd.f32 0.0, %v2123
      %v2125 = vpop.f32.mrb[0].mxu0
      %v2126 = vadd.f32 0.0, %v2125
      %2127 = vmatprep.mubr.bf16.mxu0 %v1978
      %2128 = vmatmul.mubr.bf16.gmra.mrb[0].mxu0 %v1652
      %v2129 = vpop.f32.mrb[0].mxu0
      %v2130 = vadd.f32 0.0, %v2129
      %v2131 = vpop.f32.mrb[0].mxu0
      %v2132 = vadd.f32 0.0, %v2131
      %v2133 = vpop.f32.mrb[0].mxu0
      %v2134 = vadd.f32 0.0, %v2133
      %v2135 = vpop.f32.mrb[0].mxu0
      %v2136 = vadd.f32 0.0, %v2135
      %2137 = vdwg.mxu0
      %2146 = vrot.lane.b32.xlu0 %v2027, 112
      %v2147 = vpop.permute.xlu0 %2146
      %2148 = vrot.lane.b32.xlu0 %v2031, 112
      %v2149 = vpop.permute.xlu0 %2148
      %2150 = vrot.lane.b32.xlu0 %v2037, 112
      %v2151 = vpop.permute.xlu0 %2150
      %2152 = vrot.lane.b32.xlu0 %v2041, 112
      %v2153 = vpop.permute.xlu0 %2152
      %2154 = vrot.lane.b32.xlu0 %v2047, 112
      %v2155 = vpop.permute.xlu0 %2154
      %2156 = vrot.lane.b32.xlu0 %v2051, 112
      %v2157 = vpop.permute.xlu0 %2156
      %2158 = vrot.lane.b32.xlu0 %v2057, 112
      %v2159 = vpop.permute.xlu0 %2158
      %2160 = vrot.lane.b32.xlu0 %v2061, 112
      %v2161 = vpop.permute.xlu0 %2160
      %v2170 = vmax.f32 %v2027, %v2147
      %v2171 = vmax.f32 %v2031, %v2149
      %v2172 = vmax.f32 %v2037, %v2151
      %v2173 = vmax.f32 %v2041, %v2153
      %v2174 = vmax.f32 %v2047, %v2155
      %v2175 = vmax.f32 %v2051, %v2157
      %v2176 = vmax.f32 %v2057, %v2159
      %v2177 = vmax.f32 %v2061, %v2161
      %2178 = vrot.lane.b32.xlu0 %v2027, 96
      %v2179 = vpop.permute.xlu0 %2178
      %2180 = vrot.lane.b32.xlu0 %v2031, 96
      %v2181 = vpop.permute.xlu0 %2180
      %2182 = vrot.lane.b32.xlu0 %v2037, 96
      %v2183 = vpop.permute.xlu0 %2182
      %2184 = vrot.lane.b32.xlu0 %v2041, 96
      %v2185 = vpop.permute.xlu0 %2184
      %2186 = vrot.lane.b32.xlu0 %v2047, 96
      %v2187 = vpop.permute.xlu0 %2186
      %2188 = vrot.lane.b32.xlu0 %v2051, 96
      %v2189 = vpop.permute.xlu0 %2188
      %2190 = vrot.lane.b32.xlu0 %v2057, 96
      %v2191 = vpop.permute.xlu0 %2190
      %2192 = vrot.lane.b32.xlu0 %v2061, 96
      %v2193 = vpop.permute.xlu0 %2192
      %v2202 = vmax.f32 %v2170, %v2179
      %v2203 = vmax.f32 %v2171, %v2181
      %v2204 = vmax.f32 %v2172, %v2183
      %v2205 = vmax.f32 %v2173, %v2185
      %v2206 = vmax.f32 %v2174, %v2187
      %v2207 = vmax.f32 %v2175, %v2189
      %v2208 = vmax.f32 %v2176, %v2191
      %v2209 = vmax.f32 %v2177, %v2193
      %2210 = vrot.lane.b32.xlu0 %v2027, 80
      %v2211 = vpop.permute.xlu0 %2210
      %2212 = vrot.lane.b32.xlu0 %v2031, 80
      %v2213 = vpop.permute.xlu0 %2212
      %2214 = vrot.lane.b32.xlu0 %v2037, 80
      %v2215 = vpop.permute.xlu0 %2214
      %2216 = vrot.lane.b32.xlu0 %v2041, 80
      %v2217 = vpop.permute.xlu0 %2216
      %2218 = vrot.lane.b32.xlu0 %v2047, 80
      %v2219 = vpop.permute.xlu0 %2218
      %2220 = vrot.lane.b32.xlu0 %v2051, 80
      %v2221 = vpop.permute.xlu0 %2220
      %2222 = vrot.lane.b32.xlu0 %v2057, 80
      %v2223 = vpop.permute.xlu0 %2222
      %2224 = vrot.lane.b32.xlu0 %v2061, 80
      %v2225 = vpop.permute.xlu0 %2224
      %v2234 = vmax.f32 %v2202, %v2211
      %v2235 = vmax.f32 %v2203, %v2213
      %v2236 = vmax.f32 %v2204, %v2215
      %v2237 = vmax.f32 %v2205, %v2217
      %v2238 = vmax.f32 %v2206, %v2219
      %v2239 = vmax.f32 %v2207, %v2221
      %v2240 = vmax.f32 %v2208, %v2223
      %v2241 = vmax.f32 %v2209, %v2225
      %2242 = vrot.lane.b32.xlu0 %v2027, 64
      %v2243 = vpop.permute.xlu0 %2242
      %2244 = vrot.lane.b32.xlu0 %v2031, 64
      %v2245 = vpop.permute.xlu0 %2244
      %2246 = vrot.lane.b32.xlu0 %v2037, 64
      %v2247 = vpop.permute.xlu0 %2246
      %2248 = vrot.lane.b32.xlu0 %v2041, 64
      %v2249 = vpop.permute.xlu0 %2248
      %2250 = vrot.lane.b32.xlu0 %v2047, 64
      %v2251 = vpop.permute.xlu0 %2250
      %2252 = vrot.lane.b32.xlu0 %v2051, 64
      %v2253 = vpop.permute.xlu0 %2252
      %2254 = vrot.lane.b32.xlu0 %v2057, 64
      %v2255 = vpop.permute.xlu0 %2254
      %2256 = vrot.lane.b32.xlu0 %v2061, 64
      %v2257 = vpop.permute.xlu0 %2256
      %v2266 = vmax.f32 %v2234, %v2243
      %v2267 = vmax.f32 %v2235, %v2245
      %v2268 = vmax.f32 %v2236, %v2247
      %v2269 = vmax.f32 %v2237, %v2249
      %v2270 = vmax.f32 %v2238, %v2251
      %v2271 = vmax.f32 %v2239, %v2253
      %v2272 = vmax.f32 %v2240, %v2255
      %v2273 = vmax.f32 %v2241, %v2257
      %2274 = vrot.lane.b32.xlu0 %v2027, 48
      %v2275 = vpop.permute.xlu0 %2274
      %2276 = vrot.lane.b32.xlu0 %v2031, 48
      %v2277 = vpop.permute.xlu0 %2276
      %2278 = vrot.lane.b32.xlu0 %v2037, 48
      %v2279 = vpop.permute.xlu0 %2278
      %2280 = vrot.lane.b32.xlu0 %v2041, 48
      %v2281 = vpop.permute.xlu0 %2280
      %2282 = vrot.lane.b32.xlu0 %v2047, 48
      %v2283 = vpop.permute.xlu0 %2282
      %2284 = vrot.lane.b32.xlu0 %v2051, 48
      %v2285 = vpop.permute.xlu0 %2284
      %2286 = vrot.lane.b32.xlu0 %v2057, 48
      %v2287 = vpop.permute.xlu0 %2286
      %2288 = vrot.lane.b32.xlu0 %v2061, 48
      %v2289 = vpop.permute.xlu0 %2288
      %v2298 = vmax.f32 %v2266, %v2275
      %v2299 = vmax.f32 %v2267, %v2277
      %v2300 = vmax.f32 %v2268, %v2279
      %v2301 = vmax.f32 %v2269, %v2281
      %v2302 = vmax.f32 %v2270, %v2283
      %v2303 = vmax.f32 %v2271, %v2285
      %v2304 = vmax.f32 %v2272, %v2287
      %v2305 = vmax.f32 %v2273, %v2289
      %2306 = vrot.lane.b32.xlu0 %v2027, 32
      %v2307 = vpop.permute.xlu0 %2306
      %2308 = vrot.lane.b32.xlu0 %v2031, 32
      %v2309 = vpop.permute.xlu0 %2308
      %2310 = vrot.lane.b32.xlu0 %v2037, 32
      %v2311 = vpop.permute.xlu0 %2310
      %2312 = vrot.lane.b32.xlu0 %v2041, 32
      %v2313 = vpop.permute.xlu0 %2312
      %2314 = vrot.lane.b32.xlu0 %v2047, 32
      %v2315 = vpop.permute.xlu0 %2314
      %2316 = vrot.lane.b32.xlu0 %v2051, 32
      %v2317 = vpop.permute.xlu0 %2316
      %2318 = vrot.lane.b32.xlu0 %v2057, 32
      %v2319 = vpop.permute.xlu0 %2318
      %2320 = vrot.lane.b32.xlu0 %v2061, 32
      %v2321 = vpop.permute.xlu0 %2320
      %v2330 = vmax.f32 %v2298, %v2307
      %v2331 = vmax.f32 %v2299, %v2309
      %v2332 = vmax.f32 %v2300, %v2311
      %v2333 = vmax.f32 %v2301, %v2313
      %v2334 = vmax.f32 %v2302, %v2315
      %v2335 = vmax.f32 %v2303, %v2317
      %v2336 = vmax.f32 %v2304, %v2319
      %v2337 = vmax.f32 %v2305, %v2321
      %2338 = vrot.lane.b32.xlu0 %v2027, 16
      %v2339 = vpop.permute.xlu0 %2338
      %2340 = vrot.lane.b32.xlu0 %v2031, 16
      %v2341 = vpop.permute.xlu0 %2340
      %2342 = vrot.lane.b32.xlu0 %v2037, 16
      %v2343 = vpop.permute.xlu0 %2342
      %2344 = vrot.lane.b32.xlu0 %v2041, 16
      %v2345 = vpop.permute.xlu0 %2344
      %2346 = vrot.lane.b32.xlu0 %v2047, 16
      %v2347 = vpop.permute.xlu0 %2346
      %2348 = vrot.lane.b32.xlu0 %v2051, 16
      %v2349 = vpop.permute.xlu0 %2348
      %2350 = vrot.lane.b32.xlu0 %v2057, 16
      %v2351 = vpop.permute.xlu0 %2350
      %2352 = vrot.lane.b32.xlu0 %v2061, 16
      %v2353 = vpop.permute.xlu0 %2352
      %v2362 = vmax.f32 %v2330, %v2339
      %v2363 = vmax.f32 %v2331, %v2341
      %v2364 = vmax.f32 %v2332, %v2343
      %v2365 = vmax.f32 %v2333, %v2345
      %v2366 = vmax.f32 %v2334, %v2347
      %v2367 = vmax.f32 %v2335, %v2349
      %v2368 = vmax.f32 %v2336, %v2351
      %v2369 = vmax.f32 %v2337, %v2353
      %v2370 = vmax.f32 %v2362, %v2029
      %v2371 = vmax.f32 %v2363, %v2033
      %v2372 = vmax.f32 %v2364, %v2039
      %v2373 = vmax.f32 %v2365, %v2043
      %v2374 = vmax.f32 %v2366, %v2049
      %v2375 = vmax.f32 %v2367, %v2053
      %v2376 = vmax.f32 %v2368, %v2059
      %v2377 = vmax.f32 %v2369, %v2063
      %2386 = vrot.lane.b32.xlu0 %v2029, 112
      %v2387 = vpop.permute.xlu0 %2386
      %2388 = vrot.lane.b32.xlu0 %v2033, 112
      %v2389 = vpop.permute.xlu0 %2388
      %2390 = vrot.lane.b32.xlu0 %v2039, 112
      %v2391 = vpop.permute.xlu0 %2390
      %2392 = vrot.lane.b32.xlu0 %v2043, 112
      %v2393 = vpop.permute.xlu0 %2392
      %2394 = vrot.lane.b32.xlu0 %v2049, 112
      %v2395 = vpop.permute.xlu0 %2394
      %2396 = vrot.lane.b32.xlu0 %v2053, 112
      %v2397 = vpop.permute.xlu0 %2396
      %2398 = vrot.lane.b32.xlu0 %v2059, 112
      %v2399 = vpop.permute.xlu0 %2398
      %2400 = vrot.lane.b32.xlu0 %v2063, 112
      %v2401 = vpop.permute.xlu0 %2400
      %v2410 = vmax.f32 %v2370, %v2387
      %v2411 = vmax.f32 %v2371, %v2389
      %v2412 = vmax.f32 %v2372, %v2391
      %v2413 = vmax.f32 %v2373, %v2393
      %v2414 = vmax.f32 %v2374, %v2395
      %v2415 = vmax.f32 %v2375, %v2397
      %v2416 = vmax.f32 %v2376, %v2399
      %v2417 = vmax.f32 %v2377, %v2401
      %2418 = vrot.lane.b32.xlu0 %v2029, 96
      %v2419 = vpop.permute.xlu0 %2418
      %2420 = vrot.lane.b32.xlu0 %v2033, 96
      %v2421 = vpop.permute.xlu0 %2420
      %2422 = vrot.lane.b32.xlu0 %v2039, 96
      %v2423 = vpop.permute.xlu0 %2422
      %2424 = vrot.lane.b32.xlu0 %v2043, 96
      %v2425 = vpop.permute.xlu0 %2424
      %2426 = vrot.lane.b32.xlu0 %v2049, 96
      %v2427 = vpop.permute.xlu0 %2426
      %2428 = vrot.lane.b32.xlu0 %v2053, 96
      %v2429 = vpop.permute.xlu0 %2428
      %2430 = vrot.lane.b32.xlu0 %v2059, 96
      %v2431 = vpop.permute.xlu0 %2430
      %2432 = vrot.lane.b32.xlu0 %v2063, 96
      %v2433 = vpop.permute.xlu0 %2432
      %v2442 = vmax.f32 %v2410, %v2419
      %v2443 = vmax.f32 %v2411, %v2421
      %v2444 = vmax.f32 %v2412, %v2423
      %v2445 = vmax.f32 %v2413, %v2425
      %v2446 = vmax.f32 %v2414, %v2427
      %v2447 = vmax.f32 %v2415, %v2429
      %v2448 = vmax.f32 %v2416, %v2431
      %v2449 = vmax.f32 %v2417, %v2433
      %2450 = vrot.lane.b32.xlu0 %v2029, 80
      %v2451 = vpop.permute.xlu0 %2450
      %2452 = vrot.lane.b32.xlu0 %v2033, 80
      %v2453 = vpop.permute.xlu0 %2452
      %2454 = vrot.lane.b32.xlu0 %v2039, 80
      %v2455 = vpop.permute.xlu0 %2454
      %2456 = vrot.lane.b32.xlu0 %v2043, 80
      %v2457 = vpop.permute.xlu0 %2456
      %2458 = vrot.lane.b32.xlu0 %v2049, 80
      %v2459 = vpop.permute.xlu0 %2458
      %2460 = vrot.lane.b32.xlu0 %v2053, 80
      %v2461 = vpop.permute.xlu0 %2460
      %2462 = vrot.lane.b32.xlu0 %v2059, 80
      %v2463 = vpop.permute.xlu0 %2462
      %2464 = vrot.lane.b32.xlu0 %v2063, 80
      %v2465 = vpop.permute.xlu0 %2464
      %v2474 = vmax.f32 %v2442, %v2451
      %v2475 = vmax.f32 %v2443, %v2453
      %v2476 = vmax.f32 %v2444, %v2455
      %v2477 = vmax.f32 %v2445, %v2457
      %v2478 = vmax.f32 %v2446, %v2459
      %v2479 = vmax.f32 %v2447, %v2461
      %v2480 = vmax.f32 %v2448, %v2463
      %v2481 = vmax.f32 %v2449, %v2465
      %2482 = vrot.lane.b32.xlu0 %v2029, 64
      %v2483 = vpop.permute.xlu0 %2482
      %2484 = vrot.lane.b32.xlu0 %v2033, 64
      %v2485 = vpop.permute.xlu0 %2484
      %2486 = vrot.lane.b32.xlu0 %v2039, 64
      %v2487 = vpop.permute.xlu0 %2486
      %2488 = vrot.lane.b32.xlu0 %v2043, 64
      %v2489 = vpop.permute.xlu0 %2488
      %2490 = vrot.lane.b32.xlu0 %v2049, 64
      %v2491 = vpop.permute.xlu0 %2490
      %2492 = vrot.lane.b32.xlu0 %v2053, 64
      %v2493 = vpop.permute.xlu0 %2492
      %2494 = vrot.lane.b32.xlu0 %v2059, 64
      %v2495 = vpop.permute.xlu0 %2494
      %2496 = vrot.lane.b32.xlu0 %v2063, 64
      %v2497 = vpop.permute.xlu0 %2496
      %v2506 = vmax.f32 %v2474, %v2483
      %v2507 = vmax.f32 %v2475, %v2485
      %v2508 = vmax.f32 %v2476, %v2487
      %v2509 = vmax.f32 %v2477, %v2489
      %v2510 = vmax.f32 %v2478, %v2491
      %v2511 = vmax.f32 %v2479, %v2493
      %v2512 = vmax.f32 %v2480, %v2495
      %v2513 = vmax.f32 %v2481, %v2497
      %2514 = vrot.lane.b32.xlu0 %v2029, 48
      %v2515 = vpop.permute.xlu0 %2514
      %2516 = vrot.lane.b32.xlu0 %v2033, 48
      %v2517 = vpop.permute.xlu0 %2516
      %2518 = vrot.lane.b32.xlu0 %v2039, 48
      %v2519 = vpop.permute.xlu0 %2518
      %2520 = vrot.lane.b32.xlu0 %v2043, 48
      %v2521 = vpop.permute.xlu0 %2520
      %2522 = vrot.lane.b32.xlu0 %v2049, 48
      %v2523 = vpop.permute.xlu0 %2522
      %2524 = vrot.lane.b32.xlu0 %v2053, 48
      %v2525 = vpop.permute.xlu0 %2524
      %2526 = vrot.lane.b32.xlu0 %v2059, 48
      %v2527 = vpop.permute.xlu0 %2526
      %2528 = vrot.lane.b32.xlu0 %v2063, 48
      %v2529 = vpop.permute.xlu0 %2528
      %v2538 = vmax.f32 %v2506, %v2515
      %v2539 = vmax.f32 %v2507, %v2517
      %v2540 = vmax.f32 %v2508, %v2519
      %v2541 = vmax.f32 %v2509, %v2521
      %v2542 = vmax.f32 %v2510, %v2523
      %v2543 = vmax.f32 %v2511, %v2525
      %v2544 = vmax.f32 %v2512, %v2527
      %v2545 = vmax.f32 %v2513, %v2529
      %2546 = vrot.lane.b32.xlu0 %v2029, 32
      %v2547 = vpop.permute.xlu0 %2546
      %2548 = vrot.lane.b32.xlu0 %v2033, 32
      %v2549 = vpop.permute.xlu0 %2548
      %2550 = vrot.lane.b32.xlu0 %v2039, 32
      %v2551 = vpop.permute.xlu0 %2550
      %2552 = vrot.lane.b32.xlu0 %v2043, 32
      %v2553 = vpop.permute.xlu0 %2552
      %2554 = vrot.lane.b32.xlu0 %v2049, 32
      %v2555 = vpop.permute.xlu0 %2554
      %2556 = vrot.lane.b32.xlu0 %v2053, 32
      %v2557 = vpop.permute.xlu0 %2556
      %2558 = vrot.lane.b32.xlu0 %v2059, 32
      %v2559 = vpop.permute.xlu0 %2558
      %2560 = vrot.lane.b32.xlu0 %v2063, 32
      %v2561 = vpop.permute.xlu0 %2560
      %v2570 = vmax.f32 %v2538, %v2547
      %v2571 = vmax.f32 %v2539, %v2549
      %v2572 = vmax.f32 %v2540, %v2551
      %v2573 = vmax.f32 %v2541, %v2553
      %v2574 = vmax.f32 %v2542, %v2555
      %v2575 = vmax.f32 %v2543, %v2557
      %v2576 = vmax.f32 %v2544, %v2559
      %v2577 = vmax.f32 %v2545, %v2561
      %2578 = vrot.lane.b32.xlu0 %v2029, 16
      %v2579 = vpop.permute.xlu0 %2578
      %2580 = vrot.lane.b32.xlu0 %v2033, 16
      %v2581 = vpop.permute.xlu0 %2580
      %2582 = vrot.lane.b32.xlu0 %v2039, 16
      %v2583 = vpop.permute.xlu0 %2582
      %2584 = vrot.lane.b32.xlu0 %v2043, 16
      %v2585 = vpop.permute.xlu0 %2584
      %2586 = vrot.lane.b32.xlu0 %v2049, 16
      %v2587 = vpop.permute.xlu0 %2586
      %2588 = vrot.lane.b32.xlu0 %v2053, 16
      %v2589 = vpop.permute.xlu0 %2588
      %2590 = vrot.lane.b32.xlu0 %v2059, 16
      %v2591 = vpop.permute.xlu0 %2590
      %2592 = vrot.lane.b32.xlu0 %v2063, 16
      %v2593 = vpop.permute.xlu0 %2592
      %v2602 = vmax.f32 %v2570, %v2579
      %v2603 = vmax.f32 %v2571, %v2581
      %v2604 = vmax.f32 %v2572, %v2583
      %v2605 = vmax.f32 %v2573, %v2585
      %v2606 = vmax.f32 %v2574, %v2587
      %v2607 = vmax.f32 %v2575, %v2589
      %v2608 = vmax.f32 %v2576, %v2591
      %v2609 = vmax.f32 %v2577, %v2593
      %v2610 = vmax.f32 %v2602, %v2100
      %v2611 = vmax.f32 %v2603, %v2104
      %v2612 = vmax.f32 %v2604, %v2110
      %v2613 = vmax.f32 %v2605, %v2114
      %v2614 = vmax.f32 %v2606, %v2120
      %v2615 = vmax.f32 %v2607, %v2124
      %v2616 = vmax.f32 %v2608, %v2130
      %v2617 = vmax.f32 %v2609, %v2134
      %2626 = vrot.lane.b32.xlu0 %v2100, 112
      %v2627 = vpop.permute.xlu0 %2626
      %2628 = vrot.lane.b32.xlu0 %v2104, 112
      %v2629 = vpop.permute.xlu0 %2628
      %2630 = vrot.lane.b32.xlu0 %v2110, 112
      %v2631 = vpop.permute.xlu0 %2630
      %2632 = vrot.lane.b32.xlu0 %v2114, 112
      %v2633 = vpop.permute.xlu0 %2632
      %2634 = vrot.lane.b32.xlu0 %v2120, 112
      %v2635 = vpop.permute.xlu0 %2634
      %2636 = vrot.lane.b32.xlu0 %v2124, 112
      %v2637 = vpop.permute.xlu0 %2636
      %2638 = vrot.lane.b32.xlu0 %v2130, 112
      %v2639 = vpop.permute.xlu0 %2638
      %2640 = vrot.lane.b32.xlu0 %v2134, 112
      %v2641 = vpop.permute.xlu0 %2640
      %v2650 = vmax.f32 %v2610, %v2627
      %v2651 = vmax.f32 %v2611, %v2629
      %v2652 = vmax.f32 %v2612, %v2631
      %v2653 = vmax.f32 %v2613, %v2633
      %v2654 = vmax.f32 %v2614, %v2635
      %v2655 = vmax.f32 %v2615, %v2637
      %v2656 = vmax.f32 %v2616, %v2639
      %v2657 = vmax.f32 %v2617, %v2641
      %2658 = vrot.lane.b32.xlu0 %v2100, 96
      %v2659 = vpop.permute.xlu0 %2658
      %2660 = vrot.lane.b32.xlu0 %v2104, 96
      %v2661 = vpop.permute.xlu0 %2660
      %2662 = vrot.lane.b32.xlu0 %v2110, 96
      %v2663 = vpop.permute.xlu0 %2662
      %2664 = vrot.lane.b32.xlu0 %v2114, 96
      %v2665 = vpop.permute.xlu0 %2664
      %2666 = vrot.lane.b32.xlu0 %v2120, 96
      %v2667 = vpop.permute.xlu0 %2666
      %2668 = vrot.lane.b32.xlu0 %v2124, 96
      %v2669 = vpop.permute.xlu0 %2668
      %2670 = vrot.lane.b32.xlu0 %v2130, 96
      %v2671 = vpop.permute.xlu0 %2670
      %2672 = vrot.lane.b32.xlu0 %v2134, 96
      %v2673 = vpop.permute.xlu0 %2672
      %v2682 = vmax.f32 %v2650, %v2659
      %v2683 = vmax.f32 %v2651, %v2661
      %v2684 = vmax.f32 %v2652, %v2663
      %v2685 = vmax.f32 %v2653, %v2665
      %v2686 = vmax.f32 %v2654, %v2667
      %v2687 = vmax.f32 %v2655, %v2669
      %v2688 = vmax.f32 %v2656, %v2671
      %v2689 = vmax.f32 %v2657, %v2673
      %2690 = vrot.lane.b32.xlu0 %v2100, 80
      %v2691 = vpop.permute.xlu0 %2690
      %2692 = vrot.lane.b32.xlu0 %v2104, 80
      %v2693 = vpop.permute.xlu0 %2692
      %2694 = vrot.lane.b32.xlu0 %v2110, 80
      %v2695 = vpop.permute.xlu0 %2694
      %2696 = vrot.lane.b32.xlu0 %v2114, 80
      %v2697 = vpop.permute.xlu0 %2696
      %2698 = vrot.lane.b32.xlu0 %v2120, 80
      %v2699 = vpop.permute.xlu0 %2698
      %2700 = vrot.lane.b32.xlu0 %v2124, 80
      %v2701 = vpop.permute.xlu0 %2700
      %2702 = vrot.lane.b32.xlu0 %v2130, 80
      %v2703 = vpop.permute.xlu0 %2702
      %2704 = vrot.lane.b32.xlu0 %v2134, 80
      %v2705 = vpop.permute.xlu0 %2704
      %v2714 = vmax.f32 %v2682, %v2691
      %v2715 = vmax.f32 %v2683, %v2693
      %v2716 = vmax.f32 %v2684, %v2695
      %v2717 = vmax.f32 %v2685, %v2697
      %v2718 = vmax.f32 %v2686, %v2699
      %v2719 = vmax.f32 %v2687, %v2701
      %v2720 = vmax.f32 %v2688, %v2703
      %v2721 = vmax.f32 %v2689, %v2705
      %2722 = vrot.lane.b32.xlu0 %v2100, 64
      %v2723 = vpop.permute.xlu0 %2722
      %2724 = vrot.lane.b32.xlu0 %v2104, 64
      %v2725 = vpop.permute.xlu0 %2724
      %2726 = vrot.lane.b32.xlu0 %v2110, 64
      %v2727 = vpop.permute.xlu0 %2726
      %2728 = vrot.lane.b32.xlu0 %v2114, 64
      %v2729 = vpop.permute.xlu0 %2728
      %2730 = vrot.lane.b32.xlu0 %v2120, 64
      %v2731 = vpop.permute.xlu0 %2730
      %2732 = vrot.lane.b32.xlu0 %v2124, 64
      %v2733 = vpop.permute.xlu0 %2732
      %2734 = vrot.lane.b32.xlu0 %v2130, 64
      %v2735 = vpop.permute.xlu0 %2734
      %2736 = vrot.lane.b32.xlu0 %v2134, 64
      %v2737 = vpop.permute.xlu0 %2736
      %v2746 = vmax.f32 %v2714, %v2723
      %v2747 = vmax.f32 %v2715, %v2725
      %v2748 = vmax.f32 %v2716, %v2727
      %v2749 = vmax.f32 %v2717, %v2729
      %v2750 = vmax.f32 %v2718, %v2731
      %v2751 = vmax.f32 %v2719, %v2733
      %v2752 = vmax.f32 %v2720, %v2735
      %v2753 = vmax.f32 %v2721, %v2737
      %2754 = vrot.lane.b32.xlu0 %v2100, 48
      %v2755 = vpop.permute.xlu0 %2754
      %2756 = vrot.lane.b32.xlu0 %v2104, 48
      %v2757 = vpop.permute.xlu0 %2756
      %2758 = vrot.lane.b32.xlu0 %v2110, 48
      %v2759 = vpop.permute.xlu0 %2758
      %2760 = vrot.lane.b32.xlu0 %v2114, 48
      %v2761 = vpop.permute.xlu0 %2760
      %2762 = vrot.lane.b32.xlu0 %v2120, 48
      %v2763 = vpop.permute.xlu0 %2762
      %2764 = vrot.lane.b32.xlu0 %v2124, 48
      %v2765 = vpop.permute.xlu0 %2764
      %2766 = vrot.lane.b32.xlu0 %v2130, 48
      %v2767 = vpop.permute.xlu0 %2766
      %2768 = vrot.lane.b32.xlu0 %v2134, 48
      %v2769 = vpop.permute.xlu0 %2768
      %v2778 = vmax.f32 %v2746, %v2755
      %v2779 = vmax.f32 %v2747, %v2757
      %v2780 = vmax.f32 %v2748, %v2759
      %v2781 = vmax.f32 %v2749, %v2761
      %v2782 = vmax.f32 %v2750, %v2763
      %v2783 = vmax.f32 %v2751, %v2765
      %v2784 = vmax.f32 %v2752, %v2767
      %v2785 = vmax.f32 %v2753, %v2769
      %2786 = vrot.lane.b32.xlu0 %v2100, 32
      %v2787 = vpop.permute.xlu0 %2786
      %2788 = vrot.lane.b32.xlu0 %v2104, 32
      %v2789 = vpop.permute.xlu0 %2788
      %2790 = vrot.lane.b32.xlu0 %v2110, 32
      %v2791 = vpop.permute.xlu0 %2790
      %2792 = vrot.lane.b32.xlu0 %v2114, 32
      %v2793 = vpop.permute.xlu0 %2792
      %2794 = vrot.lane.b32.xlu0 %v2120, 32
      %v2795 = vpop.permute.xlu0 %2794
      %2796 = vrot.lane.b32.xlu0 %v2124, 32
      %v2797 = vpop.permute.xlu0 %2796
      %2798 = vrot.lane.b32.xlu0 %v2130, 32
      %v2799 = vpop.permute.xlu0 %2798
      %2800 = vrot.lane.b32.xlu0 %v2134, 32
      %v2801 = vpop.permute.xlu0 %2800
      %v2810 = vmax.f32 %v2778, %v2787
      %v2811 = vmax.f32 %v2779, %v2789
      %v2812 = vmax.f32 %v2780, %v2791
      %v2813 = vmax.f32 %v2781, %v2793
      %v2814 = vmax.f32 %v2782, %v2795
      %v2815 = vmax.f32 %v2783, %v2797
      %v2816 = vmax.f32 %v2784, %v2799
      %v2817 = vmax.f32 %v2785, %v2801
      %2818 = vrot.lane.b32.xlu0 %v2100, 16
      %v2819 = vpop.permute.xlu0 %2818
      %2820 = vrot.lane.b32.xlu0 %v2104, 16
      %v2821 = vpop.permute.xlu0 %2820
      %2822 = vrot.lane.b32.xlu0 %v2110, 16
      %v2823 = vpop.permute.xlu0 %2822
      %2824 = vrot.lane.b32.xlu0 %v2114, 16
      %v2825 = vpop.permute.xlu0 %2824
      %2826 = vrot.lane.b32.xlu0 %v2120, 16
      %v2827 = vpop.permute.xlu0 %2826
      %2828 = vrot.lane.b32.xlu0 %v2124, 16
      %v2829 = vpop.permute.xlu0 %2828
      %2830 = vrot.lane.b32.xlu0 %v2130, 16
      %v2831 = vpop.permute.xlu0 %2830
      %2832 = vrot.lane.b32.xlu0 %v2134, 16
      %v2833 = vpop.permute.xlu0 %2832
      %v2842 = vmax.f32 %v2810, %v2819
      %v2843 = vmax.f32 %v2811, %v2821
      %v2844 = vmax.f32 %v2812, %v2823
      %v2845 = vmax.f32 %v2813, %v2825
      %v2846 = vmax.f32 %v2814, %v2827
      %v2847 = vmax.f32 %v2815, %v2829
      %v2848 = vmax.f32 %v2816, %v2831
      %v2849 = vmax.f32 %v2817, %v2833
      %v2850 = vmax.f32 %v2842, %v2102
      %v2851 = vmax.f32 %v2843, %v2106
      %v2852 = vmax.f32 %v2844, %v2112
      %v2853 = vmax.f32 %v2845, %v2116
      %v2854 = vmax.f32 %v2846, %v2122
      %v2855 = vmax.f32 %v2847, %v2126
      %v2856 = vmax.f32 %v2848, %v2132
      %v2857 = vmax.f32 %v2849, %v2136
      %v2858 = vadd.f32 %v2850, %v1493
      %v2859 = vadd.f32 %v2851, %v1493
      %v2860 = vadd.f32 %v2852, %v1493
      %v2861 = vadd.f32 %v2853, %v1493
      %v2862 = vadd.f32 %v2854, %v1493
      %v2863 = vadd.f32 %v2855, %v1493
      %v2864 = vadd.f32 %v2856, %v1493
      %v2865 = vadd.f32 %v2857, %v1493
      %v2866 = vmax.f32 %v2858, 0.0
      %v2867 = vmax.f32 %v2859, 0.0
      %v2868 = vmax.f32 %v2860, 0.0
      %v2869 = vmax.f32 %v2861, 0.0
      %v2870 = vmax.f32 %v2862, 0.0
      %v2871 = vmax.f32 %v2863, 0.0
      %v2872 = vmax.f32 %v2864, 0.0
      %v2873 = vmax.f32 %v2865, 0.0
      %v2874 = vpack.c.bf16 %v2867, %v2866
      %v2875 = vpack.c.bf16 %v2869, %v2868
      %v2876 = vpack.c.bf16 %v2871, %v2870
      %v2877 = vpack.c.bf16 %v2873, %v2872
      %v2882 = vunpack.c.l.b16 %v2874
      %v2883 = vunpack.c.h.b16 %v2874
      %v2884 = vunpack.c.l.b16 %v2875
      %v2885 = vunpack.c.h.b16 %v2875
      %v2886 = vunpack.c.l.b16 %v2876
      %v2887 = vunpack.c.h.b16 %v2876
      %v2888 = vunpack.c.l.b16 %v2877
      %v2889 = vunpack.c.h.b16 %v2877
      %v2890 = vpack.c.b16 %v2882, %v2882
      %v2891 = vpack.c.b16 %v2883, %v2883
      %v2892 = vpack.c.b16 %v2884, %v2884
      %v2893 = vpack.c.b16 %v2885, %v2885
      %v2894 = vpack.c.b16 %v2886, %v2886
      %v2895 = vpack.c.b16 %v2887, %v2887
      %v2896 = vpack.c.b16 %v2888, %v2888
      %v2897 = vpack.c.b16 %v2889, %v2889
      %2906 = vst.msk [vmem:[%s175 + $0x20] sm:$0xf] %vm1543, %v2890
      %2907 = vst.msk [vmem:[%s175 + $0x24] sm:$0xf] %vm1543, %v2891
      %2908 = vst.msk [vmem:[%s175 + $0x28] sm:$0xf] %vm1543, %v2892
      %2909 = vst.msk [vmem:[%s175 + $0x2c] sm:$0xf] %vm1543, %v2893
      %2910 = vst.msk [vmem:[%s175 + $0x30] sm:$0xf] %vm1543, %v2894
      %2911 = vst.msk [vmem:[%s175 + $0x34] sm:$0xf] %vm1543, %v2895
      %2912 = vst.msk [vmem:[%s175 + $0x38] sm:$0xf] %vm1543, %v2896
      %2913 = vst.msk [vmem:[%s175 + $0x3c] sm:$0xf] %vm1543, %v2897
      %v2914 = vld [vmem:[%s169 + $0x80] sm:$0xff]
      %v2915 = vld [vmem:[%s169 + $0x88] sm:$0xff]
      %v2916 = vld [vmem:[%s169 + $0x90] sm:$0xff]
      %v2917 = vld [vmem:[%s169 + $0x98] sm:$0xff]
      %v2918 = vld [vmem:[%s169 + $0xa0] sm:$0xff]
      %v2919 = vld [vmem:[%s169 + $0xa8] sm:$0xff]
      %v2920 = vld [vmem:[%s169 + $0xb0] sm:$0xff]
      %v2921 = vld [vmem:[%s169 + $0xb8] sm:$0xff]
      %v2922 = vld [vmem:[%s1] sm:$0xff]
      %v2923 = vld [vmem:[%s1 + $0x8] sm:$0xff]
      %v2924 = vld [vmem:[%s1 + $0x10] sm:$0xff]
      %v2925 = vld [vmem:[%s1 + $0x18] sm:$0xff]
      %v2926 = vld [vmem:[%s1 + $0x20] sm:$0xff]
      %v2927 = vld [vmem:[%s1 + $0x28] sm:$0xff]
      %v2928 = vld [vmem:[%s1 + $0x30] sm:$0xff]
      %v2929 = vld [vmem:[%s1 + $0x38] sm:$0xff]
      %v2930 = vld [vmem:[%s1 + $0x40] sm:$0xff]
      %v2931 = vld [vmem:[%s1 + $0x48] sm:$0xff]
      %v2932 = vld [vmem:[%s1 + $0x50] sm:$0xff]
      %v2933 = vld [vmem:[%s1 + $0x58] sm:$0xff]
      %v2934 = vld [vmem:[%s1 + $0x60] sm:$0xff]
      %v2935 = vld [vmem:[%s1 + $0x68] sm:$0xff]
      %v2936 = vld [vmem:[%s1 + $0x70] sm:$0xff]
      %v2937 = vld [vmem:[%s1 + $0x78] sm:$0xff]
      %v2938 = vld [vmem:[%s1 + $0x80] sm:$0xff]
      %v2939 = vld [vmem:[%s1 + $0x88] sm:$0xff]
      %v2940 = vld [vmem:[%s1 + $0x90] sm:$0xff]
      %v2941 = vld [vmem:[%s1 + $0x98] sm:$0xff]
      %v2942 = vld [vmem:[%s1 + $0xa0] sm:$0xff]
      %v2943 = vld [vmem:[%s1 + $0xa8] sm:$0xff]
      %v2944 = vld [vmem:[%s1 + $0xb0] sm:$0xff]
      %v2945 = vld [vmem:[%s1 + $0xb8] sm:$0xff]
      %v2946 = vld [vmem:[%s1 + $0xc0] sm:$0xff]
      %v2947 = vld [vmem:[%s1 + $0xc8] sm:$0xff]
      %v2948 = vld [vmem:[%s1 + $0xd0] sm:$0xff]
      %v2949 = vld [vmem:[%s1 + $0xd8] sm:$0xff]
      %v2950 = vld [vmem:[%s1 + $0xe0] sm:$0xff]
      %v2951 = vld [vmem:[%s1 + $0xe8] sm:$0xff]
      %v2952 = vld [vmem:[%s1 + $0xf0] sm:$0xff]
      %v2953 = vld [vmem:[%s1 + $0xf8] sm:$0xff]
      %v2954 = vld [vmem:[%s1 + $0x100] sm:$0xff]
      %v2955 = vld [vmem:[%s1 + $0x108] sm:$0xff]
      %v2956 = vld [vmem:[%s1 + $0x110] sm:$0xff]
      %v2957 = vld [vmem:[%s1 + $0x118] sm:$0xff]
      %v2958 = vld [vmem:[%s1 + $0x120] sm:$0xff]
      %v2959 = vld [vmem:[%s1 + $0x128] sm:$0xff]
      %v2960 = vld [vmem:[%s1 + $0x130] sm:$0xff]
      %v2961 = vld [vmem:[%s1 + $0x138] sm:$0xff]
      %v2962 = vld [vmem:[%s1 + $0x140] sm:$0xff]
      %v2963 = vld [vmem:[%s1 + $0x148] sm:$0xff]
      %v2964 = vld [vmem:[%s1 + $0x150] sm:$0xff]
      %v2965 = vld [vmem:[%s1 + $0x158] sm:$0xff]
      %v2966 = vld [vmem:[%s1 + $0x160] sm:$0xff]
      %v2967 = vld [vmem:[%s1 + $0x168] sm:$0xff]
      %v2968 = vld [vmem:[%s1 + $0x170] sm:$0xff]
      %v2969 = vld [vmem:[%s1 + $0x178] sm:$0xff]
      %v2970 = vld [vmem:[%s1 + $0x180] sm:$0xff]
      %v2971 = vld [vmem:[%s1 + $0x188] sm:$0xff]
      %v2972 = vld [vmem:[%s1 + $0x190] sm:$0xff]
      %v2973 = vld [vmem:[%s1 + $0x198] sm:$0xff]
      %v2974 = vld [vmem:[%s1 + $0x1a0] sm:$0xff]
      %v2975 = vld [vmem:[%s1 + $0x1a8] sm:$0xff]
      %v2976 = vld [vmem:[%s1 + $0x1b0] sm:$0xff]
      %v2977 = vld [vmem:[%s1 + $0x1b8] sm:$0xff]
      %v2978 = vld [vmem:[%s1 + $0x1c0] sm:$0xff]
      %v2979 = vld [vmem:[%s1 + $0x1c8] sm:$0xff]
      %v2980 = vld [vmem:[%s1 + $0x1d0] sm:$0xff]
      %v2981 = vld [vmem:[%s1 + $0x1d8] sm:$0xff]
      %v2982 = vld [vmem:[%s1 + $0x1e0] sm:$0x33]
      %v2983 = vld [vmem:[%s1 + $0x1e8] sm:$0x33]
      %v2992 = vunpack.c.l.b16 %v2914
      %v2993 = vunpack.c.h.b16 %v2914
      %v2994 = vunpack.c.l.b16 %v2915
      %v2995 = vunpack.c.h.b16 %v2915
      %v2996 = vunpack.c.l.b16 %v2916
      %v2997 = vunpack.c.h.b16 %v2916
      %v2998 = vunpack.c.l.b16 %v2917
      %v2999 = vunpack.c.h.b16 %v2917
      %v3000 = vunpack.c.l.b16 %v2918
      %v3001 = vunpack.c.h.b16 %v2918
      %v3002 = vunpack.c.l.b16 %v2919
      %v3003 = vunpack.c.h.b16 %v2919
      %v3004 = vunpack.c.l.b16 %v2920
      %v3005 = vunpack.c.h.b16 %v2920
      %v3006 = vunpack.c.l.b16 %v2921
      %v3007 = vunpack.c.h.b16 %v2921
      %v3008 = vpack.c.b16 %v2994, %v2992
      %v3009 = vpack.c.b16 %v2995, %v2993
      %v3010 = vpack.c.b16 %v2998, %v2996
      %v3011 = vpack.c.b16 %v2999, %v2997
      %v3012 = vpack.c.b16 %v3002, %v3000
      %v3013 = vpack.c.b16 %v3003, %v3001
      %v3014 = vpack.c.b16 %v3006, %v3004
      %v3015 = vpack.c.b16 %v3007, %v3005
      %v3082 = vunpack.c.l.b16 %v2922
      %v3083 = vunpack.c.h.b16 %v2922
      %v3084 = vunpack.c.l.b16 %v2923
      %v3085 = vunpack.c.h.b16 %v2923
      %v3086 = vunpack.c.l.b16 %v2924
      %v3087 = vunpack.c.h.b16 %v2924
      %v3088 = vunpack.c.l.b16 %v2925
      %v3089 = vunpack.c.h.b16 %v2925
      %v3090 = vunpack.c.l.b16 %v2926
      %v3091 = vunpack.c.h.b16 %v2926
      %v3092 = vunpack.c.l.b16 %v2927
      %v3093 = vunpack.c.h.b16 %v2927
      %v3094 = vunpack.c.l.b16 %v2928
      %v3095 = vunpack.c.h.b16 %v2928
      %v3096 = vunpack.c.l.b16 %v2929
      %v3097 = vunpack.c.h.b16 %v2929
      %v3098 = vunpack.c.l.b16 %v2930
      %v3099 = vunpack.c.h.b16 %v2930
      %v3100 = vunpack.c.l.b16 %v2931
      %v3101 = vunpack.c.h.b16 %v2931
      %v3102 = vunpack.c.l.b16 %v2932
      %v3103 = vunpack.c.h.b16 %v2932
      %v3104 = vunpack.c.l.b16 %v2933
      %v3105 = vunpack.c.h.b16 %v2933
      %v3106 = vunpack.c.l.b16 %v2934
      %v3107 = vunpack.c.h.b16 %v2934
      %v3108 = vunpack.c.l.b16 %v2935
      %v3109 = vunpack.c.h.b16 %v2935
      %v3110 = vunpack.c.l.b16 %v2936
      %v3111 = vunpack.c.h.b16 %v2936
      %v3112 = vunpack.c.l.b16 %v2937
      %v3113 = vunpack.c.h.b16 %v2937
      %v3114 = vunpack.c.l.b16 %v2938
      %v3115 = vunpack.c.h.b16 %v2938
      %v3116 = vunpack.c.l.b16 %v2939
      %v3117 = vunpack.c.h.b16 %v2939
      %v3118 = vunpack.c.l.b16 %v2940
      %v3119 = vunpack.c.h.b16 %v2940
      %v3120 = vunpack.c.l.b16 %v2941
      %v3121 = vunpack.c.h.b16 %v2941
      %v3122 = vunpack.c.l.b16 %v2942
      %v3123 = vunpack.c.h.b16 %v2942
      %v3124 = vunpack.c.l.b16 %v2943
      %v3125 = vunpack.c.h.b16 %v2943
      %v3126 = vunpack.c.l.b16 %v2944
      %v3127 = vunpack.c.h.b16 %v2944
      %v3128 = vunpack.c.l.b16 %v2945
      %v3129 = vunpack.c.h.b16 %v2945
      %v3130 = vunpack.c.l.b16 %v2946
      %v3131 = vunpack.c.h.b16 %v2946
      %v3132 = vunpack.c.l.b16 %v2947
      %v3133 = vunpack.c.h.b16 %v2947
      %v3134 = vunpack.c.l.b16 %v2948
      %v3135 = vunpack.c.h.b16 %v2948
      %v3136 = vunpack.c.l.b16 %v2949
      %v3137 = vunpack.c.h.b16 %v2949
      %v3138 = vunpack.c.l.b16 %v2950
      %v3139 = vunpack.c.h.b16 %v2950
      %v3140 = vunpack.c.l.b16 %v2951
      %v3141 = vunpack.c.h.b16 %v2951
      %v3142 = vunpack.c.l.b16 %v2952
      %v3143 = vunpack.c.h.b16 %v2952
      %v3144 = vunpack.c.l.b16 %v2953
      %v3145 = vunpack.c.h.b16 %v2953
      %v3146 = vunpack.c.l.b16 %v2954
      %v3147 = vunpack.c.h.b16 %v2954
      %v3148 = vunpack.c.l.b16 %v2955
      %v3149 = vunpack.c.h.b16 %v2955
      %v3150 = vunpack.c.l.b16 %v2956
      %v3151 = vunpack.c.h.b16 %v2956
      %v3152 = vunpack.c.l.b16 %v2957
      %v3153 = vunpack.c.h.b16 %v2957
      %v3154 = vunpack.c.l.b16 %v2958
      %v3155 = vunpack.c.h.b16 %v2958
      %v3156 = vunpack.c.l.b16 %v2959
      %v3157 = vunpack.c.h.b16 %v2959
      %v3158 = vunpack.c.l.b16 %v2960
      %v3159 = vunpack.c.h.b16 %v2960
      %v3160 = vunpack.c.l.b16 %v2961
      %v3161 = vunpack.c.h.b16 %v2961
      %v3162 = vunpack.c.l.b16 %v2962
      %v3163 = vunpack.c.h.b16 %v2962
      %v3164 = vunpack.c.l.b16 %v2963
      %v3165 = vunpack.c.h.b16 %v2963
      %v3166 = vunpack.c.l.b16 %v2964
      %v3167 = vunpack.c.h.b16 %v2964
      %v3168 = vunpack.c.l.b16 %v2965
      %v3169 = vunpack.c.h.b16 %v2965
      %v3170 = vunpack.c.l.b16 %v2966
      %v3171 = vunpack.c.h.b16 %v2966
      %v3172 = vunpack.c.l.b16 %v2967
      %v3173 = vunpack.c.h.b16 %v2967
      %v3174 = vunpack.c.l.b16 %v2968
      %v3175 = vunpack.c.h.b16 %v2968
      %v3176 = vunpack.c.l.b16 %v2969
      %v3177 = vunpack.c.h.b16 %v2969
      %v3178 = vunpack.c.l.b16 %v2970
      %v3179 = vunpack.c.h.b16 %v2970
      %v3180 = vunpack.c.l.b16 %v2971
      %v3181 = vunpack.c.h.b16 %v2971
      %v3182 = vunpack.c.l.b16 %v2972
      %v3183 = vunpack.c.h.b16 %v2972
      %v3184 = vunpack.c.l.b16 %v2973
      %v3185 = vunpack.c.h.b16 %v2973
      %v3186 = vunpack.c.l.b16 %v2974
      %v3187 = vunpack.c.h.b16 %v2974
      %v3188 = vunpack.c.l.b16 %v2975
      %v3189 = vunpack.c.h.b16 %v2975
      %v3190 = vunpack.c.l.b16 %v2976
      %v3191 = vunpack.c.h.b16 %v2976
      %v3192 = vunpack.c.l.b16 %v2977
      %v3193 = vunpack.c.h.b16 %v2977
      %v3194 = vunpack.c.l.b16 %v2978
      %v3195 = vunpack.c.h.b16 %v2978
      %v3196 = vunpack.c.l.b16 %v2979
      %v3197 = vunpack.c.h.b16 %v2979
      %v3198 = vunpack.c.l.b16 %v2980
      %v3199 = vunpack.c.h.b16 %v2980
      %v3200 = vunpack.c.l.b16 %v2981
      %v3201 = vunpack.c.h.b16 %v2981
      %v3202 = vunpack.c.l.b16 %v2982
      %v3203 = vunpack.c.h.b16 %v2982
      %v3204 = vunpack.c.l.b16 %v2983
      %v3205 = vunpack.c.h.b16 %v2983
      %v3206 = vpack.c.b16 %v3086, %v3082
      %v3207 = vpack.c.b16 %v3087, %v3083
      %v3208 = vpack.c.b16 %v3088, %v3084
      %v3209 = vpack.c.b16 %v3089, %v3085
      %v3210 = vpack.c.b16 %v3094, %v3090
      %v3211 = vpack.c.b16 %v3095, %v3091
      %v3212 = vpack.c.b16 %v3096, %v3092
      %v3213 = vpack.c.b16 %v3097, %v3093
      %v3214 = vpack.c.b16 %v3102, %v3098
      %v3215 = vpack.c.b16 %v3103, %v3099
      %v3216 = vpack.c.b16 %v3104, %v3100
      %v3217 = vpack.c.b16 %v3105, %v3101
      %v3218 = vpack.c.b16 %v3110, %v3106
      %v3219 = vpack.c.b16 %v3111, %v3107
      %v3220 = vpack.c.b16 %v3112, %v3108
      %v3221 = vpack.c.b16 %v3113, %v3109
      %v3222 = vpack.c.b16 %v3118, %v3114
      %v3223 = vpack.c.b16 %v3119, %v3115
      %v3224 = vpack.c.b16 %v3120, %v3116
      %v3225 = vpack.c.b16 %v3121, %v3117
      %v3226 = vpack.c.b16 %v3126, %v3122
      %v3227 = vpack.c.b16 %v3127, %v3123
      %v3228 = vpack.c.b16 %v3128, %v3124
      %v3229 = vpack.c.b16 %v3129, %v3125
      %v3230 = vpack.c.b16 %v3134, %v3130
      %v3231 = vpack.c.b16 %v3135, %v3131
      %v3232 = vpack.c.b16 %v3136, %v3132
      %v3233 = vpack.c.b16 %v3137, %v3133
      %v3234 = vpack.c.b16 %v3142, %v3138
      %v3235 = vpack.c.b16 %v3143, %v3139
      %v3236 = vpack.c.b16 %v3144, %v3140
      %v3237 = vpack.c.b16 %v3145, %v3141
      %v3238 = vpack.c.b16 %v3150, %v3146
      %v3239 = vpack.c.b16 %v3151, %v3147
      %v3240 = vpack.c.b16 %v3152, %v3148
      %v3241 = vpack.c.b16 %v3153, %v3149
      %v3242 = vpack.c.b16 %v3158, %v3154
      %v3243 = vpack.c.b16 %v3159, %v3155
      %v3244 = vpack.c.b16 %v3160, %v3156
      %v3245 = vpack.c.b16 %v3161, %v3157
      %v3246 = vpack.c.b16 %v3166, %v3162
      %v3247 = vpack.c.b16 %v3167, %v3163
      %v3248 = vpack.c.b16 %v3168, %v3164
      %v3249 = vpack.c.b16 %v3169, %v3165
      %v3250 = vpack.c.b16 %v3174, %v3170
      %v3251 = vpack.c.b16 %v3175, %v3171
      %v3252 = vpack.c.b16 %v3176, %v3172
      %v3253 = vpack.c.b16 %v3177, %v3173
      %v3254 = vpack.c.b16 %v3182, %v3178
      %v3255 = vpack.c.b16 %v3183, %v3179
      %v3256 = vpack.c.b16 %v3184, %v3180
      %v3257 = vpack.c.b16 %v3185, %v3181
      %v3258 = vpack.c.b16 %v3190, %v3186
      %v3259 = vpack.c.b16 %v3191, %v3187
      %v3260 = vpack.c.b16 %v3192, %v3188
      %v3261 = vpack.c.b16 %v3193, %v3189
      %v3262 = vpack.c.b16 %v3198, %v3194
      %v3263 = vpack.c.b16 %v3199, %v3195
      %v3264 = vpack.c.b16 %v3200, %v3196
      %v3265 = vpack.c.b16 %v3201, %v3197
      %v3266 = vpack.c.b16 %v3202, %v3202
      %v3267 = vpack.c.b16 %v3203, %v3203
      %v3268 = vpack.c.b16 %v3204, %v3204
      %v3269 = vpack.c.b16 %v3205, %v3205
      %v3331 = vsel %vm594, %v3009, 0
      %v3334 = vsel %vm594, %v3011, 0
      %v3337 = vsel %vm594, %v3013, 0
      %v3340 = vsel %vm594, %v3015, 0
      %v3343 = vand.u32 %v3266, %v610
      %v3346 = vand.u32 %v3267, %v610
      %v3349 = vand.u32 %v3268, %v610
      %v3352 = vand.u32 %v3269, %v610
      %3354 = vmatprep.subr.bf16.mxu0 %v3207
      %3355 = vmatpush1.bf16.msra.mxu0 %v3206
      %3356 = vmatprep.subr.bf16.mxu0 %v3211
      %3357 = vmatpush1.bf16.msra.mxu0 %v3210
      %3358 = vmatprep.subr.bf16.mxu0 %v3215
      %3359 = vmatpush1.bf16.msra.mxu0 %v3214
      %3360 = vmatprep.subr.bf16.mxu0 %v3219
      %3361 = vmatpush1.bf16.msra.mxu0 %v3218
      %3362 = vmatprep.subr.bf16.mxu0 %v3223
      %3363 = vmatpush1.bf16.msra.mxu0 %v3222
      %3364 = vmatprep.subr.bf16.mxu0 %v3227
      %3365 = vmatpush1.bf16.msra.mxu0 %v3226
      %3366 = vmatprep.subr.bf16.mxu0 %v3231
      %3367 = vmatpush1.bf16.msra.mxu0 %v3230
      %3368 = vmatprep.subr.bf16.mxu0 %v3235
      %3369 = vmatpush1.bf16.msra.mxu0 %v3234
      %3370 = vmatprep.subr.bf16.mxu0 %v3239
      %3371 = vmatpush1.bf16.msra.mxu0 %v3238
      %3372 = vmatprep.subr.bf16.mxu0 %v3243
      %3373 = vmatpush1.bf16.msra.mxu0 %v3242
      %3374 = vmatprep.subr.bf16.mxu0 %v3247
      %3375 = vmatpush1.bf16.msra.mxu0 %v3246
      %3376 = vmatprep.subr.bf16.mxu0 %v3251
      %3377 = vmatpush1.bf16.msra.mxu0 %v3250
      %3378 = vmatprep.subr.bf16.mxu0 %v3255
      %3379 = vmatpush1.bf16.msra.mxu0 %v3254
      %3380 = vmatprep.subr.bf16.mxu0 %v3259
      %3381 = vmatpush1.bf16.msra.mxu0 %v3258
      %3382 = vmatprep.subr.bf16.mxu0 %v3263
      %3383 = vmatpush1.bf16.msra.mxu0 %v3262
      %3384 = vmatprep.subr.bf16.mxu0 %v3346
      %3385 = vmatpush1.bf16.msra.mxu0 %v3343
      %3386 = vmatprep.mubr.bf16.mxu0 %v3331
      %3387 = vmatmul.mubr.bf16.gmra.mrb[0].mxu0 %v3008
      %v3388 = vpop.f32.mrb[0].mxu0
      %v3389 = vadd.f32 0.0, %v3388
      %v3390 = vpop.f32.mrb[0].mxu0
      %v3391 = vadd.f32 0.0, %v3390
      %v3392 = vpop.f32.mrb[0].mxu0
      %v3393 = vadd.f32 0.0, %v3392
      %v3394 = vpop.f32.mrb[0].mxu0
      %v3395 = vadd.f32 0.0, %v3394
      %3396 = vmatprep.mubr.bf16.mxu0 %v3334
      %3397 = vmatmul.mubr.bf16.gmra.mrb[0].mxu0 %v3010
      %v3398 = vpop.f32.mrb[0].mxu0
      %v3399 = vadd.f32 0.0, %v3398
      %v3400 = vpop.f32.mrb[0].mxu0
      %v3401 = vadd.f32 0.0, %v3400
      %v3402 = vpop.f32.mrb[0].mxu0
      %v3403 = vadd.f32 0.0, %v3402
      %v3404 = vpop.f32.mrb[0].mxu0
      %v3405 = vadd.f32 0.0, %v3404
      %3406 = vmatprep.mubr.bf16.mxu0 %v3337
      %3407 = vmatmul.mubr.bf16.gmra.mrb[0].mxu0 %v3012
      %v3408 = vpop.f32.mrb[0].mxu0
      %v3409 = vadd.f32 0.0, %v3408
      %v3410 = vpop.f32.mrb[0].mxu0
      %v3411 = vadd.f32 0.0, %v3410
      %v3412 = vpop.f32.mrb[0].mxu0
      %v3413 = vadd.f32 0.0, %v3412
      %v3414 = vpop.f32.mrb[0].mxu0
      %v3415 = vadd.f32 0.0, %v3414
      %3416 = vmatprep.mubr.bf16.mxu0 %v3340
      %3417 = vmatmul.mubr.bf16.gmra.mrb[0].mxu0 %v3014
      %v3418 = vpop.f32.mrb[0].mxu0
      %v3419 = vadd.f32 0.0, %v3418
      %v3420 = vpop.f32.mrb[0].mxu0
      %v3421 = vadd.f32 0.0, %v3420
      %v3422 = vpop.f32.mrb[0].mxu0
      %v3423 = vadd.f32 0.0, %v3422
      %v3424 = vpop.f32.mrb[0].mxu0
      %v3425 = vadd.f32 0.0, %v3424
      %3426 = vdwg.mxu0
      %3427 = vmatprep.subr.bf16.mxu0 %v3209
      %3428 = vmatpush1.bf16.msra.mxu0 %v3208
      %3429 = vmatprep.subr.bf16.mxu0 %v3213
      %3430 = vmatpush1.bf16.msra.mxu0 %v3212
      %3431 = vmatprep.subr.bf16.mxu0 %v3217
      %3432 = vmatpush1.bf16.msra.mxu0 %v3216
      %3433 = vmatprep.subr.bf16.mxu0 %v3221
      %3434 = vmatpush1.bf16.msra.mxu0 %v3220
      %3435 = vmatprep.subr.bf16.mxu0 %v3225
      %3436 = vmatpush1.bf16.msra.mxu0 %v3224
      %3437 = vmatprep.subr.bf16.mxu0 %v3229
      %3438 = vmatpush1.bf16.msra.mxu0 %v3228
      %3439 = vmatprep.subr.bf16.mxu0 %v3233
      %3440 = vmatpush1.bf16.msra.mxu0 %v3232
      %3441 = vmatprep.subr.bf16.mxu0 %v3237
      %3442 = vmatpush1.bf16.msra.mxu0 %v3236
      %3443 = vmatprep.subr.bf16.mxu0 %v3241
      %3444 = vmatpush1.bf16.msra.mxu0 %v3240
      %3445 = vmatprep.subr.bf16.mxu0 %v3245
      %3446 = vmatpush1.bf16.msra.mxu0 %v3244
      %3447 = vmatprep.subr.bf16.mxu0 %v3249
      %3448 = vmatpush1.bf16.msra.mxu0 %v3248
      %3449 = vmatprep.subr.bf16.mxu0 %v3253
      %3450 = vmatpush1.bf16.msra.mxu0 %v3252
      %3451 = vmatprep.subr.bf16.mxu0 %v3257
      %3452 = vmatpush1.bf16.msra.mxu0 %v3256
      %3453 = vmatprep.subr.bf16.mxu0 %v3261
      %3454 = vmatpush1.bf16.msra.mxu0 %v3260
      %3455 = vmatprep.subr.bf16.mxu0 %v3265
      %3456 = vmatpush1.bf16.msra.mxu0 %v3264
      %3457 = vmatprep.subr.bf16.mxu0 %v3352
      %3458 = vmatpush1.bf16.msra.mxu0 %v3349
      %3459 = vmatprep.mubr.bf16.mxu0 %v3331
      %3460 = vmatmul.mubr.bf16.gmra.mrb[0].mxu0 %v3008
      %v3461 = vpop.f32.mrb[0].mxu0
      %v3462 = vadd.f32 0.0, %v3461
      %v3463 = vpop.f32.mrb[0].mxu0
      %v3464 = vadd.f32 0.0, %v3463
      %v3465 = vpop.f32.mrb[0].mxu0
      %v3466 = vadd.f32 0.0, %v3465
      %v3467 = vpop.f32.mrb[0].mxu0
      %v3468 = vadd.f32 0.0, %v3467
      %3469 = vmatprep.mubr.bf16.mxu0 %v3334
      %3470 = vmatmul.mubr.bf16.gmra.mrb[0].mxu0 %v3010
      %v3471 = vpop.f32.mrb[0].mxu0
      %v3472 = vadd.f32 0.0, %v3471
      %v3473 = vpop.f32.mrb[0].mxu0
      %v3474 = vadd.f32 0.0, %v3473
      %v3475 = vpop.f32.mrb[0].mxu0
      %v3476 = vadd.f32 0.0, %v3475
      %v3477 = vpop.f32.mrb[0].mxu0
      %v3478 = vadd.f32 0.0, %v3477
      %3479 = vmatprep.mubr.bf16.mxu0 %v3337
      %3480 = vmatmul.mubr.bf16.gmra.mrb[0].mxu0 %v3012
      %v3481 = vpop.f32.mrb[0].mxu0
      %v3482 = vadd.f32 0.0, %v3481
      %v3483 = vpop.f32.mrb[0].mxu0
      %v3484 = vadd.f32 0.0, %v3483
      %v3485 = vpop.f32.mrb[0].mxu0
      %v3486 = vadd.f32 0.0, %v3485
      %v3487 = vpop.f32.mrb[0].mxu0
      %v3488 = vadd.f32 0.0, %v3487
      %3489 = vmatprep.mubr.bf16.mxu0 %v3340
      %3490 = vmatmul.mubr.bf16.gmra.mrb[0].mxu0 %v3014
      %v3491 = vpop.f32.mrb[0].mxu0
      %v3492 = vadd.f32 0.0, %v3491
      %v3493 = vpop.f32.mrb[0].mxu0
      %v3494 = vadd.f32 0.0, %v3493
      %v3495 = vpop.f32.mrb[0].mxu0
      %v3496 = vadd.f32 0.0, %v3495
      %v3497 = vpop.f32.mrb[0].mxu0
      %v3498 = vadd.f32 0.0, %v3497
      %3499 = vdwg.mxu0
      %3508 = vrot.lane.b32.xlu0 %v3389, 112
      %v3509 = vpop.permute.xlu0 %3508
      %3510 = vrot.lane.b32.xlu0 %v3393, 112
      %v3511 = vpop.permute.xlu0 %3510
      %3512 = vrot.lane.b32.xlu0 %v3399, 112
      %v3513 = vpop.permute.xlu0 %3512
      %3514 = vrot.lane.b32.xlu0 %v3403, 112
      %v3515 = vpop.permute.xlu0 %3514
      %3516 = vrot.lane.b32.xlu0 %v3409, 112
      %v3517 = vpop.permute.xlu0 %3516
      %3518 = vrot.lane.b32.xlu0 %v3413, 112
      %v3519 = vpop.permute.xlu0 %3518
      %3520 = vrot.lane.b32.xlu0 %v3419, 112
      %v3521 = vpop.permute.xlu0 %3520
      %3522 = vrot.lane.b32.xlu0 %v3423, 112
      %v3523 = vpop.permute.xlu0 %3522
      %v3532 = vmax.f32 %v3389, %v3509
      %v3533 = vmax.f32 %v3393, %v3511
      %v3534 = vmax.f32 %v3399, %v3513
      %v3535 = vmax.f32 %v3403, %v3515
      %v3536 = vmax.f32 %v3409, %v3517
      %v3537 = vmax.f32 %v3413, %v3519
      %v3538 = vmax.f32 %v3419, %v3521
      %v3539 = vmax.f32 %v3423, %v3523
      %3540 = vrot.lane.b32.xlu0 %v3389, 96
      %v3541 = vpop.permute.xlu0 %3540
      %3542 = vrot.lane.b32.xlu0 %v3393, 96
      %v3543 = vpop.permute.xlu0 %3542
      %3544 = vrot.lane.b32.xlu0 %v3399, 96
      %v3545 = vpop.permute.xlu0 %3544
      %3546 = vrot.lane.b32.xlu0 %v3403, 96
      %v3547 = vpop.permute.xlu0 %3546
      %3548 = vrot.lane.b32.xlu0 %v3409, 96
      %v3549 = vpop.permute.xlu0 %3548
      %3550 = vrot.lane.b32.xlu0 %v3413, 96
      %v3551 = vpop.permute.xlu0 %3550
      %3552 = vrot.lane.b32.xlu0 %v3419, 96
      %v3553 = vpop.permute.xlu0 %3552
      %3554 = vrot.lane.b32.xlu0 %v3423, 96
      %v3555 = vpop.permute.xlu0 %3554
      %v3564 = vmax.f32 %v3532, %v3541
      %v3565 = vmax.f32 %v3533, %v3543
      %v3566 = vmax.f32 %v3534, %v3545
      %v3567 = vmax.f32 %v3535, %v3547
      %v3568 = vmax.f32 %v3536, %v3549
      %v3569 = vmax.f32 %v3537, %v3551
      %v3570 = vmax.f32 %v3538, %v3553
      %v3571 = vmax.f32 %v3539, %v3555
      %3572 = vrot.lane.b32.xlu0 %v3389, 80
      %v3573 = vpop.permute.xlu0 %3572
      %3574 = vrot.lane.b32.xlu0 %v3393, 80
      %v3575 = vpop.permute.xlu0 %3574
      %3576 = vrot.lane.b32.xlu0 %v3399, 80
      %v3577 = vpop.permute.xlu0 %3576
      %3578 = vrot.lane.b32.xlu0 %v3403, 80
      %v3579 = vpop.permute.xlu0 %3578
      %3580 = vrot.lane.b32.xlu0 %v3409, 80
      %v3581 = vpop.permute.xlu0 %3580
      %3582 = vrot.lane.b32.xlu0 %v3413, 80
      %v3583 = vpop.permute.xlu0 %3582
      %3584 = vrot.lane.b32.xlu0 %v3419, 80
      %v3585 = vpop.permute.xlu0 %3584
      %3586 = vrot.lane.b32.xlu0 %v3423, 80
      %v3587 = vpop.permute.xlu0 %3586
      %v3596 = vmax.f32 %v3564, %v3573
      %v3597 = vmax.f32 %v3565, %v3575
      %v3598 = vmax.f32 %v3566, %v3577
      %v3599 = vmax.f32 %v3567, %v3579
      %v3600 = vmax.f32 %v3568, %v3581
      %v3601 = vmax.f32 %v3569, %v3583
      %v3602 = vmax.f32 %v3570, %v3585
      %v3603 = vmax.f32 %v3571, %v3587
      %3604 = vrot.lane.b32.xlu0 %v3389, 64
      %v3605 = vpop.permute.xlu0 %3604
      %3606 = vrot.lane.b32.xlu0 %v3393, 64
      %v3607 = vpop.permute.xlu0 %3606
      %3608 = vrot.lane.b32.xlu0 %v3399, 64
      %v3609 = vpop.permute.xlu0 %3608
      %3610 = vrot.lane.b32.xlu0 %v3403, 64
      %v3611 = vpop.permute.xlu0 %3610
      %3612 = vrot.lane.b32.xlu0 %v3409, 64
      %v3613 = vpop.permute.xlu0 %3612
      %3614 = vrot.lane.b32.xlu0 %v3413, 64
      %v3615 = vpop.permute.xlu0 %3614
      %3616 = vrot.lane.b32.xlu0 %v3419, 64
      %v3617 = vpop.permute.xlu0 %3616
      %3618 = vrot.lane.b32.xlu0 %v3423, 64
      %v3619 = vpop.permute.xlu0 %3618
      %v3628 = vmax.f32 %v3596, %v3605
      %v3629 = vmax.f32 %v3597, %v3607
      %v3630 = vmax.f32 %v3598, %v3609
      %v3631 = vmax.f32 %v3599, %v3611
      %v3632 = vmax.f32 %v3600, %v3613
      %v3633 = vmax.f32 %v3601, %v3615
      %v3634 = vmax.f32 %v3602, %v3617
      %v3635 = vmax.f32 %v3603, %v3619
      %3636 = vrot.lane.b32.xlu0 %v3389, 48
      %v3637 = vpop.permute.xlu0 %3636
      %3638 = vrot.lane.b32.xlu0 %v3393, 48
      %v3639 = vpop.permute.xlu0 %3638
      %3640 = vrot.lane.b32.xlu0 %v3399, 48
      %v3641 = vpop.permute.xlu0 %3640
      %3642 = vrot.lane.b32.xlu0 %v3403, 48
      %v3643 = vpop.permute.xlu0 %3642
      %3644 = vrot.lane.b32.xlu0 %v3409, 48
      %v3645 = vpop.permute.xlu0 %3644
      %3646 = vrot.lane.b32.xlu0 %v3413, 48
      %v3647 = vpop.permute.xlu0 %3646
      %3648 = vrot.lane.b32.xlu0 %v3419, 48
      %v3649 = vpop.permute.xlu0 %3648
      %3650 = vrot.lane.b32.xlu0 %v3423, 48
      %v3651 = vpop.permute.xlu0 %3650
      %v3660 = vmax.f32 %v3628, %v3637
      %v3661 = vmax.f32 %v3629, %v3639
      %v3662 = vmax.f32 %v3630, %v3641
      %v3663 = vmax.f32 %v3631, %v3643
      %v3664 = vmax.f32 %v3632, %v3645
      %v3665 = vmax.f32 %v3633, %v3647
      %v3666 = vmax.f32 %v3634, %v3649
      %v3667 = vmax.f32 %v3635, %v3651
      %3668 = vrot.lane.b32.xlu0 %v3389, 32
      %v3669 = vpop.permute.xlu0 %3668
      %3670 = vrot.lane.b32.xlu0 %v3393, 32
      %v3671 = vpop.permute.xlu0 %3670
      %3672 = vrot.lane.b32.xlu0 %v3399, 32
      %v3673 = vpop.permute.xlu0 %3672
      %3674 = vrot.lane.b32.xlu0 %v3403, 32
      %v3675 = vpop.permute.xlu0 %3674
      %3676 = vrot.lane.b32.xlu0 %v3409, 32
      %v3677 = vpop.permute.xlu0 %3676
      %3678 = vrot.lane.b32.xlu0 %v3413, 32
      %v3679 = vpop.permute.xlu0 %3678
      %3680 = vrot.lane.b32.xlu0 %v3419, 32
      %v3681 = vpop.permute.xlu0 %3680
      %3682 = vrot.lane.b32.xlu0 %v3423, 32
      %v3683 = vpop.permute.xlu0 %3682
      %v3692 = vmax.f32 %v3660, %v3669
      %v3693 = vmax.f32 %v3661, %v3671
      %v3694 = vmax.f32 %v3662, %v3673
      %v3695 = vmax.f32 %v3663, %v3675
      %v3696 = vmax.f32 %v3664, %v3677
      %v3697 = vmax.f32 %v3665, %v3679
      %v3698 = vmax.f32 %v3666, %v3681
      %v3699 = vmax.f32 %v3667, %v3683
      %3700 = vrot.lane.b32.xlu0 %v3389, 16
      %v3701 = vpop.permute.xlu0 %3700
      %3702 = vrot.lane.b32.xlu0 %v3393, 16
      %v3703 = vpop.permute.xlu0 %3702
      %3704 = vrot.lane.b32.xlu0 %v3399, 16
      %v3705 = vpop.permute.xlu0 %3704
      %3706 = vrot.lane.b32.xlu0 %v3403, 16
      %v3707 = vpop.permute.xlu0 %3706
      %3708 = vrot.lane.b32.xlu0 %v3409, 16
      %v3709 = vpop.permute.xlu0 %3708
      %3710 = vrot.lane.b32.xlu0 %v3413, 16
      %v3711 = vpop.permute.xlu0 %3710
      %3712 = vrot.lane.b32.xlu0 %v3419, 16
      %v3713 = vpop.permute.xlu0 %3712
      %3714 = vrot.lane.b32.xlu0 %v3423, 16
      %v3715 = vpop.permute.xlu0 %3714
      %v3724 = vmax.f32 %v3692, %v3701
      %v3725 = vmax.f32 %v3693, %v3703
      %v3726 = vmax.f32 %v3694, %v3705
      %v3727 = vmax.f32 %v3695, %v3707
      %v3728 = vmax.f32 %v3696, %v3709
      %v3729 = vmax.f32 %v3697, %v3711
      %v3730 = vmax.f32 %v3698, %v3713
      %v3731 = vmax.f32 %v3699, %v3715
      %v3732 = vmax.f32 %v3724, %v3391
      %v3733 = vmax.f32 %v3725, %v3395
      %v3734 = vmax.f32 %v3726, %v3401
      %v3735 = vmax.f32 %v3727, %v3405
      %v3736 = vmax.f32 %v3728, %v3411
      %v3737 = vmax.f32 %v3729, %v3415
      %v3738 = vmax.f32 %v3730, %v3421
      %v3739 = vmax.f32 %v3731, %v3425
      %3748 = vrot.lane.b32.xlu0 %v3391, 112
      %v3749 = vpop.permute.xlu0 %3748
      %3750 = vrot.lane.b32.xlu0 %v3395, 112
      %v3751 = vpop.permute.xlu0 %3750
      %3752 = vrot.lane.b32.xlu0 %v3401, 112
      %v3753 = vpop.permute.xlu0 %3752
      %3754 = vrot.lane.b32.xlu0 %v3405, 112
      %v3755 = vpop.permute.xlu0 %3754
      %3756 = vrot.lane.b32.xlu0 %v3411, 112
      %v3757 = vpop.permute.xlu0 %3756
      %3758 = vrot.lane.b32.xlu0 %v3415, 112
      %v3759 = vpop.permute.xlu0 %3758
      %3760 = vrot.lane.b32.xlu0 %v3421, 112
      %v3761 = vpop.permute.xlu0 %3760
      %3762 = vrot.lane.b32.xlu0 %v3425, 112
      %v3763 = vpop.permute.xlu0 %3762
      %v3772 = vmax.f32 %v3732, %v3749
      %v3773 = vmax.f32 %v3733, %v3751
      %v3774 = vmax.f32 %v3734, %v3753
      %v3775 = vmax.f32 %v3735, %v3755
      %v3776 = vmax.f32 %v3736, %v3757
      %v3777 = vmax.f32 %v3737, %v3759
      %v3778 = vmax.f32 %v3738, %v3761
      %v3779 = vmax.f32 %v3739, %v3763
      %3780 = vrot.lane.b32.xlu0 %v3391, 96
      %v3781 = vpop.permute.xlu0 %3780
      %3782 = vrot.lane.b32.xlu0 %v3395, 96
      %v3783 = vpop.permute.xlu0 %3782
      %3784 = vrot.lane.b32.xlu0 %v3401, 96
      %v3785 = vpop.permute.xlu0 %3784
      %3786 = vrot.lane.b32.xlu0 %v3405, 96
      %v3787 = vpop.permute.xlu0 %3786
      %3788 = vrot.lane.b32.xlu0 %v3411, 96
      %v3789 = vpop.permute.xlu0 %3788
      %3790 = vrot.lane.b32.xlu0 %v3415, 96
      %v3791 = vpop.permute.xlu0 %3790
      %3792 = vrot.lane.b32.xlu0 %v3421, 96
      %v3793 = vpop.permute.xlu0 %3792
      %3794 = vrot.lane.b32.xlu0 %v3425, 96
      %v3795 = vpop.permute.xlu0 %3794
      %v3804 = vmax.f32 %v3772, %v3781
      %v3805 = vmax.f32 %v3773, %v3783
      %v3806 = vmax.f32 %v3774, %v3785
      %v3807 = vmax.f32 %v3775, %v3787
      %v3808 = vmax.f32 %v3776, %v3789
      %v3809 = vmax.f32 %v3777, %v3791
      %v3810 = vmax.f32 %v3778, %v3793
      %v3811 = vmax.f32 %v3779, %v3795
      %3812 = vrot.lane.b32.xlu0 %v3391, 80
      %v3813 = vpop.permute.xlu0 %3812
      %3814 = vrot.lane.b32.xlu0 %v3395, 80
      %v3815 = vpop.permute.xlu0 %3814
      %3816 = vrot.lane.b32.xlu0 %v3401, 80
      %v3817 = vpop.permute.xlu0 %3816
      %3818 = vrot.lane.b32.xlu0 %v3405, 80
      %v3819 = vpop.permute.xlu0 %3818
      %3820 = vrot.lane.b32.xlu0 %v3411, 80
      %v3821 = vpop.permute.xlu0 %3820
      %3822 = vrot.lane.b32.xlu0 %v3415, 80
      %v3823 = vpop.permute.xlu0 %3822
      %3824 = vrot.lane.b32.xlu0 %v3421, 80
      %v3825 = vpop.permute.xlu0 %3824
      %3826 = vrot.lane.b32.xlu0 %v3425, 80
      %v3827 = vpop.permute.xlu0 %3826
      %v3836 = vmax.f32 %v3804, %v3813
      %v3837 = vmax.f32 %v3805, %v3815
      %v3838 = vmax.f32 %v3806, %v3817
      %v3839 = vmax.f32 %v3807, %v3819
      %v3840 = vmax.f32 %v3808, %v3821
      %v3841 = vmax.f32 %v3809, %v3823
      %v3842 = vmax.f32 %v3810, %v3825
      %v3843 = vmax.f32 %v3811, %v3827
      %3844 = vrot.lane.b32.xlu0 %v3391, 64
      %v3845 = vpop.permute.xlu0 %3844
      %3846 = vrot.lane.b32.xlu0 %v3395, 64
      %v3847 = vpop.permute.xlu0 %3846
      %3848 = vrot.lane.b32.xlu0 %v3401, 64
      %v3849 = vpop.permute.xlu0 %3848
      %3850 = vrot.lane.b32.xlu0 %v3405, 64
      %v3851 = vpop.permute.xlu0 %3850
      %3852 = vrot.lane.b32.xlu0 %v3411, 64
      %v3853 = vpop.permute.xlu0 %3852
      %3854 = vrot.lane.b32.xlu0 %v3415, 64
      %v3855 = vpop.permute.xlu0 %3854
      %3856 = vrot.lane.b32.xlu0 %v3421, 64
      %v3857 = vpop.permute.xlu0 %3856
      %3858 = vrot.lane.b32.xlu0 %v3425, 64
      %v3859 = vpop.permute.xlu0 %3858
      %v3868 = vmax.f32 %v3836, %v3845
      %v3869 = vmax.f32 %v3837, %v3847
      %v3870 = vmax.f32 %v3838, %v3849
      %v3871 = vmax.f32 %v3839, %v3851
      %v3872 = vmax.f32 %v3840, %v3853
      %v3873 = vmax.f32 %v3841, %v3855
      %v3874 = vmax.f32 %v3842, %v3857
      %v3875 = vmax.f32 %v3843, %v3859
      %3876 = vrot.lane.b32.xlu0 %v3391, 48
      %v3877 = vpop.permute.xlu0 %3876
      %3878 = vrot.lane.b32.xlu0 %v3395, 48
      %v3879 = vpop.permute.xlu0 %3878
      %3880 = vrot.lane.b32.xlu0 %v3401, 48
      %v3881 = vpop.permute.xlu0 %3880
      %3882 = vrot.lane.b32.xlu0 %v3405, 48
      %v3883 = vpop.permute.xlu0 %3882
      %3884 = vrot.lane.b32.xlu0 %v3411, 48
      %v3885 = vpop.permute.xlu0 %3884
      %3886 = vrot.lane.b32.xlu0 %v3415, 48
      %v3887 = vpop.permute.xlu0 %3886
      %3888 = vrot.lane.b32.xlu0 %v3421, 48
      %v3889 = vpop.permute.xlu0 %3888
      %3890 = vrot.lane.b32.xlu0 %v3425, 48
      %v3891 = vpop.permute.xlu0 %3890
      %v3900 = vmax.f32 %v3868, %v3877
      %v3901 = vmax.f32 %v3869, %v3879
      %v3902 = vmax.f32 %v3870, %v3881
      %v3903 = vmax.f32 %v3871, %v3883
      %v3904 = vmax.f32 %v3872, %v3885
      %v3905 = vmax.f32 %v3873, %v3887
      %v3906 = vmax.f32 %v3874, %v3889
      %v3907 = vmax.f32 %v3875, %v3891
      %3908 = vrot.lane.b32.xlu0 %v3391, 32
      %v3909 = vpop.permute.xlu0 %3908
      %3910 = vrot.lane.b32.xlu0 %v3395, 32
      %v3911 = vpop.permute.xlu0 %3910
      %3912 = vrot.lane.b32.xlu0 %v3401, 32
      %v3913 = vpop.permute.xlu0 %3912
      %3914 = vrot.lane.b32.xlu0 %v3405, 32
      %v3915 = vpop.permute.xlu0 %3914
      %3916 = vrot.lane.b32.xlu0 %v3411, 32
      %v3917 = vpop.permute.xlu0 %3916
      %3918 = vrot.lane.b32.xlu0 %v3415, 32
      %v3919 = vpop.permute.xlu0 %3918
      %3920 = vrot.lane.b32.xlu0 %v3421, 32
      %v3921 = vpop.permute.xlu0 %3920
      %3922 = vrot.lane.b32.xlu0 %v3425, 32
      %v3923 = vpop.permute.xlu0 %3922
      %v3932 = vmax.f32 %v3900, %v3909
      %v3933 = vmax.f32 %v3901, %v3911
      %v3934 = vmax.f32 %v3902, %v3913
      %v3935 = vmax.f32 %v3903, %v3915
      %v3936 = vmax.f32 %v3904, %v3917
      %v3937 = vmax.f32 %v3905, %v3919
      %v3938 = vmax.f32 %v3906, %v3921
      %v3939 = vmax.f32 %v3907, %v3923
      %3940 = vrot.lane.b32.xlu0 %v3391, 16
      %v3941 = vpop.permute.xlu0 %3940
      %3942 = vrot.lane.b32.xlu0 %v3395, 16
      %v3943 = vpop.permute.xlu0 %3942
      %3944 = vrot.lane.b32.xlu0 %v3401, 16
      %v3945 = vpop.permute.xlu0 %3944
      %3946 = vrot.lane.b32.xlu0 %v3405, 16
      %v3947 = vpop.permute.xlu0 %3946
      %3948 = vrot.lane.b32.xlu0 %v3411, 16
      %v3949 = vpop.permute.xlu0 %3948
      %3950 = vrot.lane.b32.xlu0 %v3415, 16
      %v3951 = vpop.permute.xlu0 %3950
      %3952 = vrot.lane.b32.xlu0 %v3421, 16
      %v3953 = vpop.permute.xlu0 %3952
      %3954 = vrot.lane.b32.xlu0 %v3425, 16
      %v3955 = vpop.permute.xlu0 %3954
      %v3964 = vmax.f32 %v3932, %v3941
      %v3965 = vmax.f32 %v3933, %v3943
      %v3966 = vmax.f32 %v3934, %v3945
      %v3967 = vmax.f32 %v3935, %v3947
      %v3968 = vmax.f32 %v3936, %v3949
      %v3969 = vmax.f32 %v3937, %v3951
      %v3970 = vmax.f32 %v3938, %v3953
      %v3971 = vmax.f32 %v3939, %v3955
      %v3972 = vmax.f32 %v3964, %v3462
      %v3973 = vmax.f32 %v3965, %v3466
      %v3974 = vmax.f32 %v3966, %v3472
      %v3975 = vmax.f32 %v3967, %v3476
      %v3976 = vmax.f32 %v3968, %v3482
      %v3977 = vmax.f32 %v3969, %v3486
      %v3978 = vmax.f32 %v3970, %v3492
      %v3979 = vmax.f32 %v3971, %v3496
      %3988 = vrot.lane.b32.xlu0 %v3462, 112
      %v3989 = vpop.permute.xlu0 %3988
      %3990 = vrot.lane.b32.xlu0 %v3466, 112
      %v3991 = vpop.permute.xlu0 %3990
      %3992 = vrot.lane.b32.xlu0 %v3472, 112
      %v3993 = vpop.permute.xlu0 %3992
      %3994 = vrot.lane.b32.xlu0 %v3476, 112
      %v3995 = vpop.permute.xlu0 %3994
      %3996 = vrot.lane.b32.xlu0 %v3482, 112
      %v3997 = vpop.permute.xlu0 %3996
      %3998 = vrot.lane.b32.xlu0 %v3486, 112
      %v3999 = vpop.permute.xlu0 %3998
      %4000 = vrot.lane.b32.xlu0 %v3492, 112
      %v4001 = vpop.permute.xlu0 %4000
      %4002 = vrot.lane.b32.xlu0 %v3496, 112
      %v4003 = vpop.permute.xlu0 %4002
      %v4012 = vmax.f32 %v3972, %v3989
      %v4013 = vmax.f32 %v3973, %v3991
      %v4014 = vmax.f32 %v3974, %v3993
      %v4015 = vmax.f32 %v3975, %v3995
      %v4016 = vmax.f32 %v3976, %v3997
      %v4017 = vmax.f32 %v3977, %v3999
      %v4018 = vmax.f32 %v3978, %v4001
      %v4019 = vmax.f32 %v3979, %v4003
      %4020 = vrot.lane.b32.xlu0 %v3462, 96
      %v4021 = vpop.permute.xlu0 %4020
      %4022 = vrot.lane.b32.xlu0 %v3466, 96
      %v4023 = vpop.permute.xlu0 %4022
      %4024 = vrot.lane.b32.xlu0 %v3472, 96
      %v4025 = vpop.permute.xlu0 %4024
      %4026 = vrot.lane.b32.xlu0 %v3476, 96
      %v4027 = vpop.permute.xlu0 %4026
      %4028 = vrot.lane.b32.xlu0 %v3482, 96
      %v4029 = vpop.permute.xlu0 %4028
      %4030 = vrot.lane.b32.xlu0 %v3486, 96
      %v4031 = vpop.permute.xlu0 %4030
      %4032 = vrot.lane.b32.xlu0 %v3492, 96
      %v4033 = vpop.permute.xlu0 %4032
      %4034 = vrot.lane.b32.xlu0 %v3496, 96
      %v4035 = vpop.permute.xlu0 %4034
      %v4044 = vmax.f32 %v4012, %v4021
      %v4045 = vmax.f32 %v4013, %v4023
      %v4046 = vmax.f32 %v4014, %v4025
      %v4047 = vmax.f32 %v4015, %v4027
      %v4048 = vmax.f32 %v4016, %v4029
      %v4049 = vmax.f32 %v4017, %v4031
      %v4050 = vmax.f32 %v4018, %v4033
      %v4051 = vmax.f32 %v4019, %v4035
      %4052 = vrot.lane.b32.xlu0 %v3462, 80
      %v4053 = vpop.permute.xlu0 %4052
      %4054 = vrot.lane.b32.xlu0 %v3466, 80
      %v4055 = vpop.permute.xlu0 %4054
      %4056 = vrot.lane.b32.xlu0 %v3472, 80
      %v4057 = vpop.permute.xlu0 %4056
      %4058 = vrot.lane.b32.xlu0 %v3476, 80
      %v4059 = vpop.permute.xlu0 %4058
      %4060 = vrot.lane.b32.xlu0 %v3482, 80
      %v4061 = vpop.permute.xlu0 %4060
      %4062 = vrot.lane.b32.xlu0 %v3486, 80
      %v4063 = vpop.permute.xlu0 %4062
      %4064 = vrot.lane.b32.xlu0 %v3492, 80
      %v4065 = vpop.permute.xlu0 %4064
      %4066 = vrot.lane.b32.xlu0 %v3496, 80
      %v4067 = vpop.permute.xlu0 %4066
      %v4076 = vmax.f32 %v4044, %v4053
      %v4077 = vmax.f32 %v4045, %v4055
      %v4078 = vmax.f32 %v4046, %v4057
      %v4079 = vmax.f32 %v4047, %v4059
      %v4080 = vmax.f32 %v4048, %v4061
      %v4081 = vmax.f32 %v4049, %v4063
      %v4082 = vmax.f32 %v4050, %v4065
      %v4083 = vmax.f32 %v4051, %v4067
      %4084 = vrot.lane.b32.xlu0 %v3462, 64
      %v4085 = vpop.permute.xlu0 %4084
      %4086 = vrot.lane.b32.xlu0 %v3466, 64
      %v4087 = vpop.permute.xlu0 %4086
      %4088 = vrot.lane.b32.xlu0 %v3472, 64
      %v4089 = vpop.permute.xlu0 %4088
      %4090 = vrot.lane.b32.xlu0 %v3476, 64
      %v4091 = vpop.permute.xlu0 %4090
      %4092 = vrot.lane.b32.xlu0 %v3482, 64
      %v4093 = vpop.permute.xlu0 %4092
      %4094 = vrot.lane.b32.xlu0 %v3486, 64
      %v4095 = vpop.permute.xlu0 %4094
      %4096 = vrot.lane.b32.xlu0 %v3492, 64
      %v4097 = vpop.permute.xlu0 %4096
      %4098 = vrot.lane.b32.xlu0 %v3496, 64
      %v4099 = vpop.permute.xlu0 %4098
      %v4108 = vmax.f32 %v4076, %v4085
      %v4109 = vmax.f32 %v4077, %v4087
      %v4110 = vmax.f32 %v4078, %v4089
      %v4111 = vmax.f32 %v4079, %v4091
      %v4112 = vmax.f32 %v4080, %v4093
      %v4113 = vmax.f32 %v4081, %v4095
      %v4114 = vmax.f32 %v4082, %v4097
      %v4115 = vmax.f32 %v4083, %v4099
      %4116 = vrot.lane.b32.xlu0 %v3462, 48
      %v4117 = vpop.permute.xlu0 %4116
      %4118 = vrot.lane.b32.xlu0 %v3466, 48
      %v4119 = vpop.permute.xlu0 %4118
      %4120 = vrot.lane.b32.xlu0 %v3472, 48
      %v4121 = vpop.permute.xlu0 %4120
      %4122 = vrot.lane.b32.xlu0 %v3476, 48
      %v4123 = vpop.permute.xlu0 %4122
      %4124 = vrot.lane.b32.xlu0 %v3482, 48
      %v4125 = vpop.permute.xlu0 %4124
      %4126 = vrot.lane.b32.xlu0 %v3486, 48
      %v4127 = vpop.permute.xlu0 %4126
      %4128 = vrot.lane.b32.xlu0 %v3492, 48
      %v4129 = vpop.permute.xlu0 %4128
      %4130 = vrot.lane.b32.xlu0 %v3496, 48
      %v4131 = vpop.permute.xlu0 %4130
      %v4140 = vmax.f32 %v4108, %v4117
      %v4141 = vmax.f32 %v4109, %v4119
      %v4142 = vmax.f32 %v4110, %v4121
      %v4143 = vmax.f32 %v4111, %v4123
      %v4144 = vmax.f32 %v4112, %v4125
      %v4145 = vmax.f32 %v4113, %v4127
      %v4146 = vmax.f32 %v4114, %v4129
      %v4147 = vmax.f32 %v4115, %v4131
      %4148 = vrot.lane.b32.xlu0 %v3462, 32
      %v4149 = vpop.permute.xlu0 %4148
      %4150 = vrot.lane.b32.xlu0 %v3466, 32
      %v4151 = vpop.permute.xlu0 %4150
      %4152 = vrot.lane.b32.xlu0 %v3472, 32
      %v4153 = vpop.permute.xlu0 %4152
      %4154 = vrot.lane.b32.xlu0 %v3476, 32
      %v4155 = vpop.permute.xlu0 %4154
      %4156 = vrot.lane.b32.xlu0 %v3482, 32
      %v4157 = vpop.permute.xlu0 %4156
      %4158 = vrot.lane.b32.xlu0 %v3486, 32
      %v4159 = vpop.permute.xlu0 %4158
      %4160 = vrot.lane.b32.xlu0 %v3492, 32
      %v4161 = vpop.permute.xlu0 %4160
      %4162 = vrot.lane.b32.xlu0 %v3496, 32
      %v4163 = vpop.permute.xlu0 %4162
      %v4172 = vmax.f32 %v4140, %v4149
      %v4173 = vmax.f32 %v4141, %v4151
      %v4174 = vmax.f32 %v4142, %v4153
      %v4175 = vmax.f32 %v4143, %v4155
      %v4176 = vmax.f32 %v4144, %v4157
      %v4177 = vmax.f32 %v4145, %v4159
      %v4178 = vmax.f32 %v4146, %v4161
      %v4179 = vmax.f32 %v4147, %v4163
      %4180 = vrot.lane.b32.xlu0 %v3462, 16
      %v4181 = vpop.permute.xlu0 %4180
      %4182 = vrot.lane.b32.xlu0 %v3466, 16
      %v4183 = vpop.permute.xlu0 %4182
      %4184 = vrot.lane.b32.xlu0 %v3472, 16
      %v4185 = vpop.permute.xlu0 %4184
      %4186 = vrot.lane.b32.xlu0 %v3476, 16
      %v4187 = vpop.permute.xlu0 %4186
      %4188 = vrot.lane.b32.xlu0 %v3482, 16
      %v4189 = vpop.permute.xlu0 %4188
      %4190 = vrot.lane.b32.xlu0 %v3486, 16
      %v4191 = vpop.permute.xlu0 %4190
      %4192 = vrot.lane.b32.xlu0 %v3492, 16
      %v4193 = vpop.permute.xlu0 %4192
      %4194 = vrot.lane.b32.xlu0 %v3496, 16
      %v4195 = vpop.permute.xlu0 %4194
      %v4204 = vmax.f32 %v4172, %v4181
      %v4205 = vmax.f32 %v4173, %v4183
      %v4206 = vmax.f32 %v4174, %v4185
      %v4207 = vmax.f32 %v4175, %v4187
      %v4208 = vmax.f32 %v4176, %v4189
      %v4209 = vmax.f32 %v4177, %v4191
      %v4210 = vmax.f32 %v4178, %v4193
      %v4211 = vmax.f32 %v4179, %v4195
      %v4212 = vmax.f32 %v4204, %v3464
      %v4213 = vmax.f32 %v4205, %v3468
      %v4214 = vmax.f32 %v4206, %v3474
      %v4215 = vmax.f32 %v4207, %v3478
      %v4216 = vmax.f32 %v4208, %v3484
      %v4217 = vmax.f32 %v4209, %v3488
      %v4218 = vmax.f32 %v4210, %v3494
      %v4219 = vmax.f32 %v4211, %v3498
      %v4220 = vadd.f32 %v4212, %v1493
      %v4221 = vadd.f32 %v4213, %v1493
      %v4222 = vadd.f32 %v4214, %v1493
      %v4223 = vadd.f32 %v4215, %v1493
      %v4224 = vadd.f32 %v4216, %v1493
      %v4225 = vadd.f32 %v4217, %v1493
      %v4226 = vadd.f32 %v4218, %v1493
      %v4227 = vadd.f32 %v4219, %v1493
      %v4228 = vmax.f32 %v4220, 0.0
      %v4229 = vmax.f32 %v4221, 0.0
      %v4230 = vmax.f32 %v4222, 0.0
      %v4231 = vmax.f32 %v4223, 0.0
      %v4232 = vmax.f32 %v4224, 0.0
      %v4233 = vmax.f32 %v4225, 0.0
      %v4234 = vmax.f32 %v4226, 0.0
      %v4235 = vmax.f32 %v4227, 0.0
      %v4236 = vpack.c.bf16 %v4229, %v4228
      %v4237 = vpack.c.bf16 %v4231, %v4230
      %v4238 = vpack.c.bf16 %v4233, %v4232
      %v4239 = vpack.c.bf16 %v4235, %v4234
      %v4244 = vunpack.c.l.b16 %v4236
      %v4245 = vunpack.c.h.b16 %v4236
      %v4246 = vunpack.c.l.b16 %v4237
      %v4247 = vunpack.c.h.b16 %v4237
      %v4248 = vunpack.c.l.b16 %v4238
      %v4249 = vunpack.c.h.b16 %v4238
      %v4250 = vunpack.c.l.b16 %v4239
      %v4251 = vunpack.c.h.b16 %v4239
      %v4252 = vpack.c.b16 %v4244, %v4244
      %v4253 = vpack.c.b16 %v4245, %v4245
      %v4254 = vpack.c.b16 %v4246, %v4246
      %v4255 = vpack.c.b16 %v4247, %v4247
      %v4256 = vpack.c.b16 %v4248, %v4248
      %v4257 = vpack.c.b16 %v4249, %v4249
      %v4258 = vpack.c.b16 %v4250, %v4250
      %v4259 = vpack.c.b16 %v4251, %v4251
      %4268 = vst.msk [vmem:[%s175 + $0x40] sm:$0xf] %vm1543, %v4252
      %4269 = vst.msk [vmem:[%s175 + $0x44] sm:$0xf] %vm1543, %v4253
      %4270 = vst.msk [vmem:[%s175 + $0x48] sm:$0xf] %vm1543, %v4254
      %4271 = vst.msk [vmem:[%s175 + $0x4c] sm:$0xf] %vm1543, %v4255
      %4272 = vst.msk [vmem:[%s175 + $0x50] sm:$0xf] %vm1543, %v4256
      %4273 = vst.msk [vmem:[%s175 + $0x54] sm:$0xf] %vm1543, %v4257
      %4274 = vst.msk [vmem:[%s175 + $0x58] sm:$0xf] %vm1543, %v4258
      %4275 = vst.msk [vmem:[%s175 + $0x5c] sm:$0xf] %vm1543, %v4259
      %v4276 = vld [vmem:[%s169 + $0xc0] sm:$0xff]
      %v4277 = vld [vmem:[%s169 + $0xc8] sm:$0xff]
      %v4278 = vld [vmem:[%s169 + $0xd0] sm:$0xff]
      %v4279 = vld [vmem:[%s169 + $0xd8] sm:$0xff]
      %v4280 = vld [vmem:[%s169 + $0xe0] sm:$0xff]
      %v4281 = vld [vmem:[%s169 + $0xe8] sm:$0xff]
      %v4282 = vld [vmem:[%s169 + $0xf0] sm:$0xff]
      %v4283 = vld [vmem:[%s169 + $0xf8] sm:$0xff]
      %v4284 = vld [vmem:[%s1] sm:$0xff]
      %v4285 = vld [vmem:[%s1 + $0x8] sm:$0xff]
      %v4286 = vld [vmem:[%s1 + $0x10] sm:$0xff]
      %v4287 = vld [vmem:[%s1 + $0x18] sm:$0xff]
      %v4288 = vld [vmem:[%s1 + $0x20] sm:$0xff]
      %v4289 = vld [vmem:[%s1 + $0x28] sm:$0xff]
      %v4290 = vld [vmem:[%s1 + $0x30] sm:$0xff]
      %v4291 = vld [vmem:[%s1 + $0x38] sm:$0xff]
      %v4292 = vld [vmem:[%s1 + $0x40] sm:$0xff]
      %v4293 = vld [vmem:[%s1 + $0x48] sm:$0xff]
      %v4294 = vld [vmem:[%s1 + $0x50] sm:$0xff]
      %v4295 = vld [vmem:[%s1 + $0x58] sm:$0xff]
      %v4296 = vld [vmem:[%s1 + $0x60] sm:$0xff]
      %v4297 = vld [vmem:[%s1 + $0x68] sm:$0xff]
      %v4298 = vld [vmem:[%s1 + $0x70] sm:$0xff]
      %v4299 = vld [vmem:[%s1 + $0x78] sm:$0xff]
      %v4300 = vld [vmem:[%s1 + $0x80] sm:$0xff]
      %v4301 = vld [vmem:[%s1 + $0x88] sm:$0xff]
      %v4302 = vld [vmem:[%s1 + $0x90] sm:$0xff]
      %v4303 = vld [vmem:[%s1 + $0x98] sm:$0xff]
      %v4304 = vld [vmem:[%s1 + $0xa0] sm:$0xff]
      %v4305 = vld [vmem:[%s1 + $0xa8] sm:$0xff]
      %v4306 = vld [vmem:[%s1 + $0xb0] sm:$0xff]
      %v4307 = vld [vmem:[%s1 + $0xb8] sm:$0xff]
      %v4308 = vld [vmem:[%s1 + $0xc0] sm:$0xff]
      %v4309 = vld [vmem:[%s1 + $0xc8] sm:$0xff]
      %v4310 = vld [vmem:[%s1 + $0xd0] sm:$0xff]
      %v4311 = vld [vmem:[%s1 + $0xd8] sm:$0xff]
      %v4312 = vld [vmem:[%s1 + $0xe0] sm:$0xff]
      %v4313 = vld [vmem:[%s1 + $0xe8] sm:$0xff]
      %v4314 = vld [vmem:[%s1 + $0xf0] sm:$0xff]
      %v4315 = vld [vmem:[%s1 + $0xf8] sm:$0xff]
      %v4316 = vld [vmem:[%s1 + $0x100] sm:$0xff]
      %v4317 = vld [vmem:[%s1 + $0x108] sm:$0xff]
      %v4318 = vld [vmem:[%s1 + $0x110] sm:$0xff]
      %v4319 = vld [vmem:[%s1 + $0x118] sm:$0xff]
      %v4320 = vld [vmem:[%s1 + $0x120] sm:$0xff]
      %v4321 = vld [vmem:[%s1 + $0x128] sm:$0xff]
      %v4322 = vld [vmem:[%s1 + $0x130] sm:$0xff]
      %v4323 = vld [vmem:[%s1 + $0x138] sm:$0xff]
      %v4324 = vld [vmem:[%s1 + $0x140] sm:$0xff]
      %v4325 = vld [vmem:[%s1 + $0x148] sm:$0xff]
      %v4326 = vld [vmem:[%s1 + $0x150] sm:$0xff]
      %v4327 = vld [vmem:[%s1 + $0x158] sm:$0xff]
      %v4328 = vld [vmem:[%s1 + $0x160] sm:$0xff]
      %v4329 = vld [vmem:[%s1 + $0x168] sm:$0xff]
      %v4330 = vld [vmem:[%s1 + $0x170] sm:$0xff]
      %v4331 = vld [vmem:[%s1 + $0x178] sm:$0xff]
      %v4332 = vld [vmem:[%s1 + $0x180] sm:$0xff]
      %v4333 = vld [vmem:[%s1 + $0x188] sm:$0xff]
      %v4334 = vld [vmem:[%s1 + $0x190] sm:$0xff]
      %v4335 = vld [vmem:[%s1 + $0x198] sm:$0xff]
      %v4336 = vld [vmem:[%s1 + $0x1a0] sm:$0xff]
      %v4337 = vld [vmem:[%s1 + $0x1a8] sm:$0xff]
      %v4338 = vld [vmem:[%s1 + $0x1b0] sm:$0xff]
      %v4339 = vld [vmem:[%s1 + $0x1b8] sm:$0xff]
      %v4340 = vld [vmem:[%s1 + $0x1c0] sm:$0xff]
      %v4341 = vld [vmem:[%s1 + $0x1c8] sm:$0xff]
      %v4342 = vld [vmem:[%s1 + $0x1d0] sm:$0xff]
      %v4343 = vld [vmem:[%s1 + $0x1d8] sm:$0xff]
      %v4344 = vld [vmem:[%s1 + $0x1e0] sm:$0x33]
      %v4345 = vld [vmem:[%s1 + $0x1e8] sm:$0x33]
      %v4354 = vunpack.c.l.b16 %v4276
      %v4355 = vunpack.c.h.b16 %v4276
      %v4356 = vunpack.c.l.b16 %v4277
      %v4357 = vunpack.c.h.b16 %v4277
      %v4358 = vunpack.c.l.b16 %v4278
      %v4359 = vunpack.c.h.b16 %v4278
      %v4360 = vunpack.c.l.b16 %v4279
      %v4361 = vunpack.c.h.b16 %v4279
      %v4362 = vunpack.c.l.b16 %v4280
      %v4363 = vunpack.c.h.b16 %v4280
      %v4364 = vunpack.c.l.b16 %v4281
      %v4365 = vunpack.c.h.b16 %v4281
      %v4366 = vunpack.c.l.b16 %v4282
      %v4367 = vunpack.c.h.b16 %v4282
      %v4368 = vunpack.c.l.b16 %v4283
      %v4369 = vunpack.c.h.b16 %v4283
      %v4370 = vpack.c.b16 %v4356, %v4354
      %v4371 = vpack.c.b16 %v4357, %v4355
      %v4372 = vpack.c.b16 %v4360, %v4358
      %v4373 = vpack.c.b16 %v4361, %v4359
      %v4374 = vpack.c.b16 %v4364, %v4362
      %v4375 = vpack.c.b16 %v4365, %v4363
      %v4376 = vpack.c.b16 %v4368, %v4366
      %v4377 = vpack.c.b16 %v4369, %v4367
      %v4444 = vunpack.c.l.b16 %v4284
      %v4445 = vunpack.c.h.b16 %v4284
      %v4446 = vunpack.c.l.b16 %v4285
      %v4447 = vunpack.c.h.b16 %v4285
      %v4448 = vunpack.c.l.b16 %v4286
      %v4449 = vunpack.c.h.b16 %v4286
      %v4450 = vunpack.c.l.b16 %v4287
      %v4451 = vunpack.c.h.b16 %v4287
      %v4452 = vunpack.c.l.b16 %v4288
      %v4453 = vunpack.c.h.b16 %v4288
      %v4454 = vunpack.c.l.b16 %v4289
      %v4455 = vunpack.c.h.b16 %v4289
      %v4456 = vunpack.c.l.b16 %v4290
      %v4457 = vunpack.c.h.b16 %v4290
      %v4458 = vunpack.c.l.b16 %v4291
      %v4459 = vunpack.c.h.b16 %v4291
      %v4460 = vunpack.c.l.b16 %v4292
      %v4461 = vunpack.c.h.b16 %v4292
      %v4462 = vunpack.c.l.b16 %v4293
      %v4463 = vunpack.c.h.b16 %v4293
      %v4464 = vunpack.c.l.b16 %v4294
      %v4465 = vunpack.c.h.b16 %v4294
      %v4466 = vunpack.c.l.b16 %v4295
      %v4467 = vunpack.c.h.b16 %v4295
      %v4468 = vunpack.c.l.b16 %v4296
      %v4469 = vunpack.c.h.b16 %v4296
      %v4470 = vunpack.c.l.b16 %v4297
      %v4471 = vunpack.c.h.b16 %v4297
      %v4472 = vunpack.c.l.b16 %v4298
      %v4473 = vunpack.c.h.b16 %v4298
      %v4474 = vunpack.c.l.b16 %v4299
      %v4475 = vunpack.c.h.b16 %v4299
      %v4476 = vunpack.c.l.b16 %v4300
      %v4477 = vunpack.c.h.b16 %v4300
      %v4478 = vunpack.c.l.b16 %v4301
      %v4479 = vunpack.c.h.b16 %v4301
      %v4480 = vunpack.c.l.b16 %v4302
      %v4481 = vunpack.c.h.b16 %v4302
      %v4482 = vunpack.c.l.b16 %v4303
      %v4483 = vunpack.c.h.b16 %v4303
      %v4484 = vunpack.c.l.b16 %v4304
      %v4485 = vunpack.c.h.b16 %v4304
      %v4486 = vunpack.c.l.b16 %v4305
      %v4487 = vunpack.c.h.b16 %v4305
      %v4488 = vunpack.c.l.b16 %v4306
      %v4489 = vunpack.c.h.b16 %v4306
      %v4490 = vunpack.c.l.b16 %v4307
      %v4491 = vunpack.c.h.b16 %v4307
      %v4492 = vunpack.c.l.b16 %v4308
      %v4493 = vunpack.c.h.b16 %v4308
      %v4494 = vunpack.c.l.b16 %v4309
      %v4495 = vunpack.c.h.b16 %v4309
      %v4496 = vunpack.c.l.b16 %v4310
      %v4497 = vunpack.c.h.b16 %v4310
      %v4498 = vunpack.c.l.b16 %v4311
      %v4499 = vunpack.c.h.b16 %v4311
      %v4500 = vunpack.c.l.b16 %v4312
      %v4501 = vunpack.c.h.b16 %v4312
      %v4502 = vunpack.c.l.b16 %v4313
      %v4503 = vunpack.c.h.b16 %v4313
      %v4504 = vunpack.c.l.b16 %v4314
      %v4505 = vunpack.c.h.b16 %v4314
      %v4506 = vunpack.c.l.b16 %v4315
      %v4507 = vunpack.c.h.b16 %v4315
      %v4508 = vunpack.c.l.b16 %v4316
      %v4509 = vunpack.c.h.b16 %v4316
      %v4510 = vunpack.c.l.b16 %v4317
      %v4511 = vunpack.c.h.b16 %v4317
      %v4512 = vunpack.c.l.b16 %v4318
      %v4513 = vunpack.c.h.b16 %v4318
      %v4514 = vunpack.c.l.b16 %v4319
      %v4515 = vunpack.c.h.b16 %v4319
      %v4516 = vunpack.c.l.b16 %v4320
      %v4517 = vunpack.c.h.b16 %v4320
      %v4518 = vunpack.c.l.b16 %v4321
      %v4519 = vunpack.c.h.b16 %v4321
      %v4520 = vunpack.c.l.b16 %v4322
      %v4521 = vunpack.c.h.b16 %v4322
      %v4522 = vunpack.c.l.b16 %v4323
      %v4523 = vunpack.c.h.b16 %v4323
      %v4524 = vunpack.c.l.b16 %v4324
      %v4525 = vunpack.c.h.b16 %v4324
      %v4526 = vunpack.c.l.b16 %v4325
      %v4527 = vunpack.c.h.b16 %v4325
      %v4528 = vunpack.c.l.b16 %v4326
      %v4529 = vunpack.c.h.b16 %v4326
      %v4530 = vunpack.c.l.b16 %v4327
      %v4531 = vunpack.c.h.b16 %v4327
      %v4532 = vunpack.c.l.b16 %v4328
      %v4533 = vunpack.c.h.b16 %v4328
      %v4534 = vunpack.c.l.b16 %v4329
      %v4535 = vunpack.c.h.b16 %v4329
      %v4536 = vunpack.c.l.b16 %v4330
      %v4537 = vunpack.c.h.b16 %v4330
      %v4538 = vunpack.c.l.b16 %v4331
      %v4539 = vunpack.c.h.b16 %v4331
      %v4540 = vunpack.c.l.b16 %v4332
      %v4541 = vunpack.c.h.b16 %v4332
      %v4542 = vunpack.c.l.b16 %v4333
      %v4543 = vunpack.c.h.b16 %v4333
      %v4544 = vunpack.c.l.b16 %v4334
      %v4545 = vunpack.c.h.b16 %v4334
      %v4546 = vunpack.c.l.b16 %v4335
      %v4547 = vunpack.c.h.b16 %v4335
      %v4548 = vunpack.c.l.b16 %v4336
      %v4549 = vunpack.c.h.b16 %v4336
      %v4550 = vunpack.c.l.b16 %v4337
      %v4551 = vunpack.c.h.b16 %v4337
      %v4552 = vunpack.c.l.b16 %v4338
      %v4553 = vunpack.c.h.b16 %v4338
      %v4554 = vunpack.c.l.b16 %v4339
      %v4555 = vunpack.c.h.b16 %v4339
      %v4556 = vunpack.c.l.b16 %v4340
      %v4557 = vunpack.c.h.b16 %v4340
      %v4558 = vunpack.c.l.b16 %v4341
      %v4559 = vunpack.c.h.b16 %v4341
      %v4560 = vunpack.c.l.b16 %v4342
      %v4561 = vunpack.c.h.b16 %v4342
      %v4562 = vunpack.c.l.b16 %v4343
      %v4563 = vunpack.c.h.b16 %v4343
      %v4564 = vunpack.c.l.b16 %v4344
      %v4565 = vunpack.c.h.b16 %v4344
      %v4566 = vunpack.c.l.b16 %v4345
      %v4567 = vunpack.c.h.b16 %v4345
      %v4568 = vpack.c.b16 %v4448, %v4444
      %v4569 = vpack.c.b16 %v4449, %v4445
      %v4570 = vpack.c.b16 %v4450, %v4446
      %v4571 = vpack.c.b16 %v4451, %v4447
      %v4572 = vpack.c.b16 %v4456, %v4452
      %v4573 = vpack.c.b16 %v4457, %v4453
      %v4574 = vpack.c.b16 %v4458, %v4454
      %v4575 = vpack.c.b16 %v4459, %v4455
      %v4576 = vpack.c.b16 %v4464, %v4460
      %v4577 = vpack.c.b16 %v4465, %v4461
      %v4578 = vpack.c.b16 %v4466, %v4462
      %v4579 = vpack.c.b16 %v4467, %v4463
      %v4580 = vpack.c.b16 %v4472, %v4468
      %v4581 = vpack.c.b16 %v4473, %v4469
      %v4582 = vpack.c.b16 %v4474, %v4470
      %v4583 = vpack.c.b16 %v4475, %v4471
      %v4584 = vpack.c.b16 %v4480, %v4476
      %v4585 = vpack.c.b16 %v4481, %v4477
      %v4586 = vpack.c.b16 %v4482, %v4478
      %v4587 = vpack.c.b16 %v4483, %v4479
      %v4588 = vpack.c.b16 %v4488, %v4484
      %v4589 = vpack.c.b16 %v4489, %v4485
      %v4590 = vpack.c.b16 %v4490, %v4486
      %v4591 = vpack.c.b16 %v4491, %v4487
      %v4592 = vpack.c.b16 %v4496, %v4492
      %v4593 = vpack.c.b16 %v4497, %v4493
      %v4594 = vpack.c.b16 %v4498, %v4494
      %v4595 = vpack.c.b16 %v4499, %v4495
      %v4596 = vpack.c.b16 %v4504, %v4500
      %v4597 = vpack.c.b16 %v4505, %v4501
      %v4598 = vpack.c.b16 %v4506, %v4502
      %v4599 = vpack.c.b16 %v4507, %v4503
      %v4600 = vpack.c.b16 %v4512, %v4508
      %v4601 = vpack.c.b16 %v4513, %v4509
      %v4602 = vpack.c.b16 %v4514, %v4510
      %v4603 = vpack.c.b16 %v4515, %v4511
      %v4604 = vpack.c.b16 %v4520, %v4516
      %v4605 = vpack.c.b16 %v4521, %v4517
      %v4606 = vpack.c.b16 %v4522, %v4518
      %v4607 = vpack.c.b16 %v4523, %v4519
      %v4608 = vpack.c.b16 %v4528, %v4524
      %v4609 = vpack.c.b16 %v4529, %v4525
      %v4610 = vpack.c.b16 %v4530, %v4526
      %v4611 = vpack.c.b16 %v4531, %v4527
      %v4612 = vpack.c.b16 %v4536, %v4532
      %v4613 = vpack.c.b16 %v4537, %v4533
      %v4614 = vpack.c.b16 %v4538, %v4534
      %v4615 = vpack.c.b16 %v4539, %v4535
      %v4616 = vpack.c.b16 %v4544, %v4540
      %v4617 = vpack.c.b16 %v4545, %v4541
      %v4618 = vpack.c.b16 %v4546, %v4542
      %v4619 = vpack.c.b16 %v4547, %v4543
      %v4620 = vpack.c.b16 %v4552, %v4548
      %v4621 = vpack.c.b16 %v4553, %v4549
      %v4622 = vpack.c.b16 %v4554, %v4550
      %v4623 = vpack.c.b16 %v4555, %v4551
      %v4624 = vpack.c.b16 %v4560, %v4556
      %v4625 = vpack.c.b16 %v4561, %v4557
      %v4626 = vpack.c.b16 %v4562, %v4558
      %v4627 = vpack.c.b16 %v4563, %v4559
      %v4628 = vpack.c.b16 %v4564, %v4564
      %v4629 = vpack.c.b16 %v4565, %v4565
      %v4630 = vpack.c.b16 %v4566, %v4566
      %v4631 = vpack.c.b16 %v4567, %v4567
      %v4693 = vsel %vm594, %v4371, 0
      %v4696 = vsel %vm594, %v4373, 0
      %v4699 = vsel %vm594, %v4375, 0
      %v4702 = vsel %vm594, %v4377, 0
      %v4705 = vand.u32 %v4628, %v610
      %v4708 = vand.u32 %v4629, %v610
      %v4711 = vand.u32 %v4630, %v610
      %v4714 = vand.u32 %v4631, %v610
      %4716 = vmatprep.subr.bf16.mxu0 %v4569
      %4717 = vmatpush1.bf16.msra.mxu0 %v4568
      %4718 = vmatprep.subr.bf16.mxu0 %v4573
      %4719 = vmatpush1.bf16.msra.mxu0 %v4572
      %4720 = vmatprep.subr.bf16.mxu0 %v4577
      %4721 = vmatpush1.bf16.msra.mxu0 %v4576
      %4722 = vmatprep.subr.bf16.mxu0 %v4581
      %4723 = vmatpush1.bf16.msra.mxu0 %v4580
      %4724 = vmatprep.subr.bf16.mxu0 %v4585
      %4725 = vmatpush1.bf16.msra.mxu0 %v4584
      %4726 = vmatprep.subr.bf16.mxu0 %v4589
      %4727 = vmatpush1.bf16.msra.mxu0 %v4588
      %4728 = vmatprep.subr.bf16.mxu0 %v4593
      %4729 = vmatpush1.bf16.msra.mxu0 %v4592
      %4730 = vmatprep.subr.bf16.mxu0 %v4597
      %4731 = vmatpush1.bf16.msra.mxu0 %v4596
      %4732 = vmatprep.subr.bf16.mxu0 %v4601
      %4733 = vmatpush1.bf16.msra.mxu0 %v4600
      %4734 = vmatprep.subr.bf16.mxu0 %v4605
      %4735 = vmatpush1.bf16.msra.mxu0 %v4604
      %4736 = vmatprep.subr.bf16.mxu0 %v4609
      %4737 = vmatpush1.bf16.msra.mxu0 %v4608
      %4738 = vmatprep.subr.bf16.mxu0 %v4613
      %4739 = vmatpush1.bf16.msra.mxu0 %v4612
      %4740 = vmatprep.subr.bf16.mxu0 %v4617
      %4741 = vmatpush1.bf16.msra.mxu0 %v4616
      %4742 = vmatprep.subr.bf16.mxu0 %v4621
      %4743 = vmatpush1.bf16.msra.mxu0 %v4620
      %4744 = vmatprep.subr.bf16.mxu0 %v4625
      %4745 = vmatpush1.bf16.msra.mxu0 %v4624
      %4746 = vmatprep.subr.bf16.mxu0 %v4708
      %4747 = vmatpush1.bf16.msra.mxu0 %v4705
      %4748 = vmatprep.mubr.bf16.mxu0 %v4693
      %4749 = vmatmul.mubr.bf16.gmra.mrb[0].mxu0 %v4370
      %v4750 = vpop.f32.mrb[0].mxu0
      %v4751 = vadd.f32 0.0, %v4750
      %v4752 = vpop.f32.mrb[0].mxu0
      %v4753 = vadd.f32 0.0, %v4752
      %v4754 = vpop.f32.mrb[0].mxu0
      %v4755 = vadd.f32 0.0, %v4754
      %v4756 = vpop.f32.mrb[0].mxu0
      %v4757 = vadd.f32 0.0, %v4756
      %4758 = vmatprep.mubr.bf16.mxu0 %v4696
      %4759 = vmatmul.mubr.bf16.gmra.mrb[0].mxu0 %v4372
      %v4760 = vpop.f32.mrb[0].mxu0
      %v4761 = vadd.f32 0.0, %v4760
      %v4762 = vpop.f32.mrb[0].mxu0
      %v4763 = vadd.f32 0.0, %v4762
      %v4764 = vpop.f32.mrb[0].mxu0
      %v4765 = vadd.f32 0.0, %v4764
      %v4766 = vpop.f32.mrb[0].mxu0
      %v4767 = vadd.f32 0.0, %v4766
      %4768 = vmatprep.mubr.bf16.mxu0 %v4699
      %4769 = vmatmul.mubr.bf16.gmra.mrb[0].mxu0 %v4374
      %v4770 = vpop.f32.mrb[0].mxu0
      %v4771 = vadd.f32 0.0, %v4770
      %v4772 = vpop.f32.mrb[0].mxu0
      %v4773 = vadd.f32 0.0, %v4772
      %v4774 = vpop.f32.mrb[0].mxu0
      %v4775 = vadd.f32 0.0, %v4774
      %v4776 = vpop.f32.mrb[0].mxu0
      %v4777 = vadd.f32 0.0, %v4776
      %4778 = vmatprep.mubr.bf16.mxu0 %v4702
      %4779 = vmatmul.mubr.bf16.gmra.mrb[0].mxu0 %v4376
      %v4780 = vpop.f32.mrb[0].mxu0
      %v4781 = vadd.f32 0.0, %v4780
      %v4782 = vpop.f32.mrb[0].mxu0
      %v4783 = vadd.f32 0.0, %v4782
      %v4784 = vpop.f32.mrb[0].mxu0
      %v4785 = vadd.f32 0.0, %v4784
      %v4786 = vpop.f32.mrb[0].mxu0
      %v4787 = vadd.f32 0.0, %v4786
      %4788 = vdwg.mxu0
      %4789 = vmatprep.subr.bf16.mxu0 %v4571
      %4790 = vmatpush1.bf16.msra.mxu0 %v4570
      %4791 = vmatprep.subr.bf16.mxu0 %v4575
      %4792 = vmatpush1.bf16.msra.mxu0 %v4574
      %4793 = vmatprep.subr.bf16.mxu0 %v4579
      %4794 = vmatpush1.bf16.msra.mxu0 %v4578
      %4795 = vmatprep.subr.bf16.mxu0 %v4583
      %4796 = vmatpush1.bf16.msra.mxu0 %v4582
      %4797 = vmatprep.subr.bf16.mxu0 %v4587
      %4798 = vmatpush1.bf16.msra.mxu0 %v4586
      %4799 = vmatprep.subr.bf16.mxu0 %v4591
      %4800 = vmatpush1.bf16.msra.mxu0 %v4590
      %4801 = vmatprep.subr.bf16.mxu0 %v4595
      %4802 = vmatpush1.bf16.msra.mxu0 %v4594
      %4803 = vmatprep.subr.bf16.mxu0 %v4599
      %4804 = vmatpush1.bf16.msra.mxu0 %v4598
      %4805 = vmatprep.subr.bf16.mxu0 %v4603
      %4806 = vmatpush1.bf16.msra.mxu0 %v4602
      %4807 = vmatprep.subr.bf16.mxu0 %v4607
      %4808 = vmatpush1.bf16.msra.mxu0 %v4606
      %4809 = vmatprep.subr.bf16.mxu0 %v4611
      %4810 = vmatpush1.bf16.msra.mxu0 %v4610
      %4811 = vmatprep.subr.bf16.mxu0 %v4615
      %4812 = vmatpush1.bf16.msra.mxu0 %v4614
      %4813 = vmatprep.subr.bf16.mxu0 %v4619
      %4814 = vmatpush1.bf16.msra.mxu0 %v4618
      %4815 = vmatprep.subr.bf16.mxu0 %v4623
      %4816 = vmatpush1.bf16.msra.mxu0 %v4622
      %4817 = vmatprep.subr.bf16.mxu0 %v4627
      %4818 = vmatpush1.bf16.msra.mxu0 %v4626
      %4819 = vmatprep.subr.bf16.mxu0 %v4714
      %4820 = vmatpush1.bf16.msra.mxu0 %v4711
      %4821 = vmatprep.mubr.bf16.mxu0 %v4693
      %4822 = vmatmul.mubr.bf16.gmra.mrb[0].mxu0 %v4370
      %v4823 = vpop.f32.mrb[0].mxu0
      %v4824 = vadd.f32 0.0, %v4823
      %v4825 = vpop.f32.mrb[0].mxu0
      %v4826 = vadd.f32 0.0, %v4825
      %v4827 = vpop.f32.mrb[0].mxu0
      %v4828 = vadd.f32 0.0, %v4827
      %v4829 = vpop.f32.mrb[0].mxu0
      %v4830 = vadd.f32 0.0, %v4829
      %4831 = vmatprep.mubr.bf16.mxu0 %v4696
      %4832 = vmatmul.mubr.bf16.gmra.mrb[0].mxu0 %v4372
      %v4833 = vpop.f32.mrb[0].mxu0
      %v4834 = vadd.f32 0.0, %v4833
      %v4835 = vpop.f32.mrb[0].mxu0
      %v4836 = vadd.f32 0.0, %v4835
      %v4837 = vpop.f32.mrb[0].mxu0
      %v4838 = vadd.f32 0.0, %v4837
      %v4839 = vpop.f32.mrb[0].mxu0
      %v4840 = vadd.f32 0.0, %v4839
      %4841 = vmatprep.mubr.bf16.mxu0 %v4699
      %4842 = vmatmul.mubr.bf16.gmra.mrb[0].mxu0 %v4374
      %v4843 = vpop.f32.mrb[0].mxu0
      %v4844 = vadd.f32 0.0, %v4843
      %v4845 = vpop.f32.mrb[0].mxu0
      %v4846 = vadd.f32 0.0, %v4845
      %v4847 = vpop.f32.mrb[0].mxu0
      %v4848 = vadd.f32 0.0, %v4847
      %v4849 = vpop.f32.mrb[0].mxu0
      %v4850 = vadd.f32 0.0, %v4849
      %4851 = vmatprep.mubr.bf16.mxu0 %v4702
      %4852 = vmatmul.mubr.bf16.gmra.mrb[0].mxu0 %v4376
      %v4853 = vpop.f32.mrb[0].mxu0
      %v4854 = vadd.f32 0.0, %v4853
      %v4855 = vpop.f32.mrb[0].mxu0
      %v4856 = vadd.f32 0.0, %v4855
      %v4857 = vpop.f32.mrb[0].mxu0
      %v4858 = vadd.f32 0.0, %v4857
      %v4859 = vpop.f32.mrb[0].mxu0
      %v4860 = vadd.f32 0.0, %v4859
      %4861 = vdwg.mxu0
      %4870 = vrot.lane.b32.xlu0 %v4751, 112
      %v4871 = vpop.permute.xlu0 %4870
      %4872 = vrot.lane.b32.xlu0 %v4755, 112
      %v4873 = vpop.permute.xlu0 %4872
      %4874 = vrot.lane.b32.xlu0 %v4761, 112
      %v4875 = vpop.permute.xlu0 %4874
      %4876 = vrot.lane.b32.xlu0 %v4765, 112
      %v4877 = vpop.permute.xlu0 %4876
      %4878 = vrot.lane.b32.xlu0 %v4771, 112
      %v4879 = vpop.permute.xlu0 %4878
      %4880 = vrot.lane.b32.xlu0 %v4775, 112
      %v4881 = vpop.permute.xlu0 %4880
      %4882 = vrot.lane.b32.xlu0 %v4781, 112
      %v4883 = vpop.permute.xlu0 %4882
      %4884 = vrot.lane.b32.xlu0 %v4785, 112
      %v4885 = vpop.permute.xlu0 %4884
      %v4894 = vmax.f32 %v4751, %v4871
      %v4895 = vmax.f32 %v4755, %v4873
      %v4896 = vmax.f32 %v4761, %v4875
      %v4897 = vmax.f32 %v4765, %v4877
      %v4898 = vmax.f32 %v4771, %v4879
      %v4899 = vmax.f32 %v4775, %v4881
      %v4900 = vmax.f32 %v4781, %v4883
      %v4901 = vmax.f32 %v4785, %v4885
      %4902 = vrot.lane.b32.xlu0 %v4751, 96
      %v4903 = vpop.permute.xlu0 %4902
      %4904 = vrot.lane.b32.xlu0 %v4755, 96
      %v4905 = vpop.permute.xlu0 %4904
      %4906 = vrot.lane.b32.xlu0 %v4761, 96
      %v4907 = vpop.permute.xlu0 %4906
      %4908 = vrot.lane.b32.xlu0 %v4765, 96
      %v4909 = vpop.permute.xlu0 %4908
      %4910 = vrot.lane.b32.xlu0 %v4771, 96
      %v4911 = vpop.permute.xlu0 %4910
      %4912 = vrot.lane.b32.xlu0 %v4775, 96
      %v4913 = vpop.permute.xlu0 %4912
      %4914 = vrot.lane.b32.xlu0 %v4781, 96
      %v4915 = vpop.permute.xlu0 %4914
      %4916 = vrot.lane.b32.xlu0 %v4785, 96
      %v4917 = vpop.permute.xlu0 %4916
      %v4926 = vmax.f32 %v4894, %v4903
      %v4927 = vmax.f32 %v4895, %v4905
      %v4928 = vmax.f32 %v4896, %v4907
      %v4929 = vmax.f32 %v4897, %v4909
      %v4930 = vmax.f32 %v4898, %v4911
      %v4931 = vmax.f32 %v4899, %v4913
      %v4932 = vmax.f32 %v4900, %v4915
      %v4933 = vmax.f32 %v4901, %v4917
      %4934 = vrot.lane.b32.xlu0 %v4751, 80
      %v4935 = vpop.permute.xlu0 %4934
      %4936 = vrot.lane.b32.xlu0 %v4755, 80
      %v4937 = vpop.permute.xlu0 %4936
      %4938 = vrot.lane.b32.xlu0 %v4761, 80
      %v4939 = vpop.permute.xlu0 %4938
      %4940 = vrot.lane.b32.xlu0 %v4765, 80
      %v4941 = vpop.permute.xlu0 %4940
      %4942 = vrot.lane.b32.xlu0 %v4771, 80
      %v4943 = vpop.permute.xlu0 %4942
      %4944 = vrot.lane.b32.xlu0 %v4775, 80
      %v4945 = vpop.permute.xlu0 %4944
      %4946 = vrot.lane.b32.xlu0 %v4781, 80
      %v4947 = vpop.permute.xlu0 %4946
      %4948 = vrot.lane.b32.xlu0 %v4785, 80
      %v4949 = vpop.permute.xlu0 %4948
      %v4958 = vmax.f32 %v4926, %v4935
      %v4959 = vmax.f32 %v4927, %v4937
      %v4960 = vmax.f32 %v4928, %v4939
      %v4961 = vmax.f32 %v4929, %v4941
      %v4962 = vmax.f32 %v4930, %v4943
      %v4963 = vmax.f32 %v4931, %v4945
      %v4964 = vmax.f32 %v4932, %v4947
      %v4965 = vmax.f32 %v4933, %v4949
      %4966 = vrot.lane.b32.xlu0 %v4751, 64
      %v4967 = vpop.permute.xlu0 %4966
      %4968 = vrot.lane.b32.xlu0 %v4755, 64
      %v4969 = vpop.permute.xlu0 %4968
      %4970 = vrot.lane.b32.xlu0 %v4761, 64
      %v4971 = vpop.permute.xlu0 %4970
      %4972 = vrot.lane.b32.xlu0 %v4765, 64
      %v4973 = vpop.permute.xlu0 %4972
      %4974 = vrot.lane.b32.xlu0 %v4771, 64
      %v4975 = vpop.permute.xlu0 %4974
      %4976 = vrot.lane.b32.xlu0 %v4775, 64
      %v4977 = vpop.permute.xlu0 %4976
      %4978 = vrot.lane.b32.xlu0 %v4781, 64
      %v4979 = vpop.permute.xlu0 %4978
      %4980 = vrot.lane.b32.xlu0 %v4785, 64
      %v4981 = vpop.permute.xlu0 %4980
      %v4990 = vmax.f32 %v4958, %v4967
      %v4991 = vmax.f32 %v4959, %v4969
      %v4992 = vmax.f32 %v4960, %v4971
      %v4993 = vmax.f32 %v4961, %v4973
      %v4994 = vmax.f32 %v4962, %v4975
      %v4995 = vmax.f32 %v4963, %v4977
      %v4996 = vmax.f32 %v4964, %v4979
      %v4997 = vmax.f32 %v4965, %v4981
      %4998 = vrot.lane.b32.xlu0 %v4751, 48
      %v4999 = vpop.permute.xlu0 %4998
      %5000 = vrot.lane.b32.xlu0 %v4755, 48
      %v5001 = vpop.permute.xlu0 %5000
      %5002 = vrot.lane.b32.xlu0 %v4761, 48
      %v5003 = vpop.permute.xlu0 %5002
      %5004 = vrot.lane.b32.xlu0 %v4765, 48
      %v5005 = vpop.permute.xlu0 %5004
      %5006 = vrot.lane.b32.xlu0 %v4771, 48
      %v5007 = vpop.permute.xlu0 %5006
      %5008 = vrot.lane.b32.xlu0 %v4775, 48
      %v5009 = vpop.permute.xlu0 %5008
      %5010 = vrot.lane.b32.xlu0 %v4781, 48
      %v5011 = vpop.permute.xlu0 %5010
      %5012 = vrot.lane.b32.xlu0 %v4785, 48
      %v5013 = vpop.permute.xlu0 %5012
      %v5022 = vmax.f32 %v4990, %v4999
      %v5023 = vmax.f32 %v4991, %v5001
      %v5024 = vmax.f32 %v4992, %v5003
      %v5025 = vmax.f32 %v4993, %v5005
      %v5026 = vmax.f32 %v4994, %v5007
      %v5027 = vmax.f32 %v4995, %v5009
      %v5028 = vmax.f32 %v4996, %v5011
      %v5029 = vmax.f32 %v4997, %v5013
      %5030 = vrot.lane.b32.xlu0 %v4751, 32
      %v5031 = vpop.permute.xlu0 %5030
      %5032 = vrot.lane.b32.xlu0 %v4755, 32
      %v5033 = vpop.permute.xlu0 %5032
      %5034 = vrot.lane.b32.xlu0 %v4761, 32
      %v5035 = vpop.permute.xlu0 %5034
      %5036 = vrot.lane.b32.xlu0 %v4765, 32
      %v5037 = vpop.permute.xlu0 %5036
      %5038 = vrot.lane.b32.xlu0 %v4771, 32
      %v5039 = vpop.permute.xlu0 %5038
      %5040 = vrot.lane.b32.xlu0 %v4775, 32
      %v5041 = vpop.permute.xlu0 %5040
      %5042 = vrot.lane.b32.xlu0 %v4781, 32
      %v5043 = vpop.permute.xlu0 %5042
      %5044 = vrot.lane.b32.xlu0 %v4785, 32
      %v5045 = vpop.permute.xlu0 %5044
      %v5054 = vmax.f32 %v5022, %v5031
      %v5055 = vmax.f32 %v5023, %v5033
      %v5056 = vmax.f32 %v5024, %v5035
      %v5057 = vmax.f32 %v5025, %v5037
      %v5058 = vmax.f32 %v5026, %v5039
      %v5059 = vmax.f32 %v5027, %v5041
      %v5060 = vmax.f32 %v5028, %v5043
      %v5061 = vmax.f32 %v5029, %v5045
      %5062 = vrot.lane.b32.xlu0 %v4751, 16
      %v5063 = vpop.permute.xlu0 %5062
      %5064 = vrot.lane.b32.xlu0 %v4755, 16
      %v5065 = vpop.permute.xlu0 %5064
      %5066 = vrot.lane.b32.xlu0 %v4761, 16
      %v5067 = vpop.permute.xlu0 %5066
      %5068 = vrot.lane.b32.xlu0 %v4765, 16
      %v5069 = vpop.permute.xlu0 %5068
      %5070 = vrot.lane.b32.xlu0 %v4771, 16
      %v5071 = vpop.permute.xlu0 %5070
      %5072 = vrot.lane.b32.xlu0 %v4775, 16
      %v5073 = vpop.permute.xlu0 %5072
      %5074 = vrot.lane.b32.xlu0 %v4781, 16
      %v5075 = vpop.permute.xlu0 %5074
      %5076 = vrot.lane.b32.xlu0 %v4785, 16
      %v5077 = vpop.permute.xlu0 %5076
      %v5086 = vmax.f32 %v5054, %v5063
      %v5087 = vmax.f32 %v5055, %v5065
      %v5088 = vmax.f32 %v5056, %v5067
      %v5089 = vmax.f32 %v5057, %v5069
      %v5090 = vmax.f32 %v5058, %v5071
      %v5091 = vmax.f32 %v5059, %v5073
      %v5092 = vmax.f32 %v5060, %v5075
      %v5093 = vmax.f32 %v5061, %v5077
      %v5094 = vmax.f32 %v5086, %v4753
      %v5095 = vmax.f32 %v5087, %v4757
      %v5096 = vmax.f32 %v5088, %v4763
      %v5097 = vmax.f32 %v5089, %v4767
      %v5098 = vmax.f32 %v5090, %v4773
      %v5099 = vmax.f32 %v5091, %v4777
      %v5100 = vmax.f32 %v5092, %v4783
      %v5101 = vmax.f32 %v5093, %v4787
      %5110 = vrot.lane.b32.xlu0 %v4753, 112
      %v5111 = vpop.permute.xlu0 %5110
      %5112 = vrot.lane.b32.xlu0 %v4757, 112
      %v5113 = vpop.permute.xlu0 %5112
      %5114 = vrot.lane.b32.xlu0 %v4763, 112
      %v5115 = vpop.permute.xlu0 %5114
      %5116 = vrot.lane.b32.xlu0 %v4767, 112
      %v5117 = vpop.permute.xlu0 %5116
      %5118 = vrot.lane.b32.xlu0 %v4773, 112
      %v5119 = vpop.permute.xlu0 %5118
      %5120 = vrot.lane.b32.xlu0 %v4777, 112
      %v5121 = vpop.permute.xlu0 %5120
      %5122 = vrot.lane.b32.xlu0 %v4783, 112
      %v5123 = vpop.permute.xlu0 %5122
      %5124 = vrot.lane.b32.xlu0 %v4787, 112
      %v5125 = vpop.permute.xlu0 %5124
      %v5134 = vmax.f32 %v5094, %v5111
      %v5135 = vmax.f32 %v5095, %v5113
      %v5136 = vmax.f32 %v5096, %v5115
      %v5137 = vmax.f32 %v5097, %v5117
      %v5138 = vmax.f32 %v5098, %v5119
      %v5139 = vmax.f32 %v5099, %v5121
      %v5140 = vmax.f32 %v5100, %v5123
      %v5141 = vmax.f32 %v5101, %v5125
      %5142 = vrot.lane.b32.xlu0 %v4753, 96
      %v5143 = vpop.permute.xlu0 %5142
      %5144 = vrot.lane.b32.xlu0 %v4757, 96
      %v5145 = vpop.permute.xlu0 %5144
      %5146 = vrot.lane.b32.xlu0 %v4763, 96
      %v5147 = vpop.permute.xlu0 %5146
      %5148 = vrot.lane.b32.xlu0 %v4767, 96
      %v5149 = vpop.permute.xlu0 %5148
      %5150 = vrot.lane.b32.xlu0 %v4773, 96
      %v5151 = vpop.permute.xlu0 %5150
      %5152 = vrot.lane.b32.xlu0 %v4777, 96
      %v5153 = vpop.permute.xlu0 %5152
      %5154 = vrot.lane.b32.xlu0 %v4783, 96
      %v5155 = vpop.permute.xlu0 %5154
      %5156 = vrot.lane.b32.xlu0 %v4787, 96
      %v5157 = vpop.permute.xlu0 %5156
      %v5166 = vmax.f32 %v5134, %v5143
      %v5167 = vmax.f32 %v5135, %v5145
      %v5168 = vmax.f32 %v5136, %v5147
      %v5169 = vmax.f32 %v5137, %v5149
      %v5170 = vmax.f32 %v5138, %v5151
      %v5171 = vmax.f32 %v5139, %v5153
      %v5172 = vmax.f32 %v5140, %v5155
      %v5173 = vmax.f32 %v5141, %v5157
      %5174 = vrot.lane.b32.xlu0 %v4753, 80
      %v5175 = vpop.permute.xlu0 %5174
      %5176 = vrot.lane.b32.xlu0 %v4757, 80
      %v5177 = vpop.permute.xlu0 %5176
      %5178 = vrot.lane.b32.xlu0 %v4763, 80
      %v5179 = vpop.permute.xlu0 %5178
      %5180 = vrot.lane.b32.xlu0 %v4767, 80
      %v5181 = vpop.permute.xlu0 %5180
      %5182 = vrot.lane.b32.xlu0 %v4773, 80
      %v5183 = vpop.permute.xlu0 %5182
      %5184 = vrot.lane.b32.xlu0 %v4777, 80
      %v5185 = vpop.permute.xlu0 %5184
      %5186 = vrot.lane.b32.xlu0 %v4783, 80
      %v5187 = vpop.permute.xlu0 %5186
      %5188 = vrot.lane.b32.xlu0 %v4787, 80
      %v5189 = vpop.permute.xlu0 %5188
      %v5198 = vmax.f32 %v5166, %v5175
      %v5199 = vmax.f32 %v5167, %v5177
      %v5200 = vmax.f32 %v5168, %v5179
      %v5201 = vmax.f32 %v5169, %v5181
      %v5202 = vmax.f32 %v5170, %v5183
      %v5203 = vmax.f32 %v5171, %v5185
      %v5204 = vmax.f32 %v5172, %v5187
      %v5205 = vmax.f32 %v5173, %v5189
      %5206 = vrot.lane.b32.xlu0 %v4753, 64
      %v5207 = vpop.permute.xlu0 %5206
      %5208 = vrot.lane.b32.xlu0 %v4757, 64
      %v5209 = vpop.permute.xlu0 %5208
      %5210 = vrot.lane.b32.xlu0 %v4763, 64
      %v5211 = vpop.permute.xlu0 %5210
      %5212 = vrot.lane.b32.xlu0 %v4767, 64
      %v5213 = vpop.permute.xlu0 %5212
      %5214 = vrot.lane.b32.xlu0 %v4773, 64
      %v5215 = vpop.permute.xlu0 %5214
      %5216 = vrot.lane.b32.xlu0 %v4777, 64
      %v5217 = vpop.permute.xlu0 %5216
      %5218 = vrot.lane.b32.xlu0 %v4783, 64
      %v5219 = vpop.permute.xlu0 %5218
      %5220 = vrot.lane.b32.xlu0 %v4787, 64
      %v5221 = vpop.permute.xlu0 %5220
      %v5230 = vmax.f32 %v5198, %v5207
      %v5231 = vmax.f32 %v5199, %v5209
      %v5232 = vmax.f32 %v5200, %v5211
      %v5233 = vmax.f32 %v5201, %v5213
      %v5234 = vmax.f32 %v5202, %v5215
      %v5235 = vmax.f32 %v5203, %v5217
      %v5236 = vmax.f32 %v5204, %v5219
      %v5237 = vmax.f32 %v5205, %v5221
      %5238 = vrot.lane.b32.xlu0 %v4753, 48
      %v5239 = vpop.permute.xlu0 %5238
      %5240 = vrot.lane.b32.xlu0 %v4757, 48
      %v5241 = vpop.permute.xlu0 %5240
      %5242 = vrot.lane.b32.xlu0 %v4763, 48
      %v5243 = vpop.permute.xlu0 %5242
      %5244 = vrot.lane.b32.xlu0 %v4767, 48
      %v5245 = vpop.permute.xlu0 %5244
      %5246 = vrot.lane.b32.xlu0 %v4773, 48
      %v5247 = vpop.permute.xlu0 %5246
      %5248 = vrot.lane.b32.xlu0 %v4777, 48
      %v5249 = vpop.permute.xlu0 %5248
      %5250 = vrot.lane.b32.xlu0 %v4783, 48
      %v5251 = vpop.permute.xlu0 %5250
      %5252 = vrot.lane.b32.xlu0 %v4787, 48
      %v5253 = vpop.permute.xlu0 %5252
      %v5262 = vmax.f32 %v5230, %v5239
      %v5263 = vmax.f32 %v5231, %v5241
      %v5264 = vmax.f32 %v5232, %v5243
      %v5265 = vmax.f32 %v5233, %v5245
      %v5266 = vmax.f32 %v5234, %v5247
      %v5267 = vmax.f32 %v5235, %v5249
      %v5268 = vmax.f32 %v5236, %v5251
      %v5269 = vmax.f32 %v5237, %v5253
      %5270 = vrot.lane.b32.xlu0 %v4753, 32
      %v5271 = vpop.permute.xlu0 %5270
      %5272 = vrot.lane.b32.xlu0 %v4757, 32
      %v5273 = vpop.permute.xlu0 %5272
      %5274 = vrot.lane.b32.xlu0 %v4763, 32
      %v5275 = vpop.permute.xlu0 %5274
      %5276 = vrot.lane.b32.xlu0 %v4767, 32
      %v5277 = vpop.permute.xlu0 %5276
      %5278 = vrot.lane.b32.xlu0 %v4773, 32
      %v5279 = vpop.permute.xlu0 %5278
      %5280 = vrot.lane.b32.xlu0 %v4777, 32
      %v5281 = vpop.permute.xlu0 %5280
      %5282 = vrot.lane.b32.xlu0 %v4783, 32
      %v5283 = vpop.permute.xlu0 %5282
      %5284 = vrot.lane.b32.xlu0 %v4787, 32
      %v5285 = vpop.permute.xlu0 %5284
      %v5294 = vmax.f32 %v5262, %v5271
      %v5295 = vmax.f32 %v5263, %v5273
      %v5296 = vmax.f32 %v5264, %v5275
      %v5297 = vmax.f32 %v5265, %v5277
      %v5298 = vmax.f32 %v5266, %v5279
      %v5299 = vmax.f32 %v5267, %v5281
      %v5300 = vmax.f32 %v5268, %v5283
      %v5301 = vmax.f32 %v5269, %v5285
      %5302 = vrot.lane.b32.xlu0 %v4753, 16
      %v5303 = vpop.permute.xlu0 %5302
      %5304 = vrot.lane.b32.xlu0 %v4757, 16
      %v5305 = vpop.permute.xlu0 %5304
      %5306 = vrot.lane.b32.xlu0 %v4763, 16
      %v5307 = vpop.permute.xlu0 %5306
      %5308 = vrot.lane.b32.xlu0 %v4767, 16
      %v5309 = vpop.permute.xlu0 %5308
      %5310 = vrot.lane.b32.xlu0 %v4773, 16
      %v5311 = vpop.permute.xlu0 %5310
      %5312 = vrot.lane.b32.xlu0 %v4777, 16
      %v5313 = vpop.permute.xlu0 %5312
      %5314 = vrot.lane.b32.xlu0 %v4783, 16
      %v5315 = vpop.permute.xlu0 %5314
      %5316 = vrot.lane.b32.xlu0 %v4787, 16
      %v5317 = vpop.permute.xlu0 %5316
      %v5326 = vmax.f32 %v5294, %v5303
      %v5327 = vmax.f32 %v5295, %v5305
      %v5328 = vmax.f32 %v5296, %v5307
      %v5329 = vmax.f32 %v5297, %v5309
      %v5330 = vmax.f32 %v5298, %v5311
      %v5331 = vmax.f32 %v5299, %v5313
      %v5332 = vmax.f32 %v5300, %v5315
      %v5333 = vmax.f32 %v5301, %v5317
      %v5334 = vmax.f32 %v5326, %v4824
      %v5335 = vmax.f32 %v5327, %v4828
      %v5336 = vmax.f32 %v5328, %v4834
      %v5337 = vmax.f32 %v5329, %v4838
      %v5338 = vmax.f32 %v5330, %v4844
      %v5339 = vmax.f32 %v5331, %v4848
      %v5340 = vmax.f32 %v5332, %v4854
      %v5341 = vmax.f32 %v5333, %v4858
      %5350 = vrot.lane.b32.xlu0 %v4824, 112
      %v5351 = vpop.permute.xlu0 %5350
      %5352 = vrot.lane.b32.xlu0 %v4828, 112
      %v5353 = vpop.permute.xlu0 %5352
      %5354 = vrot.lane.b32.xlu0 %v4834, 112
      %v5355 = vpop.permute.xlu0 %5354
      %5356 = vrot.lane.b32.xlu0 %v4838, 112
      %v5357 = vpop.permute.xlu0 %5356
      %5358 = vrot.lane.b32.xlu0 %v4844, 112
      %v5359 = vpop.permute.xlu0 %5358
      %5360 = vrot.lane.b32.xlu0 %v4848, 112
      %v5361 = vpop.permute.xlu0 %5360
      %5362 = vrot.lane.b32.xlu0 %v4854, 112
      %v5363 = vpop.permute.xlu0 %5362
      %5364 = vrot.lane.b32.xlu0 %v4858, 112
      %v5365 = vpop.permute.xlu0 %5364
      %v5374 = vmax.f32 %v5334, %v5351
      %v5375 = vmax.f32 %v5335, %v5353
      %v5376 = vmax.f32 %v5336, %v5355
      %v5377 = vmax.f32 %v5337, %v5357
      %v5378 = vmax.f32 %v5338, %v5359
      %v5379 = vmax.f32 %v5339, %v5361
      %v5380 = vmax.f32 %v5340, %v5363
      %v5381 = vmax.f32 %v5341, %v5365
      %5382 = vrot.lane.b32.xlu0 %v4824, 96
      %v5383 = vpop.permute.xlu0 %5382
      %5384 = vrot.lane.b32.xlu0 %v4828, 96
      %v5385 = vpop.permute.xlu0 %5384
      %5386 = vrot.lane.b32.xlu0 %v4834, 96
      %v5387 = vpop.permute.xlu0 %5386
      %5388 = vrot.lane.b32.xlu0 %v4838, 96
      %v5389 = vpop.permute.xlu0 %5388
      %5390 = vrot.lane.b32.xlu0 %v4844, 96
      %v5391 = vpop.permute.xlu0 %5390
      %5392 = vrot.lane.b32.xlu0 %v4848, 96
      %v5393 = vpop.permute.xlu0 %5392
      %5394 = vrot.lane.b32.xlu0 %v4854, 96
      %v5395 = vpop.permute.xlu0 %5394
      %5396 = vrot.lane.b32.xlu0 %v4858, 96
      %v5397 = vpop.permute.xlu0 %5396
      %v5406 = vmax.f32 %v5374, %v5383
      %v5407 = vmax.f32 %v5375, %v5385
      %v5408 = vmax.f32 %v5376, %v5387
      %v5409 = vmax.f32 %v5377, %v5389
      %v5410 = vmax.f32 %v5378, %v5391
      %v5411 = vmax.f32 %v5379, %v5393
      %v5412 = vmax.f32 %v5380, %v5395
      %v5413 = vmax.f32 %v5381, %v5397
      %5414 = vrot.lane.b32.xlu0 %v4824, 80
      %v5415 = vpop.permute.xlu0 %5414
      %5416 = vrot.lane.b32.xlu0 %v4828, 80
      %v5417 = vpop.permute.xlu0 %5416
      %5418 = vrot.lane.b32.xlu0 %v4834, 80
      %v5419 = vpop.permute.xlu0 %5418
      %5420 = vrot.lane.b32.xlu0 %v4838, 80
      %v5421 = vpop.permute.xlu0 %5420
      %5422 = vrot.lane.b32.xlu0 %v4844, 80
      %v5423 = vpop.permute.xlu0 %5422
      %5424 = vrot.lane.b32.xlu0 %v4848, 80
      %v5425 = vpop.permute.xlu0 %5424
      %5426 = vrot.lane.b32.xlu0 %v4854, 80
      %v5427 = vpop.permute.xlu0 %5426
      %5428 = vrot.lane.b32.xlu0 %v4858, 80
      %v5429 = vpop.permute.xlu0 %5428
      %v5438 = vmax.f32 %v5406, %v5415
      %v5439 = vmax.f32 %v5407, %v5417
      %v5440 = vmax.f32 %v5408, %v5419
      %v5441 = vmax.f32 %v5409, %v5421
      %v5442 = vmax.f32 %v5410, %v5423
      %v5443 = vmax.f32 %v5411, %v5425
      %v5444 = vmax.f32 %v5412, %v5427
      %v5445 = vmax.f32 %v5413, %v5429
      %5446 = vrot.lane.b32.xlu0 %v4824, 64
      %v5447 = vpop.permute.xlu0 %5446
      %5448 = vrot.lane.b32.xlu0 %v4828, 64
      %v5449 = vpop.permute.xlu0 %5448
      %5450 = vrot.lane.b32.xlu0 %v4834, 64
      %v5451 = vpop.permute.xlu0 %5450
      %5452 = vrot.lane.b32.xlu0 %v4838, 64
      %v5453 = vpop.permute.xlu0 %5452
      %5454 = vrot.lane.b32.xlu0 %v4844, 64
      %v5455 = vpop.permute.xlu0 %5454
      %5456 = vrot.lane.b32.xlu0 %v4848, 64
      %v5457 = vpop.permute.xlu0 %5456
      %5458 = vrot.lane.b32.xlu0 %v4854, 64
      %v5459 = vpop.permute.xlu0 %5458
      %5460 = vrot.lane.b32.xlu0 %v4858, 64
      %v5461 = vpop.permute.xlu0 %5460
      %v5470 = vmax.f32 %v5438, %v5447
      %v5471 = vmax.f32 %v5439, %v5449
      %v5472 = vmax.f32 %v5440, %v5451
      %v5473 = vmax.f32 %v5441, %v5453
      %v5474 = vmax.f32 %v5442, %v5455
      %v5475 = vmax.f32 %v5443, %v5457
      %v5476 = vmax.f32 %v5444, %v5459
      %v5477 = vmax.f32 %v5445, %v5461
      %5478 = vrot.lane.b32.xlu0 %v4824, 48
      %v5479 = vpop.permute.xlu0 %5478
      %5480 = vrot.lane.b32.xlu0 %v4828, 48
      %v5481 = vpop.permute.xlu0 %5480
      %5482 = vrot.lane.b32.xlu0 %v4834, 48
      %v5483 = vpop.permute.xlu0 %5482
      %5484 = vrot.lane.b32.xlu0 %v4838, 48
      %v5485 = vpop.permute.xlu0 %5484
      %5486 = vrot.lane.b32.xlu0 %v4844, 48
      %v5487 = vpop.permute.xlu0 %5486
      %5488 = vrot.lane.b32.xlu0 %v4848, 48
      %v5489 = vpop.permute.xlu0 %5488
      %5490 = vrot.lane.b32.xlu0 %v4854, 48
      %v5491 = vpop.permute.xlu0 %5490
      %5492 = vrot.lane.b32.xlu0 %v4858, 48
      %v5493 = vpop.permute.xlu0 %5492
      %v5502 = vmax.f32 %v5470, %v5479
      %v5503 = vmax.f32 %v5471, %v5481
      %v5504 = vmax.f32 %v5472, %v5483
      %v5505 = vmax.f32 %v5473, %v5485
      %v5506 = vmax.f32 %v5474, %v5487
      %v5507 = vmax.f32 %v5475, %v5489
      %v5508 = vmax.f32 %v5476, %v5491
      %v5509 = vmax.f32 %v5477, %v5493
      %5510 = vrot.lane.b32.xlu0 %v4824, 32
      %v5511 = vpop.permute.xlu0 %5510
      %5512 = vrot.lane.b32.xlu0 %v4828, 32
      %v5513 = vpop.permute.xlu0 %5512
      %5514 = vrot.lane.b32.xlu0 %v4834, 32
      %v5515 = vpop.permute.xlu0 %5514
      %5516 = vrot.lane.b32.xlu0 %v4838, 32
      %v5517 = vpop.permute.xlu0 %5516
      %5518 = vrot.lane.b32.xlu0 %v4844, 32
      %v5519 = vpop.permute.xlu0 %5518
      %5520 = vrot.lane.b32.xlu0 %v4848, 32
      %v5521 = vpop.permute.xlu0 %5520
      %5522 = vrot.lane.b32.xlu0 %v4854, 32
      %v5523 = vpop.permute.xlu0 %5522
      %5524 = vrot.lane.b32.xlu0 %v4858, 32
      %v5525 = vpop.permute.xlu0 %5524
      %v5534 = vmax.f32 %v5502, %v5511
      %v5535 = vmax.f32 %v5503, %v5513
      %v5536 = vmax.f32 %v5504, %v5515
      %v5537 = vmax.f32 %v5505, %v5517
      %v5538 = vmax.f32 %v5506, %v5519
      %v5539 = vmax.f32 %v5507, %v5521
      %v5540 = vmax.f32 %v5508, %v5523
      %v5541 = vmax.f32 %v5509, %v5525
      %5542 = vrot.lane.b32.xlu0 %v4824, 16
      %v5543 = vpop.permute.xlu0 %5542
      %5544 = vrot.lane.b32.xlu0 %v4828, 16
      %v5545 = vpop.permute.xlu0 %5544
      %5546 = vrot.lane.b32.xlu0 %v4834, 16
      %v5547 = vpop.permute.xlu0 %5546
      %5548 = vrot.lane.b32.xlu0 %v4838, 16
      %v5549 = vpop.permute.xlu0 %5548
      %5550 = vrot.lane.b32.xlu0 %v4844, 16
      %v5551 = vpop.permute.xlu0 %5550
      %5552 = vrot.lane.b32.xlu0 %v4848, 16
      %v5553 = vpop.permute.xlu0 %5552
      %5554 = vrot.lane.b32.xlu0 %v4854, 16
      %v5555 = vpop.permute.xlu0 %5554
      %5556 = vrot.lane.b32.xlu0 %v4858, 16
      %v5557 = vpop.permute.xlu0 %5556
      %v5566 = vmax.f32 %v5534, %v5543
      %v5567 = vmax.f32 %v5535, %v5545
      %v5568 = vmax.f32 %v5536, %v5547
      %v5569 = vmax.f32 %v5537, %v5549
      %v5570 = vmax.f32 %v5538, %v5551
      %v5571 = vmax.f32 %v5539, %v5553
      %v5572 = vmax.f32 %v5540, %v5555
      %v5573 = vmax.f32 %v5541, %v5557
      %v5574 = vmax.f32 %v5566, %v4826
      %v5575 = vmax.f32 %v5567, %v4830
      %v5576 = vmax.f32 %v5568, %v4836
      %v5577 = vmax.f32 %v5569, %v4840
      %v5578 = vmax.f32 %v5570, %v4846
      %v5579 = vmax.f32 %v5571, %v4850
      %v5580 = vmax.f32 %v5572, %v4856
      %v5581 = vmax.f32 %v5573, %v4860
      %v5582 = vadd.f32 %v5574, %v1493
      %v5583 = vadd.f32 %v5575, %v1493
      %v5584 = vadd.f32 %v5576, %v1493
      %v5585 = vadd.f32 %v5577, %v1493
      %v5586 = vadd.f32 %v5578, %v1493
      %v5587 = vadd.f32 %v5579, %v1493
      %v5588 = vadd.f32 %v5580, %v1493
      %v5589 = vadd.f32 %v5581, %v1493
      %v5590 = vmax.f32 %v5582, 0.0
      %v5591 = vmax.f32 %v5583, 0.0
      %v5592 = vmax.f32 %v5584, 0.0
      %v5593 = vmax.f32 %v5585, 0.0
      %v5594 = vmax.f32 %v5586, 0.0
      %v5595 = vmax.f32 %v5587, 0.0
      %v5596 = vmax.f32 %v5588, 0.0
      %v5597 = vmax.f32 %v5589, 0.0
      %v5598 = vpack.c.bf16 %v5591, %v5590
      %v5599 = vpack.c.bf16 %v5593, %v5592
      %v5600 = vpack.c.bf16 %v5595, %v5594
      %v5601 = vpack.c.bf16 %v5597, %v5596
      %v5606 = vunpack.c.l.b16 %v5598
      %v5607 = vunpack.c.h.b16 %v5598
      %v5608 = vunpack.c.l.b16 %v5599
      %v5609 = vunpack.c.h.b16 %v5599
      %v5610 = vunpack.c.l.b16 %v5600
      %v5611 = vunpack.c.h.b16 %v5600
      %v5612 = vunpack.c.l.b16 %v5601
      %v5613 = vunpack.c.h.b16 %v5601
      %v5614 = vpack.c.b16 %v5606, %v5606
      %v5615 = vpack.c.b16 %v5607, %v5607
      %v5616 = vpack.c.b16 %v5608, %v5608
      %v5617 = vpack.c.b16 %v5609, %v5609
      %v5618 = vpack.c.b16 %v5610, %v5610
      %v5619 = vpack.c.b16 %v5611, %v5611
      %v5620 = vpack.c.b16 %v5612, %v5612
      %v5621 = vpack.c.b16 %v5613, %v5613
      %5630 = vst.msk [vmem:[%s175 + $0x60] sm:$0xf] %vm1543, %v5614
      %5631 = vst.msk [vmem:[%s175 + $0x64] sm:$0xf] %vm1543, %v5615
      %5632 = vst.msk [vmem:[%s175 + $0x68] sm:$0xf] %vm1543, %v5616
      %5633 = vst.msk [vmem:[%s175 + $0x6c] sm:$0xf] %vm1543, %v5617
      %5634 = vst.msk [vmem:[%s175 + $0x70] sm:$0xf] %vm1543, %v5618
      %5635 = vst.msk [vmem:[%s175 + $0x74] sm:$0xf] %vm1543, %v5619
      %5636 = vst.msk [vmem:[%s175 + $0x78] sm:$0xf] %vm1543, %v5620
      %5637 = vst.msk [vmem:[%s175 + $0x7c] sm:$0xf] %vm1543, %v5621
      %v5638 = vld [vmem:[%s169 + $0x100] sm:$0xff]
      %v5639 = vld [vmem:[%s169 + $0x108] sm:$0xff]
      %v5640 = vld [vmem:[%s169 + $0x110] sm:$0xff]
      %v5641 = vld [vmem:[%s169 + $0x118] sm:$0xff]
      %v5642 = vld [vmem:[%s169 + $0x120] sm:$0xff]
      %v5643 = vld [vmem:[%s169 + $0x128] sm:$0xff]
      %v5644 = vld [vmem:[%s169 + $0x130] sm:$0xff]
      %v5645 = vld [vmem:[%s169 + $0x138] sm:$0xff]
      %v5646 = vld [vmem:[%s1] sm:$0xff]
      %v5647 = vld [vmem:[%s1 + $0x8] sm:$0xff]
      %v5648 = vld [vmem:[%s1 + $0x10] sm:$0xff]
      %v5649 = vld [vmem:[%s1 + $0x18] sm:$0xff]
      %v5650 = vld [vmem:[%s1 + $0x20] sm:$0xff]
      %v5651 = vld [vmem:[%s1 + $0x28] sm:$0xff]
      %v5652 = vld [vmem:[%s1 + $0x30] sm:$0xff]
      %v5653 = vld [vmem:[%s1 + $0x38] sm:$0xff]
      %v5654 = vld [vmem:[%s1 + $0x40] sm:$0xff]
      %v5655 = vld [vmem:[%s1 + $0x48] sm:$0xff]
      %v5656 = vld [vmem:[%s1 + $0x50] sm:$0xff]
      %v5657 = vld [vmem:[%s1 + $0x58] sm:$0xff]
      %v5658 = vld [vmem:[%s1 + $0x60] sm:$0xff]
      %v5659 = vld [vmem:[%s1 + $0x68] sm:$0xff]
      %v5660 = vld [vmem:[%s1 + $0x70] sm:$0xff]
      %v5661 = vld [vmem:[%s1 + $0x78] sm:$0xff]
      %v5662 = vld [vmem:[%s1 + $0x80] sm:$0xff]
      %v5663 = vld [vmem:[%s1 + $0x88] sm:$0xff]
      %v5664 = vld [vmem:[%s1 + $0x90] sm:$0xff]
      %v5665 = vld [vmem:[%s1 + $0x98] sm:$0xff]
      %v5666 = vld [vmem:[%s1 + $0xa0] sm:$0xff]
      %v5667 = vld [vmem:[%s1 + $0xa8] sm:$0xff]
      %v5668 = vld [vmem:[%s1 + $0xb0] sm:$0xff]
      %v5669 = vld [vmem:[%s1 + $0xb8] sm:$0xff]
      %v5670 = vld [vmem:[%s1 + $0xc0] sm:$0xff]
      %v5671 = vld [vmem:[%s1 + $0xc8] sm:$0xff]
      %v5672 = vld [vmem:[%s1 + $0xd0] sm:$0xff]
      %v5673 = vld [vmem:[%s1 + $0xd8] sm:$0xff]
      %v5674 = vld [vmem:[%s1 + $0xe0] sm:$0xff]
      %v5675 = vld [vmem:[%s1 + $0xe8] sm:$0xff]
      %v5676 = vld [vmem:[%s1 + $0xf0] sm:$0xff]
      %v5677 = vld [vmem:[%s1 + $0xf8] sm:$0xff]
      %v5678 = vld [vmem:[%s1 + $0x100] sm:$0xff]
      %v5679 = vld [vmem:[%s1 + $0x108] sm:$0xff]
      %v5680 = vld [vmem:[%s1 + $0x110] sm:$0xff]
      %v5681 = vld [vmem:[%s1 + $0x118] sm:$0xff]
      %v5682 = vld [vmem:[%s1 + $0x120] sm:$0xff]
      %v5683 = vld [vmem:[%s1 + $0x128] sm:$0xff]
      %v5684 = vld [vmem:[%s1 + $0x130] sm:$0xff]
      %v5685 = vld [vmem:[%s1 + $0x138] sm:$0xff]
      %v5686 = vld [vmem:[%s1 + $0x140] sm:$0xff]
      %v5687 = vld [vmem:[%s1 + $0x148] sm:$0xff]
      %v5688 = vld [vmem:[%s1 + $0x150] sm:$0xff]
      %v5689 = vld [vmem:[%s1 + $0x158] sm:$0xff]
      %v5690 = vld [vmem:[%s1 + $0x160] sm:$0xff]
      %v5691 = vld [vmem:[%s1 + $0x168] sm:$0xff]
      %v5692 = vld [vmem:[%s1 + $0x170] sm:$0xff]
      %v5693 = vld [vmem:[%s1 + $0x178] sm:$0xff]
      %v5694 = vld [vmem:[%s1 + $0x180] sm:$0xff]
      %v5695 = vld [vmem:[%s1 + $0x188] sm:$0xff]
      %v5696 = vld [vmem:[%s1 + $0x190] sm:$0xff]
      %v5697 = vld [vmem:[%s1 + $0x198] sm:$0xff]
      %v5698 = vld [vmem:[%s1 + $0x1a0] sm:$0xff]
      %v5699 = vld [vmem:[%s1 + $0x1a8] sm:$0xff]
      %v5700 = vld [vmem:[%s1 + $0x1b0] sm:$0xff]
      %v5701 = vld [vmem:[%s1 + $0x1b8] sm:$0xff]
      %v5702 = vld [vmem:[%s1 + $0x1c0] sm:$0xff]
      %v5703 = vld [vmem:[%s1 + $0x1c8] sm:$0xff]
      %v5704 = vld [vmem:[%s1 + $0x1d0] sm:$0xff]
      %v5705 = vld [vmem:[%s1 + $0x1d8] sm:$0xff]
      %v5706 = vld [vmem:[%s1 + $0x1e0] sm:$0x33]
      %v5707 = vld [vmem:[%s1 + $0x1e8] sm:$0x33]
      %v5716 = vunpack.c.l.b16 %v5638
      %v5717 = vunpack.c.h.b16 %v5638
      %v5718 = vunpack.c.l.b16 %v5639
      %v5719 = vunpack.c.h.b16 %v5639
      %v5720 = vunpack.c.l.b16 %v5640
      %v5721 = vunpack.c.h.b16 %v5640
      %v5722 = vunpack.c.l.b16 %v5641
      %v5723 = vunpack.c.h.b16 %v5641
      %v5724 = vunpack.c.l.b16 %v5642
      %v5725 = vunpack.c.h.b16 %v5642
      %v5726 = vunpack.c.l.b16 %v5643
      %v5727 = vunpack.c.h.b16 %v5643
      %v5728 = vunpack.c.l.b16 %v5644
      %v5729 = vunpack.c.h.b16 %v5644
      %v5730 = vunpack.c.l.b16 %v5645
      %v5731 = vunpack.c.h.b16 %v5645
      %v5732 = vpack.c.b16 %v5718, %v5716
      %v5733 = vpack.c.b16 %v5719, %v5717
      %v5734 = vpack.c.b16 %v5722, %v5720
      %v5735 = vpack.c.b16 %v5723, %v5721
      %v5736 = vpack.c.b16 %v5726, %v5724
      %v5737 = vpack.c.b16 %v5727, %v5725
      %v5738 = vpack.c.b16 %v5730, %v5728
      %v5739 = vpack.c.b16 %v5731, %v5729
      %v5806 = vunpack.c.l.b16 %v5646
      %v5807 = vunpack.c.h.b16 %v5646
      %v5808 = vunpack.c.l.b16 %v5647
      %v5809 = vunpack.c.h.b16 %v5647
      %v5810 = vunpack.c.l.b16 %v5648
      %v5811 = vunpack.c.h.b16 %v5648
      %v5812 = vunpack.c.l.b16 %v5649
      %v5813 = vunpack.c.h.b16 %v5649
      %v5814 = vunpack.c.l.b16 %v5650
      %v5815 = vunpack.c.h.b16 %v5650
      %v5816 = vunpack.c.l.b16 %v5651
      %v5817 = vunpack.c.h.b16 %v5651
      %v5818 = vunpack.c.l.b16 %v5652
      %v5819 = vunpack.c.h.b16 %v5652
      %v5820 = vunpack.c.l.b16 %v5653
      %v5821 = vunpack.c.h.b16 %v5653
      %v5822 = vunpack.c.l.b16 %v5654
      %v5823 = vunpack.c.h.b16 %v5654
      %v5824 = vunpack.c.l.b16 %v5655
      %v5825 = vunpack.c.h.b16 %v5655
      %v5826 = vunpack.c.l.b16 %v5656
      %v5827 = vunpack.c.h.b16 %v5656
      %v5828 = vunpack.c.l.b16 %v5657
      %v5829 = vunpack.c.h.b16 %v5657
      %v5830 = vunpack.c.l.b16 %v5658
      %v5831 = vunpack.c.h.b16 %v5658
      %v5832 = vunpack.c.l.b16 %v5659
      %v5833 = vunpack.c.h.b16 %v5659
      %v5834 = vunpack.c.l.b16 %v5660
      %v5835 = vunpack.c.h.b16 %v5660
      %v5836 = vunpack.c.l.b16 %v5661
      %v5837 = vunpack.c.h.b16 %v5661
      %v5838 = vunpack.c.l.b16 %v5662
      %v5839 = vunpack.c.h.b16 %v5662
      %v5840 = vunpack.c.l.b16 %v5663
      %v5841 = vunpack.c.h.b16 %v5663
      %v5842 = vunpack.c.l.b16 %v5664
      %v5843 = vunpack.c.h.b16 %v5664
      %v5844 = vunpack.c.l.b16 %v5665
      %v5845 = vunpack.c.h.b16 %v5665
      %v5846 = vunpack.c.l.b16 %v5666
      %v5847 = vunpack.c.h.b16 %v5666
      %v5848 = vunpack.c.l.b16 %v5667
      %v5849 = vunpack.c.h.b16 %v5667
      %v5850 = vunpack.c.l.b16 %v5668
      %v5851 = vunpack.c.h.b16 %v5668
      %v5852 = vunpack.c.l.b16 %v5669
      %v5853 = vunpack.c.h.b16 %v5669
      %v5854 = vunpack.c.l.b16 %v5670
      %v5855 = vunpack.c.h.b16 %v5670
      %v5856 = vunpack.c.l.b16 %v5671
      %v5857 = vunpack.c.h.b16 %v5671
      %v5858 = vunpack.c.l.b16 %v5672
      %v5859 = vunpack.c.h.b16 %v5672
      %v5860 = vunpack.c.l.b16 %v5673
      %v5861 = vunpack.c.h.b16 %v5673
      %v5862 = vunpack.c.l.b16 %v5674
      %v5863 = vunpack.c.h.b16 %v5674
      %v5864 = vunpack.c.l.b16 %v5675
      %v5865 = vunpack.c.h.b16 %v5675
      %v5866 = vunpack.c.l.b16 %v5676
      %v5867 = vunpack.c.h.b16 %v5676
      %v5868 = vunpack.c.l.b16 %v5677
      %v5869 = vunpack.c.h.b16 %v5677
      %v5870 = vunpack.c.l.b16 %v5678
      %v5871 = vunpack.c.h.b16 %v5678
      %v5872 = vunpack.c.l.b16 %v5679
      %v5873 = vunpack.c.h.b16 %v5679
      %v5874 = vunpack.c.l.b16 %v5680
      %v5875 = vunpack.c.h.b16 %v5680
      %v5876 = vunpack.c.l.b16 %v5681
      %v5877 = vunpack.c.h.b16 %v5681
      %v5878 = vunpack.c.l.b16 %v5682
      %v5879 = vunpack.c.h.b16 %v5682
      %v5880 = vunpack.c.l.b16 %v5683
      %v5881 = vunpack.c.h.b16 %v5683
      %v5882 = vunpack.c.l.b16 %v5684
      %v5883 = vunpack.c.h.b16 %v5684
      %v5884 = vunpack.c.l.b16 %v5685
      %v5885 = vunpack.c.h.b16 %v5685
      %v5886 = vunpack.c.l.b16 %v5686
      %v5887 = vunpack.c.h.b16 %v5686
      %v5888 = vunpack.c.l.b16 %v5687
      %v5889 = vunpack.c.h.b16 %v5687
      %v5890 = vunpack.c.l.b16 %v5688
      %v5891 = vunpack.c.h.b16 %v5688
      %v5892 = vunpack.c.l.b16 %v5689
      %v5893 = vunpack.c.h.b16 %v5689
      %v5894 = vunpack.c.l.b16 %v5690
      %v5895 = vunpack.c.h.b16 %v5690
      %v5896 = vunpack.c.l.b16 %v5691
      %v5897 = vunpack.c.h.b16 %v5691
      %v5898 = vunpack.c.l.b16 %v5692
      %v5899 = vunpack.c.h.b16 %v5692
      %v5900 = vunpack.c.l.b16 %v5693
      %v5901 = vunpack.c.h.b16 %v5693
      %v5902 = vunpack.c.l.b16 %v5694
      %v5903 = vunpack.c.h.b16 %v5694
      %v5904 = vunpack.c.l.b16 %v5695
      %v5905 = vunpack.c.h.b16 %v5695
      %v5906 = vunpack.c.l.b16 %v5696
      %v5907 = vunpack.c.h.b16 %v5696
      %v5908 = vunpack.c.l.b16 %v5697
      %v5909 = vunpack.c.h.b16 %v5697
      %v5910 = vunpack.c.l.b16 %v5698
      %v5911 = vunpack.c.h.b16 %v5698
      %v5912 = vunpack.c.l.b16 %v5699
      %v5913 = vunpack.c.h.b16 %v5699
      %v5914 = vunpack.c.l.b16 %v5700
      %v5915 = vunpack.c.h.b16 %v5700
      %v5916 = vunpack.c.l.b16 %v5701
      %v5917 = vunpack.c.h.b16 %v5701
      %v5918 = vunpack.c.l.b16 %v5702
      %v5919 = vunpack.c.h.b16 %v5702
      %v5920 = vunpack.c.l.b16 %v5703
      %v5921 = vunpack.c.h.b16 %v5703
      %v5922 = vunpack.c.l.b16 %v5704
      %v5923 = vunpack.c.h.b16 %v5704
      %v5924 = vunpack.c.l.b16 %v5705
      %v5925 = vunpack.c.h.b16 %v5705
      %v5926 = vunpack.c.l.b16 %v5706
      %v5927 = vunpack.c.h.b16 %v5706
      %v5928 = vunpack.c.l.b16 %v5707
      %v5929 = vunpack.c.h.b16 %v5707
      %v5930 = vpack.c.b16 %v5810, %v5806
      %v5931 = vpack.c.b16 %v5811, %v5807
      %v5932 = vpack.c.b16 %v5812, %v5808
      %v5933 = vpack.c.b16 %v5813, %v5809
      %v5934 = vpack.c.b16 %v5818, %v5814
      %v5935 = vpack.c.b16 %v5819, %v5815
      %v5936 = vpack.c.b16 %v5820, %v5816
      %v5937 = vpack.c.b16 %v5821, %v5817
      %v5938 = vpack.c.b16 %v5826, %v5822
      %v5939 = vpack.c.b16 %v5827, %v5823
      %v5940 = vpack.c.b16 %v5828, %v5824
      %v5941 = vpack.c.b16 %v5829, %v5825
      %v5942 = vpack.c.b16 %v5834, %v5830
      %v5943 = vpack.c.b16 %v5835, %v5831
      %v5944 = vpack.c.b16 %v5836, %v5832
      %v5945 = vpack.c.b16 %v5837, %v5833
      %v5946 = vpack.c.b16 %v5842, %v5838
      %v5947 = vpack.c.b16 %v5843, %v5839
      %v5948 = vpack.c.b16 %v5844, %v5840
      %v5949 = vpack.c.b16 %v5845, %v5841
      %v5950 = vpack.c.b16 %v5850, %v5846
      %v5951 = vpack.c.b16 %v5851, %v5847
      %v5952 = vpack.c.b16 %v5852, %v5848
      %v5953 = vpack.c.b16 %v5853, %v5849
      %v5954 = vpack.c.b16 %v5858, %v5854
      %v5955 = vpack.c.b16 %v5859, %v5855
      %v5956 = vpack.c.b16 %v5860, %v5856
      %v5957 = vpack.c.b16 %v5861, %v5857
      %v5958 = vpack.c.b16 %v5866, %v5862
      %v5959 = vpack.c.b16 %v5867, %v5863
      %v5960 = vpack.c.b16 %v5868, %v5864
      %v5961 = vpack.c.b16 %v5869, %v5865
      %v5962 = vpack.c.b16 %v5874, %v5870
      %v5963 = vpack.c.b16 %v5875, %v5871
      %v5964 = vpack.c.b16 %v5876, %v5872
      %v5965 = vpack.c.b16 %v5877, %v5873
      %v5966 = vpack.c.b16 %v5882, %v5878
      %v5967 = vpack.c.b16 %v5883, %v5879
      %v5968 = vpack.c.b16 %v5884, %v5880
      %v5969 = vpack.c.b16 %v5885, %v5881
      %v5970 = vpack.c.b16 %v5890, %v5886
      %v5971 = vpack.c.b16 %v5891, %v5887
      %v5972 = vpack.c.b16 %v5892, %v5888
      %v5973 = vpack.c.b16 %v5893, %v5889
      %v5974 = vpack.c.b16 %v5898, %v5894
      %v5975 = vpack.c.b16 %v5899, %v5895
      %v5976 = vpack.c.b16 %v5900, %v5896
      %v5977 = vpack.c.b16 %v5901, %v5897
      %v5978 = vpack.c.b16 %v5906, %v5902
      %v5979 = vpack.c.b16 %v5907, %v5903
      %v5980 = vpack.c.b16 %v5908, %v5904
      %v5981 = vpack.c.b16 %v5909, %v5905
      %v5982 = vpack.c.b16 %v5914, %v5910
      %v5983 = vpack.c.b16 %v5915, %v5911
      %v5984 = vpack.c.b16 %v5916, %v5912
      %v5985 = vpack.c.b16 %v5917, %v5913
      %v5986 = vpack.c.b16 %v5922, %v5918
      %v5987 = vpack.c.b16 %v5923, %v5919
      %v5988 = vpack.c.b16 %v5924, %v5920
      %v5989 = vpack.c.b16 %v5925, %v5921
      %v5990 = vpack.c.b16 %v5926, %v5926
      %v5991 = vpack.c.b16 %v5927, %v5927
      %v5992 = vpack.c.b16 %v5928, %v5928
      %v5993 = vpack.c.b16 %v5929, %v5929
      %v6055 = vsel %vm594, %v5733, 0
      %v6058 = vsel %vm594, %v5735, 0
      %v6061 = vsel %vm594, %v5737, 0
      %v6064 = vsel %vm594, %v5739, 0
      %v6067 = vand.u32 %v5990, %v610
      %v6070 = vand.u32 %v5991, %v610
      %v6073 = vand.u32 %v5992, %v610
      %v6076 = vand.u32 %v5993, %v610
      %6078 = vmatprep.subr.bf16.mxu0 %v5931
      %6079 = vmatpush1.bf16.msra.mxu0 %v5930
      %6080 = vmatprep.subr.bf16.mxu0 %v5935
      %6081 = vmatpush1.bf16.msra.mxu0 %v5934
      %6082 = vmatprep.subr.bf16.mxu0 %v5939
      %6083 = vmatpush1.bf16.msra.mxu0 %v5938
      %6084 = vmatprep.subr.bf16.mxu0 %v5943
      %6085 = vmatpush1.bf16.msra.mxu0 %v5942
      %6086 = vmatprep.subr.bf16.mxu0 %v5947
      %6087 = vmatpush1.bf16.msra.mxu0 %v5946
      %6088 = vmatprep.subr.bf16.mxu0 %v5951
      %6089 = vmatpush1.bf16.msra.mxu0 %v5950
      %6090 = vmatprep.subr.bf16.mxu0 %v5955
      %6091 = vmatpush1.bf16.msra.mxu0 %v5954
      %6092 = vmatprep.subr.bf16.mxu0 %v5959
      %6093 = vmatpush1.bf16.msra.mxu0 %v5958
      %6094 = vmatprep.subr.bf16.mxu0 %v5963
      %6095 = vmatpush1.bf16.msra.mxu0 %v5962
      %6096 = vmatprep.subr.bf16.mxu0 %v5967
      %6097 = vmatpush1.bf16.msra.mxu0 %v5966
      %6098 = vmatprep.subr.bf16.mxu0 %v5971
      %6099 = vmatpush1.bf16.msra.mxu0 %v5970
      %6100 = vmatprep.subr.bf16.mxu0 %v5975
      %6101 = vmatpush1.bf16.msra.mxu0 %v5974
      %6102 = vmatprep.subr.bf16.mxu0 %v5979
      %6103 = vmatpush1.bf16.msra.mxu0 %v5978
      %6104 = vmatprep.subr.bf16.mxu0 %v5983
      %6105 = vmatpush1.bf16.msra.mxu0 %v5982
      %6106 = vmatprep.subr.bf16.mxu0 %v5987
      %6107 = vmatpush1.bf16.msra.mxu0 %v5986
      %6108 = vmatprep.subr.bf16.mxu0 %v6070
      %6109 = vmatpush1.bf16.msra.mxu0 %v6067
      %6110 = vmatprep.mubr.bf16.mxu0 %v6055
      %6111 = vmatmul.mubr.bf16.gmra.mrb[0].mxu0 %v5732
      %v6112 = vpop.f32.mrb[0].mxu0
      %v6113 = vadd.f32 0.0, %v6112
      %v6114 = vpop.f32.mrb[0].mxu0
      %v6115 = vadd.f32 0.0, %v6114
      %v6116 = vpop.f32.mrb[0].mxu0
      %v6117 = vadd.f32 0.0, %v6116
      %v6118 = vpop.f32.mrb[0].mxu0
      %v6119 = vadd.f32 0.0, %v6118
      %6120 = vmatprep.mubr.bf16.mxu0 %v6058
      %6121 = vmatmul.mubr.bf16.gmra.mrb[0].mxu0 %v5734
      %v6122 = vpop.f32.mrb[0].mxu0
      %v6123 = vadd.f32 0.0, %v6122
      %v6124 = vpop.f32.mrb[0].mxu0
      %v6125 = vadd.f32 0.0, %v6124
      %v6126 = vpop.f32.mrb[0].mxu0
      %v6127 = vadd.f32 0.0, %v6126
      %v6128 = vpop.f32.mrb[0].mxu0
      %v6129 = vadd.f32 0.0, %v6128
      %6130 = vmatprep.mubr.bf16.mxu0 %v6061
      %6131 = vmatmul.mubr.bf16.gmra.mrb[0].mxu0 %v5736
      %v6132 = vpop.f32.mrb[0].mxu0
      %v6133 = vadd.f32 0.0, %v6132
      %v6134 = vpop.f32.mrb[0].mxu0
      %v6135 = vadd.f32 0.0, %v6134
      %v6136 = vpop.f32.mrb[0].mxu0
      %v6137 = vadd.f32 0.0, %v6136
      %v6138 = vpop.f32.mrb[0].mxu0
      %v6139 = vadd.f32 0.0, %v6138
      %6140 = vmatprep.mubr.bf16.mxu0 %v6064
      %6141 = vmatmul.mubr.bf16.gmra.mrb[0].mxu0 %v5738
      %v6142 = vpop.f32.mrb[0].mxu0
      %v6143 = vadd.f32 0.0, %v6142
      %v6144 = vpop.f32.mrb[0].mxu0
      %v6145 = vadd.f32 0.0, %v6144
      %v6146 = vpop.f32.mrb[0].mxu0
      %v6147 = vadd.f32 0.0, %v6146
      %v6148 = vpop.f32.mrb[0].mxu0
      %v6149 = vadd.f32 0.0, %v6148
      %6150 = vdwg.mxu0
      %6151 = vmatprep.subr.bf16.mxu0 %v5933
      %6152 = vmatpush1.bf16.msra.mxu0 %v5932
      %6153 = vmatprep.subr.bf16.mxu0 %v5937
      %6154 = vmatpush1.bf16.msra.mxu0 %v5936
      %6155 = vmatprep.subr.bf16.mxu0 %v5941
      %6156 = vmatpush1.bf16.msra.mxu0 %v5940
      %6157 = vmatprep.subr.bf16.mxu0 %v5945
      %6158 = vmatpush1.bf16.msra.mxu0 %v5944
      %6159 = vmatprep.subr.bf16.mxu0 %v5949
      %6160 = vmatpush1.bf16.msra.mxu0 %v5948
      %6161 = vmatprep.subr.bf16.mxu0 %v5953
      %6162 = vmatpush1.bf16.msra.mxu0 %v5952
      %6163 = vmatprep.subr.bf16.mxu0 %v5957
      %6164 = vmatpush1.bf16.msra.mxu0 %v5956
      %6165 = vmatprep.subr.bf16.mxu0 %v5961
      %6166 = vmatpush1.bf16.msra.mxu0 %v5960
      %6167 = vmatprep.subr.bf16.mxu0 %v5965
      %6168 = vmatpush1.bf16.msra.mxu0 %v5964
      %6169 = vmatprep.subr.bf16.mxu0 %v5969
      %6170 = vmatpush1.bf16.msra.mxu0 %v5968
      %6171 = vmatprep.subr.bf16.mxu0 %v5973
      %6172 = vmatpush1.bf16.msra.mxu0 %v5972
      %6173 = vmatprep.subr.bf16.mxu0 %v5977
      %6174 = vmatpush1.bf16.msra.mxu0 %v5976
      %6175 = vmatprep.subr.bf16.mxu0 %v5981
      %6176 = vmatpush1.bf16.msra.mxu0 %v5980
      %6177 = vmatprep.subr.bf16.mxu0 %v5985
      %6178 = vmatpush1.bf16.msra.mxu0 %v5984
      %6179 = vmatprep.subr.bf16.mxu0 %v5989
      %6180 = vmatpush1.bf16.msra.mxu0 %v5988
      %6181 = vmatprep.subr.bf16.mxu0 %v6076
      %6182 = vmatpush1.bf16.msra.mxu0 %v6073
      %6183 = vmatprep.mubr.bf16.mxu0 %v6055
      %6184 = vmatmul.mubr.bf16.gmra.mrb[0].mxu0 %v5732
      %v6185 = vpop.f32.mrb[0].mxu0
      %v6186 = vadd.f32 0.0, %v6185
      %v6187 = vpop.f32.mrb[0].mxu0
      %v6188 = vadd.f32 0.0, %v6187
      %v6189 = vpop.f32.mrb[0].mxu0
      %v6190 = vadd.f32 0.0, %v6189
      %v6191 = vpop.f32.mrb[0].mxu0
      %v6192 = vadd.f32 0.0, %v6191
      %6193 = vmatprep.mubr.bf16.mxu0 %v6058
      %6194 = vmatmul.mubr.bf16.gmra.mrb[0].mxu0 %v5734
      %v6195 = vpop.f32.mrb[0].mxu0
      %v6196 = vadd.f32 0.0, %v6195
      %v6197 = vpop.f32.mrb[0].mxu0
      %v6198 = vadd.f32 0.0, %v6197
      %v6199 = vpop.f32.mrb[0].mxu0
      %v6200 = vadd.f32 0.0, %v6199
      %v6201 = vpop.f32.mrb[0].mxu0
      %v6202 = vadd.f32 0.0, %v6201
      %6203 = vmatprep.mubr.bf16.mxu0 %v6061
      %6204 = vmatmul.mubr.bf16.gmra.mrb[0].mxu0 %v5736
      %v6205 = vpop.f32.mrb[0].mxu0
      %v6206 = vadd.f32 0.0, %v6205
      %v6207 = vpop.f32.mrb[0].mxu0
      %v6208 = vadd.f32 0.0, %v6207
      %v6209 = vpop.f32.mrb[0].mxu0
      %v6210 = vadd.f32 0.0, %v6209
      %v6211 = vpop.f32.mrb[0].mxu0
      %v6212 = vadd.f32 0.0, %v6211
      %6213 = vmatprep.mubr.bf16.mxu0 %v6064
      %6214 = vmatmul.mubr.bf16.gmra.mrb[0].mxu0 %v5738
      %v6215 = vpop.f32.mrb[0].mxu0
      %v6216 = vadd.f32 0.0, %v6215
      %v6217 = vpop.f32.mrb[0].mxu0
      %v6218 = vadd.f32 0.0, %v6217
      %v6219 = vpop.f32.mrb[0].mxu0
      %v6220 = vadd.f32 0.0, %v6219
      %v6221 = vpop.f32.mrb[0].mxu0
      %v6222 = vadd.f32 0.0, %v6221
      %6223 = vdwg.mxu0
      %6232 = vrot.lane.b32.xlu0 %v6113, 112
      %v6233 = vpop.permute.xlu0 %6232
      %6234 = vrot.lane.b32.xlu0 %v6117, 112
      %v6235 = vpop.permute.xlu0 %6234
      %6236 = vrot.lane.b32.xlu0 %v6123, 112
      %v6237 = vpop.permute.xlu0 %6236
      %6238 = vrot.lane.b32.xlu0 %v6127, 112
      %v6239 = vpop.permute.xlu0 %6238
      %6240 = vrot.lane.b32.xlu0 %v6133, 112
      %v6241 = vpop.permute.xlu0 %6240
      %6242 = vrot.lane.b32.xlu0 %v6137, 112
      %v6243 = vpop.permute.xlu0 %6242
      %6244 = vrot.lane.b32.xlu0 %v6143, 112
      %v6245 = vpop.permute.xlu0 %6244
      %6246 = vrot.lane.b32.xlu0 %v6147, 112
      %v6247 = vpop.permute.xlu0 %6246
      %v6256 = vmax.f32 %v6113, %v6233
      %v6257 = vmax.f32 %v6117, %v6235
      %v6258 = vmax.f32 %v6123, %v6237
      %v6259 = vmax.f32 %v6127, %v6239
      %v6260 = vmax.f32 %v6133, %v6241
      %v6261 = vmax.f32 %v6137, %v6243
      %v6262 = vmax.f32 %v6143, %v6245
      %v6263 = vmax.f32 %v6147, %v6247
      %6264 = vrot.lane.b32.xlu0 %v6113, 96
      %v6265 = vpop.permute.xlu0 %6264
      %6266 = vrot.lane.b32.xlu0 %v6117, 96
      %v6267 = vpop.permute.xlu0 %6266
      %6268 = vrot.lane.b32.xlu0 %v6123, 96
      %v6269 = vpop.permute.xlu0 %6268
      %6270 = vrot.lane.b32.xlu0 %v6127, 96
      %v6271 = vpop.permute.xlu0 %6270
      %6272 = vrot.lane.b32.xlu0 %v6133, 96
      %v6273 = vpop.permute.xlu0 %6272
      %6274 = vrot.lane.b32.xlu0 %v6137, 96
      %v6275 = vpop.permute.xlu0 %6274
      %6276 = vrot.lane.b32.xlu0 %v6143, 96
      %v6277 = vpop.permute.xlu0 %6276
      %6278 = vrot.lane.b32.xlu0 %v6147, 96
      %v6279 = vpop.permute.xlu0 %6278
      %v6288 = vmax.f32 %v6256, %v6265
      %v6289 = vmax.f32 %v6257, %v6267
      %v6290 = vmax.f32 %v6258, %v6269
      %v6291 = vmax.f32 %v6259, %v6271
      %v6292 = vmax.f32 %v6260, %v6273
      %v6293 = vmax.f32 %v6261, %v6275
      %v6294 = vmax.f32 %v6262, %v6277
      %v6295 = vmax.f32 %v6263, %v6279
      %6296 = vrot.lane.b32.xlu0 %v6113, 80
      %v6297 = vpop.permute.xlu0 %6296
      %6298 = vrot.lane.b32.xlu0 %v6117, 80
      %v6299 = vpop.permute.xlu0 %6298
      %6300 = vrot.lane.b32.xlu0 %v6123, 80
      %v6301 = vpop.permute.xlu0 %6300
      %6302 = vrot.lane.b32.xlu0 %v6127, 80
      %v6303 = vpop.permute.xlu0 %6302
      %6304 = vrot.lane.b32.xlu0 %v6133, 80
      %v6305 = vpop.permute.xlu0 %6304
      %6306 = vrot.lane.b32.xlu0 %v6137, 80
      %v6307 = vpop.permute.xlu0 %6306
      %6308 = vrot.lane.b32.xlu0 %v6143, 80
      %v6309 = vpop.permute.xlu0 %6308
      %6310 = vrot.lane.b32.xlu0 %v6147, 80
      %v6311 = vpop.permute.xlu0 %6310
      %v6320 = vmax.f32 %v6288, %v6297
      %v6321 = vmax.f32 %v6289, %v6299
      %v6322 = vmax.f32 %v6290, %v6301
      %v6323 = vmax.f32 %v6291, %v6303
      %v6324 = vmax.f32 %v6292, %v6305
      %v6325 = vmax.f32 %v6293, %v6307
      %v6326 = vmax.f32 %v6294, %v6309
      %v6327 = vmax.f32 %v6295, %v6311
      %6328 = vrot.lane.b32.xlu0 %v6113, 64
      %v6329 = vpop.permute.xlu0 %6328
      %6330 = vrot.lane.b32.xlu0 %v6117, 64
      %v6331 = vpop.permute.xlu0 %6330
      %6332 = vrot.lane.b32.xlu0 %v6123, 64
      %v6333 = vpop.permute.xlu0 %6332
      %6334 = vrot.lane.b32.xlu0 %v6127, 64
      %v6335 = vpop.permute.xlu0 %6334
      %6336 = vrot.lane.b32.xlu0 %v6133, 64
      %v6337 = vpop.permute.xlu0 %6336
      %6338 = vrot.lane.b32.xlu0 %v6137, 64
      %v6339 = vpop.permute.xlu0 %6338
      %6340 = vrot.lane.b32.xlu0 %v6143, 64
      %v6341 = vpop.permute.xlu0 %6340
      %6342 = vrot.lane.b32.xlu0 %v6147, 64
      %v6343 = vpop.permute.xlu0 %6342
      %v6352 = vmax.f32 %v6320, %v6329
      %v6353 = vmax.f32 %v6321, %v6331
      %v6354 = vmax.f32 %v6322, %v6333
      %v6355 = vmax.f32 %v6323, %v6335
      %v6356 = vmax.f32 %v6324, %v6337
      %v6357 = vmax.f32 %v6325, %v6339
      %v6358 = vmax.f32 %v6326, %v6341
      %v6359 = vmax.f32 %v6327, %v6343
      %6360 = vrot.lane.b32.xlu0 %v6113, 48
      %v6361 = vpop.permute.xlu0 %6360
      %6362 = vrot.lane.b32.xlu0 %v6117, 48
      %v6363 = vpop.permute.xlu0 %6362
      %6364 = vrot.lane.b32.xlu0 %v6123, 48
      %v6365 = vpop.permute.xlu0 %6364
      %6366 = vrot.lane.b32.xlu0 %v6127, 48
      %v6367 = vpop.permute.xlu0 %6366
      %6368 = vrot.lane.b32.xlu0 %v6133, 48
      %v6369 = vpop.permute.xlu0 %6368
      %6370 = vrot.lane.b32.xlu0 %v6137, 48
      %v6371 = vpop.permute.xlu0 %6370
      %6372 = vrot.lane.b32.xlu0 %v6143, 48
      %v6373 = vpop.permute.xlu0 %6372
      %6374 = vrot.lane.b32.xlu0 %v6147, 48
      %v6375 = vpop.permute.xlu0 %6374
      %v6384 = vmax.f32 %v6352, %v6361
      %v6385 = vmax.f32 %v6353, %v6363
      %v6386 = vmax.f32 %v6354, %v6365
      %v6387 = vmax.f32 %v6355, %v6367
      %v6388 = vmax.f32 %v6356, %v6369
      %v6389 = vmax.f32 %v6357, %v6371
      %v6390 = vmax.f32 %v6358, %v6373
      %v6391 = vmax.f32 %v6359, %v6375
      %6392 = vrot.lane.b32.xlu0 %v6113, 32
      %v6393 = vpop.permute.xlu0 %6392
      %6394 = vrot.lane.b32.xlu0 %v6117, 32
      %v6395 = vpop.permute.xlu0 %6394
      %6396 = vrot.lane.b32.xlu0 %v6123, 32
      %v6397 = vpop.permute.xlu0 %6396
      %6398 = vrot.lane.b32.xlu0 %v6127, 32
      %v6399 = vpop.permute.xlu0 %6398
      %6400 = vrot.lane.b32.xlu0 %v6133, 32
      %v6401 = vpop.permute.xlu0 %6400
      %6402 = vrot.lane.b32.xlu0 %v6137, 32
      %v6403 = vpop.permute.xlu0 %6402
      %6404 = vrot.lane.b32.xlu0 %v6143, 32
      %v6405 = vpop.permute.xlu0 %6404
      %6406 = vrot.lane.b32.xlu0 %v6147, 32
      %v6407 = vpop.permute.xlu0 %6406
      %v6416 = vmax.f32 %v6384, %v6393
      %v6417 = vmax.f32 %v6385, %v6395
      %v6418 = vmax.f32 %v6386, %v6397
      %v6419 = vmax.f32 %v6387, %v6399
      %v6420 = vmax.f32 %v6388, %v6401
      %v6421 = vmax.f32 %v6389, %v6403
      %v6422 = vmax.f32 %v6390, %v6405
      %v6423 = vmax.f32 %v6391, %v6407
      %6424 = vrot.lane.b32.xlu0 %v6113, 16
      %v6425 = vpop.permute.xlu0 %6424
      %6426 = vrot.lane.b32.xlu0 %v6117, 16
      %v6427 = vpop.permute.xlu0 %6426
      %6428 = vrot.lane.b32.xlu0 %v6123, 16
      %v6429 = vpop.permute.xlu0 %6428
      %6430 = vrot.lane.b32.xlu0 %v6127, 16
      %v6431 = vpop.permute.xlu0 %6430
      %6432 = vrot.lane.b32.xlu0 %v6133, 16
      %v6433 = vpop.permute.xlu0 %6432
      %6434 = vrot.lane.b32.xlu0 %v6137, 16
      %v6435 = vpop.permute.xlu0 %6434
      %6436 = vrot.lane.b32.xlu0 %v6143, 16
      %v6437 = vpop.permute.xlu0 %6436
      %6438 = vrot.lane.b32.xlu0 %v6147, 16
      %v6439 = vpop.permute.xlu0 %6438
      %v6448 = vmax.f32 %v6416, %v6425
      %v6449 = vmax.f32 %v6417, %v6427
      %v6450 = vmax.f32 %v6418, %v6429
      %v6451 = vmax.f32 %v6419, %v6431
      %v6452 = vmax.f32 %v6420, %v6433
      %v6453 = vmax.f32 %v6421, %v6435
      %v6454 = vmax.f32 %v6422, %v6437
      %v6455 = vmax.f32 %v6423, %v6439
      %v6456 = vmax.f32 %v6448, %v6115
      %v6457 = vmax.f32 %v6449, %v6119
      %v6458 = vmax.f32 %v6450, %v6125
      %v6459 = vmax.f32 %v6451, %v6129
      %v6460 = vmax.f32 %v6452, %v6135
      %v6461 = vmax.f32 %v6453, %v6139
      %v6462 = vmax.f32 %v6454, %v6145
      %v6463 = vmax.f32 %v6455, %v6149
      %6472 = vrot.lane.b32.xlu0 %v6115, 112
      %v6473 = vpop.permute.xlu0 %6472
      %6474 = vrot.lane.b32.xlu0 %v6119, 112
      %v6475 = vpop.permute.xlu0 %6474
      %6476 = vrot.lane.b32.xlu0 %v6125, 112
      %v6477 = vpop.permute.xlu0 %6476
      %6478 = vrot.lane.b32.xlu0 %v6129, 112
      %v6479 = vpop.permute.xlu0 %6478
      %6480 = vrot.lane.b32.xlu0 %v6135, 112
      %v6481 = vpop.permute.xlu0 %6480
      %6482 = vrot.lane.b32.xlu0 %v6139, 112
      %v6483 = vpop.permute.xlu0 %6482
      %6484 = vrot.lane.b32.xlu0 %v6145, 112
      %v6485 = vpop.permute.xlu0 %6484
      %6486 = vrot.lane.b32.xlu0 %v6149, 112
      %v6487 = vpop.permute.xlu0 %6486
      %v6496 = vmax.f32 %v6456, %v6473
      %v6497 = vmax.f32 %v6457, %v6475
      %v6498 = vmax.f32 %v6458, %v6477
      %v6499 = vmax.f32 %v6459, %v6479
      %v6500 = vmax.f32 %v6460, %v6481
      %v6501 = vmax.f32 %v6461, %v6483
      %v6502 = vmax.f32 %v6462, %v6485
      %v6503 = vmax.f32 %v6463, %v6487
      %6504 = vrot.lane.b32.xlu0 %v6115, 96
      %v6505 = vpop.permute.xlu0 %6504
      %6506 = vrot.lane.b32.xlu0 %v6119, 96
      %v6507 = vpop.permute.xlu0 %6506
      %6508 = vrot.lane.b32.xlu0 %v6125, 96
      %v6509 = vpop.permute.xlu0 %6508
      %6510 = vrot.lane.b32.xlu0 %v6129, 96
      %v6511 = vpop.permute.xlu0 %6510
      %6512 = vrot.lane.b32.xlu0 %v6135, 96
      %v6513 = vpop.permute.xlu0 %6512
      %6514 = vrot.lane.b32.xlu0 %v6139, 96
      %v6515 = vpop.permute.xlu0 %6514
      %6516 = vrot.lane.b32.xlu0 %v6145, 96
      %v6517 = vpop.permute.xlu0 %6516
      %6518 = vrot.lane.b32.xlu0 %v6149, 96
      %v6519 = vpop.permute.xlu0 %6518
      %v6528 = vmax.f32 %v6496, %v6505
      %v6529 = vmax.f32 %v6497, %v6507
      %v6530 = vmax.f32 %v6498, %v6509
      %v6531 = vmax.f32 %v6499, %v6511
      %v6532 = vmax.f32 %v6500, %v6513
      %v6533 = vmax.f32 %v6501, %v6515
      %v6534 = vmax.f32 %v6502, %v6517
      %v6535 = vmax.f32 %v6503, %v6519
      %6536 = vrot.lane.b32.xlu0 %v6115, 80
      %v6537 = vpop.permute.xlu0 %6536
      %6538 = vrot.lane.b32.xlu0 %v6119, 80
      %v6539 = vpop.permute.xlu0 %6538
      %6540 = vrot.lane.b32.xlu0 %v6125, 80
      %v6541 = vpop.permute.xlu0 %6540
      %6542 = vrot.lane.b32.xlu0 %v6129, 80
      %v6543 = vpop.permute.xlu0 %6542
      %6544 = vrot.lane.b32.xlu0 %v6135, 80
      %v6545 = vpop.permute.xlu0 %6544
      %6546 = vrot.lane.b32.xlu0 %v6139, 80
      %v6547 = vpop.permute.xlu0 %6546
      %6548 = vrot.lane.b32.xlu0 %v6145, 80
      %v6549 = vpop.permute.xlu0 %6548
      %6550 = vrot.lane.b32.xlu0 %v6149, 80
      %v6551 = vpop.permute.xlu0 %6550
      %v6560 = vmax.f32 %v6528, %v6537
      %v6561 = vmax.f32 %v6529, %v6539
      %v6562 = vmax.f32 %v6530, %v6541
      %v6563 = vmax.f32 %v6531, %v6543
      %v6564 = vmax.f32 %v6532, %v6545
      %v6565 = vmax.f32 %v6533, %v6547
      %v6566 = vmax.f32 %v6534, %v6549
      %v6567 = vmax.f32 %v6535, %v6551
      %6568 = vrot.lane.b32.xlu0 %v6115, 64
      %v6569 = vpop.permute.xlu0 %6568
      %6570 = vrot.lane.b32.xlu0 %v6119, 64
      %v6571 = vpop.permute.xlu0 %6570
      %6572 = vrot.lane.b32.xlu0 %v6125, 64
      %v6573 = vpop.permute.xlu0 %6572
      %6574 = vrot.lane.b32.xlu0 %v6129, 64
      %v6575 = vpop.permute.xlu0 %6574
      %6576 = vrot.lane.b32.xlu0 %v6135, 64
      %v6577 = vpop.permute.xlu0 %6576
      %6578 = vrot.lane.b32.xlu0 %v6139, 64
      %v6579 = vpop.permute.xlu0 %6578
      %6580 = vrot.lane.b32.xlu0 %v6145, 64
      %v6581 = vpop.permute.xlu0 %6580
      %6582 = vrot.lane.b32.xlu0 %v6149, 64
      %v6583 = vpop.permute.xlu0 %6582
      %v6592 = vmax.f32 %v6560, %v6569
      %v6593 = vmax.f32 %v6561, %v6571
      %v6594 = vmax.f32 %v6562, %v6573
      %v6595 = vmax.f32 %v6563, %v6575
      %v6596 = vmax.f32 %v6564, %v6577
      %v6597 = vmax.f32 %v6565, %v6579
      %v6598 = vmax.f32 %v6566, %v6581
      %v6599 = vmax.f32 %v6567, %v6583
      %6600 = vrot.lane.b32.xlu0 %v6115, 48
      %v6601 = vpop.permute.xlu0 %6600
      %6602 = vrot.lane.b32.xlu0 %v6119, 48
      %v6603 = vpop.permute.xlu0 %6602
      %6604 = vrot.lane.b32.xlu0 %v6125, 48
      %v6605 = vpop.permute.xlu0 %6604
      %6606 = vrot.lane.b32.xlu0 %v6129, 48
      %v6607 = vpop.permute.xlu0 %6606
      %6608 = vrot.lane.b32.xlu0 %v6135, 48
      %v6609 = vpop.permute.xlu0 %6608
      %6610 = vrot.lane.b32.xlu0 %v6139, 48
      %v6611 = vpop.permute.xlu0 %6610
      %6612 = vrot.lane.b32.xlu0 %v6145, 48
      %v6613 = vpop.permute.xlu0 %6612
      %6614 = vrot.lane.b32.xlu0 %v6149, 48
      %v6615 = vpop.permute.xlu0 %6614
      %v6624 = vmax.f32 %v6592, %v6601
      %v6625 = vmax.f32 %v6593, %v6603
      %v6626 = vmax.f32 %v6594, %v6605
      %v6627 = vmax.f32 %v6595, %v6607
      %v6628 = vmax.f32 %v6596, %v6609
      %v6629 = vmax.f32 %v6597, %v6611
      %v6630 = vmax.f32 %v6598, %v6613
      %v6631 = vmax.f32 %v6599, %v6615
      %6632 = vrot.lane.b32.xlu0 %v6115, 32
      %v6633 = vpop.permute.xlu0 %6632
      %6634 = vrot.lane.b32.xlu0 %v6119, 32
      %v6635 = vpop.permute.xlu0 %6634
      %6636 = vrot.lane.b32.xlu0 %v6125, 32
      %v6637 = vpop.permute.xlu0 %6636
      %6638 = vrot.lane.b32.xlu0 %v6129, 32
      %v6639 = vpop.permute.xlu0 %6638
      %6640 = vrot.lane.b32.xlu0 %v6135, 32
      %v6641 = vpop.permute.xlu0 %6640
      %6642 = vrot.lane.b32.xlu0 %v6139, 32
      %v6643 = vpop.permute.xlu0 %6642
      %6644 = vrot.lane.b32.xlu0 %v6145, 32
      %v6645 = vpop.permute.xlu0 %6644
      %6646 = vrot.lane.b32.xlu0 %v6149, 32
      %v6647 = vpop.permute.xlu0 %6646
      %v6656 = vmax.f32 %v6624, %v6633
      %v6657 = vmax.f32 %v6625, %v6635
      %v6658 = vmax.f32 %v6626, %v6637
      %v6659 = vmax.f32 %v6627, %v6639
      %v6660 = vmax.f32 %v6628, %v6641
      %v6661 = vmax.f32 %v6629, %v6643
      %v6662 = vmax.f32 %v6630, %v6645
      %v6663 = vmax.f32 %v6631, %v6647
      %6664 = vrot.lane.b32.xlu0 %v6115, 16
      %v6665 = vpop.permute.xlu0 %6664
      %6666 = vrot.lane.b32.xlu0 %v6119, 16
      %v6667 = vpop.permute.xlu0 %6666
      %6668 = vrot.lane.b32.xlu0 %v6125, 16
      %v6669 = vpop.permute.xlu0 %6668
      %6670 = vrot.lane.b32.xlu0 %v6129, 16
      %v6671 = vpop.permute.xlu0 %6670
      %6672 = vrot.lane.b32.xlu0 %v6135, 16
      %v6673 = vpop.permute.xlu0 %6672
      %6674 = vrot.lane.b32.xlu0 %v6139, 16
      %v6675 = vpop.permute.xlu0 %6674
      %6676 = vrot.lane.b32.xlu0 %v6145, 16
      %v6677 = vpop.permute.xlu0 %6676
      %6678 = vrot.lane.b32.xlu0 %v6149, 16
      %v6679 = vpop.permute.xlu0 %6678
      %v6688 = vmax.f32 %v6656, %v6665
      %v6689 = vmax.f32 %v6657, %v6667
      %v6690 = vmax.f32 %v6658, %v6669
      %v6691 = vmax.f32 %v6659, %v6671
      %v6692 = vmax.f32 %v6660, %v6673
      %v6693 = vmax.f32 %v6661, %v6675
      %v6694 = vmax.f32 %v6662, %v6677
      %v6695 = vmax.f32 %v6663, %v6679
      %v6696 = vmax.f32 %v6688, %v6186
      %v6697 = vmax.f32 %v6689, %v6190
      %v6698 = vmax.f32 %v6690, %v6196
      %v6699 = vmax.f32 %v6691, %v6200
      %v6700 = vmax.f32 %v6692, %v6206
      %v6701 = vmax.f32 %v6693, %v6210
      %v6702 = vmax.f32 %v6694, %v6216
      %v6703 = vmax.f32 %v6695, %v6220
      %6712 = vrot.lane.b32.xlu0 %v6186, 112
      %v6713 = vpop.permute.xlu0 %6712
      %6714 = vrot.lane.b32.xlu0 %v6190, 112
      %v6715 = vpop.permute.xlu0 %6714
      %6716 = vrot.lane.b32.xlu0 %v6196, 112
      %v6717 = vpop.permute.xlu0 %6716
      %6718 = vrot.lane.b32.xlu0 %v6200, 112
      %v6719 = vpop.permute.xlu0 %6718
      %6720 = vrot.lane.b32.xlu0 %v6206, 112
      %v6721 = vpop.permute.xlu0 %6720
      %6722 = vrot.lane.b32.xlu0 %v6210, 112
      %v6723 = vpop.permute.xlu0 %6722
      %6724 = vrot.lane.b32.xlu0 %v6216, 112
      %v6725 = vpop.permute.xlu0 %6724
      %6726 = vrot.lane.b32.xlu0 %v6220, 112
      %v6727 = vpop.permute.xlu0 %6726
      %v6736 = vmax.f32 %v6696, %v6713
      %v6737 = vmax.f32 %v6697, %v6715
      %v6738 = vmax.f32 %v6698, %v6717
      %v6739 = vmax.f32 %v6699, %v6719
      %v6740 = vmax.f32 %v6700, %v6721
      %v6741 = vmax.f32 %v6701, %v6723
      %v6742 = vmax.f32 %v6702, %v6725
      %v6743 = vmax.f32 %v6703, %v6727
      %6744 = vrot.lane.b32.xlu0 %v6186, 96
      %v6745 = vpop.permute.xlu0 %6744
      %6746 = vrot.lane.b32.xlu0 %v6190, 96
      %v6747 = vpop.permute.xlu0 %6746
      %6748 = vrot.lane.b32.xlu0 %v6196, 96
      %v6749 = vpop.permute.xlu0 %6748
      %6750 = vrot.lane.b32.xlu0 %v6200, 96
      %v6751 = vpop.permute.xlu0 %6750
      %6752 = vrot.lane.b32.xlu0 %v6206, 96
      %v6753 = vpop.permute.xlu0 %6752
      %6754 = vrot.lane.b32.xlu0 %v6210, 96
      %v6755 = vpop.permute.xlu0 %6754
      %6756 = vrot.lane.b32.xlu0 %v6216, 96
      %v6757 = vpop.permute.xlu0 %6756
      %6758 = vrot.lane.b32.xlu0 %v6220, 96
      %v6759 = vpop.permute.xlu0 %6758
      %v6768 = vmax.f32 %v6736, %v6745
      %v6769 = vmax.f32 %v6737, %v6747
      %v6770 = vmax.f32 %v6738, %v6749
      %v6771 = vmax.f32 %v6739, %v6751
      %v6772 = vmax.f32 %v6740, %v6753
      %v6773 = vmax.f32 %v6741, %v6755
      %v6774 = vmax.f32 %v6742, %v6757
      %v6775 = vmax.f32 %v6743, %v6759
      %6776 = vrot.lane.b32.xlu0 %v6186, 80
      %v6777 = vpop.permute.xlu0 %6776
      %6778 = vrot.lane.b32.xlu0 %v6190, 80
      %v6779 = vpop.permute.xlu0 %6778
      %6780 = vrot.lane.b32.xlu0 %v6196, 80
      %v6781 = vpop.permute.xlu0 %6780
      %6782 = vrot.lane.b32.xlu0 %v6200, 80
      %v6783 = vpop.permute.xlu0 %6782
      %6784 = vrot.lane.b32.xlu0 %v6206, 80
      %v6785 = vpop.permute.xlu0 %6784
      %6786 = vrot.lane.b32.xlu0 %v6210, 80
      %v6787 = vpop.permute.xlu0 %6786
      %6788 = vrot.lane.b32.xlu0 %v6216, 80
      %v6789 = vpop.permute.xlu0 %6788
      %6790 = vrot.lane.b32.xlu0 %v6220, 80
      %v6791 = vpop.permute.xlu0 %6790
      %v6800 = vmax.f32 %v6768, %v6777
      %v6801 = vmax.f32 %v6769, %v6779
      %v6802 = vmax.f32 %v6770, %v6781
      %v6803 = vmax.f32 %v6771, %v6783
      %v6804 = vmax.f32 %v6772, %v6785
      %v6805 = vmax.f32 %v6773, %v6787
      %v6806 = vmax.f32 %v6774, %v6789
      %v6807 = vmax.f32 %v6775, %v6791
      %6808 = vrot.lane.b32.xlu0 %v6186, 64
      %v6809 = vpop.permute.xlu0 %6808
      %6810 = vrot.lane.b32.xlu0 %v6190, 64
      %v6811 = vpop.permute.xlu0 %6810
      %6812 = vrot.lane.b32.xlu0 %v6196, 64
      %v6813 = vpop.permute.xlu0 %6812
      %6814 = vrot.lane.b32.xlu0 %v6200, 64
      %v6815 = vpop.permute.xlu0 %6814
      %6816 = vrot.lane.b32.xlu0 %v6206, 64
      %v6817 = vpop.permute.xlu0 %6816
      %6818 = vrot.lane.b32.xlu0 %v6210, 64
      %v6819 = vpop.permute.xlu0 %6818
      %6820 = vrot.lane.b32.xlu0 %v6216, 64
      %v6821 = vpop.permute.xlu0 %6820
      %6822 = vrot.lane.b32.xlu0 %v6220, 64
      %v6823 = vpop.permute.xlu0 %6822
      %v6832 = vmax.f32 %v6800, %v6809
      %v6833 = vmax.f32 %v6801, %v6811
      %v6834 = vmax.f32 %v6802, %v6813
      %v6835 = vmax.f32 %v6803, %v6815
      %v6836 = vmax.f32 %v6804, %v6817
      %v6837 = vmax.f32 %v6805, %v6819
      %v6838 = vmax.f32 %v6806, %v6821
      %v6839 = vmax.f32 %v6807, %v6823
      %6840 = vrot.lane.b32.xlu0 %v6186, 48
      %v6841 = vpop.permute.xlu0 %6840
      %6842 = vrot.lane.b32.xlu0 %v6190, 48
      %v6843 = vpop.permute.xlu0 %6842
      %6844 = vrot.lane.b32.xlu0 %v6196, 48
      %v6845 = vpop.permute.xlu0 %6844
      %6846 = vrot.lane.b32.xlu0 %v6200, 48
      %v6847 = vpop.permute.xlu0 %6846
      %6848 = vrot.lane.b32.xlu0 %v6206, 48
      %v6849 = vpop.permute.xlu0 %6848
      %6850 = vrot.lane.b32.xlu0 %v6210, 48
      %v6851 = vpop.permute.xlu0 %6850
      %6852 = vrot.lane.b32.xlu0 %v6216, 48
      %v6853 = vpop.permute.xlu0 %6852
      %6854 = vrot.lane.b32.xlu0 %v6220, 48
      %v6855 = vpop.permute.xlu0 %6854
      %v6864 = vmax.f32 %v6832, %v6841
      %v6865 = vmax.f32 %v6833, %v6843
      %v6866 = vmax.f32 %v6834, %v6845
      %v6867 = vmax.f32 %v6835, %v6847
      %v6868 = vmax.f32 %v6836, %v6849
      %v6869 = vmax.f32 %v6837, %v6851
      %v6870 = vmax.f32 %v6838, %v6853
      %v6871 = vmax.f32 %v6839, %v6855
      %6872 = vrot.lane.b32.xlu0 %v6186, 32
      %v6873 = vpop.permute.xlu0 %6872
      %6874 = vrot.lane.b32.xlu0 %v6190, 32
      %v6875 = vpop.permute.xlu0 %6874
      %6876 = vrot.lane.b32.xlu0 %v6196, 32
      %v6877 = vpop.permute.xlu0 %6876
      %6878 = vrot.lane.b32.xlu0 %v6200, 32
      %v6879 = vpop.permute.xlu0 %6878
      %6880 = vrot.lane.b32.xlu0 %v6206, 32
      %v6881 = vpop.permute.xlu0 %6880
      %6882 = vrot.lane.b32.xlu0 %v6210, 32
      %v6883 = vpop.permute.xlu0 %6882
      %6884 = vrot.lane.b32.xlu0 %v6216, 32
      %v6885 = vpop.permute.xlu0 %6884
      %6886 = vrot.lane.b32.xlu0 %v6220, 32
      %v6887 = vpop.permute.xlu0 %6886
      %v6896 = vmax.f32 %v6864, %v6873
      %v6897 = vmax.f32 %v6865, %v6875
      %v6898 = vmax.f32 %v6866, %v6877
      %v6899 = vmax.f32 %v6867, %v6879
      %v6900 = vmax.f32 %v6868, %v6881
      %v6901 = vmax.f32 %v6869, %v6883
      %v6902 = vmax.f32 %v6870, %v6885
      %v6903 = vmax.f32 %v6871, %v6887
      %6904 = vrot.lane.b32.xlu0 %v6186, 16
      %v6905 = vpop.permute.xlu0 %6904
      %6906 = vrot.lane.b32.xlu0 %v6190, 16
      %v6907 = vpop.permute.xlu0 %6906
      %6908 = vrot.lane.b32.xlu0 %v6196, 16
      %v6909 = vpop.permute.xlu0 %6908
      %6910 = vrot.lane.b32.xlu0 %v6200, 16
      %v6911 = vpop.permute.xlu0 %6910
      %6912 = vrot.lane.b32.xlu0 %v6206, 16
      %v6913 = vpop.permute.xlu0 %6912
      %6914 = vrot.lane.b32.xlu0 %v6210, 16
      %v6915 = vpop.permute.xlu0 %6914
      %6916 = vrot.lane.b32.xlu0 %v6216, 16
      %v6917 = vpop.permute.xlu0 %6916
      %6918 = vrot.lane.b32.xlu0 %v6220, 16
      %v6919 = vpop.permute.xlu0 %6918
      %v6928 = vmax.f32 %v6896, %v6905
      %v6929 = vmax.f32 %v6897, %v6907
      %v6930 = vmax.f32 %v6898, %v6909
      %v6931 = vmax.f32 %v6899, %v6911
      %v6932 = vmax.f32 %v6900, %v6913
      %v6933 = vmax.f32 %v6901, %v6915
      %v6934 = vmax.f32 %v6902, %v6917
      %v6935 = vmax.f32 %v6903, %v6919
      %v6936 = vmax.f32 %v6928, %v6188
      %v6937 = vmax.f32 %v6929, %v6192
      %v6938 = vmax.f32 %v6930, %v6198
      %v6939 = vmax.f32 %v6931, %v6202
      %v6940 = vmax.f32 %v6932, %v6208
      %v6941 = vmax.f32 %v6933, %v6212
      %v6942 = vmax.f32 %v6934, %v6218
      %v6943 = vmax.f32 %v6935, %v6222
      %v6944 = vadd.f32 %v6936, %v1493
      %v6945 = vadd.f32 %v6937, %v1493
      %v6946 = vadd.f32 %v6938, %v1493
      %v6947 = vadd.f32 %v6939, %v1493
      %v6948 = vadd.f32 %v6940, %v1493
      %v6949 = vadd.f32 %v6941, %v1493
      %v6950 = vadd.f32 %v6942, %v1493
      %v6951 = vadd.f32 %v6943, %v1493
      %v6952 = vmax.f32 %v6944, 0.0
      %v6953 = vmax.f32 %v6945, 0.0
      %v6954 = vmax.f32 %v6946, 0.0
      %v6955 = vmax.f32 %v6947, 0.0
      %v6956 = vmax.f32 %v6948, 0.0
      %v6957 = vmax.f32 %v6949, 0.0
      %v6958 = vmax.f32 %v6950, 0.0
      %v6959 = vmax.f32 %v6951, 0.0
      %v6960 = vpack.c.bf16 %v6953, %v6952
      %v6961 = vpack.c.bf16 %v6955, %v6954
      %v6962 = vpack.c.bf16 %v6957, %v6956
      %v6963 = vpack.c.bf16 %v6959, %v6958
      %v6968 = vunpack.c.l.b16 %v6960
      %v6969 = vunpack.c.h.b16 %v6960
      %v6970 = vunpack.c.l.b16 %v6961
      %v6971 = vunpack.c.h.b16 %v6961
      %v6972 = vunpack.c.l.b16 %v6962
      %v6973 = vunpack.c.h.b16 %v6962
      %v6974 = vunpack.c.l.b16 %v6963
      %v6975 = vunpack.c.h.b16 %v6963
      %v6976 = vpack.c.b16 %v6968, %v6968
      %v6977 = vpack.c.b16 %v6969, %v6969
      %v6978 = vpack.c.b16 %v6970, %v6970
      %v6979 = vpack.c.b16 %v6971, %v6971
      %v6980 = vpack.c.b16 %v6972, %v6972
      %v6981 = vpack.c.b16 %v6973, %v6973
      %v6982 = vpack.c.b16 %v6974, %v6974
      %v6983 = vpack.c.b16 %v6975, %v6975
      %6992 = vst.msk [vmem:[%s175 + $0x80] sm:$0xf] %vm1543, %v6976
      %6993 = vst.msk [vmem:[%s175 + $0x84] sm:$0xf] %vm1543, %v6977
      %6994 = vst.msk [vmem:[%s175 + $0x88] sm:$0xf] %vm1543, %v6978
      %6995 = vst.msk [vmem:[%s175 + $0x8c] sm:$0xf] %vm1543, %v6979
      %6996 = vst.msk [vmem:[%s175 + $0x90] sm:$0xf] %vm1543, %v6980
      %6997 = vst.msk [vmem:[%s175 + $0x94] sm:$0xf] %vm1543, %v6981
      %6998 = vst.msk [vmem:[%s175 + $0x98] sm:$0xf] %vm1543, %v6982
      %6999 = vst.msk [vmem:[%s175 + $0x9c] sm:$0xf] %vm1543, %v6983
      %v7000 = vld [vmem:[%s169 + $0x140] sm:$0xff]
      %v7001 = vld [vmem:[%s169 + $0x148] sm:$0xff]
      %v7002 = vld [vmem:[%s169 + $0x150] sm:$0xff]
      %v7003 = vld [vmem:[%s169 + $0x158] sm:$0xff]
      %v7004 = vld [vmem:[%s169 + $0x160] sm:$0xff]
      %v7005 = vld [vmem:[%s169 + $0x168] sm:$0xff]
      %v7006 = vld [vmem:[%s169 + $0x170] sm:$0xff]
      %v7007 = vld [vmem:[%s169 + $0x178] sm:$0xff]
      %v7008 = vld [vmem:[%s1] sm:$0xff]
      %v7009 = vld [vmem:[%s1 + $0x8] sm:$0xff]
      %v7010 = vld [vmem:[%s1 + $0x10] sm:$0xff]
      %v7011 = vld [vmem:[%s1 + $0x18] sm:$0xff]
      %v7012 = vld [vmem:[%s1 + $0x20] sm:$0xff]
      %v7013 = vld [vmem:[%s1 + $0x28] sm:$0xff]
      %v7014 = vld [vmem:[%s1 + $0x30] sm:$0xff]
      %v7015 = vld [vmem:[%s1 + $0x38] sm:$0xff]
      %v7016 = vld [vmem:[%s1 + $0x40] sm:$0xff]
      %v7017 = vld [vmem:[%s1 + $0x48] sm:$0xff]
      %v7018 = vld [vmem:[%s1 + $0x50] sm:$0xff]
      %v7019 = vld [vmem:[%s1 + $0x58] sm:$0xff]
      %v7020 = vld [vmem:[%s1 + $0x60] sm:$0xff]
      %v7021 = vld [vmem:[%s1 + $0x68] sm:$0xff]
      %v7022 = vld [vmem:[%s1 + $0x70] sm:$0xff]
      %v7023 = vld [vmem:[%s1 + $0x78] sm:$0xff]
      %v7024 = vld [vmem:[%s1 + $0x80] sm:$0xff]
      %v7025 = vld [vmem:[%s1 + $0x88] sm:$0xff]
      %v7026 = vld [vmem:[%s1 + $0x90] sm:$0xff]
      %v7027 = vld [vmem:[%s1 + $0x98] sm:$0xff]
      %v7028 = vld [vmem:[%s1 + $0xa0] sm:$0xff]
      %v7029 = vld [vmem:[%s1 + $0xa8] sm:$0xff]
      %v7030 = vld [vmem:[%s1 + $0xb0] sm:$0xff]
      %v7031 = vld [vmem:[%s1 + $0xb8] sm:$0xff]
      %v7032 = vld [vmem:[%s1 + $0xc0] sm:$0xff]
      %v7033 = vld [vmem:[%s1 + $0xc8] sm:$0xff]
      %v7034 = vld [vmem:[%s1 + $0xd0] sm:$0xff]
      %v7035 = vld [vmem:[%s1 + $0xd8] sm:$0xff]
      %v7036 = vld [vmem:[%s1 + $0xe0] sm:$0xff]
      %v7037 = vld [vmem:[%s1 + $0xe8] sm:$0xff]
      %v7038 = vld [vmem:[%s1 + $0xf0] sm:$0xff]
      %v7039 = vld [vmem:[%s1 + $0xf8] sm:$0xff]
      %v7040 = vld [vmem:[%s1 + $0x100] sm:$0xff]
      %v7041 = vld [vmem:[%s1 + $0x108] sm:$0xff]
      %v7042 = vld [vmem:[%s1 + $0x110] sm:$0xff]
      %v7043 = vld [vmem:[%s1 + $0x118] sm:$0xff]
      %v7044 = vld [vmem:[%s1 + $0x120] sm:$0xff]
      %v7045 = vld [vmem:[%s1 + $0x128] sm:$0xff]
      %v7046 = vld [vmem:[%s1 + $0x130] sm:$0xff]
      %v7047 = vld [vmem:[%s1 + $0x138] sm:$0xff]
      %v7048 = vld [vmem:[%s1 + $0x140] sm:$0xff]
      %v7049 = vld [vmem:[%s1 + $0x148] sm:$0xff]
      %v7050 = vld [vmem:[%s1 + $0x150] sm:$0xff]
      %v7051 = vld [vmem:[%s1 + $0x158] sm:$0xff]
      %v7052 = vld [vmem:[%s1 + $0x160] sm:$0xff]
      %v7053 = vld [vmem:[%s1 + $0x168] sm:$0xff]
      %v7054 = vld [vmem:[%s1 + $0x170] sm:$0xff]
      %v7055 = vld [vmem:[%s1 + $0x178] sm:$0xff]
      %v7056 = vld [vmem:[%s1 + $0x180] sm:$0xff]
      %v7057 = vld [vmem:[%s1 + $0x188] sm:$0xff]
      %v7058 = vld [vmem:[%s1 + $0x190] sm:$0xff]
      %v7059 = vld [vmem:[%s1 + $0x198] sm:$0xff]
      %v7060 = vld [vmem:[%s1 + $0x1a0] sm:$0xff]
      %v7061 = vld [vmem:[%s1 + $0x1a8] sm:$0xff]
      %v7062 = vld [vmem:[%s1 + $0x1b0] sm:$0xff]
      %v7063 = vld [vmem:[%s1 + $0x1b8] sm:$0xff]
      %v7064 = vld [vmem:[%s1 + $0x1c0] sm:$0xff]
      %v7065 = vld [vmem:[%s1 + $0x1c8] sm:$0xff]
      %v7066 = vld [vmem:[%s1 + $0x1d0] sm:$0xff]
      %v7067 = vld [vmem:[%s1 + $0x1d8] sm:$0xff]
      %v7068 = vld [vmem:[%s1 + $0x1e0] sm:$0x33]
      %v7069 = vld [vmem:[%s1 + $0x1e8] sm:$0x33]
      %v7078 = vunpack.c.l.b16 %v7000
      %v7079 = vunpack.c.h.b16 %v7000
      %v7080 = vunpack.c.l.b16 %v7001
      %v7081 = vunpack.c.h.b16 %v7001
      %v7082 = vunpack.c.l.b16 %v7002
      %v7083 = vunpack.c.h.b16 %v7002
      %v7084 = vunpack.c.l.b16 %v7003
      %v7085 = vunpack.c.h.b16 %v7003
      %v7086 = vunpack.c.l.b16 %v7004
      %v7087 = vunpack.c.h.b16 %v7004
      %v7088 = vunpack.c.l.b16 %v7005
      %v7089 = vunpack.c.h.b16 %v7005
      %v7090 = vunpack.c.l.b16 %v7006
      %v7091 = vunpack.c.h.b16 %v7006
      %v7092 = vunpack.c.l.b16 %v7007
      %v7093 = vunpack.c.h.b16 %v7007
      %v7094 = vpack.c.b16 %v7080, %v7078
      %v7095 = vpack.c.b16 %v7081, %v7079
      %v7096 = vpack.c.b16 %v7084, %v7082
      %v7097 = vpack.c.b16 %v7085, %v7083
      %v7098 = vpack.c.b16 %v7088, %v7086
      %v7099 = vpack.c.b16 %v7089, %v7087
      %v7100 = vpack.c.b16 %v7092, %v7090
      %v7101 = vpack.c.b16 %v7093, %v7091
      %v7168 = vunpack.c.l.b16 %v7008
      %v7169 = vunpack.c.h.b16 %v7008
      %v7170 = vunpack.c.l.b16 %v7009
      %v7171 = vunpack.c.h.b16 %v7009
      %v7172 = vunpack.c.l.b16 %v7010
      %v7173 = vunpack.c.h.b16 %v7010
      %v7174 = vunpack.c.l.b16 %v7011
      %v7175 = vunpack.c.h.b16 %v7011
      %v7176 = vunpack.c.l.b16 %v7012
      %v7177 = vunpack.c.h.b16 %v7012
      %v7178 = vunpack.c.l.b16 %v7013
      %v7179 = vunpack.c.h.b16 %v7013
      %v7180 = vunpack.c.l.b16 %v7014
      %v7181 = vunpack.c.h.b16 %v7014
      %v7182 = vunpack.c.l.b16 %v7015
      %v7183 = vunpack.c.h.b16 %v7015
      %v7184 = vunpack.c.l.b16 %v7016
      %v7185 = vunpack.c.h.b16 %v7016
      %v7186 = vunpack.c.l.b16 %v7017
      %v7187 = vunpack.c.h.b16 %v7017
      %v7188 = vunpack.c.l.b16 %v7018
      %v7189 = vunpack.c.h.b16 %v7018
      %v7190 = vunpack.c.l.b16 %v7019
      %v7191 = vunpack.c.h.b16 %v7019
      %v7192 = vunpack.c.l.b16 %v7020
      %v7193 = vunpack.c.h.b16 %v7020
      %v7194 = vunpack.c.l.b16 %v7021
      %v7195 = vunpack.c.h.b16 %v7021
      %v7196 = vunpack.c.l.b16 %v7022
      %v7197 = vunpack.c.h.b16 %v7022
      %v7198 = vunpack.c.l.b16 %v7023
      %v7199 = vunpack.c.h.b16 %v7023
      %v7200 = vunpack.c.l.b16 %v7024
      %v7201 = vunpack.c.h.b16 %v7024
      %v7202 = vunpack.c.l.b16 %v7025
      %v7203 = vunpack.c.h.b16 %v7025
      %v7204 = vunpack.c.l.b16 %v7026
      %v7205 = vunpack.c.h.b16 %v7026
      %v7206 = vunpack.c.l.b16 %v7027
      %v7207 = vunpack.c.h.b16 %v7027
      %v7208 = vunpack.c.l.b16 %v7028
      %v7209 = vunpack.c.h.b16 %v7028
      %v7210 = vunpack.c.l.b16 %v7029
      %v7211 = vunpack.c.h.b16 %v7029
      %v7212 = vunpack.c.l.b16 %v7030
      %v7213 = vunpack.c.h.b16 %v7030
      %v7214 = vunpack.c.l.b16 %v7031
      %v7215 = vunpack.c.h.b16 %v7031
      %v7216 = vunpack.c.l.b16 %v7032
      %v7217 = vunpack.c.h.b16 %v7032
      %v7218 = vunpack.c.l.b16 %v7033
      %v7219 = vunpack.c.h.b16 %v7033
      %v7220 = vunpack.c.l.b16 %v7034
      %v7221 = vunpack.c.h.b16 %v7034
      %v7222 = vunpack.c.l.b16 %v7035
      %v7223 = vunpack.c.h.b16 %v7035
      %v7224 = vunpack.c.l.b16 %v7036
      %v7225 = vunpack.c.h.b16 %v7036
      %v7226 = vunpack.c.l.b16 %v7037
      %v7227 = vunpack.c.h.b16 %v7037
      %v7228 = vunpack.c.l.b16 %v7038
      %v7229 = vunpack.c.h.b16 %v7038
      %v7230 = vunpack.c.l.b16 %v7039
      %v7231 = vunpack.c.h.b16 %v7039
      %v7232 = vunpack.c.l.b16 %v7040
      %v7233 = vunpack.c.h.b16 %v7040
      %v7234 = vunpack.c.l.b16 %v7041
      %v7235 = vunpack.c.h.b16 %v7041
      %v7236 = vunpack.c.l.b16 %v7042
      %v7237 = vunpack.c.h.b16 %v7042
      %v7238 = vunpack.c.l.b16 %v7043
      %v7239 = vunpack.c.h.b16 %v7043
      %v7240 = vunpack.c.l.b16 %v7044
      %v7241 = vunpack.c.h.b16 %v7044
      %v7242 = vunpack.c.l.b16 %v7045
      %v7243 = vunpack.c.h.b16 %v7045
      %v7244 = vunpack.c.l.b16 %v7046
      %v7245 = vunpack.c.h.b16 %v7046
      %v7246 = vunpack.c.l.b16 %v7047
      %v7247 = vunpack.c.h.b16 %v7047
      %v7248 = vunpack.c.l.b16 %v7048
      %v7249 = vunpack.c.h.b16 %v7048
      %v7250 = vunpack.c.l.b16 %v7049
      %v7251 = vunpack.c.h.b16 %v7049
      %v7252 = vunpack.c.l.b16 %v7050
      %v7253 = vunpack.c.h.b16 %v7050
      %v7254 = vunpack.c.l.b16 %v7051
      %v7255 = vunpack.c.h.b16 %v7051
      %v7256 = vunpack.c.l.b16 %v7052
      %v7257 = vunpack.c.h.b16 %v7052
      %v7258 = vunpack.c.l.b16 %v7053
      %v7259 = vunpack.c.h.b16 %v7053
      %v7260 = vunpack.c.l.b16 %v7054
      %v7261 = vunpack.c.h.b16 %v7054
      %v7262 = vunpack.c.l.b16 %v7055
      %v7263 = vunpack.c.h.b16 %v7055
      %v7264 = vunpack.c.l.b16 %v7056
      %v7265 = vunpack.c.h.b16 %v7056
      %v7266 = vunpack.c.l.b16 %v7057
      %v7267 = vunpack.c.h.b16 %v7057
      %v7268 = vunpack.c.l.b16 %v7058
      %v7269 = vunpack.c.h.b16 %v7058
      %v7270 = vunpack.c.l.b16 %v7059
      %v7271 = vunpack.c.h.b16 %v7059
      %v7272 = vunpack.c.l.b16 %v7060
      %v7273 = vunpack.c.h.b16 %v7060
      %v7274 = vunpack.c.l.b16 %v7061
      %v7275 = vunpack.c.h.b16 %v7061
      %v7276 = vunpack.c.l.b16 %v7062
      %v7277 = vunpack.c.h.b16 %v7062
      %v7278 = vunpack.c.l.b16 %v7063
      %v7279 = vunpack.c.h.b16 %v7063
      %v7280 = vunpack.c.l.b16 %v7064
      %v7281 = vunpack.c.h.b16 %v7064
      %v7282 = vunpack.c.l.b16 %v7065
      %v7283 = vunpack.c.h.b16 %v7065
      %v7284 = vunpack.c.l.b16 %v7066
      %v7285 = vunpack.c.h.b16 %v7066
      %v7286 = vunpack.c.l.b16 %v7067
      %v7287 = vunpack.c.h.b16 %v7067
      %v7288 = vunpack.c.l.b16 %v7068
      %v7289 = vunpack.c.h.b16 %v7068
      %v7290 = vunpack.c.l.b16 %v7069
      %v7291 = vunpack.c.h.b16 %v7069
      %v7292 = vpack.c.b16 %v7172, %v7168
      %v7293 = vpack.c.b16 %v7173, %v7169
      %v7294 = vpack.c.b16 %v7174, %v7170
      %v7295 = vpack.c.b16 %v7175, %v7171
      %v7296 = vpack.c.b16 %v7180, %v7176
      %v7297 = vpack.c.b16 %v7181, %v7177
      %v7298 = vpack.c.b16 %v7182, %v7178
      %v7299 = vpack.c.b16 %v7183, %v7179
      %v7300 = vpack.c.b16 %v7188, %v7184
      %v7301 = vpack.c.b16 %v7189, %v7185
      %v7302 = vpack.c.b16 %v7190, %v7186
      %v7303 = vpack.c.b16 %v7191, %v7187
      %v7304 = vpack.c.b16 %v7196, %v7192
      %v7305 = vpack.c.b16 %v7197, %v7193
      %v7306 = vpack.c.b16 %v7198, %v7194
      %v7307 = vpack.c.b16 %v7199, %v7195
      %v7308 = vpack.c.b16 %v7204, %v7200
      %v7309 = vpack.c.b16 %v7205, %v7201
      %v7310 = vpack.c.b16 %v7206, %v7202
      %v7311 = vpack.c.b16 %v7207, %v7203
      %v7312 = vpack.c.b16 %v7212, %v7208
      %v7313 = vpack.c.b16 %v7213, %v7209
      %v7314 = vpack.c.b16 %v7214, %v7210
      %v7315 = vpack.c.b16 %v7215, %v7211
      %v7316 = vpack.c.b16 %v7220, %v7216
      %v7317 = vpack.c.b16 %v7221, %v7217
      %v7318 = vpack.c.b16 %v7222, %v7218
      %v7319 = vpack.c.b16 %v7223, %v7219
      %v7320 = vpack.c.b16 %v7228, %v7224
      %v7321 = vpack.c.b16 %v7229, %v7225
      %v7322 = vpack.c.b16 %v7230, %v7226
      %v7323 = vpack.c.b16 %v7231, %v7227
      %v7324 = vpack.c.b16 %v7236, %v7232
      %v7325 = vpack.c.b16 %v7237, %v7233
      %v7326 = vpack.c.b16 %v7238, %v7234
      %v7327 = vpack.c.b16 %v7239, %v7235
      %v7328 = vpack.c.b16 %v7244, %v7240
      %v7329 = vpack.c.b16 %v7245, %v7241
      %v7330 = vpack.c.b16 %v7246, %v7242
      %v7331 = vpack.c.b16 %v7247, %v7243
      %v7332 = vpack.c.b16 %v7252, %v7248
      %v7333 = vpack.c.b16 %v7253, %v7249
      %v7334 = vpack.c.b16 %v7254, %v7250
      %v7335 = vpack.c.b16 %v7255, %v7251
      %v7336 = vpack.c.b16 %v7260, %v7256
      %v7337 = vpack.c.b16 %v7261, %v7257
      %v7338 = vpack.c.b16 %v7262, %v7258
      %v7339 = vpack.c.b16 %v7263, %v7259
      %v7340 = vpack.c.b16 %v7268, %v7264
      %v7341 = vpack.c.b16 %v7269, %v7265
      %v7342 = vpack.c.b16 %v7270, %v7266
      %v7343 = vpack.c.b16 %v7271, %v7267
      %v7344 = vpack.c.b16 %v7276, %v7272
      %v7345 = vpack.c.b16 %v7277, %v7273
      %v7346 = vpack.c.b16 %v7278, %v7274
      %v7347 = vpack.c.b16 %v7279, %v7275
      %v7348 = vpack.c.b16 %v7284, %v7280
      %v7349 = vpack.c.b16 %v7285, %v7281
      %v7350 = vpack.c.b16 %v7286, %v7282
      %v7351 = vpack.c.b16 %v7287, %v7283
      %v7352 = vpack.c.b16 %v7288, %v7288
      %v7353 = vpack.c.b16 %v7289, %v7289
      %v7354 = vpack.c.b16 %v7290, %v7290
      %v7355 = vpack.c.b16 %v7291, %v7291
      %v7417 = vsel %vm594, %v7095, 0
      %v7420 = vsel %vm594, %v7097, 0
      %v7423 = vsel %vm594, %v7099, 0
      %v7426 = vsel %vm594, %v7101, 0
      %v7429 = vand.u32 %v7352, %v610
      %v7432 = vand.u32 %v7353, %v610
      %v7435 = vand.u32 %v7354, %v610
      %v7438 = vand.u32 %v7355, %v610
      %7440 = vmatprep.subr.bf16.mxu0 %v7293
      %7441 = vmatpush1.bf16.msra.mxu0 %v7292
      %7442 = vmatprep.subr.bf16.mxu0 %v7297
      %7443 = vmatpush1.bf16.msra.mxu0 %v7296
      %7444 = vmatprep.subr.bf16.mxu0 %v7301
      %7445 = vmatpush1.bf16.msra.mxu0 %v7300
      %7446 = vmatprep.subr.bf16.mxu0 %v7305
      %7447 = vmatpush1.bf16.msra.mxu0 %v7304
      %7448 = vmatprep.subr.bf16.mxu0 %v7309
      %7449 = vmatpush1.bf16.msra.mxu0 %v7308
      %7450 = vmatprep.subr.bf16.mxu0 %v7313
      %7451 = vmatpush1.bf16.msra.mxu0 %v7312
      %7452 = vmatprep.subr.bf16.mxu0 %v7317
      %7453 = vmatpush1.bf16.msra.mxu0 %v7316
      %7454 = vmatprep.subr.bf16.mxu0 %v7321
      %7455 = vmatpush1.bf16.msra.mxu0 %v7320
      %7456 = vmatprep.subr.bf16.mxu0 %v7325
      %7457 = vmatpush1.bf16.msra.mxu0 %v7324
      %7458 = vmatprep.subr.bf16.mxu0 %v7329
      %7459 = vmatpush1.bf16.msra.mxu0 %v7328
      %7460 = vmatprep.subr.bf16.mxu0 %v7333
      %7461 = vmatpush1.bf16.msra.mxu0 %v7332
      %7462 = vmatprep.subr.bf16.mxu0 %v7337
      %7463 = vmatpush1.bf16.msra.mxu0 %v7336
      %7464 = vmatprep.subr.bf16.mxu0 %v7341
      %7465 = vmatpush1.bf16.msra.mxu0 %v7340
      %7466 = vmatprep.subr.bf16.mxu0 %v7345
      %7467 = vmatpush1.bf16.msra.mxu0 %v7344
      %7468 = vmatprep.subr.bf16.mxu0 %v7349
      %7469 = vmatpush1.bf16.msra.mxu0 %v7348
      %7470 = vmatprep.subr.bf16.mxu0 %v7432
      %7471 = vmatpush1.bf16.msra.mxu0 %v7429
      %7472 = vmatprep.mubr.bf16.mxu0 %v7417
      %7473 = vmatmul.mubr.bf16.gmra.mrb[0].mxu0 %v7094
      %v7474 = vpop.f32.mrb[0].mxu0
      %v7475 = vadd.f32 0.0, %v7474
      %v7476 = vpop.f32.mrb[0].mxu0
      %v7477 = vadd.f32 0.0, %v7476
      %v7478 = vpop.f32.mrb[0].mxu0
      %v7479 = vadd.f32 0.0, %v7478
      %v7480 = vpop.f32.mrb[0].mxu0
      %v7481 = vadd.f32 0.0, %v7480
      %7482 = vmatprep.mubr.bf16.mxu0 %v7420
      %7483 = vmatmul.mubr.bf16.gmra.mrb[0].mxu0 %v7096
      %v7484 = vpop.f32.mrb[0].mxu0
      %v7485 = vadd.f32 0.0, %v7484
      %v7486 = vpop.f32.mrb[0].mxu0
      %v7487 = vadd.f32 0.0, %v7486
      %v7488 = vpop.f32.mrb[0].mxu0
      %v7489 = vadd.f32 0.0, %v7488
      %v7490 = vpop.f32.mrb[0].mxu0
      %v7491 = vadd.f32 0.0, %v7490
      %7492 = vmatprep.mubr.bf16.mxu0 %v7423
      %7493 = vmatmul.mubr.bf16.gmra.mrb[0].mxu0 %v7098
      %v7494 = vpop.f32.mrb[0].mxu0
      %v7495 = vadd.f32 0.0, %v7494
      %v7496 = vpop.f32.mrb[0].mxu0
      %v7497 = vadd.f32 0.0, %v7496
      %v7498 = vpop.f32.mrb[0].mxu0
      %v7499 = vadd.f32 0.0, %v7498
      %v7500 = vpop.f32.mrb[0].mxu0
      %v7501 = vadd.f32 0.0, %v7500
      %7502 = vmatprep.mubr.bf16.mxu0 %v7426
      %7503 = vmatmul.mubr.bf16.gmra.mrb[0].mxu0 %v7100
      %v7504 = vpop.f32.mrb[0].mxu0
      %v7505 = vadd.f32 0.0, %v7504
      %v7506 = vpop.f32.mrb[0].mxu0
      %v7507 = vadd.f32 0.0, %v7506
      %v7508 = vpop.f32.mrb[0].mxu0
      %v7509 = vadd.f32 0.0, %v7508
      %v7510 = vpop.f32.mrb[0].mxu0
      %v7511 = vadd.f32 0.0, %v7510
      %7512 = vdwg.mxu0
      %7513 = vmatprep.subr.bf16.mxu0 %v7295
      %7514 = vmatpush1.bf16.msra.mxu0 %v7294
      %7515 = vmatprep.subr.bf16.mxu0 %v7299
      %7516 = vmatpush1.bf16.msra.mxu0 %v7298
      %7517 = vmatprep.subr.bf16.mxu0 %v7303
      %7518 = vmatpush1.bf16.msra.mxu0 %v7302
      %7519 = vmatprep.subr.bf16.mxu0 %v7307
      %7520 = vmatpush1.bf16.msra.mxu0 %v7306
      %7521 = vmatprep.subr.bf16.mxu0 %v7311
      %7522 = vmatpush1.bf16.msra.mxu0 %v7310
      %7523 = vmatprep.subr.bf16.mxu0 %v7315
      %7524 = vmatpush1.bf16.msra.mxu0 %v7314
      %7525 = vmatprep.subr.bf16.mxu0 %v7319
      %7526 = vmatpush1.bf16.msra.mxu0 %v7318
      %7527 = vmatprep.subr.bf16.mxu0 %v7323
      %7528 = vmatpush1.bf16.msra.mxu0 %v7322
      %7529 = vmatprep.subr.bf16.mxu0 %v7327
      %7530 = vmatpush1.bf16.msra.mxu0 %v7326
      %7531 = vmatprep.subr.bf16.mxu0 %v7331
      %7532 = vmatpush1.bf16.msra.mxu0 %v7330
      %7533 = vmatprep.subr.bf16.mxu0 %v7335
      %7534 = vmatpush1.bf16.msra.mxu0 %v7334
      %7535 = vmatprep.subr.bf16.mxu0 %v7339
      %7536 = vmatpush1.bf16.msra.mxu0 %v7338
      %7537 = vmatprep.subr.bf16.mxu0 %v7343
      %7538 = vmatpush1.bf16.msra.mxu0 %v7342
      %7539 = vmatprep.subr.bf16.mxu0 %v7347
      %7540 = vmatpush1.bf16.msra.mxu0 %v7346
      %7541 = vmatprep.subr.bf16.mxu0 %v7351
      %7542 = vmatpush1.bf16.msra.mxu0 %v7350
      %7543 = vmatprep.subr.bf16.mxu0 %v7438
      %7544 = vmatpush1.bf16.msra.mxu0 %v7435
      %7545 = vmatprep.mubr.bf16.mxu0 %v7417
      %7546 = vmatmul.mubr.bf16.gmra.mrb[0].mxu0 %v7094
      %v7547 = vpop.f32.mrb[0].mxu0
      %v7548 = vadd.f32 0.0, %v7547
      %v7549 = vpop.f32.mrb[0].mxu0
      %v7550 = vadd.f32 0.0, %v7549
      %v7551 = vpop.f32.mrb[0].mxu0
      %v7552 = vadd.f32 0.0, %v7551
      %v7553 = vpop.f32.mrb[0].mxu0
      %v7554 = vadd.f32 0.0, %v7553
      %7555 = vmatprep.mubr.bf16.mxu0 %v7420
      %7556 = vmatmul.mubr.bf16.gmra.mrb[0].mxu0 %v7096
      %v7557 = vpop.f32.mrb[0].mxu0
      %v7558 = vadd.f32 0.0, %v7557
      %v7559 = vpop.f32.mrb[0].mxu0
      %v7560 = vadd.f32 0.0, %v7559
      %v7561 = vpop.f32.mrb[0].mxu0
      %v7562 = vadd.f32 0.0, %v7561
      %v7563 = vpop.f32.mrb[0].mxu0
      %v7564 = vadd.f32 0.0, %v7563
      %7565 = vmatprep.mubr.bf16.mxu0 %v7423
      %7566 = vmatmul.mubr.bf16.gmra.mrb[0].mxu0 %v7098
      %v7567 = vpop.f32.mrb[0].mxu0
      %v7568 = vadd.f32 0.0, %v7567
      %v7569 = vpop.f32.mrb[0].mxu0
      %v7570 = vadd.f32 0.0, %v7569
      %v7571 = vpop.f32.mrb[0].mxu0
      %v7572 = vadd.f32 0.0, %v7571
      %v7573 = vpop.f32.mrb[0].mxu0
      %v7574 = vadd.f32 0.0, %v7573
      %7575 = vmatprep.mubr.bf16.mxu0 %v7426
      %7576 = vmatmul.mubr.bf16.gmra.mrb[0].mxu0 %v7100
      %v7577 = vpop.f32.mrb[0].mxu0
      %v7578 = vadd.f32 0.0, %v7577
      %v7579 = vpop.f32.mrb[0].mxu0
      %v7580 = vadd.f32 0.0, %v7579
      %v7581 = vpop.f32.mrb[0].mxu0
      %v7582 = vadd.f32 0.0, %v7581
      %v7583 = vpop.f32.mrb[0].mxu0
      %v7584 = vadd.f32 0.0, %v7583
      %7585 = vdwg.mxu0
      %7594 = vrot.lane.b32.xlu0 %v7475, 112
      %v7595 = vpop.permute.xlu0 %7594
      %7596 = vrot.lane.b32.xlu0 %v7479, 112
      %v7597 = vpop.permute.xlu0 %7596
      %7598 = vrot.lane.b32.xlu0 %v7485, 112
      %v7599 = vpop.permute.xlu0 %7598
      %7600 = vrot.lane.b32.xlu0 %v7489, 112
      %v7601 = vpop.permute.xlu0 %7600
      %7602 = vrot.lane.b32.xlu0 %v7495, 112
      %v7603 = vpop.permute.xlu0 %7602
      %7604 = vrot.lane.b32.xlu0 %v7499, 112
      %v7605 = vpop.permute.xlu0 %7604
      %7606 = vrot.lane.b32.xlu0 %v7505, 112
      %v7607 = vpop.permute.xlu0 %7606
      %7608 = vrot.lane.b32.xlu0 %v7509, 112
      %v7609 = vpop.permute.xlu0 %7608
      %v7618 = vmax.f32 %v7475, %v7595
      %v7619 = vmax.f32 %v7479, %v7597
      %v7620 = vmax.f32 %v7485, %v7599
      %v7621 = vmax.f32 %v7489, %v7601
      %v7622 = vmax.f32 %v7495, %v7603
      %v7623 = vmax.f32 %v7499, %v7605
      %v7624 = vmax.f32 %v7505, %v7607
      %v7625 = vmax.f32 %v7509, %v7609
      %7626 = vrot.lane.b32.xlu0 %v7475, 96
      %v7627 = vpop.permute.xlu0 %7626
      %7628 = vrot.lane.b32.xlu0 %v7479, 96
      %v7629 = vpop.permute.xlu0 %7628
      %7630 = vrot.lane.b32.xlu0 %v7485, 96
      %v7631 = vpop.permute.xlu0 %7630
      %7632 = vrot.lane.b32.xlu0 %v7489, 96
      %v7633 = vpop.permute.xlu0 %7632
      %7634 = vrot.lane.b32.xlu0 %v7495, 96
      %v7635 = vpop.permute.xlu0 %7634
      %7636 = vrot.lane.b32.xlu0 %v7499, 96
      %v7637 = vpop.permute.xlu0 %7636
      %7638 = vrot.lane.b32.xlu0 %v7505, 96
      %v7639 = vpop.permute.xlu0 %7638
      %7640 = vrot.lane.b32.xlu0 %v7509, 96
      %v7641 = vpop.permute.xlu0 %7640
      %v7650 = vmax.f32 %v7618, %v7627
      %v7651 = vmax.f32 %v7619, %v7629
      %v7652 = vmax.f32 %v7620, %v7631
      %v7653 = vmax.f32 %v7621, %v7633
      %v7654 = vmax.f32 %v7622, %v7635
      %v7655 = vmax.f32 %v7623, %v7637
      %v7656 = vmax.f32 %v7624, %v7639
      %v7657 = vmax.f32 %v7625, %v7641
      %7658 = vrot.lane.b32.xlu0 %v7475, 80
      %v7659 = vpop.permute.xlu0 %7658
      %7660 = vrot.lane.b32.xlu0 %v7479, 80
      %v7661 = vpop.permute.xlu0 %7660
      %7662 = vrot.lane.b32.xlu0 %v7485, 80
      %v7663 = vpop.permute.xlu0 %7662
      %7664 = vrot.lane.b32.xlu0 %v7489, 80
      %v7665 = vpop.permute.xlu0 %7664
      %7666 = vrot.lane.b32.xlu0 %v7495, 80
      %v7667 = vpop.permute.xlu0 %7666
      %7668 = vrot.lane.b32.xlu0 %v7499, 80
      %v7669 = vpop.permute.xlu0 %7668
      %7670 = vrot.lane.b32.xlu0 %v7505, 80
      %v7671 = vpop.permute.xlu0 %7670
      %7672 = vrot.lane.b32.xlu0 %v7509, 80
      %v7673 = vpop.permute.xlu0 %7672
      %v7682 = vmax.f32 %v7650, %v7659
      %v7683 = vmax.f32 %v7651, %v7661
      %v7684 = vmax.f32 %v7652, %v7663
      %v7685 = vmax.f32 %v7653, %v7665
      %v7686 = vmax.f32 %v7654, %v7667
      %v7687 = vmax.f32 %v7655, %v7669
      %v7688 = vmax.f32 %v7656, %v7671
      %v7689 = vmax.f32 %v7657, %v7673
      %7690 = vrot.lane.b32.xlu0 %v7475, 64
      %v7691 = vpop.permute.xlu0 %7690
      %7692 = vrot.lane.b32.xlu0 %v7479, 64
      %v7693 = vpop.permute.xlu0 %7692
      %7694 = vrot.lane.b32.xlu0 %v7485, 64
      %v7695 = vpop.permute.xlu0 %7694
      %7696 = vrot.lane.b32.xlu0 %v7489, 64
      %v7697 = vpop.permute.xlu0 %7696
      %7698 = vrot.lane.b32.xlu0 %v7495, 64
      %v7699 = vpop.permute.xlu0 %7698
      %7700 = vrot.lane.b32.xlu0 %v7499, 64
      %v7701 = vpop.permute.xlu0 %7700
      %7702 = vrot.lane.b32.xlu0 %v7505, 64
      %v7703 = vpop.permute.xlu0 %7702
      %7704 = vrot.lane.b32.xlu0 %v7509, 64
      %v7705 = vpop.permute.xlu0 %7704
      %v7714 = vmax.f32 %v7682, %v7691
      %v7715 = vmax.f32 %v7683, %v7693
      %v7716 = vmax.f32 %v7684, %v7695
      %v7717 = vmax.f32 %v7685, %v7697
      %v7718 = vmax.f32 %v7686, %v7699
      %v7719 = vmax.f32 %v7687, %v7701
      %v7720 = vmax.f32 %v7688, %v7703
      %v7721 = vmax.f32 %v7689, %v7705
      %7722 = vrot.lane.b32.xlu0 %v7475, 48
      %v7723 = vpop.permute.xlu0 %7722
      %7724 = vrot.lane.b32.xlu0 %v7479, 48
      %v7725 = vpop.permute.xlu0 %7724
      %7726 = vrot.lane.b32.xlu0 %v7485, 48
      %v7727 = vpop.permute.xlu0 %7726
      %7728 = vrot.lane.b32.xlu0 %v7489, 48
      %v7729 = vpop.permute.xlu0 %7728
      %7730 = vrot.lane.b32.xlu0 %v7495, 48
      %v7731 = vpop.permute.xlu0 %7730
      %7732 = vrot.lane.b32.xlu0 %v7499, 48
      %v7733 = vpop.permute.xlu0 %7732
      %7734 = vrot.lane.b32.xlu0 %v7505, 48
      %v7735 = vpop.permute.xlu0 %7734
      %7736 = vrot.lane.b32.xlu0 %v7509, 48
      %v7737 = vpop.permute.xlu0 %7736
      %v7746 = vmax.f32 %v7714, %v7723
      %v7747 = vmax.f32 %v7715, %v7725
      %v7748 = vmax.f32 %v7716, %v7727
      %v7749 = vmax.f32 %v7717, %v7729
      %v7750 = vmax.f32 %v7718, %v7731
      %v7751 = vmax.f32 %v7719, %v7733
      %v7752 = vmax.f32 %v7720, %v7735
      %v7753 = vmax.f32 %v7721, %v7737
      %7754 = vrot.lane.b32.xlu0 %v7475, 32
      %v7755 = vpop.permute.xlu0 %7754
      %7756 = vrot.lane.b32.xlu0 %v7479, 32
      %v7757 = vpop.permute.xlu0 %7756
      %7758 = vrot.lane.b32.xlu0 %v7485, 32
      %v7759 = vpop.permute.xlu0 %7758
      %7760 = vrot.lane.b32.xlu0 %v7489, 32
      %v7761 = vpop.permute.xlu0 %7760
      %7762 = vrot.lane.b32.xlu0 %v7495, 32
      %v7763 = vpop.permute.xlu0 %7762
      %7764 = vrot.lane.b32.xlu0 %v7499, 32
      %v7765 = vpop.permute.xlu0 %7764
      %7766 = vrot.lane.b32.xlu0 %v7505, 32
      %v7767 = vpop.permute.xlu0 %7766
      %7768 = vrot.lane.b32.xlu0 %v7509, 32
      %v7769 = vpop.permute.xlu0 %7768
      %v7778 = vmax.f32 %v7746, %v7755
      %v7779 = vmax.f32 %v7747, %v7757
      %v7780 = vmax.f32 %v7748, %v7759
      %v7781 = vmax.f32 %v7749, %v7761
      %v7782 = vmax.f32 %v7750, %v7763
      %v7783 = vmax.f32 %v7751, %v7765
      %v7784 = vmax.f32 %v7752, %v7767
      %v7785 = vmax.f32 %v7753, %v7769
      %7786 = vrot.lane.b32.xlu0 %v7475, 16
      %v7787 = vpop.permute.xlu0 %7786
      %7788 = vrot.lane.b32.xlu0 %v7479, 16
      %v7789 = vpop.permute.xlu0 %7788
      %7790 = vrot.lane.b32.xlu0 %v7485, 16
      %v7791 = vpop.permute.xlu0 %7790
      %7792 = vrot.lane.b32.xlu0 %v7489, 16
      %v7793 = vpop.permute.xlu0 %7792
      %7794 = vrot.lane.b32.xlu0 %v7495, 16
      %v7795 = vpop.permute.xlu0 %7794
      %7796 = vrot.lane.b32.xlu0 %v7499, 16
      %v7797 = vpop.permute.xlu0 %7796
      %7798 = vrot.lane.b32.xlu0 %v7505, 16
      %v7799 = vpop.permute.xlu0 %7798
      %7800 = vrot.lane.b32.xlu0 %v7509, 16
      %v7801 = vpop.permute.xlu0 %7800
      %v7810 = vmax.f32 %v7778, %v7787
      %v7811 = vmax.f32 %v7779, %v7789
      %v7812 = vmax.f32 %v7780, %v7791
      %v7813 = vmax.f32 %v7781, %v7793
      %v7814 = vmax.f32 %v7782, %v7795
      %v7815 = vmax.f32 %v7783, %v7797
      %v7816 = vmax.f32 %v7784, %v7799
      %v7817 = vmax.f32 %v7785, %v7801
      %v7818 = vmax.f32 %v7810, %v7477
      %v7819 = vmax.f32 %v7811, %v7481
      %v7820 = vmax.f32 %v7812, %v7487
      %v7821 = vmax.f32 %v7813, %v7491
      %v7822 = vmax.f32 %v7814, %v7497
      %v7823 = vmax.f32 %v7815, %v7501
      %v7824 = vmax.f32 %v7816, %v7507
      %v7825 = vmax.f32 %v7817, %v7511
      %7834 = vrot.lane.b32.xlu0 %v7477, 112
      %v7835 = vpop.permute.xlu0 %7834
      %7836 = vrot.lane.b32.xlu0 %v7481, 112
      %v7837 = vpop.permute.xlu0 %7836
      %7838 = vrot.lane.b32.xlu0 %v7487, 112
      %v7839 = vpop.permute.xlu0 %7838
      %7840 = vrot.lane.b32.xlu0 %v7491, 112
      %v7841 = vpop.permute.xlu0 %7840
      %7842 = vrot.lane.b32.xlu0 %v7497, 112
      %v7843 = vpop.permute.xlu0 %7842
      %7844 = vrot.lane.b32.xlu0 %v7501, 112
      %v7845 = vpop.permute.xlu0 %7844
      %7846 = vrot.lane.b32.xlu0 %v7507, 112
      %v7847 = vpop.permute.xlu0 %7846
      %7848 = vrot.lane.b32.xlu0 %v7511, 112
      %v7849 = vpop.permute.xlu0 %7848
      %v7858 = vmax.f32 %v7818, %v7835
      %v7859 = vmax.f32 %v7819, %v7837
      %v7860 = vmax.f32 %v7820, %v7839
      %v7861 = vmax.f32 %v7821, %v7841
      %v7862 = vmax.f32 %v7822, %v7843
      %v7863 = vmax.f32 %v7823, %v7845
      %v7864 = vmax.f32 %v7824, %v7847
      %v7865 = vmax.f32 %v7825, %v7849
      %7866 = vrot.lane.b32.xlu0 %v7477, 96
      %v7867 = vpop.permute.xlu0 %7866
      %7868 = vrot.lane.b32.xlu0 %v7481, 96
      %v7869 = vpop.permute.xlu0 %7868
      %7870 = vrot.lane.b32.xlu0 %v7487, 96
      %v7871 = vpop.permute.xlu0 %7870
      %7872 = vrot.lane.b32.xlu0 %v7491, 96
      %v7873 = vpop.permute.xlu0 %7872
      %7874 = vrot.lane.b32.xlu0 %v7497, 96
      %v7875 = vpop.permute.xlu0 %7874
      %7876 = vrot.lane.b32.xlu0 %v7501, 96
      %v7877 = vpop.permute.xlu0 %7876
      %7878 = vrot.lane.b32.xlu0 %v7507, 96
      %v7879 = vpop.permute.xlu0 %7878
      %7880 = vrot.lane.b32.xlu0 %v7511, 96
      %v7881 = vpop.permute.xlu0 %7880
      %v7890 = vmax.f32 %v7858, %v7867
      %v7891 = vmax.f32 %v7859, %v7869
      %v7892 = vmax.f32 %v7860, %v7871
      %v7893 = vmax.f32 %v7861, %v7873
      %v7894 = vmax.f32 %v7862, %v7875
      %v7895 = vmax.f32 %v7863, %v7877
      %v7896 = vmax.f32 %v7864, %v7879
      %v7897 = vmax.f32 %v7865, %v7881
      %7898 = vrot.lane.b32.xlu0 %v7477, 80
      %v7899 = vpop.permute.xlu0 %7898
      %7900 = vrot.lane.b32.xlu0 %v7481, 80
      %v7901 = vpop.permute.xlu0 %7900
      %7902 = vrot.lane.b32.xlu0 %v7487, 80
      %v7903 = vpop.permute.xlu0 %7902
      %7904 = vrot.lane.b32.xlu0 %v7491, 80
      %v7905 = vpop.permute.xlu0 %7904
      %7906 = vrot.lane.b32.xlu0 %v7497, 80
      %v7907 = vpop.permute.xlu0 %7906
      %7908 = vrot.lane.b32.xlu0 %v7501, 80
      %v7909 = vpop.permute.xlu0 %7908
      %7910 = vrot.lane.b32.xlu0 %v7507, 80
      %v7911 = vpop.permute.xlu0 %7910
      %7912 = vrot.lane.b32.xlu0 %v7511, 80
      %v7913 = vpop.permute.xlu0 %7912
      %v7922 = vmax.f32 %v7890, %v7899
      %v7923 = vmax.f32 %v7891, %v7901
      %v7924 = vmax.f32 %v7892, %v7903
      %v7925 = vmax.f32 %v7893, %v7905
      %v7926 = vmax.f32 %v7894, %v7907
      %v7927 = vmax.f32 %v7895, %v7909
      %v7928 = vmax.f32 %v7896, %v7911
      %v7929 = vmax.f32 %v7897, %v7913
      %7930 = vrot.lane.b32.xlu0 %v7477, 64
      %v7931 = vpop.permute.xlu0 %7930
      %7932 = vrot.lane.b32.xlu0 %v7481, 64
      %v7933 = vpop.permute.xlu0 %7932
      %7934 = vrot.lane.b32.xlu0 %v7487, 64
      %v7935 = vpop.permute.xlu0 %7934
      %7936 = vrot.lane.b32.xlu0 %v7491, 64
      %v7937 = vpop.permute.xlu0 %7936
      %7938 = vrot.lane.b32.xlu0 %v7497, 64
      %v7939 = vpop.permute.xlu0 %7938
      %7940 = vrot.lane.b32.xlu0 %v7501, 64
      %v7941 = vpop.permute.xlu0 %7940
      %7942 = vrot.lane.b32.xlu0 %v7507, 64
      %v7943 = vpop.permute.xlu0 %7942
      %7944 = vrot.lane.b32.xlu0 %v7511, 64
      %v7945 = vpop.permute.xlu0 %7944
      %v7954 = vmax.f32 %v7922, %v7931
      %v7955 = vmax.f32 %v7923, %v7933
      %v7956 = vmax.f32 %v7924, %v7935
      %v7957 = vmax.f32 %v7925, %v7937
      %v7958 = vmax.f32 %v7926, %v7939
      %v7959 = vmax.f32 %v7927, %v7941
      %v7960 = vmax.f32 %v7928, %v7943
      %v7961 = vmax.f32 %v7929, %v7945
      %7962 = vrot.lane.b32.xlu0 %v7477, 48
      %v7963 = vpop.permute.xlu0 %7962
      %7964 = vrot.lane.b32.xlu0 %v7481, 48
      %v7965 = vpop.permute.xlu0 %7964
      %7966 = vrot.lane.b32.xlu0 %v7487, 48
      %v7967 = vpop.permute.xlu0 %7966
      %7968 = vrot.lane.b32.xlu0 %v7491, 48
      %v7969 = vpop.permute.xlu0 %7968
      %7970 = vrot.lane.b32.xlu0 %v7497, 48
      %v7971 = vpop.permute.xlu0 %7970
      %7972 = vrot.lane.b32.xlu0 %v7501, 48
      %v7973 = vpop.permute.xlu0 %7972
      %7974 = vrot.lane.b32.xlu0 %v7507, 48
      %v7975 = vpop.permute.xlu0 %7974
      %7976 = vrot.lane.b32.xlu0 %v7511, 48
      %v7977 = vpop.permute.xlu0 %7976
      %v7986 = vmax.f32 %v7954, %v7963
      %v7987 = vmax.f32 %v7955, %v7965
      %v7988 = vmax.f32 %v7956, %v7967
      %v7989 = vmax.f32 %v7957, %v7969
      %v7990 = vmax.f32 %v7958, %v7971
      %v7991 = vmax.f32 %v7959, %v7973
      %v7992 = vmax.f32 %v7960, %v7975
      %v7993 = vmax.f32 %v7961, %v7977
      %7994 = vrot.lane.b32.xlu0 %v7477, 32
      %v7995 = vpop.permute.xlu0 %7994
      %7996 = vrot.lane.b32.xlu0 %v7481, 32
      %v7997 = vpop.permute.xlu0 %7996
      %7998 = vrot.lane.b32.xlu0 %v7487, 32
      %v7999 = vpop.permute.xlu0 %7998
      %8000 = vrot.lane.b32.xlu0 %v7491, 32
      %v8001 = vpop.permute.xlu0 %8000
      %8002 = vrot.lane.b32.xlu0 %v7497, 32
      %v8003 = vpop.permute.xlu0 %8002
      %8004 = vrot.lane.b32.xlu0 %v7501, 32
      %v8005 = vpop.permute.xlu0 %8004
      %8006 = vrot.lane.b32.xlu0 %v7507, 32
      %v8007 = vpop.permute.xlu0 %8006
      %8008 = vrot.lane.b32.xlu0 %v7511, 32
      %v8009 = vpop.permute.xlu0 %8008
      %v8018 = vmax.f32 %v7986, %v7995
      %v8019 = vmax.f32 %v7987, %v7997
      %v8020 = vmax.f32 %v7988, %v7999
      %v8021 = vmax.f32 %v7989, %v8001
      %v8022 = vmax.f32 %v7990, %v8003
      %v8023 = vmax.f32 %v7991, %v8005
      %v8024 = vmax.f32 %v7992, %v8007
      %v8025 = vmax.f32 %v7993, %v8009
      %8026 = vrot.lane.b32.xlu0 %v7477, 16
      %v8027 = vpop.permute.xlu0 %8026
      %8028 = vrot.lane.b32.xlu0 %v7481, 16
      %v8029 = vpop.permute.xlu0 %8028
      %8030 = vrot.lane.b32.xlu0 %v7487, 16
      %v8031 = vpop.permute.xlu0 %8030
      %8032 = vrot.lane.b32.xlu0 %v7491, 16
      %v8033 = vpop.permute.xlu0 %8032
      %8034 = vrot.lane.b32.xlu0 %v7497, 16
      %v8035 = vpop.permute.xlu0 %8034
      %8036 = vrot.lane.b32.xlu0 %v7501, 16
      %v8037 = vpop.permute.xlu0 %8036
      %8038 = vrot.lane.b32.xlu0 %v7507, 16
      %v8039 = vpop.permute.xlu0 %8038
      %8040 = vrot.lane.b32.xlu0 %v7511, 16
      %v8041 = vpop.permute.xlu0 %8040
      %v8050 = vmax.f32 %v8018, %v8027
      %v8051 = vmax.f32 %v8019, %v8029
      %v8052 = vmax.f32 %v8020, %v8031
      %v8053 = vmax.f32 %v8021, %v8033
      %v8054 = vmax.f32 %v8022, %v8035
      %v8055 = vmax.f32 %v8023, %v8037
      %v8056 = vmax.f32 %v8024, %v8039
      %v8057 = vmax.f32 %v8025, %v8041
      %v8058 = vmax.f32 %v8050, %v7548
      %v8059 = vmax.f32 %v8051, %v7552
      %v8060 = vmax.f32 %v8052, %v7558
      %v8061 = vmax.f32 %v8053, %v7562
      %v8062 = vmax.f32 %v8054, %v7568
      %v8063 = vmax.f32 %v8055, %v7572
      %v8064 = vmax.f32 %v8056, %v7578
      %v8065 = vmax.f32 %v8057, %v7582
      %8074 = vrot.lane.b32.xlu0 %v7548, 112
      %v8075 = vpop.permute.xlu0 %8074
      %8076 = vrot.lane.b32.xlu0 %v7552, 112
      %v8077 = vpop.permute.xlu0 %8076
      %8078 = vrot.lane.b32.xlu0 %v7558, 112
      %v8079 = vpop.permute.xlu0 %8078
      %8080 = vrot.lane.b32.xlu0 %v7562, 112
      %v8081 = vpop.permute.xlu0 %8080
      %8082 = vrot.lane.b32.xlu0 %v7568, 112
      %v8083 = vpop.permute.xlu0 %8082
      %8084 = vrot.lane.b32.xlu0 %v7572, 112
      %v8085 = vpop.permute.xlu0 %8084
      %8086 = vrot.lane.b32.xlu0 %v7578, 112
      %v8087 = vpop.permute.xlu0 %8086
      %8088 = vrot.lane.b32.xlu0 %v7582, 112
      %v8089 = vpop.permute.xlu0 %8088
      %v8098 = vmax.f32 %v8058, %v8075
      %v8099 = vmax.f32 %v8059, %v8077
      %v8100 = vmax.f32 %v8060, %v8079
      %v8101 = vmax.f32 %v8061, %v8081
      %v8102 = vmax.f32 %v8062, %v8083
      %v8103 = vmax.f32 %v8063, %v8085
      %v8104 = vmax.f32 %v8064, %v8087
      %v8105 = vmax.f32 %v8065, %v8089
      %8106 = vrot.lane.b32.xlu0 %v7548, 96
      %v8107 = vpop.permute.xlu0 %8106
      %8108 = vrot.lane.b32.xlu0 %v7552, 96
      %v8109 = vpop.permute.xlu0 %8108
      %8110 = vrot.lane.b32.xlu0 %v7558, 96
      %v8111 = vpop.permute.xlu0 %8110
      %8112 = vrot.lane.b32.xlu0 %v7562, 96
      %v8113 = vpop.permute.xlu0 %8112
      %8114 = vrot.lane.b32.xlu0 %v7568, 96
      %v8115 = vpop.permute.xlu0 %8114
      %8116 = vrot.lane.b32.xlu0 %v7572, 96
      %v8117 = vpop.permute.xlu0 %8116
      %8118 = vrot.lane.b32.xlu0 %v7578, 96
      %v8119 = vpop.permute.xlu0 %8118
      %8120 = vrot.lane.b32.xlu0 %v7582, 96
      %v8121 = vpop.permute.xlu0 %8120
      %v8130 = vmax.f32 %v8098, %v8107
      %v8131 = vmax.f32 %v8099, %v8109
      %v8132 = vmax.f32 %v8100, %v8111
      %v8133 = vmax.f32 %v8101, %v8113
      %v8134 = vmax.f32 %v8102, %v8115
      %v8135 = vmax.f32 %v8103, %v8117
      %v8136 = vmax.f32 %v8104, %v8119
      %v8137 = vmax.f32 %v8105, %v8121
      %8138 = vrot.lane.b32.xlu0 %v7548, 80
      %v8139 = vpop.permute.xlu0 %8138
      %8140 = vrot.lane.b32.xlu0 %v7552, 80
      %v8141 = vpop.permute.xlu0 %8140
      %8142 = vrot.lane.b32.xlu0 %v7558, 80
      %v8143 = vpop.permute.xlu0 %8142
      %8144 = vrot.lane.b32.xlu0 %v7562, 80
      %v8145 = vpop.permute.xlu0 %8144
      %8146 = vrot.lane.b32.xlu0 %v7568, 80
      %v8147 = vpop.permute.xlu0 %8146
      %8148 = vrot.lane.b32.xlu0 %v7572, 80
      %v8149 = vpop.permute.xlu0 %8148
      %8150 = vrot.lane.b32.xlu0 %v7578, 80
      %v8151 = vpop.permute.xlu0 %8150
      %8152 = vrot.lane.b32.xlu0 %v7582, 80
      %v8153 = vpop.permute.xlu0 %8152
      %v8162 = vmax.f32 %v8130, %v8139
      %v8163 = vmax.f32 %v8131, %v8141
      %v8164 = vmax.f32 %v8132, %v8143
      %v8165 = vmax.f32 %v8133, %v8145
      %v8166 = vmax.f32 %v8134, %v8147
      %v8167 = vmax.f32 %v8135, %v8149
      %v8168 = vmax.f32 %v8136, %v8151
      %v8169 = vmax.f32 %v8137, %v8153
      %8170 = vrot.lane.b32.xlu0 %v7548, 64
      %v8171 = vpop.permute.xlu0 %8170
      %8172 = vrot.lane.b32.xlu0 %v7552, 64
      %v8173 = vpop.permute.xlu0 %8172
      %8174 = vrot.lane.b32.xlu0 %v7558, 64
      %v8175 = vpop.permute.xlu0 %8174
      %8176 = vrot.lane.b32.xlu0 %v7562, 64
      %v8177 = vpop.permute.xlu0 %8176
      %8178 = vrot.lane.b32.xlu0 %v7568, 64
      %v8179 = vpop.permute.xlu0 %8178
      %8180 = vrot.lane.b32.xlu0 %v7572, 64
      %v8181 = vpop.permute.xlu0 %8180
      %8182 = vrot.lane.b32.xlu0 %v7578, 64
      %v8183 = vpop.permute.xlu0 %8182
      %8184 = vrot.lane.b32.xlu0 %v7582, 64
      %v8185 = vpop.permute.xlu0 %8184
      %v8194 = vmax.f32 %v8162, %v8171
      %v8195 = vmax.f32 %v8163, %v8173
      %v8196 = vmax.f32 %v8164, %v8175
      %v8197 = vmax.f32 %v8165, %v8177
      %v8198 = vmax.f32 %v8166, %v8179
      %v8199 = vmax.f32 %v8167, %v8181
      %v8200 = vmax.f32 %v8168, %v8183
      %v8201 = vmax.f32 %v8169, %v8185
      %8202 = vrot.lane.b32.xlu0 %v7548, 48
      %v8203 = vpop.permute.xlu0 %8202
      %8204 = vrot.lane.b32.xlu0 %v7552, 48
      %v8205 = vpop.permute.xlu0 %8204
      %8206 = vrot.lane.b32.xlu0 %v7558, 48
      %v8207 = vpop.permute.xlu0 %8206
      %8208 = vrot.lane.b32.xlu0 %v7562, 48
      %v8209 = vpop.permute.xlu0 %8208
      %8210 = vrot.lane.b32.xlu0 %v7568, 48
      %v8211 = vpop.permute.xlu0 %8210
      %8212 = vrot.lane.b32.xlu0 %v7572, 48
      %v8213 = vpop.permute.xlu0 %8212
      %8214 = vrot.lane.b32.xlu0 %v7578, 48
      %v8215 = vpop.permute.xlu0 %8214
      %8216 = vrot.lane.b32.xlu0 %v7582, 48
      %v8217 = vpop.permute.xlu0 %8216
      %v8226 = vmax.f32 %v8194, %v8203
      %v8227 = vmax.f32 %v8195, %v8205
      %v8228 = vmax.f32 %v8196, %v8207
      %v8229 = vmax.f32 %v8197, %v8209
      %v8230 = vmax.f32 %v8198, %v8211
      %v8231 = vmax.f32 %v8199, %v8213
      %v8232 = vmax.f32 %v8200, %v8215
      %v8233 = vmax.f32 %v8201, %v8217
      %8234 = vrot.lane.b32.xlu0 %v7548, 32
      %v8235 = vpop.permute.xlu0 %8234
      %8236 = vrot.lane.b32.xlu0 %v7552, 32
      %v8237 = vpop.permute.xlu0 %8236
      %8238 = vrot.lane.b32.xlu0 %v7558, 32
      %v8239 = vpop.permute.xlu0 %8238
      %8240 = vrot.lane.b32.xlu0 %v7562, 32
      %v8241 = vpop.permute.xlu0 %8240
      %8242 = vrot.lane.b32.xlu0 %v7568, 32
      %v8243 = vpop.permute.xlu0 %8242
      %8244 = vrot.lane.b32.xlu0 %v7572, 32
      %v8245 = vpop.permute.xlu0 %8244
      %8246 = vrot.lane.b32.xlu0 %v7578, 32
      %v8247 = vpop.permute.xlu0 %8246
      %8248 = vrot.lane.b32.xlu0 %v7582, 32
      %v8249 = vpop.permute.xlu0 %8248
      %v8258 = vmax.f32 %v8226, %v8235
      %v8259 = vmax.f32 %v8227, %v8237
      %v8260 = vmax.f32 %v8228, %v8239
      %v8261 = vmax.f32 %v8229, %v8241
      %v8262 = vmax.f32 %v8230, %v8243
      %v8263 = vmax.f32 %v8231, %v8245
      %v8264 = vmax.f32 %v8232, %v8247
      %v8265 = vmax.f32 %v8233, %v8249
      %8266 = vrot.lane.b32.xlu0 %v7548, 16
      %v8267 = vpop.permute.xlu0 %8266
      %8268 = vrot.lane.b32.xlu0 %v7552, 16
      %v8269 = vpop.permute.xlu0 %8268
      %8270 = vrot.lane.b32.xlu0 %v7558, 16
      %v8271 = vpop.permute.xlu0 %8270
      %8272 = vrot.lane.b32.xlu0 %v7562, 16
      %v8273 = vpop.permute.xlu0 %8272
      %8274 = vrot.lane.b32.xlu0 %v7568, 16
      %v8275 = vpop.permute.xlu0 %8274
      %8276 = vrot.lane.b32.xlu0 %v7572, 16
      %v8277 = vpop.permute.xlu0 %8276
      %8278 = vrot.lane.b32.xlu0 %v7578, 16
      %v8279 = vpop.permute.xlu0 %8278
      %8280 = vrot.lane.b32.xlu0 %v7582, 16
      %v8281 = vpop.permute.xlu0 %8280
      %v8290 = vmax.f32 %v8258, %v8267
      %v8291 = vmax.f32 %v8259, %v8269
      %v8292 = vmax.f32 %v8260, %v8271
      %v8293 = vmax.f32 %v8261, %v8273
      %v8294 = vmax.f32 %v8262, %v8275
      %v8295 = vmax.f32 %v8263, %v8277
      %v8296 = vmax.f32 %v8264, %v8279
      %v8297 = vmax.f32 %v8265, %v8281
      %v8298 = vmax.f32 %v8290, %v7550
      %v8299 = vmax.f32 %v8291, %v7554
      %v8300 = vmax.f32 %v8292, %v7560
      %v8301 = vmax.f32 %v8293, %v7564
      %v8302 = vmax.f32 %v8294, %v7570
      %v8303 = vmax.f32 %v8295, %v7574
      %v8304 = vmax.f32 %v8296, %v7580
      %v8305 = vmax.f32 %v8297, %v7584
      %v8306 = vadd.f32 %v8298, %v1493
      %v8307 = vadd.f32 %v8299, %v1493
      %v8308 = vadd.f32 %v8300, %v1493
      %v8309 = vadd.f32 %v8301, %v1493
      %v8310 = vadd.f32 %v8302, %v1493
      %v8311 = vadd.f32 %v8303, %v1493
      %v8312 = vadd.f32 %v8304, %v1493
      %v8313 = vadd.f32 %v8305, %v1493
      %v8314 = vmax.f32 %v8306, 0.0
      %v8315 = vmax.f32 %v8307, 0.0
      %v8316 = vmax.f32 %v8308, 0.0
      %v8317 = vmax.f32 %v8309, 0.0
      %v8318 = vmax.f32 %v8310, 0.0
      %v8319 = vmax.f32 %v8311, 0.0
      %v8320 = vmax.f32 %v8312, 0.0
      %v8321 = vmax.f32 %v8313, 0.0
      %v8322 = vpack.c.bf16 %v8315, %v8314
      %v8323 = vpack.c.bf16 %v8317, %v8316
      %v8324 = vpack.c.bf16 %v8319, %v8318
      %v8325 = vpack.c.bf16 %v8321, %v8320
      %v8330 = vunpack.c.l.b16 %v8322
      %v8331 = vunpack.c.h.b16 %v8322
      %v8332 = vunpack.c.l.b16 %v8323
      %v8333 = vunpack.c.h.b16 %v8323
      %v8334 = vunpack.c.l.b16 %v8324
      %v8335 = vunpack.c.h.b16 %v8324
      %v8336 = vunpack.c.l.b16 %v8325
      %v8337 = vunpack.c.h.b16 %v8325
      %v8338 = vpack.c.b16 %v8330, %v8330
      %v8339 = vpack.c.b16 %v8331, %v8331
      %v8340 = vpack.c.b16 %v8332, %v8332
      %v8341 = vpack.c.b16 %v8333, %v8333
      %v8342 = vpack.c.b16 %v8334, %v8334
      %v8343 = vpack.c.b16 %v8335, %v8335
      %v8344 = vpack.c.b16 %v8336, %v8336
      %v8345 = vpack.c.b16 %v8337, %v8337
      %8354 = vst.msk [vmem:[%s175 + $0xa0] sm:$0xf] %vm1543, %v8338
      %8355 = vst.msk [vmem:[%s175 + $0xa4] sm:$0xf] %vm1543, %v8339
      %8356 = vst.msk [vmem:[%s175 + $0xa8] sm:$0xf] %vm1543, %v8340
      %8357 = vst.msk [vmem:[%s175 + $0xac] sm:$0xf] %vm1543, %v8341
      %8358 = vst.msk [vmem:[%s175 + $0xb0] sm:$0xf] %vm1543, %v8342
      %8359 = vst.msk [vmem:[%s175 + $0xb4] sm:$0xf] %vm1543, %v8343
      %8360 = vst.msk [vmem:[%s175 + $0xb8] sm:$0xf] %vm1543, %v8344
      %8361 = vst.msk [vmem:[%s175 + $0xbc] sm:$0xf] %vm1543, %v8345
      %v8362 = vld [vmem:[%s169 + $0x180] sm:$0xff]
      %v8363 = vld [vmem:[%s169 + $0x188] sm:$0xff]
      %v8364 = vld [vmem:[%s169 + $0x190] sm:$0xff]
      %v8365 = vld [vmem:[%s169 + $0x198] sm:$0xff]
      %v8366 = vld [vmem:[%s169 + $0x1a0] sm:$0xff]
      %v8367 = vld [vmem:[%s169 + $0x1a8] sm:$0xff]
      %v8368 = vld [vmem:[%s169 + $0x1b0] sm:$0xff]
      %v8369 = vld [vmem:[%s169 + $0x1b8] sm:$0xff]
      %v8370 = vld [vmem:[%s1] sm:$0xff]
      %v8371 = vld [vmem:[%s1 + $0x8] sm:$0xff]
      %v8372 = vld [vmem:[%s1 + $0x10] sm:$0xff]
      %v8373 = vld [vmem:[%s1 + $0x18] sm:$0xff]
      %v8374 = vld [vmem:[%s1 + $0x20] sm:$0xff]
      %v8375 = vld [vmem:[%s1 + $0x28] sm:$0xff]
      %v8376 = vld [vmem:[%s1 + $0x30] sm:$0xff]
      %v8377 = vld [vmem:[%s1 + $0x38] sm:$0xff]
      %v8378 = vld [vmem:[%s1 + $0x40] sm:$0xff]
      %v8379 = vld [vmem:[%s1 + $0x48] sm:$0xff]
      %v8380 = vld [vmem:[%s1 + $0x50] sm:$0xff]
      %v8381 = vld [vmem:[%s1 + $0x58] sm:$0xff]
      %v8382 = vld [vmem:[%s1 + $0x60] sm:$0xff]
      %v8383 = vld [vmem:[%s1 + $0x68] sm:$0xff]
      %v8384 = vld [vmem:[%s1 + $0x70] sm:$0xff]
      %v8385 = vld [vmem:[%s1 + $0x78] sm:$0xff]
      %v8386 = vld [vmem:[%s1 + $0x80] sm:$0xff]
      %v8387 = vld [vmem:[%s1 + $0x88] sm:$0xff]
      %v8388 = vld [vmem:[%s1 + $0x90] sm:$0xff]
      %v8389 = vld [vmem:[%s1 + $0x98] sm:$0xff]
      %v8390 = vld [vmem:[%s1 + $0xa0] sm:$0xff]
      %v8391 = vld [vmem:[%s1 + $0xa8] sm:$0xff]
      %v8392 = vld [vmem:[%s1 + $0xb0] sm:$0xff]
      %v8393 = vld [vmem:[%s1 + $0xb8] sm:$0xff]
      %v8394 = vld [vmem:[%s1 + $0xc0] sm:$0xff]
      %v8395 = vld [vmem:[%s1 + $0xc8] sm:$0xff]
      %v8396 = vld [vmem:[%s1 + $0xd0] sm:$0xff]
      %v8397 = vld [vmem:[%s1 + $0xd8] sm:$0xff]
      %v8398 = vld [vmem:[%s1 + $0xe0] sm:$0xff]
      %v8399 = vld [vmem:[%s1 + $0xe8] sm:$0xff]
      %v8400 = vld [vmem:[%s1 + $0xf0] sm:$0xff]
      %v8401 = vld [vmem:[%s1 + $0xf8] sm:$0xff]
      %v8402 = vld [vmem:[%s1 + $0x100] sm:$0xff]
      %v8403 = vld [vmem:[%s1 + $0x108] sm:$0xff]
      %v8404 = vld [vmem:[%s1 + $0x110] sm:$0xff]
      %v8405 = vld [vmem:[%s1 + $0x118] sm:$0xff]
      %v8406 = vld [vmem:[%s1 + $0x120] sm:$0xff]
      %v8407 = vld [vmem:[%s1 + $0x128] sm:$0xff]
      %v8408 = vld [vmem:[%s1 + $0x130] sm:$0xff]
      %v8409 = vld [vmem:[%s1 + $0x138] sm:$0xff]
      %v8410 = vld [vmem:[%s1 + $0x140] sm:$0xff]
      %v8411 = vld [vmem:[%s1 + $0x148] sm:$0xff]
      %v8412 = vld [vmem:[%s1 + $0x150] sm:$0xff]
      %v8413 = vld [vmem:[%s1 + $0x158] sm:$0xff]
      %v8414 = vld [vmem:[%s1 + $0x160] sm:$0xff]
      %v8415 = vld [vmem:[%s1 + $0x168] sm:$0xff]
      %v8416 = vld [vmem:[%s1 + $0x170] sm:$0xff]
      %v8417 = vld [vmem:[%s1 + $0x178] sm:$0xff]
      %v8418 = vld [vmem:[%s1 + $0x180] sm:$0xff]
      %v8419 = vld [vmem:[%s1 + $0x188] sm:$0xff]
      %v8420 = vld [vmem:[%s1 + $0x190] sm:$0xff]
      %v8421 = vld [vmem:[%s1 + $0x198] sm:$0xff]
      %v8422 = vld [vmem:[%s1 + $0x1a0] sm:$0xff]
      %v8423 = vld [vmem:[%s1 + $0x1a8] sm:$0xff]
      %v8424 = vld [vmem:[%s1 + $0x1b0] sm:$0xff]
      %v8425 = vld [vmem:[%s1 + $0x1b8] sm:$0xff]
      %v8426 = vld [vmem:[%s1 + $0x1c0] sm:$0xff]
      %v8427 = vld [vmem:[%s1 + $0x1c8] sm:$0xff]
      %v8428 = vld [vmem:[%s1 + $0x1d0] sm:$0xff]
      %v8429 = vld [vmem:[%s1 + $0x1d8] sm:$0xff]
      %v8430 = vld [vmem:[%s1 + $0x1e0] sm:$0x33]
      %v8431 = vld [vmem:[%s1 + $0x1e8] sm:$0x33]
      %v8440 = vunpack.c.l.b16 %v8362
      %v8441 = vunpack.c.h.b16 %v8362
      %v8442 = vunpack.c.l.b16 %v8363
      %v8443 = vunpack.c.h.b16 %v8363
      %v8444 = vunpack.c.l.b16 %v8364
      %v8445 = vunpack.c.h.b16 %v8364
      %v8446 = vunpack.c.l.b16 %v8365
      %v8447 = vunpack.c.h.b16 %v8365
      %v8448 = vunpack.c.l.b16 %v8366
      %v8449 = vunpack.c.h.b16 %v8366
      %v8450 = vunpack.c.l.b16 %v8367
      %v8451 = vunpack.c.h.b16 %v8367
      %v8452 = vunpack.c.l.b16 %v8368
      %v8453 = vunpack.c.h.b16 %v8368
      %v8454 = vunpack.c.l.b16 %v8369
      %v8455 = vunpack.c.h.b16 %v8369
      %v8456 = vpack.c.b16 %v8442, %v8440
      %v8457 = vpack.c.b16 %v8443, %v8441
      %v8458 = vpack.c.b16 %v8446, %v8444
      %v8459 = vpack.c.b16 %v8447, %v8445
      %v8460 = vpack.c.b16 %v8450, %v8448
      %v8461 = vpack.c.b16 %v8451, %v8449
      %v8462 = vpack.c.b16 %v8454, %v8452
      %v8463 = vpack.c.b16 %v8455, %v8453
      %v8530 = vunpack.c.l.b16 %v8370
      %v8531 = vunpack.c.h.b16 %v8370
      %v8532 = vunpack.c.l.b16 %v8371
      %v8533 = vunpack.c.h.b16 %v8371
      %v8534 = vunpack.c.l.b16 %v8372
      %v8535 = vunpack.c.h.b16 %v8372
      %v8536 = vunpack.c.l.b16 %v8373
      %v8537 = vunpack.c.h.b16 %v8373
      %v8538 = vunpack.c.l.b16 %v8374
      %v8539 = vunpack.c.h.b16 %v8374
      %v8540 = vunpack.c.l.b16 %v8375
      %v8541 = vunpack.c.h.b16 %v8375
      %v8542 = vunpack.c.l.b16 %v8376
      %v8543 = vunpack.c.h.b16 %v8376
      %v8544 = vunpack.c.l.b16 %v8377
      %v8545 = vunpack.c.h.b16 %v8377
      %v8546 = vunpack.c.l.b16 %v8378
      %v8547 = vunpack.c.h.b16 %v8378
      %v8548 = vunpack.c.l.b16 %v8379
      %v8549 = vunpack.c.h.b16 %v8379
      %v8550 = vunpack.c.l.b16 %v8380
      %v8551 = vunpack.c.h.b16 %v8380
      %v8552 = vunpack.c.l.b16 %v8381
      %v8553 = vunpack.c.h.b16 %v8381
      %v8554 = vunpack.c.l.b16 %v8382
      %v8555 = vunpack.c.h.b16 %v8382
      %v8556 = vunpack.c.l.b16 %v8383
      %v8557 = vunpack.c.h.b16 %v8383
      %v8558 = vunpack.c.l.b16 %v8384
      %v8559 = vunpack.c.h.b16 %v8384
      %v8560 = vunpack.c.l.b16 %v8385
      %v8561 = vunpack.c.h.b16 %v8385
      %v8562 = vunpack.c.l.b16 %v8386
      %v8563 = vunpack.c.h.b16 %v8386
      %v8564 = vunpack.c.l.b16 %v8387
      %v8565 = vunpack.c.h.b16 %v8387
      %v8566 = vunpack.c.l.b16 %v8388
      %v8567 = vunpack.c.h.b16 %v8388
      %v8568 = vunpack.c.l.b16 %v8389
      %v8569 = vunpack.c.h.b16 %v8389
      %v8570 = vunpack.c.l.b16 %v8390
      %v8571 = vunpack.c.h.b16 %v8390
      %v8572 = vunpack.c.l.b16 %v8391
      %v8573 = vunpack.c.h.b16 %v8391
      %v8574 = vunpack.c.l.b16 %v8392
      %v8575 = vunpack.c.h.b16 %v8392
      %v8576 = vunpack.c.l.b16 %v8393
      %v8577 = vunpack.c.h.b16 %v8393
      %v8578 = vunpack.c.l.b16 %v8394
      %v8579 = vunpack.c.h.b16 %v8394
      %v8580 = vunpack.c.l.b16 %v8395
      %v8581 = vunpack.c.h.b16 %v8395
      %v8582 = vunpack.c.l.b16 %v8396
      %v8583 = vunpack.c.h.b16 %v8396
      %v8584 = vunpack.c.l.b16 %v8397
      %v8585 = vunpack.c.h.b16 %v8397
      %v8586 = vunpack.c.l.b16 %v8398
      %v8587 = vunpack.c.h.b16 %v8398
      %v8588 = vunpack.c.l.b16 %v8399
      %v8589 = vunpack.c.h.b16 %v8399
      %v8590 = vunpack.c.l.b16 %v8400
      %v8591 = vunpack.c.h.b16 %v8400
      %v8592 = vunpack.c.l.b16 %v8401
      %v8593 = vunpack.c.h.b16 %v8401
      %v8594 = vunpack.c.l.b16 %v8402
      %v8595 = vunpack.c.h.b16 %v8402
      %v8596 = vunpack.c.l.b16 %v8403
      %v8597 = vunpack.c.h.b16 %v8403
      %v8598 = vunpack.c.l.b16 %v8404
      %v8599 = vunpack.c.h.b16 %v8404
      %v8600 = vunpack.c.l.b16 %v8405
      %v8601 = vunpack.c.h.b16 %v8405
      %v8602 = vunpack.c.l.b16 %v8406
      %v8603 = vunpack.c.h.b16 %v8406
      %v8604 = vunpack.c.l.b16 %v8407
      %v8605 = vunpack.c.h.b16 %v8407
      %v8606 = vunpack.c.l.b16 %v8408
      %v8607 = vunpack.c.h.b16 %v8408
      %v8608 = vunpack.c.l.b16 %v8409
      %v8609 = vunpack.c.h.b16 %v8409
      %v8610 = vunpack.c.l.b16 %v8410
      %v8611 = vunpack.c.h.b16 %v8410
      %v8612 = vunpack.c.l.b16 %v8411
      %v8613 = vunpack.c.h.b16 %v8411
      %v8614 = vunpack.c.l.b16 %v8412
      %v8615 = vunpack.c.h.b16 %v8412
      %v8616 = vunpack.c.l.b16 %v8413
      %v8617 = vunpack.c.h.b16 %v8413
      %v8618 = vunpack.c.l.b16 %v8414
      %v8619 = vunpack.c.h.b16 %v8414
      %v8620 = vunpack.c.l.b16 %v8415
      %v8621 = vunpack.c.h.b16 %v8415
      %v8622 = vunpack.c.l.b16 %v8416
      %v8623 = vunpack.c.h.b16 %v8416
      %v8624 = vunpack.c.l.b16 %v8417
      %v8625 = vunpack.c.h.b16 %v8417
      %v8626 = vunpack.c.l.b16 %v8418
      %v8627 = vunpack.c.h.b16 %v8418
      %v8628 = vunpack.c.l.b16 %v8419
      %v8629 = vunpack.c.h.b16 %v8419
      %v8630 = vunpack.c.l.b16 %v8420
      %v8631 = vunpack.c.h.b16 %v8420
      %v8632 = vunpack.c.l.b16 %v8421
      %v8633 = vunpack.c.h.b16 %v8421
      %v8634 = vunpack.c.l.b16 %v8422
      %v8635 = vunpack.c.h.b16 %v8422
      %v8636 = vunpack.c.l.b16 %v8423
      %v8637 = vunpack.c.h.b16 %v8423
      %v8638 = vunpack.c.l.b16 %v8424
      %v8639 = vunpack.c.h.b16 %v8424
      %v8640 = vunpack.c.l.b16 %v8425
      %v8641 = vunpack.c.h.b16 %v8425
      %v8642 = vunpack.c.l.b16 %v8426
      %v8643 = vunpack.c.h.b16 %v8426
      %v8644 = vunpack.c.l.b16 %v8427
      %v8645 = vunpack.c.h.b16 %v8427
      %v8646 = vunpack.c.l.b16 %v8428
      %v8647 = vunpack.c.h.b16 %v8428
      %v8648 = vunpack.c.l.b16 %v8429
      %v8649 = vunpack.c.h.b16 %v8429
      %v8650 = vunpack.c.l.b16 %v8430
      %v8651 = vunpack.c.h.b16 %v8430
      %v8652 = vunpack.c.l.b16 %v8431
      %v8653 = vunpack.c.h.b16 %v8431
      %v8654 = vpack.c.b16 %v8534, %v8530
      %v8655 = vpack.c.b16 %v8535, %v8531
      %v8656 = vpack.c.b16 %v8536, %v8532
      %v8657 = vpack.c.b16 %v8537, %v8533
      %v8658 = vpack.c.b16 %v8542, %v8538
      %v8659 = vpack.c.b16 %v8543, %v8539
      %v8660 = vpack.c.b16 %v8544, %v8540
      %v8661 = vpack.c.b16 %v8545, %v8541
      %v8662 = vpack.c.b16 %v8550, %v8546
      %v8663 = vpack.c.b16 %v8551, %v8547
      %v8664 = vpack.c.b16 %v8552, %v8548
      %v8665 = vpack.c.b16 %v8553, %v8549
      %v8666 = vpack.c.b16 %v8558, %v8554
      %v8667 = vpack.c.b16 %v8559, %v8555
      %v8668 = vpack.c.b16 %v8560, %v8556
      %v8669 = vpack.c.b16 %v8561, %v8557
      %v8670 = vpack.c.b16 %v8566, %v8562
      %v8671 = vpack.c.b16 %v8567, %v8563
      %v8672 = vpack.c.b16 %v8568, %v8564
      %v8673 = vpack.c.b16 %v8569, %v8565
      %v8674 = vpack.c.b16 %v8574, %v8570
      %v8675 = vpack.c.b16 %v8575, %v8571
      %v8676 = vpack.c.b16 %v8576, %v8572
      %v8677 = vpack.c.b16 %v8577, %v8573
      %v8678 = vpack.c.b16 %v8582, %v8578
      %v8679 = vpack.c.b16 %v8583, %v8579
      %v8680 = vpack.c.b16 %v8584, %v8580
      %v8681 = vpack.c.b16 %v8585, %v8581
      %v8682 = vpack.c.b16 %v8590, %v8586
      %v8683 = vpack.c.b16 %v8591, %v8587
      %v8684 = vpack.c.b16 %v8592, %v8588
      %v8685 = vpack.c.b16 %v8593, %v8589
      %v8686 = vpack.c.b16 %v8598, %v8594
      %v8687 = vpack.c.b16 %v8599, %v8595
      %v8688 = vpack.c.b16 %v8600, %v8596
      %v8689 = vpack.c.b16 %v8601, %v8597
      %v8690 = vpack.c.b16 %v8606, %v8602
      %v8691 = vpack.c.b16 %v8607, %v8603
      %v8692 = vpack.c.b16 %v8608, %v8604
      %v8693 = vpack.c.b16 %v8609, %v8605
      %v8694 = vpack.c.b16 %v8614, %v8610
      %v8695 = vpack.c.b16 %v8615, %v8611
      %v8696 = vpack.c.b16 %v8616, %v8612
      %v8697 = vpack.c.b16 %v8617, %v8613
      %v8698 = vpack.c.b16 %v8622, %v8618
      %v8699 = vpack.c.b16 %v8623, %v8619
      %v8700 = vpack.c.b16 %v8624, %v8620
      %v8701 = vpack.c.b16 %v8625, %v8621
      %v8702 = vpack.c.b16 %v8630, %v8626
      %v8703 = vpack.c.b16 %v8631, %v8627
      %v8704 = vpack.c.b16 %v8632, %v8628
      %v8705 = vpack.c.b16 %v8633, %v8629
      %v8706 = vpack.c.b16 %v8638, %v8634
      %v8707 = vpack.c.b16 %v8639, %v8635
      %v8708 = vpack.c.b16 %v8640, %v8636
      %v8709 = vpack.c.b16 %v8641, %v8637
      %v8710 = vpack.c.b16 %v8646, %v8642
      %v8711 = vpack.c.b16 %v8647, %v8643
      %v8712 = vpack.c.b16 %v8648, %v8644
      %v8713 = vpack.c.b16 %v8649, %v8645
      %v8714 = vpack.c.b16 %v8650, %v8650
      %v8715 = vpack.c.b16 %v8651, %v8651
      %v8716 = vpack.c.b16 %v8652, %v8652
      %v8717 = vpack.c.b16 %v8653, %v8653
      %v8779 = vsel %vm594, %v8457, 0
      %v8782 = vsel %vm594, %v8459, 0
      %v8785 = vsel %vm594, %v8461, 0
      %v8788 = vsel %vm594, %v8463, 0
      %v8791 = vand.u32 %v8714, %v610
      %v8794 = vand.u32 %v8715, %v610
      %v8797 = vand.u32 %v8716, %v610
      %v8800 = vand.u32 %v8717, %v610
      %8802 = vmatprep.subr.bf16.mxu0 %v8655
      %8803 = vmatpush1.bf16.msra.mxu0 %v8654
      %8804 = vmatprep.subr.bf16.mxu0 %v8659
      %8805 = vmatpush1.bf16.msra.mxu0 %v8658
      %8806 = vmatprep.subr.bf16.mxu0 %v8663
      %8807 = vmatpush1.bf16.msra.mxu0 %v8662
      %8808 = vmatprep.subr.bf16.mxu0 %v8667
      %8809 = vmatpush1.bf16.msra.mxu0 %v8666
      %8810 = vmatprep.subr.bf16.mxu0 %v8671
      %8811 = vmatpush1.bf16.msra.mxu0 %v8670
      %8812 = vmatprep.subr.bf16.mxu0 %v8675
      %8813 = vmatpush1.bf16.msra.mxu0 %v8674
      %8814 = vmatprep.subr.bf16.mxu0 %v8679
      %8815 = vmatpush1.bf16.msra.mxu0 %v8678
      %8816 = vmatprep.subr.bf16.mxu0 %v8683
      %8817 = vmatpush1.bf16.msra.mxu0 %v8682
      %8818 = vmatprep.subr.bf16.mxu0 %v8687
      %8819 = vmatpush1.bf16.msra.mxu0 %v8686
      %8820 = vmatprep.subr.bf16.mxu0 %v8691
      %8821 = vmatpush1.bf16.msra.mxu0 %v8690
      %8822 = vmatprep.subr.bf16.mxu0 %v8695
      %8823 = vmatpush1.bf16.msra.mxu0 %v8694
      %8824 = vmatprep.subr.bf16.mxu0 %v8699
      %8825 = vmatpush1.bf16.msra.mxu0 %v8698
      %8826 = vmatprep.subr.bf16.mxu0 %v8703
      %8827 = vmatpush1.bf16.msra.mxu0 %v8702
      %8828 = vmatprep.subr.bf16.mxu0 %v8707
      %8829 = vmatpush1.bf16.msra.mxu0 %v8706
      %8830 = vmatprep.subr.bf16.mxu0 %v8711
      %8831 = vmatpush1.bf16.msra.mxu0 %v8710
      %8832 = vmatprep.subr.bf16.mxu0 %v8794
      %8833 = vmatpush1.bf16.msra.mxu0 %v8791
      %8834 = vmatprep.mubr.bf16.mxu0 %v8779
      %8835 = vmatmul.mubr.bf16.gmra.mrb[0].mxu0 %v8456
      %v8836 = vpop.f32.mrb[0].mxu0
      %v8837 = vadd.f32 0.0, %v8836
      %v8838 = vpop.f32.mrb[0].mxu0
      %v8839 = vadd.f32 0.0, %v8838
      %v8840 = vpop.f32.mrb[0].mxu0
      %v8841 = vadd.f32 0.0, %v8840
      %v8842 = vpop.f32.mrb[0].mxu0
      %v8843 = vadd.f32 0.0, %v8842
      %8844 = vmatprep.mubr.bf16.mxu0 %v8782
      %8845 = vmatmul.mubr.bf16.gmra.mrb[0].mxu0 %v8458
      %v8846 = vpop.f32.mrb[0].mxu0
      %v8847 = vadd.f32 0.0, %v8846
      %v8848 = vpop.f32.mrb[0].mxu0
      %v8849 = vadd.f32 0.0, %v8848
      %v8850 = vpop.f32.mrb[0].mxu0
      %v8851 = vadd.f32 0.0, %v8850
      %v8852 = vpop.f32.mrb[0].mxu0
      %v8853 = vadd.f32 0.0, %v8852
      %8854 = vmatprep.mubr.bf16.mxu0 %v8785
      %8855 = vmatmul.mubr.bf16.gmra.mrb[0].mxu0 %v8460
      %v8856 = vpop.f32.mrb[0].mxu0
      %v8857 = vadd.f32 0.0, %v8856
      %v8858 = vpop.f32.mrb[0].mxu0
      %v8859 = vadd.f32 0.0, %v8858
      %v8860 = vpop.f32.mrb[0].mxu0
      %v8861 = vadd.f32 0.0, %v8860
      %v8862 = vpop.f32.mrb[0].mxu0
      %v8863 = vadd.f32 0.0, %v8862
      %8864 = vmatprep.mubr.bf16.mxu0 %v8788
      %8865 = vmatmul.mubr.bf16.gmra.mrb[0].mxu0 %v8462
      %v8866 = vpop.f32.mrb[0].mxu0
      %v8867 = vadd.f32 0.0, %v8866
      %v8868 = vpop.f32.mrb[0].mxu0
      %v8869 = vadd.f32 0.0, %v8868
      %v8870 = vpop.f32.mrb[0].mxu0
      %v8871 = vadd.f32 0.0, %v8870
      %v8872 = vpop.f32.mrb[0].mxu0
      %v8873 = vadd.f32 0.0, %v8872
      %8874 = vdwg.mxu0
      %8875 = vmatprep.subr.bf16.mxu0 %v8657
      %8876 = vmatpush1.bf16.msra.mxu0 %v8656
      %8877 = vmatprep.subr.bf16.mxu0 %v8661
      %8878 = vmatpush1.bf16.msra.mxu0 %v8660
      %8879 = vmatprep.subr.bf16.mxu0 %v8665
      %8880 = vmatpush1.bf16.msra.mxu0 %v8664
      %8881 = vmatprep.subr.bf16.mxu0 %v8669
      %8882 = vmatpush1.bf16.msra.mxu0 %v8668
      %8883 = vmatprep.subr.bf16.mxu0 %v8673
      %8884 = vmatpush1.bf16.msra.mxu0 %v8672
      %8885 = vmatprep.subr.bf16.mxu0 %v8677
      %8886 = vmatpush1.bf16.msra.mxu0 %v8676
      %8887 = vmatprep.subr.bf16.mxu0 %v8681
      %8888 = vmatpush1.bf16.msra.mxu0 %v8680
      %8889 = vmatprep.subr.bf16.mxu0 %v8685
      %8890 = vmatpush1.bf16.msra.mxu0 %v8684
      %8891 = vmatprep.subr.bf16.mxu0 %v8689
      %8892 = vmatpush1.bf16.msra.mxu0 %v8688
      %8893 = vmatprep.subr.bf16.mxu0 %v8693
      %8894 = vmatpush1.bf16.msra.mxu0 %v8692
      %8895 = vmatprep.subr.bf16.mxu0 %v8697
      %8896 = vmatpush1.bf16.msra.mxu0 %v8696
      %8897 = vmatprep.subr.bf16.mxu0 %v8701
      %8898 = vmatpush1.bf16.msra.mxu0 %v8700
      %8899 = vmatprep.subr.bf16.mxu0 %v8705
      %8900 = vmatpush1.bf16.msra.mxu0 %v8704
      %8901 = vmatprep.subr.bf16.mxu0 %v8709
      %8902 = vmatpush1.bf16.msra.mxu0 %v8708
      %8903 = vmatprep.subr.bf16.mxu0 %v8713
      %8904 = vmatpush1.bf16.msra.mxu0 %v8712
      %8905 = vmatprep.subr.bf16.mxu0 %v8800
      %8906 = vmatpush1.bf16.msra.mxu0 %v8797
      %8907 = vmatprep.mubr.bf16.mxu0 %v8779
      %8908 = vmatmul.mubr.bf16.gmra.mrb[0].mxu0 %v8456
      %v8909 = vpop.f32.mrb[0].mxu0
      %v8910 = vadd.f32 0.0, %v8909
      %v8911 = vpop.f32.mrb[0].mxu0
      %v8912 = vadd.f32 0.0, %v8911
      %v8913 = vpop.f32.mrb[0].mxu0
      %v8914 = vadd.f32 0.0, %v8913
      %v8915 = vpop.f32.mrb[0].mxu0
      %v8916 = vadd.f32 0.0, %v8915
      %8917 = vmatprep.mubr.bf16.mxu0 %v8782
      %8918 = vmatmul.mubr.bf16.gmra.mrb[0].mxu0 %v8458
      %v8919 = vpop.f32.mrb[0].mxu0
      %v8920 = vadd.f32 0.0, %v8919
      %v8921 = vpop.f32.mrb[0].mxu0
      %v8922 = vadd.f32 0.0, %v8921
      %v8923 = vpop.f32.mrb[0].mxu0
      %v8924 = vadd.f32 0.0, %v8923
      %v8925 = vpop.f32.mrb[0].mxu0
      %v8926 = vadd.f32 0.0, %v8925
      %8927 = vmatprep.mubr.bf16.mxu0 %v8785
      %8928 = vmatmul.mubr.bf16.gmra.mrb[0].mxu0 %v8460
      %v8929 = vpop.f32.mrb[0].mxu0
      %v8930 = vadd.f32 0.0, %v8929
      %v8931 = vpop.f32.mrb[0].mxu0
      %v8932 = vadd.f32 0.0, %v8931
      %v8933 = vpop.f32.mrb[0].mxu0
      %v8934 = vadd.f32 0.0, %v8933
      %v8935 = vpop.f32.mrb[0].mxu0
      %v8936 = vadd.f32 0.0, %v8935
      %8937 = vmatprep.mubr.bf16.mxu0 %v8788
      %8938 = vmatmul.mubr.bf16.gmra.mrb[0].mxu0 %v8462
      %v8939 = vpop.f32.mrb[0].mxu0
      %v8940 = vadd.f32 0.0, %v8939
      %v8941 = vpop.f32.mrb[0].mxu0
      %v8942 = vadd.f32 0.0, %v8941
      %v8943 = vpop.f32.mrb[0].mxu0
      %v8944 = vadd.f32 0.0, %v8943
      %v8945 = vpop.f32.mrb[0].mxu0
      %v8946 = vadd.f32 0.0, %v8945
      %8947 = vdwg.mxu0
      %8956 = vrot.lane.b32.xlu0 %v8837, 112
      %v8957 = vpop.permute.xlu0 %8956
      %8958 = vrot.lane.b32.xlu0 %v8841, 112
      %v8959 = vpop.permute.xlu0 %8958
      %8960 = vrot.lane.b32.xlu0 %v8847, 112
      %v8961 = vpop.permute.xlu0 %8960
      %8962 = vrot.lane.b32.xlu0 %v8851, 112
      %v8963 = vpop.permute.xlu0 %8962
      %8964 = vrot.lane.b32.xlu0 %v8857, 112
      %v8965 = vpop.permute.xlu0 %8964
      %8966 = vrot.lane.b32.xlu0 %v8861, 112
      %v8967 = vpop.permute.xlu0 %8966
      %8968 = vrot.lane.b32.xlu0 %v8867, 112
      %v8969 = vpop.permute.xlu0 %8968
      %8970 = vrot.lane.b32.xlu0 %v8871, 112
      %v8971 = vpop.permute.xlu0 %8970
      %v8980 = vmax.f32 %v8837, %v8957
      %v8981 = vmax.f32 %v8841, %v8959
      %v8982 = vmax.f32 %v8847, %v8961
      %v8983 = vmax.f32 %v8851, %v8963
      %v8984 = vmax.f32 %v8857, %v8965
      %v8985 = vmax.f32 %v8861, %v8967
      %v8986 = vmax.f32 %v8867, %v8969
      %v8987 = vmax.f32 %v8871, %v8971
      %8988 = vrot.lane.b32.xlu0 %v8837, 96
      %v8989 = vpop.permute.xlu0 %8988
      %8990 = vrot.lane.b32.xlu0 %v8841, 96
      %v8991 = vpop.permute.xlu0 %8990
      %8992 = vrot.lane.b32.xlu0 %v8847, 96
      %v8993 = vpop.permute.xlu0 %8992
      %8994 = vrot.lane.b32.xlu0 %v8851, 96
      %v8995 = vpop.permute.xlu0 %8994
      %8996 = vrot.lane.b32.xlu0 %v8857, 96
      %v8997 = vpop.permute.xlu0 %8996
      %8998 = vrot.lane.b32.xlu0 %v8861, 96
      %v8999 = vpop.permute.xlu0 %8998
      %9000 = vrot.lane.b32.xlu0 %v8867, 96
      %v9001 = vpop.permute.xlu0 %9000
      %9002 = vrot.lane.b32.xlu0 %v8871, 96
      %v9003 = vpop.permute.xlu0 %9002
      %v9012 = vmax.f32 %v8980, %v8989
      %v9013 = vmax.f32 %v8981, %v8991
      %v9014 = vmax.f32 %v8982, %v8993
      %v9015 = vmax.f32 %v8983, %v8995
      %v9016 = vmax.f32 %v8984, %v8997
      %v9017 = vmax.f32 %v8985, %v8999
      %v9018 = vmax.f32 %v8986, %v9001
      %v9019 = vmax.f32 %v8987, %v9003
      %9020 = vrot.lane.b32.xlu0 %v8837, 80
      %v9021 = vpop.permute.xlu0 %9020
      %9022 = vrot.lane.b32.xlu0 %v8841, 80
      %v9023 = vpop.permute.xlu0 %9022
      %9024 = vrot.lane.b32.xlu0 %v8847, 80
      %v9025 = vpop.permute.xlu0 %9024
      %9026 = vrot.lane.b32.xlu0 %v8851, 80
      %v9027 = vpop.permute.xlu0 %9026
      %9028 = vrot.lane.b32.xlu0 %v8857, 80
      %v9029 = vpop.permute.xlu0 %9028
      %9030 = vrot.lane.b32.xlu0 %v8861, 80
      %v9031 = vpop.permute.xlu0 %9030
      %9032 = vrot.lane.b32.xlu0 %v8867, 80
      %v9033 = vpop.permute.xlu0 %9032
      %9034 = vrot.lane.b32.xlu0 %v8871, 80
      %v9035 = vpop.permute.xlu0 %9034
      %v9044 = vmax.f32 %v9012, %v9021
      %v9045 = vmax.f32 %v9013, %v9023
      %v9046 = vmax.f32 %v9014, %v9025
      %v9047 = vmax.f32 %v9015, %v9027
      %v9048 = vmax.f32 %v9016, %v9029
      %v9049 = vmax.f32 %v9017, %v9031
      %v9050 = vmax.f32 %v9018, %v9033
      %v9051 = vmax.f32 %v9019, %v9035
      %9052 = vrot.lane.b32.xlu0 %v8837, 64
      %v9053 = vpop.permute.xlu0 %9052
      %9054 = vrot.lane.b32.xlu0 %v8841, 64
      %v9055 = vpop.permute.xlu0 %9054
      %9056 = vrot.lane.b32.xlu0 %v8847, 64
      %v9057 = vpop.permute.xlu0 %9056
      %9058 = vrot.lane.b32.xlu0 %v8851, 64
      %v9059 = vpop.permute.xlu0 %9058
      %9060 = vrot.lane.b32.xlu0 %v8857, 64
      %v9061 = vpop.permute.xlu0 %9060
      %9062 = vrot.lane.b32.xlu0 %v8861, 64
      %v9063 = vpop.permute.xlu0 %9062
      %9064 = vrot.lane.b32.xlu0 %v8867, 64
      %v9065 = vpop.permute.xlu0 %9064
      %9066 = vrot.lane.b32.xlu0 %v8871, 64
      %v9067 = vpop.permute.xlu0 %9066
      %v9076 = vmax.f32 %v9044, %v9053
      %v9077 = vmax.f32 %v9045, %v9055
      %v9078 = vmax.f32 %v9046, %v9057
      %v9079 = vmax.f32 %v9047, %v9059
      %v9080 = vmax.f32 %v9048, %v9061
      %v9081 = vmax.f32 %v9049, %v9063
      %v9082 = vmax.f32 %v9050, %v9065
      %v9083 = vmax.f32 %v9051, %v9067
      %9084 = vrot.lane.b32.xlu0 %v8837, 48
      %v9085 = vpop.permute.xlu0 %9084
      %9086 = vrot.lane.b32.xlu0 %v8841, 48
      %v9087 = vpop.permute.xlu0 %9086
      %9088 = vrot.lane.b32.xlu0 %v8847, 48
      %v9089 = vpop.permute.xlu0 %9088
      %9090 = vrot.lane.b32.xlu0 %v8851, 48
      %v9091 = vpop.permute.xlu0 %9090
      %9092 = vrot.lane.b32.xlu0 %v8857, 48
      %v9093 = vpop.permute.xlu0 %9092
      %9094 = vrot.lane.b32.xlu0 %v8861, 48
      %v9095 = vpop.permute.xlu0 %9094
      %9096 = vrot.lane.b32.xlu0 %v8867, 48
      %v9097 = vpop.permute.xlu0 %9096
      %9098 = vrot.lane.b32.xlu0 %v8871, 48
      %v9099 = vpop.permute.xlu0 %9098
      %v9108 = vmax.f32 %v9076, %v9085
      %v9109 = vmax.f32 %v9077, %v9087
      %v9110 = vmax.f32 %v9078, %v9089
      %v9111 = vmax.f32 %v9079, %v9091
      %v9112 = vmax.f32 %v9080, %v9093
      %v9113 = vmax.f32 %v9081, %v9095
      %v9114 = vmax.f32 %v9082, %v9097
      %v9115 = vmax.f32 %v9083, %v9099
      %9116 = vrot.lane.b32.xlu0 %v8837, 32
      %v9117 = vpop.permute.xlu0 %9116
      %9118 = vrot.lane.b32.xlu0 %v8841, 32
      %v9119 = vpop.permute.xlu0 %9118
      %9120 = vrot.lane.b32.xlu0 %v8847, 32
      %v9121 = vpop.permute.xlu0 %9120
      %9122 = vrot.lane.b32.xlu0 %v8851, 32
      %v9123 = vpop.permute.xlu0 %9122
      %9124 = vrot.lane.b32.xlu0 %v8857, 32
      %v9125 = vpop.permute.xlu0 %9124
      %9126 = vrot.lane.b32.xlu0 %v8861, 32
      %v9127 = vpop.permute.xlu0 %9126
      %9128 = vrot.lane.b32.xlu0 %v8867, 32
      %v9129 = vpop.permute.xlu0 %9128
      %9130 = vrot.lane.b32.xlu0 %v8871, 32
      %v9131 = vpop.permute.xlu0 %9130
      %v9140 = vmax.f32 %v9108, %v9117
      %v9141 = vmax.f32 %v9109, %v9119
      %v9142 = vmax.f32 %v9110, %v9121
      %v9143 = vmax.f32 %v9111, %v9123
      %v9144 = vmax.f32 %v9112, %v9125
      %v9145 = vmax.f32 %v9113, %v9127
      %v9146 = vmax.f32 %v9114, %v9129
      %v9147 = vmax.f32 %v9115, %v9131
      %9148 = vrot.lane.b32.xlu0 %v8837, 16
      %v9149 = vpop.permute.xlu0 %9148
      %9150 = vrot.lane.b32.xlu0 %v8841, 16
      %v9151 = vpop.permute.xlu0 %9150
      %9152 = vrot.lane.b32.xlu0 %v8847, 16
      %v9153 = vpop.permute.xlu0 %9152
      %9154 = vrot.lane.b32.xlu0 %v8851, 16
      %v9155 = vpop.permute.xlu0 %9154
      %9156 = vrot.lane.b32.xlu0 %v8857, 16
      %v9157 = vpop.permute.xlu0 %9156
      %9158 = vrot.lane.b32.xlu0 %v8861, 16
      %v9159 = vpop.permute.xlu0 %9158
      %9160 = vrot.lane.b32.xlu0 %v8867, 16
      %v9161 = vpop.permute.xlu0 %9160
      %9162 = vrot.lane.b32.xlu0 %v8871, 16
      %v9163 = vpop.permute.xlu0 %9162
      %v9172 = vmax.f32 %v9140, %v9149
      %v9173 = vmax.f32 %v9141, %v9151
      %v9174 = vmax.f32 %v9142, %v9153
      %v9175 = vmax.f32 %v9143, %v9155
      %v9176 = vmax.f32 %v9144, %v9157
      %v9177 = vmax.f32 %v9145, %v9159
      %v9178 = vmax.f32 %v9146, %v9161
      %v9179 = vmax.f32 %v9147, %v9163
      %v9180 = vmax.f32 %v9172, %v8839
      %v9181 = vmax.f32 %v9173, %v8843
      %v9182 = vmax.f32 %v9174, %v8849
      %v9183 = vmax.f32 %v9175, %v8853
      %v9184 = vmax.f32 %v9176, %v8859
      %v9185 = vmax.f32 %v9177, %v8863
      %v9186 = vmax.f32 %v9178, %v8869
      %v9187 = vmax.f32 %v9179, %v8873
      %9196 = vrot.lane.b32.xlu0 %v8839, 112
      %v9197 = vpop.permute.xlu0 %9196
      %9198 = vrot.lane.b32.xlu0 %v8843, 112
      %v9199 = vpop.permute.xlu0 %9198
      %9200 = vrot.lane.b32.xlu0 %v8849, 112
      %v9201 = vpop.permute.xlu0 %9200
      %9202 = vrot.lane.b32.xlu0 %v8853, 112
      %v9203 = vpop.permute.xlu0 %9202
      %9204 = vrot.lane.b32.xlu0 %v8859, 112
      %v9205 = vpop.permute.xlu0 %9204
      %9206 = vrot.lane.b32.xlu0 %v8863, 112
      %v9207 = vpop.permute.xlu0 %9206
      %9208 = vrot.lane.b32.xlu0 %v8869, 112
      %v9209 = vpop.permute.xlu0 %9208
      %9210 = vrot.lane.b32.xlu0 %v8873, 112
      %v9211 = vpop.permute.xlu0 %9210
      %v9220 = vmax.f32 %v9180, %v9197
      %v9221 = vmax.f32 %v9181, %v9199
      %v9222 = vmax.f32 %v9182, %v9201
      %v9223 = vmax.f32 %v9183, %v9203
      %v9224 = vmax.f32 %v9184, %v9205
      %v9225 = vmax.f32 %v9185, %v9207
      %v9226 = vmax.f32 %v9186, %v9209
      %v9227 = vmax.f32 %v9187, %v9211
      %9228 = vrot.lane.b32.xlu0 %v8839, 96
      %v9229 = vpop.permute.xlu0 %9228
      %9230 = vrot.lane.b32.xlu0 %v8843, 96
      %v9231 = vpop.permute.xlu0 %9230
      %9232 = vrot.lane.b32.xlu0 %v8849, 96
      %v9233 = vpop.permute.xlu0 %9232
      %9234 = vrot.lane.b32.xlu0 %v8853, 96
      %v9235 = vpop.permute.xlu0 %9234
      %9236 = vrot.lane.b32.xlu0 %v8859, 96
      %v9237 = vpop.permute.xlu0 %9236
      %9238 = vrot.lane.b32.xlu0 %v8863, 96
      %v9239 = vpop.permute.xlu0 %9238
      %9240 = vrot.lane.b32.xlu0 %v8869, 96
      %v9241 = vpop.permute.xlu0 %9240
      %9242 = vrot.lane.b32.xlu0 %v8873, 96
      %v9243 = vpop.permute.xlu0 %9242
      %v9252 = vmax.f32 %v9220, %v9229
      %v9253 = vmax.f32 %v9221, %v9231
      %v9254 = vmax.f32 %v9222, %v9233
      %v9255 = vmax.f32 %v9223, %v9235
      %v9256 = vmax.f32 %v9224, %v9237
      %v9257 = vmax.f32 %v9225, %v9239
      %v9258 = vmax.f32 %v9226, %v9241
      %v9259 = vmax.f32 %v9227, %v9243
      %9260 = vrot.lane.b32.xlu0 %v8839, 80
      %v9261 = vpop.permute.xlu0 %9260
      %9262 = vrot.lane.b32.xlu0 %v8843, 80
      %v9263 = vpop.permute.xlu0 %9262
      %9264 = vrot.lane.b32.xlu0 %v8849, 80
      %v9265 = vpop.permute.xlu0 %9264
      %9266 = vrot.lane.b32.xlu0 %v8853, 80
      %v9267 = vpop.permute.xlu0 %9266
      %9268 = vrot.lane.b32.xlu0 %v8859, 80
      %v9269 = vpop.permute.xlu0 %9268
      %9270 = vrot.lane.b32.xlu0 %v8863, 80
      %v9271 = vpop.permute.xlu0 %9270
      %9272 = vrot.lane.b32.xlu0 %v8869, 80
      %v9273 = vpop.permute.xlu0 %9272
      %9274 = vrot.lane.b32.xlu0 %v8873, 80
      %v9275 = vpop.permute.xlu0 %9274
      %v9284 = vmax.f32 %v9252, %v9261
      %v9285 = vmax.f32 %v9253, %v9263
      %v9286 = vmax.f32 %v9254, %v9265
      %v9287 = vmax.f32 %v9255, %v9267
      %v9288 = vmax.f32 %v9256, %v9269
      %v9289 = vmax.f32 %v9257, %v9271
      %v9290 = vmax.f32 %v9258, %v9273
      %v9291 = vmax.f32 %v9259, %v9275
      %9292 = vrot.lane.b32.xlu0 %v8839, 64
      %v9293 = vpop.permute.xlu0 %9292
      %9294 = vrot.lane.b32.xlu0 %v8843, 64
      %v9295 = vpop.permute.xlu0 %9294
      %9296 = vrot.lane.b32.xlu0 %v8849, 64
      %v9297 = vpop.permute.xlu0 %9296
      %9298 = vrot.lane.b32.xlu0 %v8853, 64
      %v9299 = vpop.permute.xlu0 %9298
      %9300 = vrot.lane.b32.xlu0 %v8859, 64
      %v9301 = vpop.permute.xlu0 %9300
      %9302 = vrot.lane.b32.xlu0 %v8863, 64
      %v9303 = vpop.permute.xlu0 %9302
      %9304 = vrot.lane.b32.xlu0 %v8869, 64
      %v9305 = vpop.permute.xlu0 %9304
      %9306 = vrot.lane.b32.xlu0 %v8873, 64
      %v9307 = vpop.permute.xlu0 %9306
      %v9316 = vmax.f32 %v9284, %v9293
      %v9317 = vmax.f32 %v9285, %v9295
      %v9318 = vmax.f32 %v9286, %v9297
      %v9319 = vmax.f32 %v9287, %v9299
      %v9320 = vmax.f32 %v9288, %v9301
      %v9321 = vmax.f32 %v9289, %v9303
      %v9322 = vmax.f32 %v9290, %v9305
      %v9323 = vmax.f32 %v9291, %v9307
      %9324 = vrot.lane.b32.xlu0 %v8839, 48
      %v9325 = vpop.permute.xlu0 %9324
      %9326 = vrot.lane.b32.xlu0 %v8843, 48
      %v9327 = vpop.permute.xlu0 %9326
      %9328 = vrot.lane.b32.xlu0 %v8849, 48
      %v9329 = vpop.permute.xlu0 %9328
      %9330 = vrot.lane.b32.xlu0 %v8853, 48
      %v9331 = vpop.permute.xlu0 %9330
      %9332 = vrot.lane.b32.xlu0 %v8859, 48
      %v9333 = vpop.permute.xlu0 %9332
      %9334 = vrot.lane.b32.xlu0 %v8863, 48
      %v9335 = vpop.permute.xlu0 %9334
      %9336 = vrot.lane.b32.xlu0 %v8869, 48
      %v9337 = vpop.permute.xlu0 %9336
      %9338 = vrot.lane.b32.xlu0 %v8873, 48
      %v9339 = vpop.permute.xlu0 %9338
      %v9348 = vmax.f32 %v9316, %v9325
      %v9349 = vmax.f32 %v9317, %v9327
      %v9350 = vmax.f32 %v9318, %v9329
      %v9351 = vmax.f32 %v9319, %v9331
      %v9352 = vmax.f32 %v9320, %v9333
      %v9353 = vmax.f32 %v9321, %v9335
      %v9354 = vmax.f32 %v9322, %v9337
      %v9355 = vmax.f32 %v9323, %v9339
      %9356 = vrot.lane.b32.xlu0 %v8839, 32
      %v9357 = vpop.permute.xlu0 %9356
      %9358 = vrot.lane.b32.xlu0 %v8843, 32
      %v9359 = vpop.permute.xlu0 %9358
      %9360 = vrot.lane.b32.xlu0 %v8849, 32
      %v9361 = vpop.permute.xlu0 %9360
      %9362 = vrot.lane.b32.xlu0 %v8853, 32
      %v9363 = vpop.permute.xlu0 %9362
      %9364 = vrot.lane.b32.xlu0 %v8859, 32
      %v9365 = vpop.permute.xlu0 %9364
      %9366 = vrot.lane.b32.xlu0 %v8863, 32
      %v9367 = vpop.permute.xlu0 %9366
      %9368 = vrot.lane.b32.xlu0 %v8869, 32
      %v9369 = vpop.permute.xlu0 %9368
      %9370 = vrot.lane.b32.xlu0 %v8873, 32
      %v9371 = vpop.permute.xlu0 %9370
      %v9380 = vmax.f32 %v9348, %v9357
      %v9381 = vmax.f32 %v9349, %v9359
      %v9382 = vmax.f32 %v9350, %v9361
      %v9383 = vmax.f32 %v9351, %v9363
      %v9384 = vmax.f32 %v9352, %v9365
      %v9385 = vmax.f32 %v9353, %v9367
      %v9386 = vmax.f32 %v9354, %v9369
      %v9387 = vmax.f32 %v9355, %v9371
      %9388 = vrot.lane.b32.xlu0 %v8839, 16
      %v9389 = vpop.permute.xlu0 %9388
      %9390 = vrot.lane.b32.xlu0 %v8843, 16
      %v9391 = vpop.permute.xlu0 %9390
      %9392 = vrot.lane.b32.xlu0 %v8849, 16
      %v9393 = vpop.permute.xlu0 %9392
      %9394 = vrot.lane.b32.xlu0 %v8853, 16
      %v9395 = vpop.permute.xlu0 %9394
      %9396 = vrot.lane.b32.xlu0 %v8859, 16
      %v9397 = vpop.permute.xlu0 %9396
      %9398 = vrot.lane.b32.xlu0 %v8863, 16
      %v9399 = vpop.permute.xlu0 %9398
      %9400 = vrot.lane.b32.xlu0 %v8869, 16
      %v9401 = vpop.permute.xlu0 %9400
      %9402 = vrot.lane.b32.xlu0 %v8873, 16
      %v9403 = vpop.permute.xlu0 %9402
      %v9412 = vmax.f32 %v9380, %v9389
      %v9413 = vmax.f32 %v9381, %v9391
      %v9414 = vmax.f32 %v9382, %v9393
      %v9415 = vmax.f32 %v9383, %v9395
      %v9416 = vmax.f32 %v9384, %v9397
      %v9417 = vmax.f32 %v9385, %v9399
      %v9418 = vmax.f32 %v9386, %v9401
      %v9419 = vmax.f32 %v9387, %v9403
      %v9420 = vmax.f32 %v9412, %v8910
      %v9421 = vmax.f32 %v9413, %v8914
      %v9422 = vmax.f32 %v9414, %v8920
      %v9423 = vmax.f32 %v9415, %v8924
      %v9424 = vmax.f32 %v9416, %v8930
      %v9425 = vmax.f32 %v9417, %v8934
      %v9426 = vmax.f32 %v9418, %v8940
      %v9427 = vmax.f32 %v9419, %v8944
      %9436 = vrot.lane.b32.xlu0 %v8910, 112
      %v9437 = vpop.permute.xlu0 %9436
      %9438 = vrot.lane.b32.xlu0 %v8914, 112
      %v9439 = vpop.permute.xlu0 %9438
      %9440 = vrot.lane.b32.xlu0 %v8920, 112
      %v9441 = vpop.permute.xlu0 %9440
      %9442 = vrot.lane.b32.xlu0 %v8924, 112
      %v9443 = vpop.permute.xlu0 %9442
      %9444 = vrot.lane.b32.xlu0 %v8930, 112
      %v9445 = vpop.permute.xlu0 %9444
      %9446 = vrot.lane.b32.xlu0 %v8934, 112
      %v9447 = vpop.permute.xlu0 %9446
      %9448 = vrot.lane.b32.xlu0 %v8940, 112
      %v9449 = vpop.permute.xlu0 %9448
      %9450 = vrot.lane.b32.xlu0 %v8944, 112
      %v9451 = vpop.permute.xlu0 %9450
      %v9460 = vmax.f32 %v9420, %v9437
      %v9461 = vmax.f32 %v9421, %v9439
      %v9462 = vmax.f32 %v9422, %v9441
      %v9463 = vmax.f32 %v9423, %v9443
      %v9464 = vmax.f32 %v9424, %v9445
      %v9465 = vmax.f32 %v9425, %v9447
      %v9466 = vmax.f32 %v9426, %v9449
      %v9467 = vmax.f32 %v9427, %v9451
      %9468 = vrot.lane.b32.xlu0 %v8910, 96
      %v9469 = vpop.permute.xlu0 %9468
      %9470 = vrot.lane.b32.xlu0 %v8914, 96
      %v9471 = vpop.permute.xlu0 %9470
      %9472 = vrot.lane.b32.xlu0 %v8920, 96
      %v9473 = vpop.permute.xlu0 %9472
      %9474 = vrot.lane.b32.xlu0 %v8924, 96
      %v9475 = vpop.permute.xlu0 %9474
      %9476 = vrot.lane.b32.xlu0 %v8930, 96
      %v9477 = vpop.permute.xlu0 %9476
      %9478 = vrot.lane.b32.xlu0 %v8934, 96
      %v9479 = vpop.permute.xlu0 %9478
      %9480 = vrot.lane.b32.xlu0 %v8940, 96
      %v9481 = vpop.permute.xlu0 %9480
      %9482 = vrot.lane.b32.xlu0 %v8944, 96
      %v9483 = vpop.permute.xlu0 %9482
      %v9492 = vmax.f32 %v9460, %v9469
      %v9493 = vmax.f32 %v9461, %v9471
      %v9494 = vmax.f32 %v9462, %v9473
      %v9495 = vmax.f32 %v9463, %v9475
      %v9496 = vmax.f32 %v9464, %v9477
      %v9497 = vmax.f32 %v9465, %v9479
      %v9498 = vmax.f32 %v9466, %v9481
      %v9499 = vmax.f32 %v9467, %v9483
      %9500 = vrot.lane.b32.xlu0 %v8910, 80
      %v9501 = vpop.permute.xlu0 %9500
      %9502 = vrot.lane.b32.xlu0 %v8914, 80
      %v9503 = vpop.permute.xlu0 %9502
      %9504 = vrot.lane.b32.xlu0 %v8920, 80
      %v9505 = vpop.permute.xlu0 %9504
      %9506 = vrot.lane.b32.xlu0 %v8924, 80
      %v9507 = vpop.permute.xlu0 %9506
      %9508 = vrot.lane.b32.xlu0 %v8930, 80
      %v9509 = vpop.permute.xlu0 %9508
      %9510 = vrot.lane.b32.xlu0 %v8934, 80
      %v9511 = vpop.permute.xlu0 %9510
      %9512 = vrot.lane.b32.xlu0 %v8940, 80
      %v9513 = vpop.permute.xlu0 %9512
      %9514 = vrot.lane.b32.xlu0 %v8944, 80
      %v9515 = vpop.permute.xlu0 %9514
      %v9524 = vmax.f32 %v9492, %v9501
      %v9525 = vmax.f32 %v9493, %v9503
      %v9526 = vmax.f32 %v9494, %v9505
      %v9527 = vmax.f32 %v9495, %v9507
      %v9528 = vmax.f32 %v9496, %v9509
      %v9529 = vmax.f32 %v9497, %v9511
      %v9530 = vmax.f32 %v9498, %v9513
      %v9531 = vmax.f32 %v9499, %v9515
      %9532 = vrot.lane.b32.xlu0 %v8910, 64
      %v9533 = vpop.permute.xlu0 %9532
      %9534 = vrot.lane.b32.xlu0 %v8914, 64
      %v9535 = vpop.permute.xlu0 %9534
      %9536 = vrot.lane.b32.xlu0 %v8920, 64
      %v9537 = vpop.permute.xlu0 %9536
      %9538 = vrot.lane.b32.xlu0 %v8924, 64
      %v9539 = vpop.permute.xlu0 %9538
      %9540 = vrot.lane.b32.xlu0 %v8930, 64
      %v9541 = vpop.permute.xlu0 %9540
      %9542 = vrot.lane.b32.xlu0 %v8934, 64
      %v9543 = vpop.permute.xlu0 %9542
      %9544 = vrot.lane.b32.xlu0 %v8940, 64
      %v9545 = vpop.permute.xlu0 %9544
      %9546 = vrot.lane.b32.xlu0 %v8944, 64
      %v9547 = vpop.permute.xlu0 %9546
      %v9556 = vmax.f32 %v9524, %v9533
      %v9557 = vmax.f32 %v9525, %v9535
      %v9558 = vmax.f32 %v9526, %v9537
      %v9559 = vmax.f32 %v9527, %v9539
      %v9560 = vmax.f32 %v9528, %v9541
      %v9561 = vmax.f32 %v9529, %v9543
      %v9562 = vmax.f32 %v9530, %v9545
      %v9563 = vmax.f32 %v9531, %v9547
      %9564 = vrot.lane.b32.xlu0 %v8910, 48
      %v9565 = vpop.permute.xlu0 %9564
      %9566 = vrot.lane.b32.xlu0 %v8914, 48
      %v9567 = vpop.permute.xlu0 %9566
      %9568 = vrot.lane.b32.xlu0 %v8920, 48
      %v9569 = vpop.permute.xlu0 %9568
      %9570 = vrot.lane.b32.xlu0 %v8924, 48
      %v9571 = vpop.permute.xlu0 %9570
      %9572 = vrot.lane.b32.xlu0 %v8930, 48
      %v9573 = vpop.permute.xlu0 %9572
      %9574 = vrot.lane.b32.xlu0 %v8934, 48
      %v9575 = vpop.permute.xlu0 %9574
      %9576 = vrot.lane.b32.xlu0 %v8940, 48
      %v9577 = vpop.permute.xlu0 %9576
      %9578 = vrot.lane.b32.xlu0 %v8944, 48
      %v9579 = vpop.permute.xlu0 %9578
      %v9588 = vmax.f32 %v9556, %v9565
      %v9589 = vmax.f32 %v9557, %v9567
      %v9590 = vmax.f32 %v9558, %v9569
      %v9591 = vmax.f32 %v9559, %v9571
      %v9592 = vmax.f32 %v9560, %v9573
      %v9593 = vmax.f32 %v9561, %v9575
      %v9594 = vmax.f32 %v9562, %v9577
      %v9595 = vmax.f32 %v9563, %v9579
      %9596 = vrot.lane.b32.xlu0 %v8910, 32
      %v9597 = vpop.permute.xlu0 %9596
      %9598 = vrot.lane.b32.xlu0 %v8914, 32
      %v9599 = vpop.permute.xlu0 %9598
      %9600 = vrot.lane.b32.xlu0 %v8920, 32
      %v9601 = vpop.permute.xlu0 %9600
      %9602 = vrot.lane.b32.xlu0 %v8924, 32
      %v9603 = vpop.permute.xlu0 %9602
      %9604 = vrot.lane.b32.xlu0 %v8930, 32
      %v9605 = vpop.permute.xlu0 %9604
      %9606 = vrot.lane.b32.xlu0 %v8934, 32
      %v9607 = vpop.permute.xlu0 %9606
      %9608 = vrot.lane.b32.xlu0 %v8940, 32
      %v9609 = vpop.permute.xlu0 %9608
      %9610 = vrot.lane.b32.xlu0 %v8944, 32
      %v9611 = vpop.permute.xlu0 %9610
      %v9620 = vmax.f32 %v9588, %v9597
      %v9621 = vmax.f32 %v9589, %v9599
      %v9622 = vmax.f32 %v9590, %v9601
      %v9623 = vmax.f32 %v9591, %v9603
      %v9624 = vmax.f32 %v9592, %v9605
      %v9625 = vmax.f32 %v9593, %v9607
      %v9626 = vmax.f32 %v9594, %v9609
      %v9627 = vmax.f32 %v9595, %v9611
      %9628 = vrot.lane.b32.xlu0 %v8910, 16
      %v9629 = vpop.permute.xlu0 %9628
      %9630 = vrot.lane.b32.xlu0 %v8914, 16
      %v9631 = vpop.permute.xlu0 %9630
      %9632 = vrot.lane.b32.xlu0 %v8920, 16
      %v9633 = vpop.permute.xlu0 %9632
      %9634 = vrot.lane.b32.xlu0 %v8924, 16
      %v9635 = vpop.permute.xlu0 %9634
      %9636 = vrot.lane.b32.xlu0 %v8930, 16
      %v9637 = vpop.permute.xlu0 %9636
      %9638 = vrot.lane.b32.xlu0 %v8934, 16
      %v9639 = vpop.permute.xlu0 %9638
      %9640 = vrot.lane.b32.xlu0 %v8940, 16
      %v9641 = vpop.permute.xlu0 %9640
      %9642 = vrot.lane.b32.xlu0 %v8944, 16
      %v9643 = vpop.permute.xlu0 %9642
      %v9652 = vmax.f32 %v9620, %v9629
      %v9653 = vmax.f32 %v9621, %v9631
      %v9654 = vmax.f32 %v9622, %v9633
      %v9655 = vmax.f32 %v9623, %v9635
      %v9656 = vmax.f32 %v9624, %v9637
      %v9657 = vmax.f32 %v9625, %v9639
      %v9658 = vmax.f32 %v9626, %v9641
      %v9659 = vmax.f32 %v9627, %v9643
      %v9660 = vmax.f32 %v9652, %v8912
      %v9661 = vmax.f32 %v9653, %v8916
      %v9662 = vmax.f32 %v9654, %v8922
      %v9663 = vmax.f32 %v9655, %v8926
      %v9664 = vmax.f32 %v9656, %v8932
      %v9665 = vmax.f32 %v9657, %v8936
      %v9666 = vmax.f32 %v9658, %v8942
      %v9667 = vmax.f32 %v9659, %v8946
      %v9668 = vadd.f32 %v9660, %v1493
      %v9669 = vadd.f32 %v9661, %v1493
      %v9670 = vadd.f32 %v9662, %v1493
      %v9671 = vadd.f32 %v9663, %v1493
      %v9672 = vadd.f32 %v9664, %v1493
      %v9673 = vadd.f32 %v9665, %v1493
      %v9674 = vadd.f32 %v9666, %v1493
      %v9675 = vadd.f32 %v9667, %v1493
      %v9676 = vmax.f32 %v9668, 0.0
      %v9677 = vmax.f32 %v9669, 0.0
      %v9678 = vmax.f32 %v9670, 0.0
      %v9679 = vmax.f32 %v9671, 0.0
      %v9680 = vmax.f32 %v9672, 0.0
      %v9681 = vmax.f32 %v9673, 0.0
      %v9682 = vmax.f32 %v9674, 0.0
      %v9683 = vmax.f32 %v9675, 0.0
      %v9684 = vpack.c.bf16 %v9677, %v9676
      %v9685 = vpack.c.bf16 %v9679, %v9678
      %v9686 = vpack.c.bf16 %v9681, %v9680
      %v9687 = vpack.c.bf16 %v9683, %v9682
      %v9692 = vunpack.c.l.b16 %v9684
      %v9693 = vunpack.c.h.b16 %v9684
      %v9694 = vunpack.c.l.b16 %v9685
      %v9695 = vunpack.c.h.b16 %v9685
      %v9696 = vunpack.c.l.b16 %v9686
      %v9697 = vunpack.c.h.b16 %v9686
      %v9698 = vunpack.c.l.b16 %v9687
      %v9699 = vunpack.c.h.b16 %v9687
      %v9700 = vpack.c.b16 %v9692, %v9692
      %v9701 = vpack.c.b16 %v9693, %v9693
      %v9702 = vpack.c.b16 %v9694, %v9694
      %v9703 = vpack.c.b16 %v9695, %v9695
      %v9704 = vpack.c.b16 %v9696, %v9696
      %v9705 = vpack.c.b16 %v9697, %v9697
      %v9706 = vpack.c.b16 %v9698, %v9698
      %v9707 = vpack.c.b16 %v9699, %v9699
      %9716 = vst.msk [vmem:[%s175 + $0xc0] sm:$0xf] %vm1543, %v9700
      %9717 = vst.msk [vmem:[%s175 + $0xc4] sm:$0xf] %vm1543, %v9701
      %9718 = vst.msk [vmem:[%s175 + $0xc8] sm:$0xf] %vm1543, %v9702
      %9719 = vst.msk [vmem:[%s175 + $0xcc] sm:$0xf] %vm1543, %v9703
      %9720 = vst.msk [vmem:[%s175 + $0xd0] sm:$0xf] %vm1543, %v9704
      %9721 = vst.msk [vmem:[%s175 + $0xd4] sm:$0xf] %vm1543, %v9705
      %9722 = vst.msk [vmem:[%s175 + $0xd8] sm:$0xf] %vm1543, %v9706
      %9723 = vst.msk [vmem:[%s175 + $0xdc] sm:$0xf] %vm1543, %v9707
      %v9724 = vld [vmem:[%s169 + $0x1c0] sm:$0xff]
      %v9725 = vld [vmem:[%s169 + $0x1c8] sm:$0xff]
      %v9726 = vld [vmem:[%s169 + $0x1d0] sm:$0xff]
      %v9727 = vld [vmem:[%s169 + $0x1d8] sm:$0xff]
      %v9728 = vld [vmem:[%s169 + $0x1e0] sm:$0xff]
      %v9729 = vld [vmem:[%s169 + $0x1e8] sm:$0xff]
      %v9730 = vld [vmem:[%s169 + $0x1f0] sm:$0xff]
      %v9731 = vld [vmem:[%s169 + $0x1f8] sm:$0xff]
      %v9732 = vld [vmem:[%s1] sm:$0xff]
      %v9733 = vld [vmem:[%s1 + $0x8] sm:$0xff]
      %v9734 = vld [vmem:[%s1 + $0x10] sm:$0xff]
      %v9735 = vld [vmem:[%s1 + $0x18] sm:$0xff]
      %v9736 = vld [vmem:[%s1 + $0x20] sm:$0xff]
      %v9737 = vld [vmem:[%s1 + $0x28] sm:$0xff]
      %v9738 = vld [vmem:[%s1 + $0x30] sm:$0xff]
      %v9739 = vld [vmem:[%s1 + $0x38] sm:$0xff]
      %v9740 = vld [vmem:[%s1 + $0x40] sm:$0xff]
      %v9741 = vld [vmem:[%s1 + $0x48] sm:$0xff]
      %v9742 = vld [vmem:[%s1 + $0x50] sm:$0xff]
      %v9743 = vld [vmem:[%s1 + $0x58] sm:$0xff]
      %v9744 = vld [vmem:[%s1 + $0x60] sm:$0xff]
      %v9745 = vld [vmem:[%s1 + $0x68] sm:$0xff]
      %v9746 = vld [vmem:[%s1 + $0x70] sm:$0xff]
      %v9747 = vld [vmem:[%s1 + $0x78] sm:$0xff]
      %v9748 = vld [vmem:[%s1 + $0x80] sm:$0xff]
      %v9749 = vld [vmem:[%s1 + $0x88] sm:$0xff]
      %v9750 = vld [vmem:[%s1 + $0x90] sm:$0xff]
      %v9751 = vld [vmem:[%s1 + $0x98] sm:$0xff]
      %v9752 = vld [vmem:[%s1 + $0xa0] sm:$0xff]
      %v9753 = vld [vmem:[%s1 + $0xa8] sm:$0xff]
      %v9754 = vld [vmem:[%s1 + $0xb0] sm:$0xff]
      %v9755 = vld [vmem:[%s1 + $0xb8] sm:$0xff]
      %v9756 = vld [vmem:[%s1 + $0xc0] sm:$0xff]
      %v9757 = vld [vmem:[%s1 + $0xc8] sm:$0xff]
      %v9758 = vld [vmem:[%s1 + $0xd0] sm:$0xff]
      %v9759 = vld [vmem:[%s1 + $0xd8] sm:$0xff]
      %v9760 = vld [vmem:[%s1 + $0xe0] sm:$0xff]
      %v9761 = vld [vmem:[%s1 + $0xe8] sm:$0xff]
      %v9762 = vld [vmem:[%s1 + $0xf0] sm:$0xff]
      %v9763 = vld [vmem:[%s1 + $0xf8] sm:$0xff]
      %v9764 = vld [vmem:[%s1 + $0x100] sm:$0xff]
      %v9765 = vld [vmem:[%s1 + $0x108] sm:$0xff]
      %v9766 = vld [vmem:[%s1 + $0x110] sm:$0xff]
      %v9767 = vld [vmem:[%s1 + $0x118] sm:$0xff]
      %v9768 = vld [vmem:[%s1 + $0x120] sm:$0xff]
      %v9769 = vld [vmem:[%s1 + $0x128] sm:$0xff]
      %v9770 = vld [vmem:[%s1 + $0x130] sm:$0xff]
      %v9771 = vld [vmem:[%s1 + $0x138] sm:$0xff]
      %v9772 = vld [vmem:[%s1 + $0x140] sm:$0xff]
      %v9773 = vld [vmem:[%s1 + $0x148] sm:$0xff]
      %v9774 = vld [vmem:[%s1 + $0x150] sm:$0xff]
      %v9775 = vld [vmem:[%s1 + $0x158] sm:$0xff]
      %v9776 = vld [vmem:[%s1 + $0x160] sm:$0xff]
      %v9777 = vld [vmem:[%s1 + $0x168] sm:$0xff]
      %v9778 = vld [vmem:[%s1 + $0x170] sm:$0xff]
      %v9779 = vld [vmem:[%s1 + $0x178] sm:$0xff]
      %v9780 = vld [vmem:[%s1 + $0x180] sm:$0xff]
      %v9781 = vld [vmem:[%s1 + $0x188] sm:$0xff]
      %v9782 = vld [vmem:[%s1 + $0x190] sm:$0xff]
      %v9783 = vld [vmem:[%s1 + $0x198] sm:$0xff]
      %v9784 = vld [vmem:[%s1 + $0x1a0] sm:$0xff]
      %v9785 = vld [vmem:[%s1 + $0x1a8] sm:$0xff]
      %v9786 = vld [vmem:[%s1 + $0x1b0] sm:$0xff]
      %v9787 = vld [vmem:[%s1 + $0x1b8] sm:$0xff]
      %v9788 = vld [vmem:[%s1 + $0x1c0] sm:$0xff]
      %v9789 = vld [vmem:[%s1 + $0x1c8] sm:$0xff]
      %v9790 = vld [vmem:[%s1 + $0x1d0] sm:$0xff]
      %v9791 = vld [vmem:[%s1 + $0x1d8] sm:$0xff]
      %v9792 = vld [vmem:[%s1 + $0x1e0] sm:$0x33]
      %v9793 = vld [vmem:[%s1 + $0x1e8] sm:$0x33]
      %v9802 = vunpack.c.l.b16 %v9724
      %v9803 = vunpack.c.h.b16 %v9724
      %v9804 = vunpack.c.l.b16 %v9725
      %v9805 = vunpack.c.h.b16 %v9725
      %v9806 = vunpack.c.l.b16 %v9726
      %v9807 = vunpack.c.h.b16 %v9726
      %v9808 = vunpack.c.l.b16 %v9727
      %v9809 = vunpack.c.h.b16 %v9727
      %v9810 = vunpack.c.l.b16 %v9728
      %v9811 = vunpack.c.h.b16 %v9728
      %v9812 = vunpack.c.l.b16 %v9729
      %v9813 = vunpack.c.h.b16 %v9729
      %v9814 = vunpack.c.l.b16 %v9730
      %v9815 = vunpack.c.h.b16 %v9730
      %v9816 = vunpack.c.l.b16 %v9731
      %v9817 = vunpack.c.h.b16 %v9731
      %v9818 = vpack.c.b16 %v9804, %v9802
      %v9819 = vpack.c.b16 %v9805, %v9803
      %v9820 = vpack.c.b16 %v9808, %v9806
      %v9821 = vpack.c.b16 %v9809, %v9807
      %v9822 = vpack.c.b16 %v9812, %v9810
      %v9823 = vpack.c.b16 %v9813, %v9811
      %v9824 = vpack.c.b16 %v9816, %v9814
      %v9825 = vpack.c.b16 %v9817, %v9815
      %v9892 = vunpack.c.l.b16 %v9732
      %v9893 = vunpack.c.h.b16 %v9732
      %v9894 = vunpack.c.l.b16 %v9733
      %v9895 = vunpack.c.h.b16 %v9733
      %v9896 = vunpack.c.l.b16 %v9734
      %v9897 = vunpack.c.h.b16 %v9734
      %v9898 = vunpack.c.l.b16 %v9735
      %v9899 = vunpack.c.h.b16 %v9735
      %v9900 = vunpack.c.l.b16 %v9736
      %v9901 = vunpack.c.h.b16 %v9736
      %v9902 = vunpack.c.l.b16 %v9737
      %v9903 = vunpack.c.h.b16 %v9737
      %v9904 = vunpack.c.l.b16 %v9738
      %v9905 = vunpack.c.h.b16 %v9738
      %v9906 = vunpack.c.l.b16 %v9739
      %v9907 = vunpack.c.h.b16 %v9739
      %v9908 = vunpack.c.l.b16 %v9740
      %v9909 = vunpack.c.h.b16 %v9740
      %v9910 = vunpack.c.l.b16 %v9741
      %v9911 = vunpack.c.h.b16 %v9741
      %v9912 = vunpack.c.l.b16 %v9742
      %v9913 = vunpack.c.h.b16 %v9742
      %v9914 = vunpack.c.l.b16 %v9743
      %v9915 = vunpack.c.h.b16 %v9743
      %v9916 = vunpack.c.l.b16 %v9744
      %v9917 = vunpack.c.h.b16 %v9744
      %v9918 = vunpack.c.l.b16 %v9745
      %v9919 = vunpack.c.h.b16 %v9745
      %v9920 = vunpack.c.l.b16 %v9746
      %v9921 = vunpack.c.h.b16 %v9746
      %v9922 = vunpack.c.l.b16 %v9747
      %v9923 = vunpack.c.h.b16 %v9747
      %v9924 = vunpack.c.l.b16 %v9748
      %v9925 = vunpack.c.h.b16 %v9748
      %v9926 = vunpack.c.l.b16 %v9749
      %v9927 = vunpack.c.h.b16 %v9749
      %v9928 = vunpack.c.l.b16 %v9750
      %v9929 = vunpack.c.h.b16 %v9750
      %v9930 = vunpack.c.l.b16 %v9751
      %v9931 = vunpack.c.h.b16 %v9751
      %v9932 = vunpack.c.l.b16 %v9752
      %v9933 = vunpack.c.h.b16 %v9752
      %v9934 = vunpack.c.l.b16 %v9753
      %v9935 = vunpack.c.h.b16 %v9753
      %v9936 = vunpack.c.l.b16 %v9754
      %v9937 = vunpack.c.h.b16 %v9754
      %v9938 = vunpack.c.l.b16 %v9755
      %v9939 = vunpack.c.h.b16 %v9755
      %v9940 = vunpack.c.l.b16 %v9756
      %v9941 = vunpack.c.h.b16 %v9756
      %v9942 = vunpack.c.l.b16 %v9757
      %v9943 = vunpack.c.h.b16 %v9757
      %v9944 = vunpack.c.l.b16 %v9758
      %v9945 = vunpack.c.h.b16 %v9758
      %v9946 = vunpack.c.l.b16 %v9759
      %v9947 = vunpack.c.h.b16 %v9759
      %v9948 = vunpack.c.l.b16 %v9760
      %v9949 = vunpack.c.h.b16 %v9760
      %v9950 = vunpack.c.l.b16 %v9761
      %v9951 = vunpack.c.h.b16 %v9761
      %v9952 = vunpack.c.l.b16 %v9762
      %v9953 = vunpack.c.h.b16 %v9762
      %v9954 = vunpack.c.l.b16 %v9763
      %v9955 = vunpack.c.h.b16 %v9763
      %v9956 = vunpack.c.l.b16 %v9764
      %v9957 = vunpack.c.h.b16 %v9764
      %v9958 = vunpack.c.l.b16 %v9765
      %v9959 = vunpack.c.h.b16 %v9765
      %v9960 = vunpack.c.l.b16 %v9766
      %v9961 = vunpack.c.h.b16 %v9766
      %v9962 = vunpack.c.l.b16 %v9767
      %v9963 = vunpack.c.h.b16 %v9767
      %v9964 = vunpack.c.l.b16 %v9768
      %v9965 = vunpack.c.h.b16 %v9768
      %v9966 = vunpack.c.l.b16 %v9769
      %v9967 = vunpack.c.h.b16 %v9769
      %v9968 = vunpack.c.l.b16 %v9770
      %v9969 = vunpack.c.h.b16 %v9770
      %v9970 = vunpack.c.l.b16 %v9771
      %v9971 = vunpack.c.h.b16 %v9771
      %v9972 = vunpack.c.l.b16 %v9772
      %v9973 = vunpack.c.h.b16 %v9772
      %v9974 = vunpack.c.l.b16 %v9773
      %v9975 = vunpack.c.h.b16 %v9773
      %v9976 = vunpack.c.l.b16 %v9774
      %v9977 = vunpack.c.h.b16 %v9774
      %v9978 = vunpack.c.l.b16 %v9775
      %v9979 = vunpack.c.h.b16 %v9775
      %v9980 = vunpack.c.l.b16 %v9776
      %v9981 = vunpack.c.h.b16 %v9776
      %v9982 = vunpack.c.l.b16 %v9777
      %v9983 = vunpack.c.h.b16 %v9777
      %v9984 = vunpack.c.l.b16 %v9778
      %v9985 = vunpack.c.h.b16 %v9778
      %v9986 = vunpack.c.l.b16 %v9779
      %v9987 = vunpack.c.h.b16 %v9779
      %v9988 = vunpack.c.l.b16 %v9780
      %v9989 = vunpack.c.h.b16 %v9780
      %v9990 = vunpack.c.l.b16 %v9781
      %v9991 = vunpack.c.h.b16 %v9781
      %v9992 = vunpack.c.l.b16 %v9782
      %v9993 = vunpack.c.h.b16 %v9782
      %v9994 = vunpack.c.l.b16 %v9783
      %v9995 = vunpack.c.h.b16 %v9783
      %v9996 = vunpack.c.l.b16 %v9784
      %v9997 = vunpack.c.h.b16 %v9784
      %v9998 = vunpack.c.l.b16 %v9785
      %v9999 = vunpack.c.h.b16 %v9785
      %v10000 = vunpack.c.l.b16 %v9786
      %v10001 = vunpack.c.h.b16 %v9786
      %v10002 = vunpack.c.l.b16 %v9787
      %v10003 = vunpack.c.h.b16 %v9787
      %v10004 = vunpack.c.l.b16 %v9788
      %v10005 = vunpack.c.h.b16 %v9788
      %v10006 = vunpack.c.l.b16 %v9789
      %v10007 = vunpack.c.h.b16 %v9789
      %v10008 = vunpack.c.l.b16 %v9790
      %v10009 = vunpack.c.h.b16 %v9790
      %v10010 = vunpack.c.l.b16 %v9791
      %v10011 = vunpack.c.h.b16 %v9791
      %v10012 = vunpack.c.l.b16 %v9792
      %v10013 = vunpack.c.h.b16 %v9792
      %v10014 = vunpack.c.l.b16 %v9793
      %v10015 = vunpack.c.h.b16 %v9793
      %v10016 = vpack.c.b16 %v9896, %v9892
      %v10017 = vpack.c.b16 %v9897, %v9893
      %v10018 = vpack.c.b16 %v9898, %v9894
      %v10019 = vpack.c.b16 %v9899, %v9895
      %v10020 = vpack.c.b16 %v9904, %v9900
      %v10021 = vpack.c.b16 %v9905, %v9901
      %v10022 = vpack.c.b16 %v9906, %v9902
      %v10023 = vpack.c.b16 %v9907, %v9903
      %v10024 = vpack.c.b16 %v9912, %v9908
      %v10025 = vpack.c.b16 %v9913, %v9909
      %v10026 = vpack.c.b16 %v9914, %v9910
      %v10027 = vpack.c.b16 %v9915, %v9911
      %v10028 = vpack.c.b16 %v9920, %v9916
      %v10029 = vpack.c.b16 %v9921, %v9917
      %v10030 = vpack.c.b16 %v9922, %v9918
      %v10031 = vpack.c.b16 %v9923, %v9919
      %v10032 = vpack.c.b16 %v9928, %v9924
      %v10033 = vpack.c.b16 %v9929, %v9925
      %v10034 = vpack.c.b16 %v9930, %v9926
      %v10035 = vpack.c.b16 %v9931, %v9927
      %v10036 = vpack.c.b16 %v9936, %v9932
      %v10037 = vpack.c.b16 %v9937, %v9933
      %v10038 = vpack.c.b16 %v9938, %v9934
      %v10039 = vpack.c.b16 %v9939, %v9935
      %v10040 = vpack.c.b16 %v9944, %v9940
      %v10041 = vpack.c.b16 %v9945, %v9941
      %v10042 = vpack.c.b16 %v9946, %v9942
      %v10043 = vpack.c.b16 %v9947, %v9943
      %v10044 = vpack.c.b16 %v9952, %v9948
      %v10045 = vpack.c.b16 %v9953, %v9949
      %v10046 = vpack.c.b16 %v9954, %v9950
      %v10047 = vpack.c.b16 %v9955, %v9951
      %v10048 = vpack.c.b16 %v9960, %v9956
      %v10049 = vpack.c.b16 %v9961, %v9957
      %v10050 = vpack.c.b16 %v9962, %v9958
      %v10051 = vpack.c.b16 %v9963, %v9959
      %v10052 = vpack.c.b16 %v9968, %v9964
      %v10053 = vpack.c.b16 %v9969, %v9965
      %v10054 = vpack.c.b16 %v9970, %v9966
      %v10055 = vpack.c.b16 %v9971, %v9967
      %v10056 = vpack.c.b16 %v9976, %v9972
      %v10057 = vpack.c.b16 %v9977, %v9973
      %v10058 = vpack.c.b16 %v9978, %v9974
      %v10059 = vpack.c.b16 %v9979, %v9975
      %v10060 = vpack.c.b16 %v9984, %v9980
      %v10061 = vpack.c.b16 %v9985, %v9981
      %v10062 = vpack.c.b16 %v9986, %v9982
      %v10063 = vpack.c.b16 %v9987, %v9983
      %v10064 = vpack.c.b16 %v9992, %v9988
      %v10065 = vpack.c.b16 %v9993, %v9989
      %v10066 = vpack.c.b16 %v9994, %v9990
      %v10067 = vpack.c.b16 %v9995, %v9991
      %v10068 = vpack.c.b16 %v10000, %v9996
      %v10069 = vpack.c.b16 %v10001, %v9997
      %v10070 = vpack.c.b16 %v10002, %v9998
      %v10071 = vpack.c.b16 %v10003, %v9999
      %v10072 = vpack.c.b16 %v10008, %v10004
      %v10073 = vpack.c.b16 %v10009, %v10005
      %v10074 = vpack.c.b16 %v10010, %v10006
      %v10075 = vpack.c.b16 %v10011, %v10007
      %v10076 = vpack.c.b16 %v10012, %v10012
      %v10077 = vpack.c.b16 %v10013, %v10013
      %v10078 = vpack.c.b16 %v10014, %v10014
      %v10079 = vpack.c.b16 %v10015, %v10015
      %v10141 = vsel %vm594, %v9819, 0
      %v10144 = vsel %vm594, %v9821, 0
      %v10147 = vsel %vm594, %v9823, 0
      %v10150 = vsel %vm594, %v9825, 0
      %v10153 = vand.u32 %v10076, %v610
      %v10156 = vand.u32 %v10077, %v610
      %v10159 = vand.u32 %v10078, %v610
      %v10162 = vand.u32 %v10079, %v610
      %10164 = vmatprep.subr.bf16.mxu0 %v10017
      %10165 = vmatpush1.bf16.msra.mxu0 %v10016
      %10166 = vmatprep.subr.bf16.mxu0 %v10021
      %10167 = vmatpush1.bf16.msra.mxu0 %v10020
      %10168 = vmatprep.subr.bf16.mxu0 %v10025
      %10169 = vmatpush1.bf16.msra.mxu0 %v10024
      %10170 = vmatprep.subr.bf16.mxu0 %v10029
      %10171 = vmatpush1.bf16.msra.mxu0 %v10028
      %10172 = vmatprep.subr.bf16.mxu0 %v10033
      %10173 = vmatpush1.bf16.msra.mxu0 %v10032
      %10174 = vmatprep.subr.bf16.mxu0 %v10037
      %10175 = vmatpush1.bf16.msra.mxu0 %v10036
      %10176 = vmatprep.subr.bf16.mxu0 %v10041
      %10177 = vmatpush1.bf16.msra.mxu0 %v10040
      %10178 = vmatprep.subr.bf16.mxu0 %v10045
      %10179 = vmatpush1.bf16.msra.mxu0 %v10044
      %10180 = vmatprep.subr.bf16.mxu0 %v10049
      %10181 = vmatpush1.bf16.msra.mxu0 %v10048
      %10182 = vmatprep.subr.bf16.mxu0 %v10053
      %10183 = vmatpush1.bf16.msra.mxu0 %v10052
      %10184 = vmatprep.subr.bf16.mxu0 %v10057
      %10185 = vmatpush1.bf16.msra.mxu0 %v10056
      %10186 = vmatprep.subr.bf16.mxu0 %v10061
      %10187 = vmatpush1.bf16.msra.mxu0 %v10060
      %10188 = vmatprep.subr.bf16.mxu0 %v10065
      %10189 = vmatpush1.bf16.msra.mxu0 %v10064
      %10190 = vmatprep.subr.bf16.mxu0 %v10069
      %10191 = vmatpush1.bf16.msra.mxu0 %v10068
      %10192 = vmatprep.subr.bf16.mxu0 %v10073
      %10193 = vmatpush1.bf16.msra.mxu0 %v10072
      %10194 = vmatprep.subr.bf16.mxu0 %v10156
      %10195 = vmatpush1.bf16.msra.mxu0 %v10153
      %10196 = vmatprep.mubr.bf16.mxu0 %v10141
      %10197 = vmatmul.mubr.bf16.gmra.mrb[0].mxu0 %v9818
      %v10198 = vpop.f32.mrb[0].mxu0
      %v10199 = vadd.f32 0.0, %v10198
      %v10200 = vpop.f32.mrb[0].mxu0
      %v10201 = vadd.f32 0.0, %v10200
      %v10202 = vpop.f32.mrb[0].mxu0
      %v10203 = vadd.f32 0.0, %v10202
      %v10204 = vpop.f32.mrb[0].mxu0
      %v10205 = vadd.f32 0.0, %v10204
      %10206 = vmatprep.mubr.bf16.mxu0 %v10144
      %10207 = vmatmul.mubr.bf16.gmra.mrb[0].mxu0 %v9820
      %v10208 = vpop.f32.mrb[0].mxu0
      %v10209 = vadd.f32 0.0, %v10208
      %v10210 = vpop.f32.mrb[0].mxu0
      %v10211 = vadd.f32 0.0, %v10210
      %v10212 = vpop.f32.mrb[0].mxu0
      %v10213 = vadd.f32 0.0, %v10212
      %v10214 = vpop.f32.mrb[0].mxu0
      %v10215 = vadd.f32 0.0, %v10214
      %10216 = vmatprep.mubr.bf16.mxu0 %v10147
      %10217 = vmatmul.mubr.bf16.gmra.mrb[0].mxu0 %v9822
      %v10218 = vpop.f32.mrb[0].mxu0
      %v10219 = vadd.f32 0.0, %v10218
      %v10220 = vpop.f32.mrb[0].mxu0
      %v10221 = vadd.f32 0.0, %v10220
      %v10222 = vpop.f32.mrb[0].mxu0
      %v10223 = vadd.f32 0.0, %v10222
      %v10224 = vpop.f32.mrb[0].mxu0
      %v10225 = vadd.f32 0.0, %v10224
      %10226 = vmatprep.mubr.bf16.mxu0 %v10150
      %10227 = vmatmul.mubr.bf16.gmra.mrb[0].mxu0 %v9824
      %v10228 = vpop.f32.mrb[0].mxu0
      %v10229 = vadd.f32 0.0, %v10228
      %v10230 = vpop.f32.mrb[0].mxu0
      %v10231 = vadd.f32 0.0, %v10230
      %v10232 = vpop.f32.mrb[0].mxu0
      %v10233 = vadd.f32 0.0, %v10232
      %v10234 = vpop.f32.mrb[0].mxu0
      %v10235 = vadd.f32 0.0, %v10234
      %10236 = vdwg.mxu0
      %10237 = vmatprep.subr.bf16.mxu0 %v10019
      %10238 = vmatpush1.bf16.msra.mxu0 %v10018
      %10239 = vmatprep.subr.bf16.mxu0 %v10023
      %10240 = vmatpush1.bf16.msra.mxu0 %v10022
      %10241 = vmatprep.subr.bf16.mxu0 %v10027
      %10242 = vmatpush1.bf16.msra.mxu0 %v10026
      %10243 = vmatprep.subr.bf16.mxu0 %v10031
      %10244 = vmatpush1.bf16.msra.mxu0 %v10030
      %10245 = vmatprep.subr.bf16.mxu0 %v10035
      %10246 = vmatpush1.bf16.msra.mxu0 %v10034
      %10247 = vmatprep.subr.bf16.mxu0 %v10039
      %10248 = vmatpush1.bf16.msra.mxu0 %v10038
      %10249 = vmatprep.subr.bf16.mxu0 %v10043
      %10250 = vmatpush1.bf16.msra.mxu0 %v10042
      %10251 = vmatprep.subr.bf16.mxu0 %v10047
      %10252 = vmatpush1.bf16.msra.mxu0 %v10046
      %10253 = vmatprep.subr.bf16.mxu0 %v10051
      %10254 = vmatpush1.bf16.msra.mxu0 %v10050
      %10255 = vmatprep.subr.bf16.mxu0 %v10055
      %10256 = vmatpush1.bf16.msra.mxu0 %v10054
      %10257 = vmatprep.subr.bf16.mxu0 %v10059
      %10258 = vmatpush1.bf16.msra.mxu0 %v10058
      %10259 = vmatprep.subr.bf16.mxu0 %v10063
      %10260 = vmatpush1.bf16.msra.mxu0 %v10062
      %10261 = vmatprep.subr.bf16.mxu0 %v10067
      %10262 = vmatpush1.bf16.msra.mxu0 %v10066
      %10263 = vmatprep.subr.bf16.mxu0 %v10071
      %10264 = vmatpush1.bf16.msra.mxu0 %v10070
      %10265 = vmatprep.subr.bf16.mxu0 %v10075
      %10266 = vmatpush1.bf16.msra.mxu0 %v10074
      %10267 = vmatprep.subr.bf16.mxu0 %v10162
      %10268 = vmatpush1.bf16.msra.mxu0 %v10159
      %10269 = vmatprep.mubr.bf16.mxu0 %v10141
      %10270 = vmatmul.mubr.bf16.gmra.mrb[0].mxu0 %v9818
      %v10271 = vpop.f32.mrb[0].mxu0
      %v10272 = vadd.f32 0.0, %v10271
      %v10273 = vpop.f32.mrb[0].mxu0
      %v10274 = vadd.f32 0.0, %v10273
      %v10275 = vpop.f32.mrb[0].mxu0
      %v10276 = vadd.f32 0.0, %v10275
      %v10277 = vpop.f32.mrb[0].mxu0
      %v10278 = vadd.f32 0.0, %v10277
      %10279 = vmatprep.mubr.bf16.mxu0 %v10144
      %10280 = vmatmul.mubr.bf16.gmra.mrb[0].mxu0 %v9820
      %v10281 = vpop.f32.mrb[0].mxu0
      %v10282 = vadd.f32 0.0, %v10281
      %v10283 = vpop.f32.mrb[0].mxu0
      %v10284 = vadd.f32 0.0, %v10283
      %v10285 = vpop.f32.mrb[0].mxu0
      %v10286 = vadd.f32 0.0, %v10285
      %v10287 = vpop.f32.mrb[0].mxu0
      %v10288 = vadd.f32 0.0, %v10287
      %10289 = vmatprep.mubr.bf16.mxu0 %v10147
      %10290 = vmatmul.mubr.bf16.gmra.mrb[0].mxu0 %v9822
      %v10291 = vpop.f32.mrb[0].mxu0
      %v10292 = vadd.f32 0.0, %v10291
      %v10293 = vpop.f32.mrb[0].mxu0
      %v10294 = vadd.f32 0.0, %v10293
      %v10295 = vpop.f32.mrb[0].mxu0
      %v10296 = vadd.f32 0.0, %v10295
      %v10297 = vpop.f32.mrb[0].mxu0
      %v10298 = vadd.f32 0.0, %v10297
      %10299 = vmatprep.mubr.bf16.mxu0 %v10150
      %10300 = vmatmul.mubr.bf16.gmra.mrb[0].mxu0 %v9824
      %v10301 = vpop.f32.mrb[0].mxu0
      %v10302 = vadd.f32 0.0, %v10301
      %v10303 = vpop.f32.mrb[0].mxu0
      %v10304 = vadd.f32 0.0, %v10303
      %v10305 = vpop.f32.mrb[0].mxu0
      %v10306 = vadd.f32 0.0, %v10305
      %v10307 = vpop.f32.mrb[0].mxu0
      %v10308 = vadd.f32 0.0, %v10307
      %10309 = vdwg.mxu0
      %10318 = vrot.lane.b32.xlu0 %v10199, 112
      %v10319 = vpop.permute.xlu0 %10318
      %10320 = vrot.lane.b32.xlu0 %v10203, 112
      %v10321 = vpop.permute.xlu0 %10320
      %10322 = vrot.lane.b32.xlu0 %v10209, 112
      %v10323 = vpop.permute.xlu0 %10322
      %10324 = vrot.lane.b32.xlu0 %v10213, 112
      %v10325 = vpop.permute.xlu0 %10324
      %10326 = vrot.lane.b32.xlu0 %v10219, 112
      %v10327 = vpop.permute.xlu0 %10326
      %10328 = vrot.lane.b32.xlu0 %v10223, 112
      %v10329 = vpop.permute.xlu0 %10328
      %10330 = vrot.lane.b32.xlu0 %v10229, 112
      %v10331 = vpop.permute.xlu0 %10330
      %10332 = vrot.lane.b32.xlu0 %v10233, 112
      %v10333 = vpop.permute.xlu0 %10332
      %v10342 = vmax.f32 %v10199, %v10319
      %v10343 = vmax.f32 %v10203, %v10321
      %v10344 = vmax.f32 %v10209, %v10323
      %v10345 = vmax.f32 %v10213, %v10325
      %v10346 = vmax.f32 %v10219, %v10327
      %v10347 = vmax.f32 %v10223, %v10329
      %v10348 = vmax.f32 %v10229, %v10331
      %v10349 = vmax.f32 %v10233, %v10333
      %10350 = vrot.lane.b32.xlu0 %v10199, 96
      %v10351 = vpop.permute.xlu0 %10350
      %10352 = vrot.lane.b32.xlu0 %v10203, 96
      %v10353 = vpop.permute.xlu0 %10352
      %10354 = vrot.lane.b32.xlu0 %v10209, 96
      %v10355 = vpop.permute.xlu0 %10354
      %10356 = vrot.lane.b32.xlu0 %v10213, 96
      %v10357 = vpop.permute.xlu0 %10356
      %10358 = vrot.lane.b32.xlu0 %v10219, 96
      %v10359 = vpop.permute.xlu0 %10358
      %10360 = vrot.lane.b32.xlu0 %v10223, 96
      %v10361 = vpop.permute.xlu0 %10360
      %10362 = vrot.lane.b32.xlu0 %v10229, 96
      %v10363 = vpop.permute.xlu0 %10362
      %10364 = vrot.lane.b32.xlu0 %v10233, 96
      %v10365 = vpop.permute.xlu0 %10364
      %v10374 = vmax.f32 %v10342, %v10351
      %v10375 = vmax.f32 %v10343, %v10353
      %v10376 = vmax.f32 %v10344, %v10355
      %v10377 = vmax.f32 %v10345, %v10357
      %v10378 = vmax.f32 %v10346, %v10359
      %v10379 = vmax.f32 %v10347, %v10361
      %v10380 = vmax.f32 %v10348, %v10363
      %v10381 = vmax.f32 %v10349, %v10365
      %10382 = vrot.lane.b32.xlu0 %v10199, 80
      %v10383 = vpop.permute.xlu0 %10382
      %10384 = vrot.lane.b32.xlu0 %v10203, 80
      %v10385 = vpop.permute.xlu0 %10384
      %10386 = vrot.lane.b32.xlu0 %v10209, 80
      %v10387 = vpop.permute.xlu0 %10386
      %10388 = vrot.lane.b32.xlu0 %v10213, 80
      %v10389 = vpop.permute.xlu0 %10388
      %10390 = vrot.lane.b32.xlu0 %v10219, 80
      %v10391 = vpop.permute.xlu0 %10390
      %10392 = vrot.lane.b32.xlu0 %v10223, 80
      %v10393 = vpop.permute.xlu0 %10392
      %10394 = vrot.lane.b32.xlu0 %v10229, 80
      %v10395 = vpop.permute.xlu0 %10394
      %10396 = vrot.lane.b32.xlu0 %v10233, 80
      %v10397 = vpop.permute.xlu0 %10396
      %v10406 = vmax.f32 %v10374, %v10383
      %v10407 = vmax.f32 %v10375, %v10385
      %v10408 = vmax.f32 %v10376, %v10387
      %v10409 = vmax.f32 %v10377, %v10389
      %v10410 = vmax.f32 %v10378, %v10391
      %v10411 = vmax.f32 %v10379, %v10393
      %v10412 = vmax.f32 %v10380, %v10395
      %v10413 = vmax.f32 %v10381, %v10397
      %10414 = vrot.lane.b32.xlu0 %v10199, 64
      %v10415 = vpop.permute.xlu0 %10414
      %10416 = vrot.lane.b32.xlu0 %v10203, 64
      %v10417 = vpop.permute.xlu0 %10416
      %10418 = vrot.lane.b32.xlu0 %v10209, 64
      %v10419 = vpop.permute.xlu0 %10418
      %10420 = vrot.lane.b32.xlu0 %v10213, 64
      %v10421 = vpop.permute.xlu0 %10420
      %10422 = vrot.lane.b32.xlu0 %v10219, 64
      %v10423 = vpop.permute.xlu0 %10422
      %10424 = vrot.lane.b32.xlu0 %v10223, 64
      %v10425 = vpop.permute.xlu0 %10424
      %10426 = vrot.lane.b32.xlu0 %v10229, 64
      %v10427 = vpop.permute.xlu0 %10426
      %10428 = vrot.lane.b32.xlu0 %v10233, 64
      %v10429 = vpop.permute.xlu0 %10428
      %v10438 = vmax.f32 %v10406, %v10415
      %v10439 = vmax.f32 %v10407, %v10417
      %v10440 = vmax.f32 %v10408, %v10419
      %v10441 = vmax.f32 %v10409, %v10421
      %v10442 = vmax.f32 %v10410, %v10423
      %v10443 = vmax.f32 %v10411, %v10425
      %v10444 = vmax.f32 %v10412, %v10427
      %v10445 = vmax.f32 %v10413, %v10429
      %10446 = vrot.lane.b32.xlu0 %v10199, 48
      %v10447 = vpop.permute.xlu0 %10446
      %10448 = vrot.lane.b32.xlu0 %v10203, 48
      %v10449 = vpop.permute.xlu0 %10448
      %10450 = vrot.lane.b32.xlu0 %v10209, 48
      %v10451 = vpop.permute.xlu0 %10450
      %10452 = vrot.lane.b32.xlu0 %v10213, 48
      %v10453 = vpop.permute.xlu0 %10452
      %10454 = vrot.lane.b32.xlu0 %v10219, 48
      %v10455 = vpop.permute.xlu0 %10454
      %10456 = vrot.lane.b32.xlu0 %v10223, 48
      %v10457 = vpop.permute.xlu0 %10456
      %10458 = vrot.lane.b32.xlu0 %v10229, 48
      %v10459 = vpop.permute.xlu0 %10458
      %10460 = vrot.lane.b32.xlu0 %v10233, 48
      %v10461 = vpop.permute.xlu0 %10460
      %v10470 = vmax.f32 %v10438, %v10447
      %v10471 = vmax.f32 %v10439, %v10449
      %v10472 = vmax.f32 %v10440, %v10451
      %v10473 = vmax.f32 %v10441, %v10453
      %v10474 = vmax.f32 %v10442, %v10455
      %v10475 = vmax.f32 %v10443, %v10457
      %v10476 = vmax.f32 %v10444, %v10459
      %v10477 = vmax.f32 %v10445, %v10461
      %10478 = vrot.lane.b32.xlu0 %v10199, 32
      %v10479 = vpop.permute.xlu0 %10478
      %10480 = vrot.lane.b32.xlu0 %v10203, 32
      %v10481 = vpop.permute.xlu0 %10480
      %10482 = vrot.lane.b32.xlu0 %v10209, 32
      %v10483 = vpop.permute.xlu0 %10482
      %10484 = vrot.lane.b32.xlu0 %v10213, 32
      %v10485 = vpop.permute.xlu0 %10484
      %10486 = vrot.lane.b32.xlu0 %v10219, 32
      %v10487 = vpop.permute.xlu0 %10486
      %10488 = vrot.lane.b32.xlu0 %v10223, 32
      %v10489 = vpop.permute.xlu0 %10488
      %10490 = vrot.lane.b32.xlu0 %v10229, 32
      %v10491 = vpop.permute.xlu0 %10490
      %10492 = vrot.lane.b32.xlu0 %v10233, 32
      %v10493 = vpop.permute.xlu0 %10492
      %v10502 = vmax.f32 %v10470, %v10479
      %v10503 = vmax.f32 %v10471, %v10481
      %v10504 = vmax.f32 %v10472, %v10483
      %v10505 = vmax.f32 %v10473, %v10485
      %v10506 = vmax.f32 %v10474, %v10487
      %v10507 = vmax.f32 %v10475, %v10489
      %v10508 = vmax.f32 %v10476, %v10491
      %v10509 = vmax.f32 %v10477, %v10493
      %10510 = vrot.lane.b32.xlu0 %v10199, 16
      %v10511 = vpop.permute.xlu0 %10510
      %10512 = vrot.lane.b32.xlu0 %v10203, 16
      %v10513 = vpop.permute.xlu0 %10512
      %10514 = vrot.lane.b32.xlu0 %v10209, 16
      %v10515 = vpop.permute.xlu0 %10514
      %10516 = vrot.lane.b32.xlu0 %v10213, 16
      %v10517 = vpop.permute.xlu0 %10516
      %10518 = vrot.lane.b32.xlu0 %v10219, 16
      %v10519 = vpop.permute.xlu0 %10518
      %10520 = vrot.lane.b32.xlu0 %v10223, 16
      %v10521 = vpop.permute.xlu0 %10520
      %10522 = vrot.lane.b32.xlu0 %v10229, 16
      %v10523 = vpop.permute.xlu0 %10522
      %10524 = vrot.lane.b32.xlu0 %v10233, 16
      %v10525 = vpop.permute.xlu0 %10524
      %v10534 = vmax.f32 %v10502, %v10511
      %v10535 = vmax.f32 %v10503, %v10513
      %v10536 = vmax.f32 %v10504, %v10515
      %v10537 = vmax.f32 %v10505, %v10517
      %v10538 = vmax.f32 %v10506, %v10519
      %v10539 = vmax.f32 %v10507, %v10521
      %v10540 = vmax.f32 %v10508, %v10523
      %v10541 = vmax.f32 %v10509, %v10525
      %v10542 = vmax.f32 %v10534, %v10201
      %v10543 = vmax.f32 %v10535, %v10205
      %v10544 = vmax.f32 %v10536, %v10211
      %v10545 = vmax.f32 %v10537, %v10215
      %v10546 = vmax.f32 %v10538, %v10221
      %v10547 = vmax.f32 %v10539, %v10225
      %v10548 = vmax.f32 %v10540, %v10231
      %v10549 = vmax.f32 %v10541, %v10235
      %10558 = vrot.lane.b32.xlu0 %v10201, 112
      %v10559 = vpop.permute.xlu0 %10558
      %10560 = vrot.lane.b32.xlu0 %v10205, 112
      %v10561 = vpop.permute.xlu0 %10560
      %10562 = vrot.lane.b32.xlu0 %v10211, 112
      %v10563 = vpop.permute.xlu0 %10562
      %10564 = vrot.lane.b32.xlu0 %v10215, 112
      %v10565 = vpop.permute.xlu0 %10564
      %10566 = vrot.lane.b32.xlu0 %v10221, 112
      %v10567 = vpop.permute.xlu0 %10566
      %10568 = vrot.lane.b32.xlu0 %v10225, 112
      %v10569 = vpop.permute.xlu0 %10568
      %10570 = vrot.lane.b32.xlu0 %v10231, 112
      %v10571 = vpop.permute.xlu0 %10570
      %10572 = vrot.lane.b32.xlu0 %v10235, 112
      %v10573 = vpop.permute.xlu0 %10572
      %v10582 = vmax.f32 %v10542, %v10559
      %v10583 = vmax.f32 %v10543, %v10561
      %v10584 = vmax.f32 %v10544, %v10563
      %v10585 = vmax.f32 %v10545, %v10565
      %v10586 = vmax.f32 %v10546, %v10567
      %v10587 = vmax.f32 %v10547, %v10569
      %v10588 = vmax.f32 %v10548, %v10571
      %v10589 = vmax.f32 %v10549, %v10573
      %10590 = vrot.lane.b32.xlu0 %v10201, 96
      %v10591 = vpop.permute.xlu0 %10590
      %10592 = vrot.lane.b32.xlu0 %v10205, 96
      %v10593 = vpop.permute.xlu0 %10592
      %10594 = vrot.lane.b32.xlu0 %v10211, 96
      %v10595 = vpop.permute.xlu0 %10594
      %10596 = vrot.lane.b32.xlu0 %v10215, 96
      %v10597 = vpop.permute.xlu0 %10596
      %10598 = vrot.lane.b32.xlu0 %v10221, 96
      %v10599 = vpop.permute.xlu0 %10598
      %10600 = vrot.lane.b32.xlu0 %v10225, 96
      %v10601 = vpop.permute.xlu0 %10600
      %10602 = vrot.lane.b32.xlu0 %v10231, 96
      %v10603 = vpop.permute.xlu0 %10602
      %10604 = vrot.lane.b32.xlu0 %v10235, 96
      %v10605 = vpop.permute.xlu0 %10604
      %v10614 = vmax.f32 %v10582, %v10591
      %v10615 = vmax.f32 %v10583, %v10593
      %v10616 = vmax.f32 %v10584, %v10595
      %v10617 = vmax.f32 %v10585, %v10597
      %v10618 = vmax.f32 %v10586, %v10599
      %v10619 = vmax.f32 %v10587, %v10601
      %v10620 = vmax.f32 %v10588, %v10603
      %v10621 = vmax.f32 %v10589, %v10605
      %10622 = vrot.lane.b32.xlu0 %v10201, 80
      %v10623 = vpop.permute.xlu0 %10622
      %10624 = vrot.lane.b32.xlu0 %v10205, 80
      %v10625 = vpop.permute.xlu0 %10624
      %10626 = vrot.lane.b32.xlu0 %v10211, 80
      %v10627 = vpop.permute.xlu0 %10626
      %10628 = vrot.lane.b32.xlu0 %v10215, 80
      %v10629 = vpop.permute.xlu0 %10628
      %10630 = vrot.lane.b32.xlu0 %v10221, 80
      %v10631 = vpop.permute.xlu0 %10630
      %10632 = vrot.lane.b32.xlu0 %v10225, 80
      %v10633 = vpop.permute.xlu0 %10632
      %10634 = vrot.lane.b32.xlu0 %v10231, 80
      %v10635 = vpop.permute.xlu0 %10634
      %10636 = vrot.lane.b32.xlu0 %v10235, 80
      %v10637 = vpop.permute.xlu0 %10636
      %v10646 = vmax.f32 %v10614, %v10623
      %v10647 = vmax.f32 %v10615, %v10625
      %v10648 = vmax.f32 %v10616, %v10627
      %v10649 = vmax.f32 %v10617, %v10629
      %v10650 = vmax.f32 %v10618, %v10631
      %v10651 = vmax.f32 %v10619, %v10633
      %v10652 = vmax.f32 %v10620, %v10635
      %v10653 = vmax.f32 %v10621, %v10637
      %10654 = vrot.lane.b32.xlu0 %v10201, 64
      %v10655 = vpop.permute.xlu0 %10654
      %10656 = vrot.lane.b32.xlu0 %v10205, 64
      %v10657 = vpop.permute.xlu0 %10656
      %10658 = vrot.lane.b32.xlu0 %v10211, 64
      %v10659 = vpop.permute.xlu0 %10658
      %10660 = vrot.lane.b32.xlu0 %v10215, 64
      %v10661 = vpop.permute.xlu0 %10660
      %10662 = vrot.lane.b32.xlu0 %v10221, 64
      %v10663 = vpop.permute.xlu0 %10662
      %10664 = vrot.lane.b32.xlu0 %v10225, 64
      %v10665 = vpop.permute.xlu0 %10664
      %10666 = vrot.lane.b32.xlu0 %v10231, 64
      %v10667 = vpop.permute.xlu0 %10666
      %10668 = vrot.lane.b32.xlu0 %v10235, 64
      %v10669 = vpop.permute.xlu0 %10668
      %v10678 = vmax.f32 %v10646, %v10655
      %v10679 = vmax.f32 %v10647, %v10657
      %v10680 = vmax.f32 %v10648, %v10659
      %v10681 = vmax.f32 %v10649, %v10661
      %v10682 = vmax.f32 %v10650, %v10663
      %v10683 = vmax.f32 %v10651, %v10665
      %v10684 = vmax.f32 %v10652, %v10667
      %v10685 = vmax.f32 %v10653, %v10669
      %10686 = vrot.lane.b32.xlu0 %v10201, 48
      %v10687 = vpop.permute.xlu0 %10686
      %10688 = vrot.lane.b32.xlu0 %v10205, 48
      %v10689 = vpop.permute.xlu0 %10688
      %10690 = vrot.lane.b32.xlu0 %v10211, 48
      %v10691 = vpop.permute.xlu0 %10690
      %10692 = vrot.lane.b32.xlu0 %v10215, 48
      %v10693 = vpop.permute.xlu0 %10692
      %10694 = vrot.lane.b32.xlu0 %v10221, 48
      %v10695 = vpop.permute.xlu0 %10694
      %10696 = vrot.lane.b32.xlu0 %v10225, 48
      %v10697 = vpop.permute.xlu0 %10696
      %10698 = vrot.lane.b32.xlu0 %v10231, 48
      %v10699 = vpop.permute.xlu0 %10698
      %10700 = vrot.lane.b32.xlu0 %v10235, 48
      %v10701 = vpop.permute.xlu0 %10700
      %v10710 = vmax.f32 %v10678, %v10687
      %v10711 = vmax.f32 %v10679, %v10689
      %v10712 = vmax.f32 %v10680, %v10691
      %v10713 = vmax.f32 %v10681, %v10693
      %v10714 = vmax.f32 %v10682, %v10695
      %v10715 = vmax.f32 %v10683, %v10697
      %v10716 = vmax.f32 %v10684, %v10699
      %v10717 = vmax.f32 %v10685, %v10701
      %10718 = vrot.lane.b32.xlu0 %v10201, 32
      %v10719 = vpop.permute.xlu0 %10718
      %10720 = vrot.lane.b32.xlu0 %v10205, 32
      %v10721 = vpop.permute.xlu0 %10720
      %10722 = vrot.lane.b32.xlu0 %v10211, 32
      %v10723 = vpop.permute.xlu0 %10722
      %10724 = vrot.lane.b32.xlu0 %v10215, 32
      %v10725 = vpop.permute.xlu0 %10724
      %10726 = vrot.lane.b32.xlu0 %v10221, 32
      %v10727 = vpop.permute.xlu0 %10726
      %10728 = vrot.lane.b32.xlu0 %v10225, 32
      %v10729 = vpop.permute.xlu0 %10728
      %10730 = vrot.lane.b32.xlu0 %v10231, 32
      %v10731 = vpop.permute.xlu0 %10730
      %10732 = vrot.lane.b32.xlu0 %v10235, 32
      %v10733 = vpop.permute.xlu0 %10732
      %v10742 = vmax.f32 %v10710, %v10719
      %v10743 = vmax.f32 %v10711, %v10721
      %v10744 = vmax.f32 %v10712, %v10723
      %v10745 = vmax.f32 %v10713, %v10725
      %v10746 = vmax.f32 %v10714, %v10727
      %v10747 = vmax.f32 %v10715, %v10729
      %v10748 = vmax.f32 %v10716, %v10731
      %v10749 = vmax.f32 %v10717, %v10733
      %10750 = vrot.lane.b32.xlu0 %v10201, 16
      %v10751 = vpop.permute.xlu0 %10750
      %10752 = vrot.lane.b32.xlu0 %v10205, 16
      %v10753 = vpop.permute.xlu0 %10752
      %10754 = vrot.lane.b32.xlu0 %v10211, 16
      %v10755 = vpop.permute.xlu0 %10754
      %10756 = vrot.lane.b32.xlu0 %v10215, 16
      %v10757 = vpop.permute.xlu0 %10756
      %10758 = vrot.lane.b32.xlu0 %v10221, 16
      %v10759 = vpop.permute.xlu0 %10758
      %10760 = vrot.lane.b32.xlu0 %v10225, 16
      %v10761 = vpop.permute.xlu0 %10760
      %10762 = vrot.lane.b32.xlu0 %v10231, 16
      %v10763 = vpop.permute.xlu0 %10762
      %10764 = vrot.lane.b32.xlu0 %v10235, 16
      %v10765 = vpop.permute.xlu0 %10764
      %v10774 = vmax.f32 %v10742, %v10751
      %v10775 = vmax.f32 %v10743, %v10753
      %v10776 = vmax.f32 %v10744, %v10755
      %v10777 = vmax.f32 %v10745, %v10757
      %v10778 = vmax.f32 %v10746, %v10759
      %v10779 = vmax.f32 %v10747, %v10761
      %v10780 = vmax.f32 %v10748, %v10763
      %v10781 = vmax.f32 %v10749, %v10765
      %v10782 = vmax.f32 %v10774, %v10272
      %v10783 = vmax.f32 %v10775, %v10276
      %v10784 = vmax.f32 %v10776, %v10282
      %v10785 = vmax.f32 %v10777, %v10286
      %v10786 = vmax.f32 %v10778, %v10292
      %v10787 = vmax.f32 %v10779, %v10296
      %v10788 = vmax.f32 %v10780, %v10302
      %v10789 = vmax.f32 %v10781, %v10306
      %10798 = vrot.lane.b32.xlu0 %v10272, 112
      %v10799 = vpop.permute.xlu0 %10798
      %10800 = vrot.lane.b32.xlu0 %v10276, 112
      %v10801 = vpop.permute.xlu0 %10800
      %10802 = vrot.lane.b32.xlu0 %v10282, 112
      %v10803 = vpop.permute.xlu0 %10802
      %10804 = vrot.lane.b32.xlu0 %v10286, 112
      %v10805 = vpop.permute.xlu0 %10804
      %10806 = vrot.lane.b32.xlu0 %v10292, 112
      %v10807 = vpop.permute.xlu0 %10806
      %10808 = vrot.lane.b32.xlu0 %v10296, 112
      %v10809 = vpop.permute.xlu0 %10808
      %10810 = vrot.lane.b32.xlu0 %v10302, 112
      %v10811 = vpop.permute.xlu0 %10810
      %10812 = vrot.lane.b32.xlu0 %v10306, 112
      %v10813 = vpop.permute.xlu0 %10812
      %v10822 = vmax.f32 %v10782, %v10799
      %v10823 = vmax.f32 %v10783, %v10801
      %v10824 = vmax.f32 %v10784, %v10803
      %v10825 = vmax.f32 %v10785, %v10805
      %v10826 = vmax.f32 %v10786, %v10807
      %v10827 = vmax.f32 %v10787, %v10809
      %v10828 = vmax.f32 %v10788, %v10811
      %v10829 = vmax.f32 %v10789, %v10813
      %10830 = vrot.lane.b32.xlu0 %v10272, 96
      %v10831 = vpop.permute.xlu0 %10830
      %10832 = vrot.lane.b32.xlu0 %v10276, 96
      %v10833 = vpop.permute.xlu0 %10832
      %10834 = vrot.lane.b32.xlu0 %v10282, 96
      %v10835 = vpop.permute.xlu0 %10834
      %10836 = vrot.lane.b32.xlu0 %v10286, 96
      %v10837 = vpop.permute.xlu0 %10836
      %10838 = vrot.lane.b32.xlu0 %v10292, 96
      %v10839 = vpop.permute.xlu0 %10838
      %10840 = vrot.lane.b32.xlu0 %v10296, 96
      %v10841 = vpop.permute.xlu0 %10840
      %10842 = vrot.lane.b32.xlu0 %v10302, 96
      %v10843 = vpop.permute.xlu0 %10842
      %10844 = vrot.lane.b32.xlu0 %v10306, 96
      %v10845 = vpop.permute.xlu0 %10844
      %v10854 = vmax.f32 %v10822, %v10831
      %v10855 = vmax.f32 %v10823, %v10833
      %v10856 = vmax.f32 %v10824, %v10835
      %v10857 = vmax.f32 %v10825, %v10837
      %v10858 = vmax.f32 %v10826, %v10839
      %v10859 = vmax.f32 %v10827, %v10841
      %v10860 = vmax.f32 %v10828, %v10843
      %v10861 = vmax.f32 %v10829, %v10845
      %10862 = vrot.lane.b32.xlu0 %v10272, 80
      %v10863 = vpop.permute.xlu0 %10862
      %10864 = vrot.lane.b32.xlu0 %v10276, 80
      %v10865 = vpop.permute.xlu0 %10864
      %10866 = vrot.lane.b32.xlu0 %v10282, 80
      %v10867 = vpop.permute.xlu0 %10866
      %10868 = vrot.lane.b32.xlu0 %v10286, 80
      %v10869 = vpop.permute.xlu0 %10868
      %10870 = vrot.lane.b32.xlu0 %v10292, 80
      %v10871 = vpop.permute.xlu0 %10870
      %10872 = vrot.lane.b32.xlu0 %v10296, 80
      %v10873 = vpop.permute.xlu0 %10872
      %10874 = vrot.lane.b32.xlu0 %v10302, 80
      %v10875 = vpop.permute.xlu0 %10874
      %10876 = vrot.lane.b32.xlu0 %v10306, 80
      %v10877 = vpop.permute.xlu0 %10876
      %v10886 = vmax.f32 %v10854, %v10863
      %v10887 = vmax.f32 %v10855, %v10865
      %v10888 = vmax.f32 %v10856, %v10867
      %v10889 = vmax.f32 %v10857, %v10869
      %v10890 = vmax.f32 %v10858, %v10871
      %v10891 = vmax.f32 %v10859, %v10873
      %v10892 = vmax.f32 %v10860, %v10875
      %v10893 = vmax.f32 %v10861, %v10877
      %10894 = vrot.lane.b32.xlu0 %v10272, 64
      %v10895 = vpop.permute.xlu0 %10894
      %10896 = vrot.lane.b32.xlu0 %v10276, 64
      %v10897 = vpop.permute.xlu0 %10896
      %10898 = vrot.lane.b32.xlu0 %v10282, 64
      %v10899 = vpop.permute.xlu0 %10898
      %10900 = vrot.lane.b32.xlu0 %v10286, 64
      %v10901 = vpop.permute.xlu0 %10900
      %10902 = vrot.lane.b32.xlu0 %v10292, 64
      %v10903 = vpop.permute.xlu0 %10902
      %10904 = vrot.lane.b32.xlu0 %v10296, 64
      %v10905 = vpop.permute.xlu0 %10904
      %10906 = vrot.lane.b32.xlu0 %v10302, 64
      %v10907 = vpop.permute.xlu0 %10906
      %10908 = vrot.lane.b32.xlu0 %v10306, 64
      %v10909 = vpop.permute.xlu0 %10908
      %v10918 = vmax.f32 %v10886, %v10895
      %v10919 = vmax.f32 %v10887, %v10897
      %v10920 = vmax.f32 %v10888, %v10899
      %v10921 = vmax.f32 %v10889, %v10901
      %v10922 = vmax.f32 %v10890, %v10903
      %v10923 = vmax.f32 %v10891, %v10905
      %v10924 = vmax.f32 %v10892, %v10907
      %v10925 = vmax.f32 %v10893, %v10909
      %10926 = vrot.lane.b32.xlu0 %v10272, 48
      %v10927 = vpop.permute.xlu0 %10926
      %10928 = vrot.lane.b32.xlu0 %v10276, 48
      %v10929 = vpop.permute.xlu0 %10928
      %10930 = vrot.lane.b32.xlu0 %v10282, 48
      %v10931 = vpop.permute.xlu0 %10930
      %10932 = vrot.lane.b32.xlu0 %v10286, 48
      %v10933 = vpop.permute.xlu0 %10932
      %10934 = vrot.lane.b32.xlu0 %v10292, 48
      %v10935 = vpop.permute.xlu0 %10934
      %10936 = vrot.lane.b32.xlu0 %v10296, 48
      %v10937 = vpop.permute.xlu0 %10936
      %10938 = vrot.lane.b32.xlu0 %v10302, 48
      %v10939 = vpop.permute.xlu0 %10938
      %10940 = vrot.lane.b32.xlu0 %v10306, 48
      %v10941 = vpop.permute.xlu0 %10940
      %v10950 = vmax.f32 %v10918, %v10927
      %v10951 = vmax.f32 %v10919, %v10929
      %v10952 = vmax.f32 %v10920, %v10931
      %v10953 = vmax.f32 %v10921, %v10933
      %v10954 = vmax.f32 %v10922, %v10935
      %v10955 = vmax.f32 %v10923, %v10937
      %v10956 = vmax.f32 %v10924, %v10939
      %v10957 = vmax.f32 %v10925, %v10941
      %10958 = vrot.lane.b32.xlu0 %v10272, 32
      %v10959 = vpop.permute.xlu0 %10958
      %10960 = vrot.lane.b32.xlu0 %v10276, 32
      %v10961 = vpop.permute.xlu0 %10960
      %10962 = vrot.lane.b32.xlu0 %v10282, 32
      %v10963 = vpop.permute.xlu0 %10962
      %10964 = vrot.lane.b32.xlu0 %v10286, 32
      %v10965 = vpop.permute.xlu0 %10964
      %10966 = vrot.lane.b32.xlu0 %v10292, 32
      %v10967 = vpop.permute.xlu0 %10966
      %10968 = vrot.lane.b32.xlu0 %v10296, 32
      %v10969 = vpop.permute.xlu0 %10968
      %10970 = vrot.lane.b32.xlu0 %v10302, 32
      %v10971 = vpop.permute.xlu0 %10970
      %10972 = vrot.lane.b32.xlu0 %v10306, 32
      %v10973 = vpop.permute.xlu0 %10972
      %v10982 = vmax.f32 %v10950, %v10959
      %v10983 = vmax.f32 %v10951, %v10961
      %v10984 = vmax.f32 %v10952, %v10963
      %v10985 = vmax.f32 %v10953, %v10965
      %v10986 = vmax.f32 %v10954, %v10967
      %v10987 = vmax.f32 %v10955, %v10969
      %v10988 = vmax.f32 %v10956, %v10971
      %v10989 = vmax.f32 %v10957, %v10973
      %10990 = vrot.lane.b32.xlu0 %v10272, 16
      %v10991 = vpop.permute.xlu0 %10990
      %10992 = vrot.lane.b32.xlu0 %v10276, 16
      %v10993 = vpop.permute.xlu0 %10992
      %10994 = vrot.lane.b32.xlu0 %v10282, 16
      %v10995 = vpop.permute.xlu0 %10994
      %10996 = vrot.lane.b32.xlu0 %v10286, 16
      %v10997 = vpop.permute.xlu0 %10996
      %10998 = vrot.lane.b32.xlu0 %v10292, 16
      %v10999 = vpop.permute.xlu0 %10998
      %11000 = vrot.lane.b32.xlu0 %v10296, 16
      %v11001 = vpop.permute.xlu0 %11000
      %11002 = vrot.lane.b32.xlu0 %v10302, 16
      %v11003 = vpop.permute.xlu0 %11002
      %11004 = vrot.lane.b32.xlu0 %v10306, 16
      %v11005 = vpop.permute.xlu0 %11004
      %v11014 = vmax.f32 %v10982, %v10991
      %v11015 = vmax.f32 %v10983, %v10993
      %v11016 = vmax.f32 %v10984, %v10995
      %v11017 = vmax.f32 %v10985, %v10997
      %v11018 = vmax.f32 %v10986, %v10999
      %v11019 = vmax.f32 %v10987, %v11001
      %v11020 = vmax.f32 %v10988, %v11003
      %v11021 = vmax.f32 %v10989, %v11005
      %v11022 = vmax.f32 %v11014, %v10274
      %v11023 = vmax.f32 %v11015, %v10278
      %v11024 = vmax.f32 %v11016, %v10284
      %v11025 = vmax.f32 %v11017, %v10288
      %v11026 = vmax.f32 %v11018, %v10294
      %v11027 = vmax.f32 %v11019, %v10298
      %v11028 = vmax.f32 %v11020, %v10304
      %v11029 = vmax.f32 %v11021, %v10308
      %v11030 = vadd.f32 %v11022, %v1493
      %v11031 = vadd.f32 %v11023, %v1493
      %v11032 = vadd.f32 %v11024, %v1493
      %v11033 = vadd.f32 %v11025, %v1493
      %v11034 = vadd.f32 %v11026, %v1493
      %v11035 = vadd.f32 %v11027, %v1493
      %v11036 = vadd.f32 %v11028, %v1493
      %v11037 = vadd.f32 %v11029, %v1493
      %v11038 = vmax.f32 %v11030, 0.0
      %v11039 = vmax.f32 %v11031, 0.0
      %v11040 = vmax.f32 %v11032, 0.0
      %v11041 = vmax.f32 %v11033, 0.0
      %v11042 = vmax.f32 %v11034, 0.0
      %v11043 = vmax.f32 %v11035, 0.0
      %v11044 = vmax.f32 %v11036, 0.0
      %v11045 = vmax.f32 %v11037, 0.0
      %v11046 = vpack.c.bf16 %v11039, %v11038
      %v11047 = vpack.c.bf16 %v11041, %v11040
      %v11048 = vpack.c.bf16 %v11043, %v11042
      %v11049 = vpack.c.bf16 %v11045, %v11044
      %v11054 = vunpack.c.l.b16 %v11046
      %v11055 = vunpack.c.h.b16 %v11046
      %v11056 = vunpack.c.l.b16 %v11047
      %v11057 = vunpack.c.h.b16 %v11047
      %v11058 = vunpack.c.l.b16 %v11048
      %v11059 = vunpack.c.h.b16 %v11048
      %v11060 = vunpack.c.l.b16 %v11049
      %v11061 = vunpack.c.h.b16 %v11049
      %v11062 = vpack.c.b16 %v11054, %v11054
      %v11063 = vpack.c.b16 %v11055, %v11055
      %v11064 = vpack.c.b16 %v11056, %v11056
      %v11065 = vpack.c.b16 %v11057, %v11057
      %v11066 = vpack.c.b16 %v11058, %v11058
      %v11067 = vpack.c.b16 %v11059, %v11059
      %v11068 = vpack.c.b16 %v11060, %v11060
      %v11069 = vpack.c.b16 %v11061, %v11061
      %11078 = vst.msk [vmem:[%s175 + $0xe0] sm:$0xf] %vm1543, %v11062
      %11079 = vst.msk [vmem:[%s175 + $0xe4] sm:$0xf] %vm1543, %v11063
      %11080 = vst.msk [vmem:[%s175 + $0xe8] sm:$0xf] %vm1543, %v11064
      %11081 = vst.msk [vmem:[%s175 + $0xec] sm:$0xf] %vm1543, %v11065
      %11082 = vst.msk [vmem:[%s175 + $0xf0] sm:$0xf] %vm1543, %v11066
      %11083 = vst.msk [vmem:[%s175 + $0xf4] sm:$0xf] %vm1543, %v11067
      %11084 = vst.msk [vmem:[%s175 + $0xf8] sm:$0xf] %vm1543, %v11068
      %11085 = vst.msk [vmem:[%s175 + $0xfc] sm:$0xf] %vm1543, %v11069
      %s11086 = smul.u32 64, %s14
      %p11087 = scmp.lt.s32.totalorder %s11086, 127
      %s11088 = scalar_select %p11087, %s11086, 127
      %s11089 = smul.addr %s11088, 4
      %s11090 = scalar_lea.vmem %s3, %s11089
      // Predicated region
      $region33: #{cnn_embedding_forward.3} parent=31 // pred_check
        %p11091 = pneg %p100
      $region34: #{cnn_embedding_forward.3} parent=31 // pred_check_branch
        %11093 = sbr.rel (%p11091) target = $region36
      $region35: #{cnn_embedding_forward.3} parent=31 // pred_region
        %s11094 = smul.u32 64, %s14
      $region36: #{cnn_embedding_forward.3} parent=31 // pred_fallthru
        _
    $region32: #{cnn_embedding_forward.3} parent=5 // pred_fallthru
      _
    %p11095 = scmp.le.s32.totalorder 2, %s9
    // Predicated region
    $region37: #{cnn_embedding_forward.3} parent=5 // pred_check
      %p11096 = pneg %p11095
    $region38: #{cnn_embedding_forward.3} parent=5 // pred_check_branch
      %11098 = sbr.rel (%p11096) target = $region40
    $region39: #{cnn_embedding_forward.3} parent=5 // pred_region
      %s11099 = ssub.s32 %s9, 2
      // Predicated region
      $region41: #{cnn_embedding_forward.3} parent=39 // pred_check
        %p11100 = pneg %p106
      $region42: #{cnn_embedding_forward.3} parent=39 // pred_check_branch
        %11102 = sbr.rel (%p11100) target = $region44
      $region43: #{cnn_embedding_forward.3} parent=39 // pred_region
        %s11103 = smul.u32 64, %s15
        %p11104 = scmp.lt.s32.totalorder %s11103, 127
        %s11105 = scalar_select %p11104, %s11103, 127
        %s11106 = smul.addr %s11105, 4
        %s11107 = scalar_lea.vmem %s3, %s11106
      $region44: #{cnn_embedding_forward.3} parent=39 // pred_fallthru
        _
    $region40: #{cnn_embedding_forward.3} parent=5 // pred_fallthru
      _
  $region6: #{cnn_embedding_forward.3} parent=0 // loop_footer
    %s13 = sadd.s32 1, %s9
  $region7: #{cnn_embedding_forward.3} parent=0 // loop_footer_branch
    %8 = sbr.rel target = $region3
  $region8: #{cnn_embedding_forward.3} parent=0 // loop_exit
    _

// kernel: cnn_embedding_forward.4
$region0: #{cnn_embedding_forward.4}
  #allocation0 [shape = 'u32[]', space=smem, size = 0x4, offset = 0x4, fixed_abs, tag = 'smem constant byte address 0x4 - core index']
  #allocation1 [shape = 'u32[144,128]{1,0:T(1,128)}', space=vmem, size = 0x12000, scoped, tag = 'internal scratch']
  %s0 = inlined_call_operand.vmem [shape: bf16[90,400], index: 0, kind: input, shape index: {}]
  %s1 = inlined_call_operand.vmem [shape: bf16[400,288], index: 1, kind: input, shape index: {}]
  %s2 = inlined_call_operand.vmem [shape: f32[1,32], index: 2, kind: input, shape index: {}]
  %s3 = inlined_call_operand.vmem [shape: bf16[90,32], index: 3, kind: output, shape index: {}]
  %s4 = sld [smem:[#allocation0]]
  $region22: #{cnn_embedding_forward.4} parent=0
    _
  %s6 = ssub.s32 1, %s4
  %s7 = scalar_select 0, %s6, %s4
  // Predicated region
  $region2: #{cnn_embedding_forward.4} parent=0 // pred_check
    _
  $region3: #{cnn_embedding_forward.4} parent=0 // pred_check_branch
    %9 = sbr.rel (0) target = $region5
  $region4: #{cnn_embedding_forward.4} parent=0 // pred_region
    _
  $region5: #{cnn_embedding_forward.4} parent=0 // pred_fallthru
    _
  // Predicated region
  $region6: #{cnn_embedding_forward.4} parent=0 // pred_check
    _
  $region7: #{cnn_embedding_forward.4} parent=0 // pred_check_branch
    %11 = sbr.rel (0) target = $region9
  $region8: #{cnn_embedding_forward.4} parent=0 // pred_region
    _
  $region9: #{cnn_embedding_forward.4} parent=0 // pred_fallthru
    _
  // Predicated region
  $region10: #{cnn_embedding_forward.4} parent=0 // pred_check
    _
  $region11: #{cnn_embedding_forward.4} parent=0 // pred_check_branch
    %13 = sbr.rel (0) target = $region13
  $region12: #{cnn_embedding_forward.4} parent=0 // pred_region
    _
  $region13: #{cnn_embedding_forward.4} parent=0 // pred_fallthru
    _
  %v15 = vld [vmem:[%s2] sm:$0x1]
  %v16 = vld [vmem:[%s0] sm:$0xff]
  %v17 = vld [vmem:[%s0 + $0x8] sm:$0xff]
  %v18 = vld [vmem:[%s0 + $0x10] sm:$0xff]
  %v19 = vld [vmem:[%s0 + $0x18] sm:$0xff]
  %v20 = vld [vmem:[%s0 + $0x20] sm:$0xff]
  %v21 = vld [vmem:[%s0 + $0x28] sm:$0xff]
  %v22 = vld [vmem:[%s0 + $0x30] sm:$0xff]
  %v23 = vld [vmem:[%s0 + $0x38] sm:$0xff]
  %v24 = vld [vmem:[%s0 + $0x40] sm:$0xff]
  %v25 = vld [vmem:[%s0 + $0x48] sm:$0xff]
  %v26 = vld [vmem:[%s0 + $0x50] sm:$0xff]
  %v27 = vld [vmem:[%s0 + $0x58] sm:$0xff]
  %v28 = vld [vmem:[%s0 + $0x60] sm:$0xff]
  %v29 = vld [vmem:[%s0 + $0x68] sm:$0xff]
  %v30 = vld [vmem:[%s0 + $0x70] sm:$0xff]
  %v31 = vld [vmem:[%s0 + $0x78] sm:$0xff]
  %v32 = vld [vmem:[%s0 + $0x80] sm:$0xff]
  %v33 = vld [vmem:[%s0 + $0x88] sm:$0xff]
  %v34 = vld [vmem:[%s0 + $0x90] sm:$0xff]
  %v35 = vld [vmem:[%s0 + $0x98] sm:$0xff]
  %v36 = vld [vmem:[%s0 + $0xa0] sm:$0xff]
  %v37 = vld [vmem:[%s0 + $0xa8] sm:$0xff]
  %v38 = vld [vmem:[%s0 + $0xb0] sm:$0x11]
  %v39 = vld [vmem:[%s0 + $0xb8] sm:$0x11]
  %v40 = vld [vmem:[%s1] sm:$0xff]
  %v41 = vld [vmem:[%s1 + $0x8] sm:$0xf]
  %v42 = vld [vmem:[%s1 + $0xc] sm:$0xff]
  %v43 = vld [vmem:[%s1 + $0x14] sm:$0xf]
  %v44 = vld [vmem:[%s1 + $0x18] sm:$0xff]
  %v45 = vld [vmem:[%s1 + $0x20] sm:$0xf]
  %v46 = vld [vmem:[%s1 + $0x24] sm:$0xff]
  %v47 = vld [vmem:[%s1 + $0x2c] sm:$0xf]
  %v48 = vld [vmem:[%s1 + $0x30] sm:$0xff]
  %v49 = vld [vmem:[%s1 + $0x38] sm:$0xf]
  %v50 = vld [vmem:[%s1 + $0x3c] sm:$0xff]
  %v51 = vld [vmem:[%s1 + $0x44] sm:$0xf]
  %v52 = vld [vmem:[%s1 + $0x48] sm:$0xff]
  %v53 = vld [vmem:[%s1 + $0x50] sm:$0xf]
  %v54 = vld [vmem:[%s1 + $0x54] sm:$0xff]
  %v55 = vld [vmem:[%s1 + $0x5c] sm:$0xf]
  %v56 = vld [vmem:[%s1 + $0x60] sm:$0xff]
  %v57 = vld [vmem:[%s1 + $0x68] sm:$0xf]
  %v58 = vld [vmem:[%s1 + $0x6c] sm:$0xff]
  %v59 = vld [vmem:[%s1 + $0x74] sm:$0xf]
  %v60 = vld [vmem:[%s1 + $0x78] sm:$0xff]
  %v61 = vld [vmem:[%s1 + $0x80] sm:$0xf]
  %v62 = vld [vmem:[%s1 + $0x84] sm:$0xff]
  %v63 = vld [vmem:[%s1 + $0x8c] sm:$0xf]
  %v64 = vld [vmem:[%s1 + $0x90] sm:$0xff]
  %v65 = vld [vmem:[%s1 + $0x98] sm:$0xf]
  %v66 = vld [vmem:[%s1 + $0x9c] sm:$0xff]
  %v67 = vld [vmem:[%s1 + $0xa4] sm:$0xf]
  %v68 = vld [vmem:[%s1 + $0xa8] sm:$0xff]
  %v69 = vld [vmem:[%s1 + $0xb0] sm:$0xf]
  %v70 = vld [vmem:[%s1 + $0xb4] sm:$0xff]
  %v71 = vld [vmem:[%s1 + $0xbc] sm:$0xf]
  %v72 = vld [vmem:[%s1 + $0xc0] sm:$0xff]
  %v73 = vld [vmem:[%s1 + $0xc8] sm:$0xf]
  %v74 = vld [vmem:[%s1 + $0xcc] sm:$0xff]
  %v75 = vld [vmem:[%s1 + $0xd4] sm:$0xf]
  %v76 = vld [vmem:[%s1 + $0xd8] sm:$0xff]
  %v77 = vld [vmem:[%s1 + $0xe0] sm:$0xf]
  %v78 = vld [vmem:[%s1 + $0xe4] sm:$0xff]
  %v79 = vld [vmem:[%s1 + $0xec] sm:$0xf]
  %v80 = vld [vmem:[%s1 + $0xf0] sm:$0xff]
  %v81 = vld [vmem:[%s1 + $0xf8] sm:$0xf]
  %v82 = vld [vmem:[%s1 + $0xfc] sm:$0xff]
  %v83 = vld [vmem:[%s1 + $0x104] sm:$0xf]
  %v84 = vld [vmem:[%s1 + $0x108] sm:$0xff]
  %v85 = vld [vmem:[%s1 + $0x110] sm:$0xf]
  %v86 = vld [vmem:[%s1 + $0x114] sm:$0xff]
  %v87 = vld [vmem:[%s1 + $0x11c] sm:$0xf]
  %v88 = vld [vmem:[%s1 + $0x120] sm:$0xff]
  %v89 = vld [vmem:[%s1 + $0x128] sm:$0xf]
  %v90 = vld [vmem:[%s1 + $0x12c] sm:$0xff]
  %v91 = vld [vmem:[%s1 + $0x134] sm:$0xf]
  %v92 = vld [vmem:[%s1 + $0x138] sm:$0xff]
  %v93 = vld [vmem:[%s1 + $0x140] sm:$0xf]
  %v94 = vld [vmem:[%s1 + $0x144] sm:$0xff]
  %v95 = vld [vmem:[%s1 + $0x14c] sm:$0xf]
  %v96 = vld [vmem:[%s1 + $0x150] sm:$0xff]
  %v97 = vld [vmem:[%s1 + $0x158] sm:$0xf]
  %v98 = vld [vmem:[%s1 + $0x15c] sm:$0xff]
  %v99 = vld [vmem:[%s1 + $0x164] sm:$0xf]
  %v100 = vld [vmem:[%s1 + $0x168] sm:$0xff]
  %v101 = vld [vmem:[%s1 + $0x170] sm:$0xf]
  %v102 = vld [vmem:[%s1 + $0x174] sm:$0xff]
  %v103 = vld [vmem:[%s1 + $0x17c] sm:$0xf]
  %v104 = vld [vmem:[%s1 + $0x180] sm:$0xff]
  %v105 = vld [vmem:[%s1 + $0x188] sm:$0xf]
  %v106 = vld [vmem:[%s1 + $0x18c] sm:$0xff]
  %v107 = vld [vmem:[%s1 + $0x194] sm:$0xf]
  %v108 = vld [vmem:[%s1 + $0x198] sm:$0xff]
  %v109 = vld [vmem:[%s1 + $0x1a0] sm:$0xf]
  %v110 = vld [vmem:[%s1 + $0x1a4] sm:$0xff]
  %v111 = vld [vmem:[%s1 + $0x1ac] sm:$0xf]
  %v112 = vld [vmem:[%s1 + $0x1b0] sm:$0xff]
  %v113 = vld [vmem:[%s1 + $0x1b8] sm:$0xf]
  %v114 = vld [vmem:[%s1 + $0x1bc] sm:$0xff]
  %v115 = vld [vmem:[%s1 + $0x1c4] sm:$0xf]
  %v116 = vld [vmem:[%s1 + $0x1c8] sm:$0xff]
  %v117 = vld [vmem:[%s1 + $0x1d0] sm:$0xf]
  %v118 = vld [vmem:[%s1 + $0x1d4] sm:$0xff]
  %v119 = vld [vmem:[%s1 + $0x1dc] sm:$0xf]
  %v120 = vld [vmem:[%s1 + $0x1e0] sm:$0xff]
  %v121 = vld [vmem:[%s1 + $0x1e8] sm:$0xf]
  %v122 = vld [vmem:[%s1 + $0x1ec] sm:$0xff]
  %v123 = vld [vmem:[%s1 + $0x1f4] sm:$0xf]
  %v124 = vld [vmem:[%s1 + $0x1f8] sm:$0xff]
  %v125 = vld [vmem:[%s1 + $0x200] sm:$0xf]
  %v126 = vld [vmem:[%s1 + $0x204] sm:$0xff]
  %v127 = vld [vmem:[%s1 + $0x20c] sm:$0xf]
  %v128 = vld [vmem:[%s1 + $0x210] sm:$0xff]
  %v129 = vld [vmem:[%s1 + $0x218] sm:$0xf]
  %v130 = vld [vmem:[%s1 + $0x21c] sm:$0xff]
  %v131 = vld [vmem:[%s1 + $0x224] sm:$0xf]
  %v132 = vld [vmem:[%s1 + $0x228] sm:$0xff]
  %v133 = vld [vmem:[%s1 + $0x230] sm:$0xf]
  %v134 = vld [vmem:[%s1 + $0x234] sm:$0xff]
  %v135 = vld [vmem:[%s1 + $0x23c] sm:$0xf]
  %v136 = vld [vmem:[%s1 + $0x240] sm:$0xff]
  %v137 = vld [vmem:[%s1 + $0x248] sm:$0xf]
  %v138 = vld [vmem:[%s1 + $0x24c] sm:$0xff]
  %v139 = vld [vmem:[%s1 + $0x254] sm:$0xf]
  %v164 = vunpack.c.l.b16 %v16
  %v165 = vunpack.c.h.b16 %v16
  %v166 = vunpack.c.l.b16 %v17
  %v167 = vunpack.c.h.b16 %v17
  %v168 = vunpack.c.l.b16 %v18
  %v169 = vunpack.c.h.b16 %v18
  %v170 = vunpack.c.l.b16 %v19
  %v171 = vunpack.c.h.b16 %v19
  %v172 = vunpack.c.l.b16 %v20
  %v173 = vunpack.c.h.b16 %v20
  %v174 = vunpack.c.l.b16 %v21
  %v175 = vunpack.c.h.b16 %v21
  %v176 = vunpack.c.l.b16 %v22
  %v177 = vunpack.c.h.b16 %v22
  %v178 = vunpack.c.l.b16 %v23
  %v179 = vunpack.c.h.b16 %v23
  %v180 = vunpack.c.l.b16 %v24
  %v181 = vunpack.c.h.b16 %v24
  %v182 = vunpack.c.l.b16 %v25
  %v183 = vunpack.c.h.b16 %v25
  %v184 = vunpack.c.l.b16 %v26
  %v185 = vunpack.c.h.b16 %v26
  %v186 = vunpack.c.l.b16 %v27
  %v187 = vunpack.c.h.b16 %v27
  %v188 = vunpack.c.l.b16 %v28
  %v189 = vunpack.c.h.b16 %v28
  %v190 = vunpack.c.l.b16 %v29
  %v191 = vunpack.c.h.b16 %v29
  %v192 = vunpack.c.l.b16 %v30
  %v193 = vunpack.c.h.b16 %v30
  %v194 = vunpack.c.l.b16 %v31
  %v195 = vunpack.c.h.b16 %v31
  %v196 = vunpack.c.l.b16 %v32
  %v197 = vunpack.c.h.b16 %v32
  %v198 = vunpack.c.l.b16 %v33
  %v199 = vunpack.c.h.b16 %v33
  %v200 = vunpack.c.l.b16 %v34
  %v201 = vunpack.c.h.b16 %v34
  %v202 = vunpack.c.l.b16 %v35
  %v203 = vunpack.c.h.b16 %v35
  %v204 = vunpack.c.l.b16 %v36
  %v205 = vunpack.c.h.b16 %v36
  %v206 = vunpack.c.l.b16 %v37
  %v207 = vunpack.c.h.b16 %v37
  %v208 = vunpack.c.l.b16 %v38
  %v209 = vunpack.c.h.b16 %v38
  %v210 = vunpack.c.l.b16 %v39
  %v211 = vunpack.c.h.b16 %v39
  %v212 = vpack.c.b16 %v168, %v164
  %v213 = vpack.c.b16 %v169, %v165
  %v214 = vpack.c.b16 %v170, %v166
  %v215 = vpack.c.b16 %v171, %v167
  %v216 = vpack.c.b16 %v176, %v172
  %v217 = vpack.c.b16 %v177, %v173
  %v218 = vpack.c.b16 %v178, %v174
  %v219 = vpack.c.b16 %v179, %v175
  %v220 = vpack.c.b16 %v184, %v180
  %v221 = vpack.c.b16 %v185, %v181
  %v222 = vpack.c.b16 %v186, %v182
  %v223 = vpack.c.b16 %v187, %v183
  %v224 = vpack.c.b16 %v192, %v188
  %v225 = vpack.c.b16 %v193, %v189
  %v226 = vpack.c.b16 %v194, %v190
  %v227 = vpack.c.b16 %v195, %v191
  %v228 = vpack.c.b16 %v200, %v196
  %v229 = vpack.c.b16 %v201, %v197
  %v230 = vpack.c.b16 %v202, %v198
  %v231 = vpack.c.b16 %v203, %v199
  %v232 = vpack.c.b16 %v208, %v204
  %v233 = vpack.c.b16 %v209, %v205
  %v234 = vpack.c.b16 %v210, %v206
  %v235 = vpack.c.b16 %v211, %v207
  %v354 = vunpack.c.l.b16 %v40
  %v355 = vunpack.c.h.b16 %v40
  %v356 = vunpack.c.l.b16 %v41
  %v357 = vunpack.c.l.b16 %v42
  %v358 = vunpack.c.h.b16 %v42
  %v359 = vunpack.c.l.b16 %v43
  %v360 = vunpack.c.l.b16 %v44
  %v361 = vunpack.c.h.b16 %v44
  %v362 = vunpack.c.l.b16 %v45
  %v363 = vunpack.c.l.b16 %v46
  %v364 = vunpack.c.h.b16 %v46
  %v365 = vunpack.c.l.b16 %v47
  %v366 = vunpack.c.l.b16 %v48
  %v367 = vunpack.c.h.b16 %v48
  %v368 = vunpack.c.l.b16 %v49
  %v369 = vunpack.c.l.b16 %v50
  %v370 = vunpack.c.h.b16 %v50
  %v371 = vunpack.c.l.b16 %v51
  %v372 = vunpack.c.l.b16 %v52
  %v373 = vunpack.c.h.b16 %v52
  %v374 = vunpack.c.l.b16 %v53
  %v375 = vunpack.c.l.b16 %v54
  %v376 = vunpack.c.h.b16 %v54
  %v377 = vunpack.c.l.b16 %v55
  %v378 = vunpack.c.l.b16 %v56
  %v379 = vunpack.c.h.b16 %v56
  %v380 = vunpack.c.l.b16 %v57
  %v381 = vunpack.c.l.b16 %v58
  %v382 = vunpack.c.h.b16 %v58
  %v383 = vunpack.c.l.b16 %v59
  %v384 = vunpack.c.l.b16 %v60
  %v385 = vunpack.c.h.b16 %v60
  %v386 = vunpack.c.l.b16 %v61
  %v387 = vunpack.c.l.b16 %v62
  %v388 = vunpack.c.h.b16 %v62
  %v389 = vunpack.c.l.b16 %v63
  %v390 = vunpack.c.l.b16 %v64
  %v391 = vunpack.c.h.b16 %v64
  %v392 = vunpack.c.l.b16 %v65
  %v393 = vunpack.c.l.b16 %v66
  %v394 = vunpack.c.h.b16 %v66
  %v395 = vunpack.c.l.b16 %v67
  %v396 = vunpack.c.l.b16 %v68
  %v397 = vunpack.c.h.b16 %v68
  %v398 = vunpack.c.l.b16 %v69
  %v399 = vunpack.c.l.b16 %v70
  %v400 = vunpack.c.h.b16 %v70
  %v401 = vunpack.c.l.b16 %v71
  %v402 = vunpack.c.l.b16 %v72
  %v403 = vunpack.c.h.b16 %v72
  %v404 = vunpack.c.l.b16 %v73
  %v405 = vunpack.c.l.b16 %v74
  %v406 = vunpack.c.h.b16 %v74
  %v407 = vunpack.c.l.b16 %v75
  %v408 = vunpack.c.l.b16 %v76
  %v409 = vunpack.c.h.b16 %v76
  %v410 = vunpack.c.l.b16 %v77
  %v411 = vunpack.c.l.b16 %v78
  %v412 = vunpack.c.h.b16 %v78
  %v413 = vunpack.c.l.b16 %v79
  %v414 = vunpack.c.l.b16 %v80
  %v415 = vunpack.c.h.b16 %v80
  %v416 = vunpack.c.l.b16 %v81
  %v417 = vunpack.c.l.b16 %v82
  %v418 = vunpack.c.h.b16 %v82
  %v419 = vunpack.c.l.b16 %v83
  %v420 = vunpack.c.l.b16 %v84
  %v421 = vunpack.c.h.b16 %v84
  %v422 = vunpack.c.l.b16 %v85
  %v423 = vunpack.c.l.b16 %v86
  %v424 = vunpack.c.h.b16 %v86
  %v425 = vunpack.c.l.b16 %v87
  %v426 = vunpack.c.l.b16 %v88
  %v427 = vunpack.c.h.b16 %v88
  %v428 = vunpack.c.l.b16 %v89
  %v429 = vunpack.c.l.b16 %v90
  %v430 = vunpack.c.h.b16 %v90
  %v431 = vunpack.c.l.b16 %v91
  %v432 = vunpack.c.l.b16 %v92
  %v433 = vunpack.c.h.b16 %v92
  %v434 = vunpack.c.l.b16 %v93
  %v435 = vunpack.c.l.b16 %v94
  %v436 = vunpack.c.h.b16 %v94
  %v437 = vunpack.c.l.b16 %v95
  %v438 = vunpack.c.l.b16 %v96
  %v439 = vunpack.c.h.b16 %v96
  %v440 = vunpack.c.l.b16 %v97
  %v441 = vunpack.c.l.b16 %v98
  %v442 = vunpack.c.h.b16 %v98
  %v443 = vunpack.c.l.b16 %v99
  %v444 = vunpack.c.l.b16 %v100
  %v445 = vunpack.c.h.b16 %v100
  %v446 = vunpack.c.l.b16 %v101
  %v447 = vunpack.c.l.b16 %v102
  %v448 = vunpack.c.h.b16 %v102
  %v449 = vunpack.c.l.b16 %v103
  %v450 = vunpack.c.l.b16 %v104
  %v451 = vunpack.c.h.b16 %v104
  %v452 = vunpack.c.l.b16 %v105
  %v453 = vunpack.c.l.b16 %v106
  %v454 = vunpack.c.h.b16 %v106
  %v455 = vunpack.c.l.b16 %v107
  %v456 = vunpack.c.l.b16 %v108
  %v457 = vunpack.c.h.b16 %v108
  %v458 = vunpack.c.l.b16 %v109
  %v459 = vunpack.c.l.b16 %v110
  %v460 = vunpack.c.h.b16 %v110
  %v461 = vunpack.c.l.b16 %v111
  %v462 = vunpack.c.l.b16 %v112
  %v463 = vunpack.c.h.b16 %v112
  %v464 = vunpack.c.l.b16 %v113
  %v465 = vunpack.c.l.b16 %v114
  %v466 = vunpack.c.h.b16 %v114
  %v467 = vunpack.c.l.b16 %v115
  %v468 = vunpack.c.l.b16 %v116
  %v469 = vunpack.c.h.b16 %v116
  %v470 = vunpack.c.l.b16 %v117
  %v471 = vunpack.c.l.b16 %v118
  %v472 = vunpack.c.h.b16 %v118
  %v473 = vunpack.c.l.b16 %v119
  %v474 = vunpack.c.l.b16 %v120
  %v475 = vunpack.c.h.b16 %v120
  %v476 = vunpack.c.l.b16 %v121
  %v477 = vunpack.c.l.b16 %v122
  %v478 = vunpack.c.h.b16 %v122
  %v479 = vunpack.c.l.b16 %v123
  %v480 = vunpack.c.l.b16 %v124
  %v481 = vunpack.c.h.b16 %v124
  %v482 = vunpack.c.l.b16 %v125
  %v483 = vunpack.c.l.b16 %v126
  %v484 = vunpack.c.h.b16 %v126
  %v485 = vunpack.c.l.b16 %v127
  %v486 = vunpack.c.l.b16 %v128
  %v487 = vunpack.c.h.b16 %v128
  %v488 = vunpack.c.l.b16 %v129
  %v489 = vunpack.c.l.b16 %v130
  %v490 = vunpack.c.h.b16 %v130
  %v491 = vunpack.c.l.b16 %v131
  %v492 = vunpack.c.l.b16 %v132
  %v493 = vunpack.c.h.b16 %v132
  %v494 = vunpack.c.l.b16 %v133
  %v495 = vunpack.c.l.b16 %v134
  %v496 = vunpack.c.h.b16 %v134
  %v497 = vunpack.c.l.b16 %v135
  %v498 = vunpack.c.l.b16 %v136
  %v499 = vunpack.c.h.b16 %v136
  %v500 = vunpack.c.l.b16 %v137
  %v501 = vunpack.c.l.b16 %v138
  %v502 = vunpack.c.h.b16 %v138
  %v503 = vunpack.c.l.b16 %v139
  %v504 = vpack.c.b16 %v357, %v354
  %v505 = vpack.c.b16 %v358, %v355
  %v506 = vpack.c.b16 %v359, %v356
  %v507 = vpack.c.b16 %v363, %v360
  %v508 = vpack.c.b16 %v364, %v361
  %v509 = vpack.c.b16 %v365, %v362
  %v510 = vpack.c.b16 %v369, %v366
  %v511 = vpack.c.b16 %v370, %v367
  %v512 = vpack.c.b16 %v371, %v368
  %v513 = vpack.c.b16 %v375, %v372
  %v514 = vpack.c.b16 %v376, %v373
  %v515 = vpack.c.b16 %v377, %v374
  %v516 = vpack.c.b16 %v381, %v378
  %v517 = vpack.c.b16 %v382, %v379
  %v518 = vpack.c.b16 %v383, %v380
  %v519 = vpack.c.b16 %v387, %v384
  %v520 = vpack.c.b16 %v388, %v385
  %v521 = vpack.c.b16 %v389, %v386
  %v522 = vpack.c.b16 %v393, %v390
  %v523 = vpack.c.b16 %v394, %v391
  %v524 = vpack.c.b16 %v395, %v392
  %v525 = vpack.c.b16 %v399, %v396
  %v526 = vpack.c.b16 %v400, %v397
  %v527 = vpack.c.b16 %v401, %v398
  %v528 = vpack.c.b16 %v405, %v402
  %v529 = vpack.c.b16 %v406, %v403
  %v530 = vpack.c.b16 %v407, %v404
  %v531 = vpack.c.b16 %v411, %v408
  %v532 = vpack.c.b16 %v412, %v409
  %v533 = vpack.c.b16 %v413, %v410
  %v534 = vpack.c.b16 %v417, %v414
  %v535 = vpack.c.b16 %v418, %v415
  %v536 = vpack.c.b16 %v419, %v416
  %v537 = vpack.c.b16 %v423, %v420
  %v538 = vpack.c.b16 %v424, %v421
  %v539 = vpack.c.b16 %v425, %v422
  %v540 = vpack.c.b16 %v429, %v426
  %v541 = vpack.c.b16 %v430, %v427
  %v542 = vpack.c.b16 %v431, %v428
  %v543 = vpack.c.b16 %v435, %v432
  %v544 = vpack.c.b16 %v436, %v433
  %v545 = vpack.c.b16 %v437, %v434
  %v546 = vpack.c.b16 %v441, %v438
  %v547 = vpack.c.b16 %v442, %v439
  %v548 = vpack.c.b16 %v443, %v440
  %v549 = vpack.c.b16 %v447, %v444
  %v550 = vpack.c.b16 %v448, %v445
  %v551 = vpack.c.b16 %v449, %v446
  %v552 = vpack.c.b16 %v453, %v450
  %v553 = vpack.c.b16 %v454, %v451
  %v554 = vpack.c.b16 %v455, %v452
  %v555 = vpack.c.b16 %v459, %v456
  %v556 = vpack.c.b16 %v460, %v457
  %v557 = vpack.c.b16 %v461, %v458
  %v558 = vpack.c.b16 %v465, %v462
  %v559 = vpack.c.b16 %v466, %v463
  %v560 = vpack.c.b16 %v467, %v464
  %v561 = vpack.c.b16 %v471, %v468
  %v562 = vpack.c.b16 %v472, %v469
  %v563 = vpack.c.b16 %v473, %v470
  %v564 = vpack.c.b16 %v477, %v474
  %v565 = vpack.c.b16 %v478, %v475
  %v566 = vpack.c.b16 %v479, %v476
  %v567 = vpack.c.b16 %v483, %v480
  %v568 = vpack.c.b16 %v484, %v481
  %v569 = vpack.c.b16 %v485, %v482
  %v570 = vpack.c.b16 %v489, %v486
  %v571 = vpack.c.b16 %v490, %v487
  %v572 = vpack.c.b16 %v491, %v488
  %v573 = vpack.c.b16 %v495, %v492
  %v574 = vpack.c.b16 %v496, %v493
  %v575 = vpack.c.b16 %v497, %v494
  %v576 = vpack.c.b16 %v501, %v498
  %v577 = vpack.c.b16 %v502, %v499
  %v578 = vpack.c.b16 %v503, %v500
  %vm654 = vcmask 130048
  %v656 = vsel %vm654, %v215, 0
  %v659 = vsel %vm654, %v219, 0
  %v662 = vsel %vm654, %v223, 0
  %v665 = vsel %vm654, %v227, 0
  %v668 = vsel %vm654, %v231, 0
  %v671 = vsel %vm654, %v235, 0
  %673 = vmatprep.subr.bf16.mxu0 %v505
  %674 = vmatpush1.bf16.msra.mxu0 %v504
  %675 = vmatprep.subr.bf16.mxu0 %v508
  %676 = vmatpush1.bf16.msra.mxu0 %v507
  %677 = vmatprep.subr.bf16.mxu0 %v511
  %678 = vmatpush1.bf16.msra.mxu0 %v510
  %679 = vmatprep.subr.bf16.mxu0 %v514
  %680 = vmatpush1.bf16.msra.mxu0 %v513
  %681 = vmatprep.subr.bf16.mxu0 %v517
  %682 = vmatpush1.bf16.msra.mxu0 %v516
  %683 = vmatprep.subr.bf16.mxu0 %v520
  %684 = vmatpush1.bf16.msra.mxu0 %v519
  %685 = vmatprep.subr.bf16.mxu0 %v523
  %686 = vmatpush1.bf16.msra.mxu0 %v522
  %687 = vmatprep.subr.bf16.mxu0 %v526
  %688 = vmatpush1.bf16.msra.mxu0 %v525
  %689 = vmatprep.subr.bf16.mxu0 %v529
  %690 = vmatpush1.bf16.msra.mxu0 %v528
  %691 = vmatprep.subr.bf16.mxu0 %v532
  %692 = vmatpush1.bf16.msra.mxu0 %v531
  %693 = vmatprep.subr.bf16.mxu0 %v535
  %694 = vmatpush1.bf16.msra.mxu0 %v534
  %695 = vmatprep.subr.bf16.mxu0 %v538
  %696 = vmatpush1.bf16.msra.mxu0 %v537
  %697 = vmatprep.subr.bf16.mxu0 %v541
  %698 = vmatpush1.bf16.msra.mxu0 %v540
  %699 = vmatprep.subr.bf16.mxu0 %v544
  %700 = vmatpush1.bf16.msra.mxu0 %v543
  %701 = vmatprep.subr.bf16.mxu0 %v547
  %702 = vmatpush1.bf16.msra.mxu0 %v546
  %703 = vmatprep.subr.bf16.mxu0 %v550
  %704 = vmatpush1.bf16.msra.mxu0 %v549
  %705 = vmatprep.mubr.bf16.mxu0 %v213
  %706 = vmatmul.mubr.bf16.gmra.mrb[0].mxu0 %v212
  %v707 = vpop.f32.mrb[0].mxu0
  %v708 = vadd.f32 0.0, %v707
  %v709 = vpop.f32.mrb[0].mxu0
  %v710 = vadd.f32 0.0, %v709
  %v711 = vpop.f32.mrb[0].mxu0
  %v712 = vadd.f32 0.0, %v711
  %v713 = vpop.f32.mrb[0].mxu0
  %v714 = vadd.f32 0.0, %v713
  %715 = vmatprep.mubr.bf16.mxu0 %v217
  %716 = vmatmul.mubr.bf16.gmra.mrb[0].mxu0 %v216
  %v717 = vpop.f32.mrb[0].mxu0
  %v718 = vadd.f32 0.0, %v717
  %v719 = vpop.f32.mrb[0].mxu0
  %v720 = vadd.f32 0.0, %v719
  %v721 = vpop.f32.mrb[0].mxu0
  %v722 = vadd.f32 0.0, %v721
  %v723 = vpop.f32.mrb[0].mxu0
  %v724 = vadd.f32 0.0, %v723
  %725 = vmatprep.mubr.bf16.mxu0 %v221
  %726 = vmatmul.mubr.bf16.gmra.mrb[0].mxu0 %v220
  %v727 = vpop.f32.mrb[0].mxu0
  %v728 = vadd.f32 0.0, %v727
  %v729 = vpop.f32.mrb[0].mxu0
  %v730 = vadd.f32 0.0, %v729
  %v731 = vpop.f32.mrb[0].mxu0
  %v732 = vadd.f32 0.0, %v731
  %v733 = vpop.f32.mrb[0].mxu0
  %v734 = vadd.f32 0.0, %v733
  %735 = vmatprep.mubr.bf16.mxu0 %v225
  %736 = vmatmul.mubr.bf16.gmra.mrb[0].mxu0 %v224
  %v737 = vpop.f32.mrb[0].mxu0
  %v738 = vadd.f32 0.0, %v737
  %v739 = vpop.f32.mrb[0].mxu0
  %v740 = vadd.f32 0.0, %v739
  %v741 = vpop.f32.mrb[0].mxu0
  %v742 = vadd.f32 0.0, %v741
  %v743 = vpop.f32.mrb[0].mxu0
  %v744 = vadd.f32 0.0, %v743
  %745 = vmatprep.mubr.bf16.mxu0 %v229
  %746 = vmatmul.mubr.bf16.gmra.mrb[0].mxu0 %v228
  %v747 = vpop.f32.mrb[0].mxu0
  %v748 = vadd.f32 0.0, %v747
  %v749 = vpop.f32.mrb[0].mxu0
  %v750 = vadd.f32 0.0, %v749
  %v751 = vpop.f32.mrb[0].mxu0
  %v752 = vadd.f32 0.0, %v751
  %v753 = vpop.f32.mrb[0].mxu0
  %v754 = vadd.f32 0.0, %v753
  %755 = vmatprep.mubr.bf16.mxu0 %v233
  %756 = vmatmul.mubr.bf16.gmra.mrb[0].mxu0 %v232
  %v757 = vpop.f32.mrb[0].mxu0
  %v758 = vadd.f32 0.0, %v757
  %v759 = vpop.f32.mrb[0].mxu0
  %v760 = vadd.f32 0.0, %v759
  %v761 = vpop.f32.mrb[0].mxu0
  %v762 = vadd.f32 0.0, %v761
  %v763 = vpop.f32.mrb[0].mxu0
  %v764 = vadd.f32 0.0, %v763
  %765 = vdwg.mxu0
  %766 = vmatprep.subr.bf16.mxu0 %v553
  %767 = vmatpush1.bf16.msra.mxu0 %v552
  %768 = vmatprep.subr.bf16.mxu0 %v556
  %769 = vmatpush1.bf16.msra.mxu0 %v555
  %770 = vmatprep.subr.bf16.mxu0 %v559
  %771 = vmatpush1.bf16.msra.mxu0 %v558
  %772 = vmatprep.subr.bf16.mxu0 %v562
  %773 = vmatpush1.bf16.msra.mxu0 %v561
  %774 = vmatprep.subr.bf16.mxu0 %v565
  %775 = vmatpush1.bf16.msra.mxu0 %v564
  %776 = vmatprep.subr.bf16.mxu0 %v568
  %777 = vmatpush1.bf16.msra.mxu0 %v567
  %778 = vmatprep.subr.bf16.mxu0 %v571
  %779 = vmatpush1.bf16.msra.mxu0 %v570
  %780 = vmatprep.subr.bf16.mxu0 %v574
  %781 = vmatpush1.bf16.msra.mxu0 %v573
  %782 = vmatprep.subr.bf16.mxu0 %v577
  %783 = vmatpush1.bf16.msra.mxu0 %v576
  %784 = vmatprep.subr.bf16.mxu0 0
  %785 = vmatpush1.bf16.msra.mxu0 0
  %786 = vmatprep.subr.bf16.mxu0 0
  %787 = vmatpush1.bf16.msra.mxu0 0
  %788 = vmatprep.subr.bf16.mxu0 0
  %789 = vmatpush1.bf16.msra.mxu0 0
  %790 = vmatprep.subr.bf16.mxu0 0
  %791 = vmatpush1.bf16.msra.mxu0 0
  %792 = vmatprep.subr.bf16.mxu0 0
  %793 = vmatpush1.bf16.msra.mxu0 0
  %794 = vmatprep.subr.bf16.mxu0 0
  %795 = vmatpush1.bf16.msra.mxu0 0
  %796 = vmatprep.subr.bf16.mxu0 0
  %797 = vmatpush1.bf16.msra.mxu0 0
  %798 = vmatprep.mubr.bf16.mxu0 %v656
  %799 = vmatmul.mubr.bf16.gmra.mrb[0].mxu0 %v214
  %v800 = vpop.f32.mrb[0].mxu0
  %v801 = vadd.f32 %v708, %v800
  %v802 = vpop.f32.mrb[0].mxu0
  %v803 = vadd.f32 %v710, %v802
  %v804 = vpop.f32.mrb[0].mxu0
  %v805 = vadd.f32 %v712, %v804
  %v806 = vpop.f32.mrb[0].mxu0
  %v807 = vadd.f32 %v714, %v806
  %808 = vmatprep.mubr.bf16.mxu0 %v659
  %809 = vmatmul.mubr.bf16.gmra.mrb[0].mxu0 %v218
  %v810 = vpop.f32.mrb[0].mxu0
  %v811 = vadd.f32 %v718, %v810
  %v812 = vpop.f32.mrb[0].mxu0
  %v813 = vadd.f32 %v720, %v812
  %v814 = vpop.f32.mrb[0].mxu0
  %v815 = vadd.f32 %v722, %v814
  %v816 = vpop.f32.mrb[0].mxu0
  %v817 = vadd.f32 %v724, %v816
  %818 = vmatprep.mubr.bf16.mxu0 %v662
  %819 = vmatmul.mubr.bf16.gmra.mrb[0].mxu0 %v222
  %v820 = vpop.f32.mrb[0].mxu0
  %v821 = vadd.f32 %v728, %v820
  %v822 = vpop.f32.mrb[0].mxu0
  %v823 = vadd.f32 %v730, %v822
  %v824 = vpop.f32.mrb[0].mxu0
  %v825 = vadd.f32 %v732, %v824
  %v826 = vpop.f32.mrb[0].mxu0
  %v827 = vadd.f32 %v734, %v826
  %828 = vmatprep.mubr.bf16.mxu0 %v665
  %829 = vmatmul.mubr.bf16.gmra.mrb[0].mxu0 %v226
  %v830 = vpop.f32.mrb[0].mxu0
  %v831 = vadd.f32 %v738, %v830
  %v832 = vpop.f32.mrb[0].mxu0
  %v833 = vadd.f32 %v740, %v832
  %v834 = vpop.f32.mrb[0].mxu0
  %v835 = vadd.f32 %v742, %v834
  %v836 = vpop.f32.mrb[0].mxu0
  %v837 = vadd.f32 %v744, %v836
  %838 = vmatprep.mubr.bf16.mxu0 %v668
  %839 = vmatmul.mubr.bf16.gmra.mrb[0].mxu0 %v230
  %v840 = vpop.f32.mrb[0].mxu0
  %v841 = vadd.f32 %v748, %v840
  %v842 = vpop.f32.mrb[0].mxu0
  %v843 = vadd.f32 %v750, %v842
  %v844 = vpop.f32.mrb[0].mxu0
  %v845 = vadd.f32 %v752, %v844
  %v846 = vpop.f32.mrb[0].mxu0
  %v847 = vadd.f32 %v754, %v846
  %848 = vmatprep.mubr.bf16.mxu0 %v671
  %849 = vmatmul.mubr.bf16.gmra.mrb[0].mxu0 %v234
  %v850 = vpop.f32.mrb[0].mxu0
  %v851 = vadd.f32 %v758, %v850
  %v852 = vpop.f32.mrb[0].mxu0
  %v853 = vadd.f32 %v760, %v852
  %v854 = vpop.f32.mrb[0].mxu0
  %v855 = vadd.f32 %v762, %v854
  %v856 = vpop.f32.mrb[0].mxu0
  %v857 = vadd.f32 %v764, %v856
  %858 = vdwg.mxu0
  %859 = vmatprep.subr.bf16.mxu0 0
  %860 = vmatpush1.bf16.msra.mxu0 %v506
  %861 = vmatprep.subr.bf16.mxu0 0
  %862 = vmatpush1.bf16.msra.mxu0 %v509
  %863 = vmatprep.subr.bf16.mxu0 0
  %864 = vmatpush1.bf16.msra.mxu0 %v512
  %865 = vmatprep.subr.bf16.mxu0 0
  %866 = vmatpush1.bf16.msra.mxu0 %v515
  %867 = vmatprep.subr.bf16.mxu0 0
  %868 = vmatpush1.bf16.msra.mxu0 %v518
  %869 = vmatprep.subr.bf16.mxu0 0
  %870 = vmatpush1.bf16.msra.mxu0 %v521
  %871 = vmatprep.subr.bf16.mxu0 0
  %872 = vmatpush1.bf16.msra.mxu0 %v524
  %873 = vmatprep.subr.bf16.mxu0 0
  %874 = vmatpush1.bf16.msra.mxu0 %v527
  %875 = vmatprep.subr.bf16.mxu0 0
  %876 = vmatpush1.bf16.msra.mxu0 %v530
  %877 = vmatprep.subr.bf16.mxu0 0
  %878 = vmatpush1.bf16.msra.mxu0 %v533
  %879 = vmatprep.subr.bf16.mxu0 0
  %880 = vmatpush1.bf16.msra.mxu0 %v536
  %881 = vmatprep.subr.bf16.mxu0 0
  %882 = vmatpush1.bf16.msra.mxu0 %v539
  %883 = vmatprep.subr.bf16.mxu0 0
  %884 = vmatpush1.bf16.msra.mxu0 %v542
  %885 = vmatprep.subr.bf16.mxu0 0
  %886 = vmatpush1.bf16.msra.mxu0 %v545
  %887 = vmatprep.subr.bf16.mxu0 0
  %888 = vmatpush1.bf16.msra.mxu0 %v548
  %889 = vmatprep.subr.bf16.mxu0 0
  %890 = vmatpush1.bf16.msra.mxu0 %v551
  %891 = vmatprep.mubr.bf16.mxu0 %v213
  %892 = vmatmul.mubr.bf16.gmra.mrb[0].mxu0 %v212
  %v893 = vpop.f32.mrb[0].mxu0
  %v894 = vadd.f32 0.0, %v893
  %v895 = vpop.f32.mrb[0].mxu0
  %v896 = vpop.f32.mrb[0].mxu0
  %v897 = vadd.f32 0.0, %v896
  %v898 = vpop.f32.mrb[0].mxu0
  %899 = vmatprep.mubr.bf16.mxu0 %v217
  %900 = vmatmul.mubr.bf16.gmra.mrb[0].mxu0 %v216
  %v901 = vpop.f32.mrb[0].mxu0
  %v902 = vadd.f32 0.0, %v901
  %v903 = vpop.f32.mrb[0].mxu0
  %v904 = vpop.f32.mrb[0].mxu0
  %v905 = vadd.f32 0.0, %v904
  %v906 = vpop.f32.mrb[0].mxu0
  %907 = vmatprep.mubr.bf16.mxu0 %v221
  %908 = vmatmul.mubr.bf16.gmra.mrb[0].mxu0 %v220
  %v909 = vpop.f32.mrb[0].mxu0
  %v910 = vadd.f32 0.0, %v909
  %v911 = vpop.f32.mrb[0].mxu0
  %v912 = vpop.f32.mrb[0].mxu0
  %v913 = vadd.f32 0.0, %v912
  %v914 = vpop.f32.mrb[0].mxu0
  %915 = vmatprep.mubr.bf16.mxu0 %v225
  %916 = vmatmul.mubr.bf16.gmra.mrb[0].mxu0 %v224
  %v917 = vpop.f32.mrb[0].mxu0
  %v918 = vadd.f32 0.0, %v917
  %v919 = vpop.f32.mrb[0].mxu0
  %v920 = vpop.f32.mrb[0].mxu0
  %v921 = vadd.f32 0.0, %v920
  %v922 = vpop.f32.mrb[0].mxu0
  %923 = vmatprep.mubr.bf16.mxu0 %v229
  %924 = vmatmul.mubr.bf16.gmra.mrb[0].mxu0 %v228
  %v925 = vpop.f32.mrb[0].mxu0
  %v926 = vadd.f32 0.0, %v925
  %v927 = vpop.f32.mrb[0].mxu0
  %v928 = vpop.f32.mrb[0].mxu0
  %v929 = vadd.f32 0.0, %v928
  %v930 = vpop.f32.mrb[0].mxu0
  %931 = vmatprep.mubr.bf16.mxu0 %v233
  %932 = vmatmul.mubr.bf16.gmra.mrb[0].mxu0 %v232
  %v933 = vpop.f32.mrb[0].mxu0
  %v934 = vadd.f32 0.0, %v933
  %v935 = vpop.f32.mrb[0].mxu0
  %v936 = vpop.f32.mrb[0].mxu0
  %v937 = vadd.f32 0.0, %v936
  %v938 = vpop.f32.mrb[0].mxu0
  %939 = vdwg.mxu0
  %940 = vmatprep.subr.bf16.mxu0 0
  %941 = vmatpush1.bf16.msra.mxu0 %v554
  %942 = vmatprep.subr.bf16.mxu0 0
  %943 = vmatpush1.bf16.msra.mxu0 %v557
  %944 = vmatprep.subr.bf16.mxu0 0
  %945 = vmatpush1.bf16.msra.mxu0 %v560
  %946 = vmatprep.subr.bf16.mxu0 0
  %947 = vmatpush1.bf16.msra.mxu0 %v563
  %948 = vmatprep.subr.bf16.mxu0 0
  %949 = vmatpush1.bf16.msra.mxu0 %v566
  %950 = vmatprep.subr.bf16.mxu0 0
  %951 = vmatpush1.bf16.msra.mxu0 %v569
  %952 = vmatprep.subr.bf16.mxu0 0
  %953 = vmatpush1.bf16.msra.mxu0 %v572
  %954 = vmatprep.subr.bf16.mxu0 0
  %955 = vmatpush1.bf16.msra.mxu0 %v575
  %956 = vmatprep.subr.bf16.mxu0 0
  %957 = vmatpush1.bf16.msra.mxu0 %v578
  %958 = vmatprep.subr.bf16.mxu0 0
  %959 = vmatpush1.bf16.msra.mxu0 0
  %960 = vmatprep.subr.bf16.mxu0 0
  %961 = vmatpush1.bf16.msra.mxu0 0
  %962 = vmatprep.subr.bf16.mxu0 0
  %963 = vmatpush1.bf16.msra.mxu0 0
  %964 = vmatprep.subr.bf16.mxu0 0
  %965 = vmatpush1.bf16.msra.mxu0 0
  %966 = vmatprep.subr.bf16.mxu0 0
  %967 = vmatpush1.bf16.msra.mxu0 0
  %968 = vmatprep.subr.bf16.mxu0 0
  %969 = vmatpush1.bf16.msra.mxu0 0
  %970 = vmatprep.subr.bf16.mxu0 0
  %971 = vmatpush1.bf16.msra.mxu0 0
  %972 = vmatprep.mubr.bf16.mxu0 %v656
  %973 = vmatmul.mubr.bf16.gmra.mrb[0].mxu0 %v214
  %v974 = vpop.f32.mrb[0].mxu0
  %v975 = vadd.f32 %v894, %v974
  %v976 = vpop.f32.mrb[0].mxu0
  %v977 = vpop.f32.mrb[0].mxu0
  %v978 = vadd.f32 %v897, %v977
  %v979 = vpop.f32.mrb[0].mxu0
  %980 = vmatprep.mubr.bf16.mxu0 %v659
  %981 = vmatmul.mubr.bf16.gmra.mrb[0].mxu0 %v218
  %v982 = vpop.f32.mrb[0].mxu0
  %v983 = vadd.f32 %v902, %v982
  %v984 = vpop.f32.mrb[0].mxu0
  %v985 = vpop.f32.mrb[0].mxu0
  %v986 = vadd.f32 %v905, %v985
  %v987 = vpop.f32.mrb[0].mxu0
  %988 = vmatprep.mubr.bf16.mxu0 %v662
  %989 = vmatmul.mubr.bf16.gmra.mrb[0].mxu0 %v222
  %v990 = vpop.f32.mrb[0].mxu0
  %v991 = vadd.f32 %v910, %v990
  %v992 = vpop.f32.mrb[0].mxu0
  %v993 = vpop.f32.mrb[0].mxu0
  %v994 = vadd.f32 %v913, %v993
  %v995 = vpop.f32.mrb[0].mxu0
  %996 = vmatprep.mubr.bf16.mxu0 %v665
  %997 = vmatmul.mubr.bf16.gmra.mrb[0].mxu0 %v226
  %v998 = vpop.f32.mrb[0].mxu0
  %v999 = vadd.f32 %v918, %v998
  %v1000 = vpop.f32.mrb[0].mxu0
  %v1001 = vpop.f32.mrb[0].mxu0
  %v1002 = vadd.f32 %v921, %v1001
  %v1003 = vpop.f32.mrb[0].mxu0
  %1004 = vmatprep.mubr.bf16.mxu0 %v668
  %1005 = vmatmul.mubr.bf16.gmra.mrb[0].mxu0 %v230
  %v1006 = vpop.f32.mrb[0].mxu0
  %v1007 = vadd.f32 %v926, %v1006
  %v1008 = vpop.f32.mrb[0].mxu0
  %v1009 = vpop.f32.mrb[0].mxu0
  %v1010 = vadd.f32 %v929, %v1009
  %v1011 = vpop.f32.mrb[0].mxu0
  %1012 = vmatprep.mubr.bf16.mxu0 %v671
  %1013 = vmatmul.mubr.bf16.gmra.mrb[0].mxu0 %v234
  %v1014 = vpop.f32.mrb[0].mxu0
  %v1015 = vadd.f32 %v934, %v1014
  %v1016 = vpop.f32.mrb[0].mxu0
  %v1017 = vpop.f32.mrb[0].mxu0
  %v1018 = vadd.f32 %v937, %v1017
  %v1019 = vpop.f32.mrb[0].mxu0
  %1020 = vdwg.mxu0
  %1033 = vrot.lane.b32.xlu0 %v801, 96
  %v1034 = vpop.permute.xlu0 %1033
  %1035 = vrot.lane.b32.xlu0 %v805, 96
  %v1036 = vpop.permute.xlu0 %1035
  %1037 = vrot.lane.b32.xlu0 %v811, 96
  %v1038 = vpop.permute.xlu0 %1037
  %1039 = vrot.lane.b32.xlu0 %v815, 96
  %v1040 = vpop.permute.xlu0 %1039
  %1041 = vrot.lane.b32.xlu0 %v821, 96
  %v1042 = vpop.permute.xlu0 %1041
  %1043 = vrot.lane.b32.xlu0 %v825, 96
  %v1044 = vpop.permute.xlu0 %1043
  %1045 = vrot.lane.b32.xlu0 %v831, 96
  %v1046 = vpop.permute.xlu0 %1045
  %1047 = vrot.lane.b32.xlu0 %v835, 96
  %v1048 = vpop.permute.xlu0 %1047
  %1049 = vrot.lane.b32.xlu0 %v841, 96
  %v1050 = vpop.permute.xlu0 %1049
  %1051 = vrot.lane.b32.xlu0 %v845, 96
  %v1052 = vpop.permute.xlu0 %1051
  %1053 = vrot.lane.b32.xlu0 %v851, 96
  %v1054 = vpop.permute.xlu0 %1053
  %1055 = vrot.lane.b32.xlu0 %v855, 96
  %v1056 = vpop.permute.xlu0 %1055
  %v1069 = vmax.f32 %v801, %v1034
  %v1070 = vmax.f32 %v805, %v1036
  %v1071 = vmax.f32 %v811, %v1038
  %v1072 = vmax.f32 %v815, %v1040
  %v1073 = vmax.f32 %v821, %v1042
  %v1074 = vmax.f32 %v825, %v1044
  %v1075 = vmax.f32 %v831, %v1046
  %v1076 = vmax.f32 %v835, %v1048
  %v1077 = vmax.f32 %v841, %v1050
  %v1078 = vmax.f32 %v845, %v1052
  %v1079 = vmax.f32 %v851, %v1054
  %v1080 = vmax.f32 %v855, %v1056
  %1081 = vrot.lane.b32.xlu0 %v801, 64
  %v1082 = vpop.permute.xlu0 %1081
  %1083 = vrot.lane.b32.xlu0 %v805, 64
  %v1084 = vpop.permute.xlu0 %1083
  %1085 = vrot.lane.b32.xlu0 %v811, 64
  %v1086 = vpop.permute.xlu0 %1085
  %1087 = vrot.lane.b32.xlu0 %v815, 64
  %v1088 = vpop.permute.xlu0 %1087
  %1089 = vrot.lane.b32.xlu0 %v821, 64
  %v1090 = vpop.permute.xlu0 %1089
  %1091 = vrot.lane.b32.xlu0 %v825, 64
  %v1092 = vpop.permute.xlu0 %1091
  %1093 = vrot.lane.b32.xlu0 %v831, 64
  %v1094 = vpop.permute.xlu0 %1093
  %1095 = vrot.lane.b32.xlu0 %v835, 64
  %v1096 = vpop.permute.xlu0 %1095
  %1097 = vrot.lane.b32.xlu0 %v841, 64
  %v1098 = vpop.permute.xlu0 %1097
  %1099 = vrot.lane.b32.xlu0 %v845, 64
  %v1100 = vpop.permute.xlu0 %1099
  %1101 = vrot.lane.b32.xlu0 %v851, 64
  %v1102 = vpop.permute.xlu0 %1101
  %1103 = vrot.lane.b32.xlu0 %v855, 64
  %v1104 = vpop.permute.xlu0 %1103
  %v1117 = vmax.f32 %v1069, %v1082
  %v1118 = vmax.f32 %v1070, %v1084
  %v1119 = vmax.f32 %v1071, %v1086
  %v1120 = vmax.f32 %v1072, %v1088
  %v1121 = vmax.f32 %v1073, %v1090
  %v1122 = vmax.f32 %v1074, %v1092
  %v1123 = vmax.f32 %v1075, %v1094
  %v1124 = vmax.f32 %v1076, %v1096
  %v1125 = vmax.f32 %v1077, %v1098
  %v1126 = vmax.f32 %v1078, %v1100
  %v1127 = vmax.f32 %v1079, %v1102
  %v1128 = vmax.f32 %v1080, %v1104
  %1129 = vrot.lane.b32.xlu0 %v801, 32
  %v1130 = vpop.permute.xlu0 %1129
  %1131 = vrot.lane.b32.xlu0 %v805, 32
  %v1132 = vpop.permute.xlu0 %1131
  %1133 = vrot.lane.b32.xlu0 %v811, 32
  %v1134 = vpop.permute.xlu0 %1133
  %1135 = vrot.lane.b32.xlu0 %v815, 32
  %v1136 = vpop.permute.xlu0 %1135
  %1137 = vrot.lane.b32.xlu0 %v821, 32
  %v1138 = vpop.permute.xlu0 %1137
  %1139 = vrot.lane.b32.xlu0 %v825, 32
  %v1140 = vpop.permute.xlu0 %1139
  %1141 = vrot.lane.b32.xlu0 %v831, 32
  %v1142 = vpop.permute.xlu0 %1141
  %1143 = vrot.lane.b32.xlu0 %v835, 32
  %v1144 = vpop.permute.xlu0 %1143
  %1145 = vrot.lane.b32.xlu0 %v841, 32
  %v1146 = vpop.permute.xlu0 %1145
  %1147 = vrot.lane.b32.xlu0 %v845, 32
  %v1148 = vpop.permute.xlu0 %1147
  %1149 = vrot.lane.b32.xlu0 %v851, 32
  %v1150 = vpop.permute.xlu0 %1149
  %1151 = vrot.lane.b32.xlu0 %v855, 32
  %v1152 = vpop.permute.xlu0 %1151
  %v1165 = vmax.f32 %v1117, %v1130
  %v1166 = vmax.f32 %v1118, %v1132
  %v1167 = vmax.f32 %v1119, %v1134
  %v1168 = vmax.f32 %v1120, %v1136
  %v1169 = vmax.f32 %v1121, %v1138
  %v1170 = vmax.f32 %v1122, %v1140
  %v1171 = vmax.f32 %v1123, %v1142
  %v1172 = vmax.f32 %v1124, %v1144
  %v1173 = vmax.f32 %v1125, %v1146
  %v1174 = vmax.f32 %v1126, %v1148
  %v1175 = vmax.f32 %v1127, %v1150
  %v1176 = vmax.f32 %v1128, %v1152
  %v1177 = vmax.f32 %v1165, %v803
  %v1178 = vmax.f32 %v1166, %v807
  %v1179 = vmax.f32 %v1167, %v813
  %v1180 = vmax.f32 %v1168, %v817
  %v1181 = vmax.f32 %v1169, %v823
  %v1182 = vmax.f32 %v1170, %v827
  %v1183 = vmax.f32 %v1171, %v833
  %v1184 = vmax.f32 %v1172, %v837
  %v1185 = vmax.f32 %v1173, %v843
  %v1186 = vmax.f32 %v1174, %v847
  %v1187 = vmax.f32 %v1175, %v853
  %v1188 = vmax.f32 %v1176, %v857
  %1201 = vrot.lane.b32.xlu0 %v803, 96
  %v1202 = vpop.permute.xlu0 %1201
  %1203 = vrot.lane.b32.xlu0 %v807, 96
  %v1204 = vpop.permute.xlu0 %1203
  %1205 = vrot.lane.b32.xlu0 %v813, 96
  %v1206 = vpop.permute.xlu0 %1205
  %1207 = vrot.lane.b32.xlu0 %v817, 96
  %v1208 = vpop.permute.xlu0 %1207
  %1209 = vrot.lane.b32.xlu0 %v823, 96
  %v1210 = vpop.permute.xlu0 %1209
  %1211 = vrot.lane.b32.xlu0 %v827, 96
  %v1212 = vpop.permute.xlu0 %1211
  %1213 = vrot.lane.b32.xlu0 %v833, 96
  %v1214 = vpop.permute.xlu0 %1213
  %1215 = vrot.lane.b32.xlu0 %v837, 96
  %v1216 = vpop.permute.xlu0 %1215
  %1217 = vrot.lane.b32.xlu0 %v843, 96
  %v1218 = vpop.permute.xlu0 %1217
  %1219 = vrot.lane.b32.xlu0 %v847, 96
  %v1220 = vpop.permute.xlu0 %1219
  %1221 = vrot.lane.b32.xlu0 %v853, 96
  %v1222 = vpop.permute.xlu0 %1221
  %1223 = vrot.lane.b32.xlu0 %v857, 96
  %v1224 = vpop.permute.xlu0 %1223
  %v1237 = vmax.f32 %v1177, %v1202
  %v1238 = vmax.f32 %v1178, %v1204
  %v1239 = vmax.f32 %v1179, %v1206
  %v1240 = vmax.f32 %v1180, %v1208
  %v1241 = vmax.f32 %v1181, %v1210
  %v1242 = vmax.f32 %v1182, %v1212
  %v1243 = vmax.f32 %v1183, %v1214
  %v1244 = vmax.f32 %v1184, %v1216
  %v1245 = vmax.f32 %v1185, %v1218
  %v1246 = vmax.f32 %v1186, %v1220
  %v1247 = vmax.f32 %v1187, %v1222
  %v1248 = vmax.f32 %v1188, %v1224
  %1249 = vrot.lane.b32.xlu0 %v803, 64
  %v1250 = vpop.permute.xlu0 %1249
  %1251 = vrot.lane.b32.xlu0 %v807, 64
  %v1252 = vpop.permute.xlu0 %1251
  %1253 = vrot.lane.b32.xlu0 %v813, 64
  %v1254 = vpop.permute.xlu0 %1253
  %1255 = vrot.lane.b32.xlu0 %v817, 64
  %v1256 = vpop.permute.xlu0 %1255
  %1257 = vrot.lane.b32.xlu0 %v823, 64
  %v1258 = vpop.permute.xlu0 %1257
  %1259 = vrot.lane.b32.xlu0 %v827, 64
  %v1260 = vpop.permute.xlu0 %1259
  %1261 = vrot.lane.b32.xlu0 %v833, 64
  %v1262 = vpop.permute.xlu0 %1261
  %1263 = vrot.lane.b32.xlu0 %v837, 64
  %v1264 = vpop.permute.xlu0 %1263
  %1265 = vrot.lane.b32.xlu0 %v843, 64
  %v1266 = vpop.permute.xlu0 %1265
  %1267 = vrot.lane.b32.xlu0 %v847, 64
  %v1268 = vpop.permute.xlu0 %1267
  %1269 = vrot.lane.b32.xlu0 %v853, 64
  %v1270 = vpop.permute.xlu0 %1269
  %1271 = vrot.lane.b32.xlu0 %v857, 64
  %v1272 = vpop.permute.xlu0 %1271
  %v1285 = vmax.f32 %v1237, %v1250
  %v1286 = vmax.f32 %v1238, %v1252
  %v1287 = vmax.f32 %v1239, %v1254
  %v1288 = vmax.f32 %v1240, %v1256
  %v1289 = vmax.f32 %v1241, %v1258
  %v1290 = vmax.f32 %v1242, %v1260
  %v1291 = vmax.f32 %v1243, %v1262
  %v1292 = vmax.f32 %v1244, %v1264
  %v1293 = vmax.f32 %v1245, %v1266
  %v1294 = vmax.f32 %v1246, %v1268
  %v1295 = vmax.f32 %v1247, %v1270
  %v1296 = vmax.f32 %v1248, %v1272
  %1297 = vrot.lane.b32.xlu0 %v803, 32
  %v1298 = vpop.permute.xlu0 %1297
  %1299 = vrot.lane.b32.xlu0 %v807, 32
  %v1300 = vpop.permute.xlu0 %1299
  %1301 = vrot.lane.b32.xlu0 %v813, 32
  %v1302 = vpop.permute.xlu0 %1301
  %1303 = vrot.lane.b32.xlu0 %v817, 32
  %v1304 = vpop.permute.xlu0 %1303
  %1305 = vrot.lane.b32.xlu0 %v823, 32
  %v1306 = vpop.permute.xlu0 %1305
  %1307 = vrot.lane.b32.xlu0 %v827, 32
  %v1308 = vpop.permute.xlu0 %1307
  %1309 = vrot.lane.b32.xlu0 %v833, 32
  %v1310 = vpop.permute.xlu0 %1309
  %1311 = vrot.lane.b32.xlu0 %v837, 32
  %v1312 = vpop.permute.xlu0 %1311
  %1313 = vrot.lane.b32.xlu0 %v843, 32
  %v1314 = vpop.permute.xlu0 %1313
  %1315 = vrot.lane.b32.xlu0 %v847, 32
  %v1316 = vpop.permute.xlu0 %1315
  %1317 = vrot.lane.b32.xlu0 %v853, 32
  %v1318 = vpop.permute.xlu0 %1317
  %1319 = vrot.lane.b32.xlu0 %v857, 32
  %v1320 = vpop.permute.xlu0 %1319
  %v1333 = vmax.f32 %v1285, %v1298
  %v1334 = vmax.f32 %v1286, %v1300
  %v1335 = vmax.f32 %v1287, %v1302
  %v1336 = vmax.f32 %v1288, %v1304
  %v1337 = vmax.f32 %v1289, %v1306
  %v1338 = vmax.f32 %v1290, %v1308
  %v1339 = vmax.f32 %v1291, %v1310
  %v1340 = vmax.f32 %v1292, %v1312
  %v1341 = vmax.f32 %v1293, %v1314
  %v1342 = vmax.f32 %v1294, %v1316
  %v1343 = vmax.f32 %v1295, %v1318
  %v1344 = vmax.f32 %v1296, %v1320
  %v1345 = vmax.f32 %v1333, %v975
  %v1346 = vmax.f32 %v1334, %v978
  %v1347 = vmax.f32 %v1335, %v983
  %v1348 = vmax.f32 %v1336, %v986
  %v1349 = vmax.f32 %v1337, %v991
  %v1350 = vmax.f32 %v1338, %v994
  %v1351 = vmax.f32 %v1339, %v999
  %v1352 = vmax.f32 %v1340, %v1002
  %v1353 = vmax.f32 %v1341, %v1007
  %v1354 = vmax.f32 %v1342, %v1010
  %v1355 = vmax.f32 %v1343, %v1015
  %v1356 = vmax.f32 %v1344, %v1018
  %v1358 = vlaneseq
  %v1359 = vshrl.u32 %v1358, 7
  %v1360 = vsub.s32 0, %v1359
  %v1361 = vrot.slane %v15, %v1360
  %v1363 = vadd.f32 %v1345, %v1361
  %v1364 = vadd.f32 %v1346, %v1361
  %v1365 = vadd.f32 %v1347, %v1361
  %v1366 = vadd.f32 %v1348, %v1361
  %v1367 = vadd.f32 %v1349, %v1361
  %v1368 = vadd.f32 %v1350, %v1361
  %v1369 = vadd.f32 %v1351, %v1361
  %v1370 = vadd.f32 %v1352, %v1361
  %v1371 = vadd.f32 %v1353, %v1361
  %v1372 = vadd.f32 %v1354, %v1361
  %v1373 = vadd.f32 %v1355, %v1361
  %v1374 = vadd.f32 %v1356, %v1361
  %v1375 = vmax.f32 %v1363, 0.0
  %v1376 = vmax.f32 %v1364, 0.0
  %v1377 = vmax.f32 %v1365, 0.0
  %v1378 = vmax.f32 %v1366, 0.0
  %v1379 = vmax.f32 %v1367, 0.0
  %v1380 = vmax.f32 %v1368, 0.0
  %v1381 = vmax.f32 %v1369, 0.0
  %v1382 = vmax.f32 %v1370, 0.0
  %v1383 = vmax.f32 %v1371, 0.0
  %v1384 = vmax.f32 %v1372, 0.0
  %v1385 = vmax.f32 %v1373, 0.0
  %v1386 = vmax.f32 %v1374, 0.0
  %v1387 = vpack.c.bf16 %v1376, %v1375
  %v1388 = vpack.c.bf16 %v1378, %v1377
  %v1389 = vpack.c.bf16 %v1380, %v1379
  %v1390 = vpack.c.bf16 %v1382, %v1381
  %v1391 = vpack.c.bf16 %v1384, %v1383
  %v1392 = vpack.c.bf16 %v1386, %v1385
  %v1399 = vunpack.c.l.b16 %v1387
  %v1400 = vunpack.c.h.b16 %v1387
  %v1401 = vunpack.c.l.b16 %v1388
  %v1402 = vunpack.c.h.b16 %v1388
  %v1403 = vunpack.c.l.b16 %v1389
  %v1404 = vunpack.c.h.b16 %v1389
  %v1405 = vunpack.c.l.b16 %v1390
  %v1406 = vunpack.c.h.b16 %v1390
  %v1407 = vunpack.c.l.b16 %v1391
  %v1408 = vunpack.c.h.b16 %v1391
  %v1409 = vunpack.c.l.b16 %v1392
  %v1410 = vunpack.c.h.b16 %v1392
  %v1411 = vpack.c.b16 %v1399, %v1399
  %v1412 = vpack.c.b16 %v1400, %v1400
  %v1413 = vpack.c.b16 %v1401, %v1401
  %v1414 = vpack.c.b16 %v1402, %v1402
  %v1415 = vpack.c.b16 %v1403, %v1403
  %v1416 = vpack.c.b16 %v1404, %v1404
  %v1417 = vpack.c.b16 %v1405, %v1405
  %v1418 = vpack.c.b16 %v1406, %v1406
  %v1419 = vpack.c.b16 %v1407, %v1407
  %v1420 = vpack.c.b16 %v1408, %v1408
  %v1421 = vpack.c.b16 %v1409, %v1409
  %v1422 = vpack.c.b16 %v1410, %v1410
  %vm1435 = vcmask 257024
  %1436 = vst.msk [vmem:[%s3] sm:$0xf] %vm1435, %v1411
  %1437 = vst.msk [vmem:[%s3 + $0x4] sm:$0xf] %vm1435, %v1412
  %1438 = vst.msk [vmem:[%s3 + $0x8] sm:$0xf] %vm1435, %v1413
  %1439 = vst.msk [vmem:[%s3 + $0xc] sm:$0xf] %vm1435, %v1414
  %1440 = vst.msk [vmem:[%s3 + $0x10] sm:$0xf] %vm1435, %v1415
  %1441 = vst.msk [vmem:[%s3 + $0x14] sm:$0xf] %vm1435, %v1416
  %1442 = vst.msk [vmem:[%s3 + $0x18] sm:$0xf] %vm1435, %v1417
  %1443 = vst.msk [vmem:[%s3 + $0x1c] sm:$0xf] %vm1435, %v1418
  %1444 = vst.msk [vmem:[%s3 + $0x20] sm:$0xf] %vm1435, %v1419
  %1445 = vst.msk [vmem:[%s3 + $0x24] sm:$0xf] %vm1435, %v1420
  %1446 = vst.msk [vmem:[%s3 + $0x28] sm:$0xf] %vm1435, %v1421
  %vm1447 = vcmask 253952
  %1448 = vst.msk [vmem:[%s3 + $0x2c] sm:$0x1] %vm1447, %v1422
  // Predicated region
  $region14: #{cnn_embedding_forward.4} parent=0 // pred_check
    _
  $region15: #{cnn_embedding_forward.4} parent=0 // pred_check_branch
    %1450 = sbr.rel (0) target = $region17
  $region16: #{cnn_embedding_forward.4} parent=0 // pred_region
    _
  $region17: #{cnn_embedding_forward.4} parent=0 // pred_fallthru
    _
  // Predicated region
  $region18: #{cnn_embedding_forward.4} parent=0 // pred_check
    _
  $region19: #{cnn_embedding_forward.4} parent=0 // pred_check_branch
    %1452 = sbr.rel (0) target = $region21
  $region20: #{cnn_embedding_forward.4} parent=0 // pred_region
    _
  $region21: #{cnn_embedding_forward.4} parent=0 // pred_fallthru
    _

// kernel: cnn_embedding_forward.5
$region0: #{cnn_embedding_forward.5}
  #allocation0 [shape = 'u32[]', space=smem, size = 0x4, offset = 0x4, fixed_abs, tag = 'smem constant byte address 0x4 - core index']
  #allocation1 [shape = 'u32[144,128]{1,0:T(1,128)}', space=vmem, size = 0x12000, scoped, tag = 'internal scratch']
  %s0 = inlined_call_operand.vmem [shape: bf16[2,1440], index: 0, kind: input, shape index: {}]
  %s1 = inlined_call_operand.vmem [shape: bf16[1440,48], index: 1, kind: input, shape index: {}]
  %s2 = inlined_call_operand.vmem [shape: f32[1,48], index: 2, kind: input, shape index: {}]
  %s3 = inlined_call_operand.vmem [shape: f32[2,48], index: 3, kind: output, shape index: {}]
  %s4 = sld [smem:[#allocation0]]
  $region22: #{cnn_embedding_forward.5} parent=0
    _
  %s6 = ssub.s32 1, %s4
  %s7 = scalar_select 0, %s6, %s4
  // Predicated region
  $region2: #{cnn_embedding_forward.5} parent=0 // pred_check
    _
  $region3: #{cnn_embedding_forward.5} parent=0 // pred_check_branch
    %9 = sbr.rel (0) target = $region5
  $region4: #{cnn_embedding_forward.5} parent=0 // pred_region
    _
  $region5: #{cnn_embedding_forward.5} parent=0 // pred_fallthru
    _
  // Predicated region
  $region6: #{cnn_embedding_forward.5} parent=0 // pred_check
    _
  $region7: #{cnn_embedding_forward.5} parent=0 // pred_check_branch
    %11 = sbr.rel (0) target = $region9
  $region8: #{cnn_embedding_forward.5} parent=0 // pred_region
    _
  $region9: #{cnn_embedding_forward.5} parent=0 // pred_fallthru
    _
  // Predicated region
  $region10: #{cnn_embedding_forward.5} parent=0 // pred_check
    _
  $region11: #{cnn_embedding_forward.5} parent=0 // pred_check_branch
    %13 = sbr.rel (0) target = $region13
  $region12: #{cnn_embedding_forward.5} parent=0 // pred_region
    _
  $region13: #{cnn_embedding_forward.5} parent=0 // pred_fallthru
    _
  %v15 = vld [vmem:[%s0] sm:$0xff]
  %v16 = vld [vmem:[%s0 + $0x8] sm:$0xf]
  %v17 = vld [vmem:[%s1] sm:$0xf]
  %v18 = vld [vmem:[%s1 + $0x4] sm:$0xf]
  %v19 = vld [vmem:[%s1 + $0x8] sm:$0xf]
  %v20 = vld [vmem:[%s1 + $0xc] sm:$0xf]
  %v21 = vld [vmem:[%s1 + $0x10] sm:$0xf]
  %v22 = vld [vmem:[%s1 + $0x14] sm:$0xf]
  %v23 = vld [vmem:[%s1 + $0x18] sm:$0xf]
  %v24 = vld [vmem:[%s1 + $0x1c] sm:$0xf]
  %v25 = vld [vmem:[%s1 + $0x20] sm:$0xf]
  %v26 = vld [vmem:[%s1 + $0x24] sm:$0xf]
  %v27 = vld [vmem:[%s1 + $0x28] sm:$0xf]
  %v28 = vld [vmem:[%s1 + $0x2c] sm:$0xf]
  %v29 = vld [vmem:[%s1 + $0x30] sm:$0xf]
  %v30 = vld [vmem:[%s1 + $0x34] sm:$0xf]
  %v31 = vld [vmem:[%s1 + $0x38] sm:$0xf]
  %v32 = vld [vmem:[%s1 + $0x3c] sm:$0xf]
  %v33 = vld [vmem:[%s1 + $0x40] sm:$0xf]
  %v34 = vld [vmem:[%s1 + $0x44] sm:$0xf]
  %v35 = vld [vmem:[%s1 + $0x48] sm:$0xf]
  %v36 = vld [vmem:[%s1 + $0x4c] sm:$0xf]
  %v37 = vld [vmem:[%s1 + $0x50] sm:$0xf]
  %v38 = vld [vmem:[%s1 + $0x54] sm:$0xf]
  %v39 = vld [vmem:[%s1 + $0x58] sm:$0xf]
  %v40 = vld [vmem:[%s1 + $0x5c] sm:$0xf]
  %v41 = vld [vmem:[%s1 + $0x60] sm:$0xf]
  %v42 = vld [vmem:[%s1 + $0x64] sm:$0xf]
  %v43 = vld [vmem:[%s1 + $0x68] sm:$0xf]
  %v44 = vld [vmem:[%s1 + $0x6c] sm:$0xf]
  %v45 = vld [vmem:[%s1 + $0x70] sm:$0xf]
  %v46 = vld [vmem:[%s1 + $0x74] sm:$0xf]
  %v47 = vld [vmem:[%s1 + $0x78] sm:$0xf]
  %v48 = vld [vmem:[%s1 + $0x7c] sm:$0xf]
  %v49 = vld [vmem:[%s1 + $0x80] sm:$0xf]
  %v50 = vld [vmem:[%s1 + $0x84] sm:$0xf]
  %v51 = vld [vmem:[%s1 + $0x88] sm:$0xf]
  %v52 = vld [vmem:[%s1 + $0x8c] sm:$0xf]
  %v53 = vld [vmem:[%s1 + $0x90] sm:$0xf]
  %v54 = vld [vmem:[%s1 + $0x94] sm:$0xf]
  %v55 = vld [vmem:[%s1 + $0x98] sm:$0xf]
  %v56 = vld [vmem:[%s1 + $0x9c] sm:$0xf]
  %v57 = vld [vmem:[%s1 + $0xa0] sm:$0xf]
  %v58 = vld [vmem:[%s1 + $0xa4] sm:$0xf]
  %v59 = vld [vmem:[%s1 + $0xa8] sm:$0xf]
  %v60 = vld [vmem:[%s1 + $0xac] sm:$0xf]
  %v61 = vld [vmem:[%s1 + $0xb0] sm:$0xf]
  %v62 = vld [vmem:[%s1 + $0xb4] sm:$0xf]
  %v63 = vld [vmem:[%s1 + $0xb8] sm:$0xf]
  %v64 = vld [vmem:[%s1 + $0xbc] sm:$0xf]
  %v65 = vld [vmem:[%s1 + $0xc0] sm:$0xf]
  %v66 = vld [vmem:[%s1 + $0xc4] sm:$0xf]
  %v67 = vld [vmem:[%s1 + $0xc8] sm:$0xf]
  %v68 = vld [vmem:[%s1 + $0xcc] sm:$0xf]
  %v69 = vld [vmem:[%s1 + $0xd0] sm:$0xf]
  %v70 = vld [vmem:[%s1 + $0xd4] sm:$0xf]
  %v71 = vld [vmem:[%s1 + $0xd8] sm:$0xf]
  %v72 = vld [vmem:[%s1 + $0xdc] sm:$0xf]
  %v73 = vld [vmem:[%s1 + $0xe0] sm:$0xf]
  %v74 = vld [vmem:[%s1 + $0xe4] sm:$0xf]
  %v75 = vld [vmem:[%s1 + $0xe8] sm:$0xf]
  %v76 = vld [vmem:[%s1 + $0xec] sm:$0xf]
  %v77 = vld [vmem:[%s1 + $0xf0] sm:$0xf]
  %v78 = vld [vmem:[%s1 + $0xf4] sm:$0xf]
  %v79 = vld [vmem:[%s1 + $0xf8] sm:$0xf]
  %v80 = vld [vmem:[%s1 + $0xfc] sm:$0xf]
  %v81 = vld [vmem:[%s1 + $0x100] sm:$0xf]
  %v82 = vld [vmem:[%s1 + $0x104] sm:$0xf]
  %v83 = vld [vmem:[%s1 + $0x108] sm:$0xf]
  %v84 = vld [vmem:[%s1 + $0x10c] sm:$0xf]
  %v85 = vld [vmem:[%s1 + $0x110] sm:$0xf]
  %v86 = vld [vmem:[%s1 + $0x114] sm:$0xf]
  %v87 = vld [vmem:[%s1 + $0x118] sm:$0xf]
  %v88 = vld [vmem:[%s1 + $0x11c] sm:$0xf]
  %v89 = vld [vmem:[%s1 + $0x120] sm:$0xf]
  %v90 = vld [vmem:[%s1 + $0x124] sm:$0xf]
  %v91 = vld [vmem:[%s1 + $0x128] sm:$0xf]
  %v92 = vld [vmem:[%s1 + $0x12c] sm:$0xf]
  %v93 = vld [vmem:[%s1 + $0x130] sm:$0xf]
  %v94 = vld [vmem:[%s1 + $0x134] sm:$0xf]
  %v95 = vld [vmem:[%s1 + $0x138] sm:$0xf]
  %v96 = vld [vmem:[%s1 + $0x13c] sm:$0xf]
  %v97 = vld [vmem:[%s1 + $0x140] sm:$0xf]
  %v98 = vld [vmem:[%s1 + $0x144] sm:$0xf]
  %v99 = vld [vmem:[%s1 + $0x148] sm:$0xf]
  %v100 = vld [vmem:[%s1 + $0x14c] sm:$0xf]
  %v101 = vld [vmem:[%s1 + $0x150] sm:$0xf]
  %v102 = vld [vmem:[%s1 + $0x154] sm:$0xf]
  %v103 = vld [vmem:[%s1 + $0x158] sm:$0xf]
  %v104 = vld [vmem:[%s1 + $0x15c] sm:$0xf]
  %v105 = vld [vmem:[%s1 + $0x160] sm:$0xf]
  %v106 = vld [vmem:[%s1 + $0x164] sm:$0xf]
  %v107 = vld [vmem:[%s1 + $0x168] sm:$0xf]
  %v108 = vld [vmem:[%s1 + $0x16c] sm:$0xf]
  %v109 = vld [vmem:[%s1 + $0x170] sm:$0xf]
  %v110 = vld [vmem:[%s1 + $0x174] sm:$0xf]
  %v111 = vld [vmem:[%s1 + $0x178] sm:$0xf]
  %v112 = vld [vmem:[%s1 + $0x17c] sm:$0xf]
  %v113 = vld [vmem:[%s1 + $0x180] sm:$0xf]
  %v114 = vld [vmem:[%s1 + $0x184] sm:$0xf]
  %v115 = vld [vmem:[%s1 + $0x188] sm:$0xf]
  %v116 = vld [vmem:[%s1 + $0x18c] sm:$0xf]
  %v117 = vld [vmem:[%s1 + $0x190] sm:$0xf]
  %v118 = vld [vmem:[%s1 + $0x194] sm:$0xf]
  %v119 = vld [vmem:[%s1 + $0x198] sm:$0xf]
  %v120 = vld [vmem:[%s1 + $0x19c] sm:$0xf]
  %v121 = vld [vmem:[%s1 + $0x1a0] sm:$0xf]
  %v122 = vld [vmem:[%s1 + $0x1a4] sm:$0xf]
  %v123 = vld [vmem:[%s1 + $0x1a8] sm:$0xf]
  %v124 = vld [vmem:[%s1 + $0x1ac] sm:$0xf]
  %v125 = vld [vmem:[%s1 + $0x1b0] sm:$0xf]
  %v126 = vld [vmem:[%s1 + $0x1b4] sm:$0xf]
  %v127 = vld [vmem:[%s1 + $0x1b8] sm:$0xf]
  %v128 = vld [vmem:[%s1 + $0x1bc] sm:$0xf]
  %v129 = vld [vmem:[%s1 + $0x1c0] sm:$0xf]
  %v130 = vld [vmem:[%s1 + $0x1c4] sm:$0xf]
  %v131 = vld [vmem:[%s1 + $0x1c8] sm:$0xf]
  %v132 = vld [vmem:[%s1 + $0x1cc] sm:$0xf]
  %v133 = vld [vmem:[%s1 + $0x1d0] sm:$0xf]
  %v134 = vld [vmem:[%s1 + $0x1d4] sm:$0xf]
  %v135 = vld [vmem:[%s1 + $0x1d8] sm:$0xf]
  %v136 = vld [vmem:[%s1 + $0x1dc] sm:$0xf]
  %v137 = vld [vmem:[%s1 + $0x1e0] sm:$0xf]
  %v138 = vld [vmem:[%s1 + $0x1e4] sm:$0xf]
  %v139 = vld [vmem:[%s1 + $0x1e8] sm:$0xf]
  %v140 = vld [vmem:[%s1 + $0x1ec] sm:$0xf]
  %v141 = vld [vmem:[%s1 + $0x1f0] sm:$0xf]
  %v142 = vld [vmem:[%s1 + $0x1f4] sm:$0xf]
  %v143 = vld [vmem:[%s1 + $0x1f8] sm:$0xf]
  %v144 = vld [vmem:[%s1 + $0x1fc] sm:$0xf]
  %v145 = vld [vmem:[%s1 + $0x200] sm:$0xf]
  %v146 = vld [vmem:[%s1 + $0x204] sm:$0xf]
  %v147 = vld [vmem:[%s1 + $0x208] sm:$0xf]
  %v148 = vld [vmem:[%s1 + $0x20c] sm:$0xf]
  %v149 = vld [vmem:[%s1 + $0x210] sm:$0xf]
  %v150 = vld [vmem:[%s1 + $0x214] sm:$0xf]
  %v151 = vld [vmem:[%s1 + $0x218] sm:$0xf]
  %v152 = vld [vmem:[%s1 + $0x21c] sm:$0xf]
  %v153 = vld [vmem:[%s1 + $0x220] sm:$0xf]
  %v154 = vld [vmem:[%s1 + $0x224] sm:$0xf]
  %v155 = vld [vmem:[%s1 + $0x228] sm:$0xf]
  %v156 = vld [vmem:[%s1 + $0x22c] sm:$0xf]
  %v157 = vld [vmem:[%s1 + $0x230] sm:$0xf]
  %v158 = vld [vmem:[%s1 + $0x234] sm:$0xf]
  %v159 = vld [vmem:[%s1 + $0x238] sm:$0xf]
  %v160 = vld [vmem:[%s1 + $0x23c] sm:$0xf]
  %v161 = vld [vmem:[%s1 + $0x240] sm:$0xf]
  %v162 = vld [vmem:[%s1 + $0x244] sm:$0xf]
  %v163 = vld [vmem:[%s1 + $0x248] sm:$0xf]
  %v164 = vld [vmem:[%s1 + $0x24c] sm:$0xf]
  %v165 = vld [vmem:[%s1 + $0x250] sm:$0xf]
  %v166 = vld [vmem:[%s1 + $0x254] sm:$0xf]
  %v167 = vld [vmem:[%s1 + $0x258] sm:$0xf]
  %v168 = vld [vmem:[%s1 + $0x25c] sm:$0xf]
  %v169 = vld [vmem:[%s1 + $0x260] sm:$0xf]
  %v170 = vld [vmem:[%s1 + $0x264] sm:$0xf]
  %v171 = vld [vmem:[%s1 + $0x268] sm:$0xf]
  %v172 = vld [vmem:[%s1 + $0x26c] sm:$0xf]
  %v173 = vld [vmem:[%s1 + $0x270] sm:$0xf]
  %v174 = vld [vmem:[%s1 + $0x274] sm:$0xf]
  %v175 = vld [vmem:[%s1 + $0x278] sm:$0xf]
  %v176 = vld [vmem:[%s1 + $0x27c] sm:$0xf]
  %v177 = vld [vmem:[%s1 + $0x280] sm:$0xf]
  %v178 = vld [vmem:[%s1 + $0x284] sm:$0xf]
  %v179 = vld [vmem:[%s1 + $0x288] sm:$0xf]
  %v180 = vld [vmem:[%s1 + $0x28c] sm:$0xf]
  %v181 = vld [vmem:[%s1 + $0x290] sm:$0xf]
  %v182 = vld [vmem:[%s1 + $0x294] sm:$0xf]
  %v183 = vld [vmem:[%s1 + $0x298] sm:$0xf]
  %v184 = vld [vmem:[%s1 + $0x29c] sm:$0xf]
  %v185 = vld [vmem:[%s1 + $0x2a0] sm:$0xf]
  %v186 = vld [vmem:[%s1 + $0x2a4] sm:$0xf]
  %v187 = vld [vmem:[%s1 + $0x2a8] sm:$0xf]
  %v188 = vld [vmem:[%s1 + $0x2ac] sm:$0xf]
  %v189 = vld [vmem:[%s1 + $0x2b0] sm:$0xf]
  %v190 = vld [vmem:[%s1 + $0x2b4] sm:$0xf]
  %v191 = vld [vmem:[%s1 + $0x2b8] sm:$0xf]
  %v192 = vld [vmem:[%s1 + $0x2bc] sm:$0xf]
  %v193 = vld [vmem:[%s1 + $0x2c0] sm:$0xf]
  %v194 = vld [vmem:[%s1 + $0x2c4] sm:$0xf]
  %v195 = vld [vmem:[%s1 + $0x2c8] sm:$0xf]
  %v196 = vld [vmem:[%s1 + $0x2cc] sm:$0xf]
  %v197 = vld [vmem:[%s2] sm:$0x1]
  %v199 = vlaneseq
  %v200 = vshrl.u32 %v199, 7
  %v201 = vsub.s32 0, %v200
  %v202 = vrot.slane %v197, %v201
  %v206 = vcombine.high %v15, %v15
  %v208 = vunpack.c.l.s4 1966171168
  %v209 = vunpack.c.0.s8 %v208
  %v210 = vlaneseq
  %v211 = vshrl.u32 %v210, 7
  %v212 = vsub.s32 %v209, %v211
  %v213 = vrot.slane %v15, %v212
  %v215 = vunpack.c.l.s4 1966171168
  %v216 = vunpack.c.0.s8 %v215
  %v217 = vlaneseq
  %v218 = vshrl.u32 %v217, 7
  %v219 = vsub.s32 %v216, %v218
  %v220 = vrot.slane %v206, %v219
  %v221 = vcombine.high %v213, %v213
  %v222 = vcombine.high %v220, %v220
  %v224 = vunpack.c.l.s4 1966171168
  %v225 = vunpack.c.0.s8 %v224
  %v226 = vlaneseq
  %v227 = vshrl.u32 %v226, 7
  %v228 = vsub.s32 %v225, %v227
  %v229 = vrot.slane %v213, %v228
  %v231 = vunpack.c.l.s4 1966171168
  %v232 = vunpack.c.0.s8 %v231
  %v233 = vlaneseq
  %v234 = vshrl.u32 %v233, 7
  %v235 = vsub.s32 %v232, %v234
  %v236 = vrot.slane %v220, %v235
  %v238 = vunpack.c.l.s4 1966171168
  %v239 = vunpack.c.0.s8 %v238
  %v240 = vlaneseq
  %v241 = vshrl.u32 %v240, 7
  %v242 = vsub.s32 %v239, %v241
  %v243 = vrot.slane %v221, %v242
  %v245 = vunpack.c.l.s4 1966171168
  %v246 = vunpack.c.0.s8 %v245
  %v247 = vlaneseq
  %v248 = vshrl.u32 %v247, 7
  %v249 = vsub.s32 %v246, %v248
  %v250 = vrot.slane %v222, %v249
  %v251 = vcombine.high %v229, %v229
  %v252 = vcombine.high %v236, %v236
  %v253 = vcombine.high %v243, %v243
  %v254 = vcombine.high %v250, %v250
  %v256 = vunpack.c.l.s4 1966171168
  %v257 = vunpack.c.0.s8 %v256
  %v258 = vlaneseq
  %v259 = vshrl.u32 %v258, 7
  %v260 = vsub.s32 %v257, %v259
  %v261 = vrot.slane %v16, %v260
  %v262 = vcombine.high %v261, %v261
  %v264 = vunpack.c.l.s4 1966171168
  %v265 = vunpack.c.0.s8 %v264
  %v266 = vlaneseq
  %v267 = vshrl.u32 %v266, 7
  %v268 = vsub.s32 %v265, %v267
  %v269 = vrot.slane %v261, %v268
  %v271 = vunpack.c.l.s4 1966171168
  %v272 = vunpack.c.0.s8 %v271
  %v273 = vlaneseq
  %v274 = vshrl.u32 %v273, 7
  %v275 = vsub.s32 %v272, %v274
  %v276 = vrot.slane %v262, %v275
  %v277 = vcombine.high %v269, %v269
  %v278 = vcombine.high %v276, %v276
  %v470 = vunpack.c.l.b16 %v17
  %v471 = vunpack.c.l.b16 %v18
  %v472 = vunpack.c.l.b16 %v19
  %v473 = vunpack.c.l.b16 %v20
  %v474 = vunpack.c.l.b16 %v21
  %v475 = vunpack.c.l.b16 %v22
  %v476 = vunpack.c.l.b16 %v23
  %v477 = vunpack.c.l.b16 %v24
  %v478 = vunpack.c.l.b16 %v25
  %v479 = vunpack.c.l.b16 %v26
  %v480 = vunpack.c.l.b16 %v27
  %v481 = vunpack.c.l.b16 %v28
  %v482 = vunpack.c.l.b16 %v29
  %v483 = vunpack.c.l.b16 %v30
  %v484 = vunpack.c.l.b16 %v31
  %v485 = vunpack.c.l.b16 %v32
  %v486 = vunpack.c.l.b16 %v33
  %v487 = vunpack.c.l.b16 %v34
  %v488 = vunpack.c.l.b16 %v35
  %v489 = vunpack.c.l.b16 %v36
  %v490 = vunpack.c.l.b16 %v37
  %v491 = vunpack.c.l.b16 %v38
  %v492 = vunpack.c.l.b16 %v39
  %v493 = vunpack.c.l.b16 %v40
  %v494 = vunpack.c.l.b16 %v41
  %v495 = vunpack.c.l.b16 %v42
  %v496 = vunpack.c.l.b16 %v43
  %v497 = vunpack.c.l.b16 %v44
  %v498 = vunpack.c.l.b16 %v45
  %v499 = vunpack.c.l.b16 %v46
  %v500 = vunpack.c.l.b16 %v47
  %v501 = vunpack.c.l.b16 %v48
  %v502 = vunpack.c.l.b16 %v49
  %v503 = vunpack.c.l.b16 %v50
  %v504 = vunpack.c.l.b16 %v51
  %v505 = vunpack.c.l.b16 %v52
  %v506 = vunpack.c.l.b16 %v53
  %v507 = vunpack.c.l.b16 %v54
  %v508 = vunpack.c.l.b16 %v55
  %v509 = vunpack.c.l.b16 %v56
  %v510 = vunpack.c.l.b16 %v57
  %v511 = vunpack.c.l.b16 %v58
  %v512 = vunpack.c.l.b16 %v59
  %v513 = vunpack.c.l.b16 %v60
  %v514 = vunpack.c.l.b16 %v61
  %v515 = vunpack.c.l.b16 %v62
  %v516 = vunpack.c.l.b16 %v63
  %v517 = vunpack.c.l.b16 %v64
  %v518 = vunpack.c.l.b16 %v65
  %v519 = vunpack.c.l.b16 %v66
  %v520 = vunpack.c.l.b16 %v67
  %v521 = vunpack.c.l.b16 %v68
  %v522 = vunpack.c.l.b16 %v69
  %v523 = vunpack.c.l.b16 %v70
  %v524 = vunpack.c.l.b16 %v71
  %v525 = vunpack.c.l.b16 %v72
  %v526 = vunpack.c.l.b16 %v73
  %v527 = vunpack.c.l.b16 %v74
  %v528 = vunpack.c.l.b16 %v75
  %v529 = vunpack.c.l.b16 %v76
  %v530 = vunpack.c.l.b16 %v77
  %v531 = vunpack.c.l.b16 %v78
  %v532 = vunpack.c.l.b16 %v79
  %v533 = vunpack.c.l.b16 %v80
  %v534 = vunpack.c.l.b16 %v81
  %v535 = vunpack.c.l.b16 %v82
  %v536 = vunpack.c.l.b16 %v83
  %v537 = vunpack.c.l.b16 %v84
  %v538 = vunpack.c.l.b16 %v85
  %v539 = vunpack.c.l.b16 %v86
  %v540 = vunpack.c.l.b16 %v87
  %v541 = vunpack.c.l.b16 %v88
  %v542 = vunpack.c.l.b16 %v89
  %v543 = vunpack.c.l.b16 %v90
  %v544 = vunpack.c.l.b16 %v91
  %v545 = vunpack.c.l.b16 %v92
  %v546 = vunpack.c.l.b16 %v93
  %v547 = vunpack.c.l.b16 %v94
  %v548 = vunpack.c.l.b16 %v95
  %v549 = vunpack.c.l.b16 %v96
  %v550 = vunpack.c.l.b16 %v97
  %v551 = vunpack.c.l.b16 %v98
  %v552 = vunpack.c.l.b16 %v99
  %v553 = vunpack.c.l.b16 %v100
  %v554 = vunpack.c.l.b16 %v101
  %v555 = vunpack.c.l.b16 %v102
  %v556 = vunpack.c.l.b16 %v103
  %v557 = vunpack.c.l.b16 %v104
  %v558 = vunpack.c.l.b16 %v105
  %v559 = vunpack.c.l.b16 %v106
  %v560 = vunpack.c.l.b16 %v107
  %v561 = vunpack.c.l.b16 %v108
  %v562 = vunpack.c.l.b16 %v109
  %v563 = vunpack.c.l.b16 %v110
  %v564 = vunpack.c.l.b16 %v111
  %v565 = vunpack.c.l.b16 %v112
  %v566 = vunpack.c.l.b16 %v113
  %v567 = vunpack.c.l.b16 %v114
  %v568 = vunpack.c.l.b16 %v115
  %v569 = vunpack.c.l.b16 %v116
  %v570 = vunpack.c.l.b16 %v117
  %v571 = vunpack.c.l.b16 %v118
  %v572 = vunpack.c.l.b16 %v119
  %v573 = vunpack.c.l.b16 %v120
  %v574 = vunpack.c.l.b16 %v121
  %v575 = vunpack.c.l.b16 %v122
  %v576 = vunpack.c.l.b16 %v123
  %v577 = vunpack.c.l.b16 %v124
  %v578 = vunpack.c.l.b16 %v125
  %v579 = vunpack.c.l.b16 %v126
  %v580 = vunpack.c.l.b16 %v127
  %v581 = vunpack.c.l.b16 %v128
  %v582 = vunpack.c.l.b16 %v129
  %v583 = vunpack.c.l.b16 %v130
  %v584 = vunpack.c.l.b16 %v131
  %v585 = vunpack.c.l.b16 %v132
  %v586 = vunpack.c.l.b16 %v133
  %v587 = vunpack.c.l.b16 %v134
  %v588 = vunpack.c.l.b16 %v135
  %v589 = vunpack.c.l.b16 %v136
  %v590 = vunpack.c.l.b16 %v137
  %v591 = vunpack.c.l.b16 %v138
  %v592 = vunpack.c.l.b16 %v139
  %v593 = vunpack.c.l.b16 %v140
  %v594 = vunpack.c.l.b16 %v141
  %v595 = vunpack.c.l.b16 %v142
  %v596 = vunpack.c.l.b16 %v143
  %v597 = vunpack.c.l.b16 %v144
  %v598 = vunpack.c.l.b16 %v145
  %v599 = vunpack.c.l.b16 %v146
  %v600 = vunpack.c.l.b16 %v147
  %v601 = vunpack.c.l.b16 %v148
  %v602 = vunpack.c.l.b16 %v149
  %v603 = vunpack.c.l.b16 %v150
  %v604 = vunpack.c.l.b16 %v151
  %v605 = vunpack.c.l.b16 %v152
  %v606 = vunpack.c.l.b16 %v153
  %v607 = vunpack.c.l.b16 %v154
  %v608 = vunpack.c.l.b16 %v155
  %v609 = vunpack.c.l.b16 %v156
  %v610 = vunpack.c.l.b16 %v157
  %v611 = vunpack.c.l.b16 %v158
  %v612 = vunpack.c.l.b16 %v159
  %v613 = vunpack.c.l.b16 %v160
  %v614 = vunpack.c.l.b16 %v161
  %v615 = vunpack.c.l.b16 %v162
  %v616 = vunpack.c.l.b16 %v163
  %v617 = vunpack.c.l.b16 %v164
  %v618 = vunpack.c.l.b16 %v165
  %v619 = vunpack.c.l.b16 %v166
  %v620 = vunpack.c.l.b16 %v167
  %v621 = vunpack.c.l.b16 %v168
  %v622 = vunpack.c.l.b16 %v169
  %v623 = vunpack.c.l.b16 %v170
  %v624 = vunpack.c.l.b16 %v171
  %v625 = vunpack.c.l.b16 %v172
  %v626 = vunpack.c.l.b16 %v173
  %v627 = vunpack.c.l.b16 %v174
  %v628 = vunpack.c.l.b16 %v175
  %v629 = vunpack.c.l.b16 %v176
  %v630 = vunpack.c.l.b16 %v177
  %v631 = vunpack.c.l.b16 %v178
  %v632 = vunpack.c.l.b16 %v179
  %v633 = vunpack.c.l.b16 %v180
  %v634 = vunpack.c.l.b16 %v181
  %v635 = vunpack.c.l.b16 %v182
  %v636 = vunpack.c.l.b16 %v183
  %v637 = vunpack.c.l.b16 %v184
  %v638 = vunpack.c.l.b16 %v185
  %v639 = vunpack.c.l.b16 %v186
  %v640 = vunpack.c.l.b16 %v187
  %v641 = vunpack.c.l.b16 %v188
  %v642 = vunpack.c.l.b16 %v189
  %v643 = vunpack.c.l.b16 %v190
  %v644 = vunpack.c.l.b16 %v191
  %v645 = vunpack.c.l.b16 %v192
  %v646 = vunpack.c.l.b16 %v193
  %v647 = vunpack.c.l.b16 %v194
  %v648 = vunpack.c.l.b16 %v195
  %v649 = vunpack.c.l.b16 %v196
  %v650 = vpack.c.b16 %v471, %v470
  %v651 = vpack.c.b16 %v473, %v472
  %v652 = vpack.c.b16 %v475, %v474
  %v653 = vpack.c.b16 %v477, %v476
  %v654 = vpack.c.b16 %v479, %v478
  %v655 = vpack.c.b16 %v481, %v480
  %v656 = vpack.c.b16 %v483, %v482
  %v657 = vpack.c.b16 %v485, %v484
  %v658 = vpack.c.b16 %v487, %v486
  %v659 = vpack.c.b16 %v489, %v488
  %v660 = vpack.c.b16 %v491, %v490
  %v661 = vpack.c.b16 %v493, %v492
  %v662 = vpack.c.b16 %v495, %v494
  %v663 = vpack.c.b16 %v497, %v496
  %v664 = vpack.c.b16 %v499, %v498
  %v665 = vpack.c.b16 %v501, %v500
  %v666 = vpack.c.b16 %v503, %v502
  %v667 = vpack.c.b16 %v505, %v504
  %v668 = vpack.c.b16 %v507, %v506
  %v669 = vpack.c.b16 %v509, %v508
  %v670 = vpack.c.b16 %v511, %v510
  %v671 = vpack.c.b16 %v513, %v512
  %v672 = vpack.c.b16 %v515, %v514
  %v673 = vpack.c.b16 %v517, %v516
  %v674 = vpack.c.b16 %v519, %v518
  %v675 = vpack.c.b16 %v521, %v520
  %v676 = vpack.c.b16 %v523, %v522
  %v677 = vpack.c.b16 %v525, %v524
  %v678 = vpack.c.b16 %v527, %v526
  %v679 = vpack.c.b16 %v529, %v528
  %v680 = vpack.c.b16 %v531, %v530
  %v681 = vpack.c.b16 %v533, %v532
  %v682 = vpack.c.b16 %v535, %v534
  %v683 = vpack.c.b16 %v537, %v536
  %v684 = vpack.c.b16 %v539, %v538
  %v685 = vpack.c.b16 %v541, %v540
  %v686 = vpack.c.b16 %v543, %v542
  %v687 = vpack.c.b16 %v545, %v544
  %v688 = vpack.c.b16 %v547, %v546
  %v689 = vpack.c.b16 %v549, %v548
  %v690 = vpack.c.b16 %v551, %v550
  %v691 = vpack.c.b16 %v553, %v552
  %v692 = vpack.c.b16 %v555, %v554
  %v693 = vpack.c.b16 %v557, %v556
  %v694 = vpack.c.b16 %v559, %v558
  %v695 = vpack.c.b16 %v561, %v560
  %v696 = vpack.c.b16 %v563, %v562
  %v697 = vpack.c.b16 %v565, %v564
  %v698 = vpack.c.b16 %v567, %v566
  %v699 = vpack.c.b16 %v569, %v568
  %v700 = vpack.c.b16 %v571, %v570
  %v701 = vpack.c.b16 %v573, %v572
  %v702 = vpack.c.b16 %v575, %v574
  %v703 = vpack.c.b16 %v577, %v576
  %v704 = vpack.c.b16 %v579, %v578
  %v705 = vpack.c.b16 %v581, %v580
  %v706 = vpack.c.b16 %v583, %v582
  %v707 = vpack.c.b16 %v585, %v584
  %v708 = vpack.c.b16 %v587, %v586
  %v709 = vpack.c.b16 %v589, %v588
  %v710 = vpack.c.b16 %v591, %v590
  %v711 = vpack.c.b16 %v593, %v592
  %v712 = vpack.c.b16 %v595, %v594
  %v713 = vpack.c.b16 %v597, %v596
  %v714 = vpack.c.b16 %v599, %v598
  %v715 = vpack.c.b16 %v601, %v600
  %v716 = vpack.c.b16 %v603, %v602
  %v717 = vpack.c.b16 %v605, %v604
  %v718 = vpack.c.b16 %v607, %v606
  %v719 = vpack.c.b16 %v609, %v608
  %v720 = vpack.c.b16 %v611, %v610
  %v721 = vpack.c.b16 %v613, %v612
  %v722 = vpack.c.b16 %v615, %v614
  %v723 = vpack.c.b16 %v617, %v616
  %v724 = vpack.c.b16 %v619, %v618
  %v725 = vpack.c.b16 %v621, %v620
  %v726 = vpack.c.b16 %v623, %v622
  %v727 = vpack.c.b16 %v625, %v624
  %v728 = vpack.c.b16 %v627, %v626
  %v729 = vpack.c.b16 %v629, %v628
  %v730 = vpack.c.b16 %v631, %v630
  %v731 = vpack.c.b16 %v633, %v632
  %v732 = vpack.c.b16 %v635, %v634
  %v733 = vpack.c.b16 %v637, %v636
  %v734 = vpack.c.b16 %v639, %v638
  %v735 = vpack.c.b16 %v641, %v640
  %v736 = vpack.c.b16 %v643, %v642
  %v737 = vpack.c.b16 %v645, %v644
  %v738 = vpack.c.b16 %v647, %v646
  %v739 = vpack.c.b16 %v649, %v648
  %vm830 = vcmask 261120
  %v832 = vsel %vm830, %v278, 0
  %834 = vmatprep.subr.bf16.mxu0 0
  %835 = vmatpush1.bf16.msra.mxu0 %v650
  %836 = vmatprep.subr.bf16.mxu0 0
  %837 = vmatpush1.bf16.msra.mxu0 %v651
  %838 = vmatprep.subr.bf16.mxu0 0
  %839 = vmatpush1.bf16.msra.mxu0 %v652
  %840 = vmatprep.subr.bf16.mxu0 0
  %841 = vmatpush1.bf16.msra.mxu0 %v653
  %842 = vmatprep.subr.bf16.mxu0 0
  %843 = vmatpush1.bf16.msra.mxu0 %v654
  %844 = vmatprep.subr.bf16.mxu0 0
  %845 = vmatpush1.bf16.msra.mxu0 %v655
  %846 = vmatprep.subr.bf16.mxu0 0
  %847 = vmatpush1.bf16.msra.mxu0 %v656
  %848 = vmatprep.subr.bf16.mxu0 0
  %849 = vmatpush1.bf16.msra.mxu0 %v657
  %850 = vmatprep.subr.bf16.mxu0 0
  %851 = vmatpush1.bf16.msra.mxu0 %v658
  %852 = vmatprep.subr.bf16.mxu0 0
  %853 = vmatpush1.bf16.msra.mxu0 %v659
  %854 = vmatprep.subr.bf16.mxu0 0
  %855 = vmatpush1.bf16.msra.mxu0 %v660
  %856 = vmatprep.subr.bf16.mxu0 0
  %857 = vmatpush1.bf16.msra.mxu0 %v661
  %858 = vmatprep.subr.bf16.mxu0 0
  %859 = vmatpush1.bf16.msra.mxu0 %v662
  %860 = vmatprep.subr.bf16.mxu0 0
  %861 = vmatpush1.bf16.msra.mxu0 %v663
  %862 = vmatprep.subr.bf16.mxu0 0
  %863 = vmatpush1.bf16.msra.mxu0 %v664
  %864 = vmatprep.subr.bf16.mxu0 0
  %865 = vmatpush1.bf16.msra.mxu0 %v665
  %866 = vmatprep.mubr.bf16.mxu0 %v243
  %867 = vmatmul.mubr.bf16.gmra.mrb[0].mxu0 %v229
  %v868 = vpop.f32.mrb[0].mxu0
  %v869 = vadd.f32 %v202, %v868
  %v870 = vpop.f32.mrb[0].mxu0
  %v871 = vpop.f32.mrb[0].mxu0
  %v872 = vpop.f32.mrb[0].mxu0
  %873 = vdwg.mxu0
  %874 = vmatprep.subr.bf16.mxu0 0
  %875 = vmatpush1.bf16.msra.mxu0 %v666
  %876 = vmatprep.subr.bf16.mxu0 0
  %877 = vmatpush1.bf16.msra.mxu0 %v667
  %878 = vmatprep.subr.bf16.mxu0 0
  %879 = vmatpush1.bf16.msra.mxu0 %v668
  %880 = vmatprep.subr.bf16.mxu0 0
  %881 = vmatpush1.bf16.msra.mxu0 %v669
  %882 = vmatprep.subr.bf16.mxu0 0
  %883 = vmatpush1.bf16.msra.mxu0 %v670
  %884 = vmatprep.subr.bf16.mxu0 0
  %885 = vmatpush1.bf16.msra.mxu0 %v671
  %886 = vmatprep.subr.bf16.mxu0 0
  %887 = vmatpush1.bf16.msra.mxu0 %v672
  %888 = vmatprep.subr.bf16.mxu0 0
  %889 = vmatpush1.bf16.msra.mxu0 %v673
  %890 = vmatprep.subr.bf16.mxu0 0
  %891 = vmatpush1.bf16.msra.mxu0 %v674
  %892 = vmatprep.subr.bf16.mxu0 0
  %893 = vmatpush1.bf16.msra.mxu0 %v675
  %894 = vmatprep.subr.bf16.mxu0 0
  %895 = vmatpush1.bf16.msra.mxu0 %v676
  %896 = vmatprep.subr.bf16.mxu0 0
  %897 = vmatpush1.bf16.msra.mxu0 %v677
  %898 = vmatprep.subr.bf16.mxu0 0
  %899 = vmatpush1.bf16.msra.mxu0 %v678
  %900 = vmatprep.subr.bf16.mxu0 0
  %901 = vmatpush1.bf16.msra.mxu0 %v679
  %902 = vmatprep.subr.bf16.mxu0 0
  %903 = vmatpush1.bf16.msra.mxu0 %v680
  %904 = vmatprep.subr.bf16.mxu0 0
  %905 = vmatpush1.bf16.msra.mxu0 %v681
  %906 = vmatprep.mubr.bf16.mxu0 %v253
  %907 = vmatmul.mubr.bf16.gmra.mrb[0].mxu0 %v251
  %v908 = vpop.f32.mrb[0].mxu0
  %v909 = vadd.f32 %v869, %v908
  %v910 = vpop.f32.mrb[0].mxu0
  %v911 = vpop.f32.mrb[0].mxu0
  %v912 = vpop.f32.mrb[0].mxu0
  %913 = vdwg.mxu0
  %914 = vmatprep.subr.bf16.mxu0 0
  %915 = vmatpush1.bf16.msra.mxu0 %v682
  %916 = vmatprep.subr.bf16.mxu0 0
  %917 = vmatpush1.bf16.msra.mxu0 %v683
  %918 = vmatprep.subr.bf16.mxu0 0
  %919 = vmatpush1.bf16.msra.mxu0 %v684
  %920 = vmatprep.subr.bf16.mxu0 0
  %921 = vmatpush1.bf16.msra.mxu0 %v685
  %922 = vmatprep.subr.bf16.mxu0 0
  %923 = vmatpush1.bf16.msra.mxu0 %v686
  %924 = vmatprep.subr.bf16.mxu0 0
  %925 = vmatpush1.bf16.msra.mxu0 %v687
  %926 = vmatprep.subr.bf16.mxu0 0
  %927 = vmatpush1.bf16.msra.mxu0 %v688
  %928 = vmatprep.subr.bf16.mxu0 0
  %929 = vmatpush1.bf16.msra.mxu0 %v689
  %930 = vmatprep.subr.bf16.mxu0 0
  %931 = vmatpush1.bf16.msra.mxu0 %v690
  %932 = vmatprep.subr.bf16.mxu0 0
  %933 = vmatpush1.bf16.msra.mxu0 %v691
  %934 = vmatprep.subr.bf16.mxu0 0
  %935 = vmatpush1.bf16.msra.mxu0 %v692
  %936 = vmatprep.subr.bf16.mxu0 0
  %937 = vmatpush1.bf16.msra.mxu0 %v693
  %938 = vmatprep.subr.bf16.mxu0 0
  %939 = vmatpush1.bf16.msra.mxu0 %v694
  %940 = vmatprep.subr.bf16.mxu0 0
  %941 = vmatpush1.bf16.msra.mxu0 %v695
  %942 = vmatprep.subr.bf16.mxu0 0
  %943 = vmatpush1.bf16.msra.mxu0 %v696
  %944 = vmatprep.subr.bf16.mxu0 0
  %945 = vmatpush1.bf16.msra.mxu0 %v697
  %946 = vmatprep.mubr.bf16.mxu0 %v250
  %947 = vmatmul.mubr.bf16.gmra.mrb[0].mxu0 %v236
  %v948 = vpop.f32.mrb[0].mxu0
  %v949 = vadd.f32 %v909, %v948
  %v950 = vpop.f32.mrb[0].mxu0
  %v951 = vpop.f32.mrb[0].mxu0
  %v952 = vpop.f32.mrb[0].mxu0
  %953 = vdwg.mxu0
  %954 = vmatprep.subr.bf16.mxu0 0
  %955 = vmatpush1.bf16.msra.mxu0 %v698
  %956 = vmatprep.subr.bf16.mxu0 0
  %957 = vmatpush1.bf16.msra.mxu0 %v699
  %958 = vmatprep.subr.bf16.mxu0 0
  %959 = vmatpush1.bf16.msra.mxu0 %v700
  %960 = vmatprep.subr.bf16.mxu0 0
  %961 = vmatpush1.bf16.msra.mxu0 %v701
  %962 = vmatprep.subr.bf16.mxu0 0
  %963 = vmatpush1.bf16.msra.mxu0 %v702
  %964 = vmatprep.subr.bf16.mxu0 0
  %965 = vmatpush1.bf16.msra.mxu0 %v703
  %966 = vmatprep.subr.bf16.mxu0 0
  %967 = vmatpush1.bf16.msra.mxu0 %v704
  %968 = vmatprep.subr.bf16.mxu0 0
  %969 = vmatpush1.bf16.msra.mxu0 %v705
  %970 = vmatprep.subr.bf16.mxu0 0
  %971 = vmatpush1.bf16.msra.mxu0 %v706
  %972 = vmatprep.subr.bf16.mxu0 0
  %973 = vmatpush1.bf16.msra.mxu0 %v707
  %974 = vmatprep.subr.bf16.mxu0 0
  %975 = vmatpush1.bf16.msra.mxu0 %v708
  %976 = vmatprep.subr.bf16.mxu0 0
  %977 = vmatpush1.bf16.msra.mxu0 %v709
  %978 = vmatprep.subr.bf16.mxu0 0
  %979 = vmatpush1.bf16.msra.mxu0 %v710
  %980 = vmatprep.subr.bf16.mxu0 0
  %981 = vmatpush1.bf16.msra.mxu0 %v711
  %982 = vmatprep.subr.bf16.mxu0 0
  %983 = vmatpush1.bf16.msra.mxu0 %v712
  %984 = vmatprep.subr.bf16.mxu0 0
  %985 = vmatpush1.bf16.msra.mxu0 %v713
  %986 = vmatprep.mubr.bf16.mxu0 %v254
  %987 = vmatmul.mubr.bf16.gmra.mrb[0].mxu0 %v252
  %v988 = vpop.f32.mrb[0].mxu0
  %v989 = vadd.f32 %v949, %v988
  %v990 = vpop.f32.mrb[0].mxu0
  %v991 = vpop.f32.mrb[0].mxu0
  %v992 = vpop.f32.mrb[0].mxu0
  %993 = vdwg.mxu0
  %994 = vmatprep.subr.bf16.mxu0 0
  %995 = vmatpush1.bf16.msra.mxu0 %v714
  %996 = vmatprep.subr.bf16.mxu0 0
  %997 = vmatpush1.bf16.msra.mxu0 %v715
  %998 = vmatprep.subr.bf16.mxu0 0
  %999 = vmatpush1.bf16.msra.mxu0 %v716
  %1000 = vmatprep.subr.bf16.mxu0 0
  %1001 = vmatpush1.bf16.msra.mxu0 %v717
  %1002 = vmatprep.subr.bf16.mxu0 0
  %1003 = vmatpush1.bf16.msra.mxu0 %v718
  %1004 = vmatprep.subr.bf16.mxu0 0
  %1005 = vmatpush1.bf16.msra.mxu0 %v719
  %1006 = vmatprep.subr.bf16.mxu0 0
  %1007 = vmatpush1.bf16.msra.mxu0 %v720
  %1008 = vmatprep.subr.bf16.mxu0 0
  %1009 = vmatpush1.bf16.msra.mxu0 %v721
  %1010 = vmatprep.subr.bf16.mxu0 0
  %1011 = vmatpush1.bf16.msra.mxu0 %v722
  %1012 = vmatprep.subr.bf16.mxu0 0
  %1013 = vmatpush1.bf16.msra.mxu0 %v723
  %1014 = vmatprep.subr.bf16.mxu0 0
  %1015 = vmatpush1.bf16.msra.mxu0 %v724
  %1016 = vmatprep.subr.bf16.mxu0 0
  %1017 = vmatpush1.bf16.msra.mxu0 %v725
  %1018 = vmatprep.subr.bf16.mxu0 0
  %1019 = vmatpush1.bf16.msra.mxu0 %v726
  %1020 = vmatprep.subr.bf16.mxu0 0
  %1021 = vmatpush1.bf16.msra.mxu0 %v727
  %1022 = vmatprep.subr.bf16.mxu0 0
  %1023 = vmatpush1.bf16.msra.mxu0 %v728
  %1024 = vmatprep.subr.bf16.mxu0 0
  %1025 = vmatpush1.bf16.msra.mxu0 %v729
  %1026 = vmatprep.mubr.bf16.mxu0 %v276
  %1027 = vmatmul.mubr.bf16.gmra.mrb[0].mxu0 %v269
  %v1028 = vpop.f32.mrb[0].mxu0
  %v1029 = vadd.f32 %v989, %v1028
  %v1030 = vpop.f32.mrb[0].mxu0
  %v1031 = vpop.f32.mrb[0].mxu0
  %v1032 = vpop.f32.mrb[0].mxu0
  %1033 = vdwg.mxu0
  %1034 = vmatprep.subr.bf16.mxu0 0
  %1035 = vmatpush1.bf16.msra.mxu0 %v730
  %1036 = vmatprep.subr.bf16.mxu0 0
  %1037 = vmatpush1.bf16.msra.mxu0 %v731
  %1038 = vmatprep.subr.bf16.mxu0 0
  %1039 = vmatpush1.bf16.msra.mxu0 %v732
  %1040 = vmatprep.subr.bf16.mxu0 0
  %1041 = vmatpush1.bf16.msra.mxu0 %v733
  %1042 = vmatprep.subr.bf16.mxu0 0
  %1043 = vmatpush1.bf16.msra.mxu0 %v734
  %1044 = vmatprep.subr.bf16.mxu0 0
  %1045 = vmatpush1.bf16.msra.mxu0 %v735
  %1046 = vmatprep.subr.bf16.mxu0 0
  %1047 = vmatpush1.bf16.msra.mxu0 %v736
  %1048 = vmatprep.subr.bf16.mxu0 0
  %1049 = vmatpush1.bf16.msra.mxu0 %v737
  %1050 = vmatprep.subr.bf16.mxu0 0
  %1051 = vmatpush1.bf16.msra.mxu0 %v738
  %1052 = vmatprep.subr.bf16.mxu0 0
  %1053 = vmatpush1.bf16.msra.mxu0 %v739
  %1054 = vmatprep.subr.bf16.mxu0 0
  %1055 = vmatpush1.bf16.msra.mxu0 0
  %1056 = vmatprep.subr.bf16.mxu0 0
  %1057 = vmatpush1.bf16.msra.mxu0 0
  %1058 = vmatprep.subr.bf16.mxu0 0
  %1059 = vmatpush1.bf16.msra.mxu0 0
  %1060 = vmatprep.subr.bf16.mxu0 0
  %1061 = vmatpush1.bf16.msra.mxu0 0
  %1062 = vmatprep.subr.bf16.mxu0 0
  %1063 = vmatpush1.bf16.msra.mxu0 0
  %1064 = vmatprep.subr.bf16.mxu0 0
  %1065 = vmatpush1.bf16.msra.mxu0 0
  %1066 = vmatprep.mubr.bf16.mxu0 %v832
  %1067 = vmatmul.mubr.bf16.gmra.mrb[0].mxu0 %v277
  %v1068 = vpop.f32.mrb[0].mxu0
  %v1069 = vadd.f32 %v1029, %v1068
  %v1070 = vpop.f32.mrb[0].mxu0
  %v1071 = vpop.f32.mrb[0].mxu0
  %v1072 = vpop.f32.mrb[0].mxu0
  %1073 = vdwg.mxu0
  %vm1074 = vcmask 386048
  %1075 = vst.msk [vmem:[%s3] sm:$0x3] %vm1074, %v1069
  // Predicated region
  $region14: #{cnn_embedding_forward.5} parent=0 // pred_check
    _
  $region15: #{cnn_embedding_forward.5} parent=0 // pred_check_branch
    %1077 = sbr.rel (0) target = $region17
  $region16: #{cnn_embedding_forward.5} parent=0 // pred_region
    _
  $region17: #{cnn_embedding_forward.5} parent=0 // pred_fallthru
    _
  // Predicated region
  $region18: #{cnn_embedding_forward.5} parent=0 // pred_check
    _
  $region19: #{cnn_embedding_forward.5} parent=0 // pred_check_branch
    %1079 = sbr.rel (0) target = $region21
  $region20: #{cnn_embedding_forward.5} parent=0 // pred_region
    _
  $region21: #{cnn_embedding_forward.5} parent=0 // pred_fallthru
    _

</llo_original>
